<compile_context>
chip_gen: v7x
topology: tpu7x:2x2x1
jax: 0.10.0
libtpu: 0.0.40
codegen_flags: <defaults>
</compile_context>

<pallas_src>
import functools

import jax
import jax.numpy as jnp
from jax import lax
from jax.experimental import pallas as pl
from jax.experimental.pallas import tpu as pltpu


# -----------------------------------------------------------------------------
# Sizing helpers
# -----------------------------------------------------------------------------
_VMEM_BUDGET_BYTES = 40 * 1024 * 1024   # target for buffers+weights per call
_VMEM_LIMIT_CAP = 56 * 1024 * 1024      # stay under v7x's 64 MiB physical VMEM


def _row_tile(n, cap=1024):
    """Largest MXU-friendly divisor of n (prefer x256, then x128, then x8)."""
    for pref in (256, 128, 8):
        best = None
        for d in range(pref, min(n, cap) + 1, pref):
            if n % d == 0:
                best = d
        if best is not None:
            return best
    return n


def _pick_time_tile(t_len, per_step_bytes, fixed_bytes,
                    budget=_VMEM_BUDGET_BYTES):
    """Largest divisor of t_len whose chunk buffers fit the VMEM budget."""
    avail = max(budget - fixed_bytes, per_step_bytes)
    cap = max(1, min(t_len, avail // max(per_step_bytes, 1)))
    best = 1
    for d in range(1, int(cap) + 1):
        if t_len % d == 0:
            best = d
    return best


def _vmem_limit(fixed_bytes, per_step_bytes, tt):
    need = fixed_bytes + per_step_bytes * tt + (8 << 20)
    return int(min(max(need, 32 << 20), _VMEM_LIMIT_CAP))


# -----------------------------------------------------------------------------
# Shared recurrence (both directions, one time chunk), state in registers.
# -----------------------------------------------------------------------------
def _recurrence(gxf_s, gxb_s, whhf_ref, whhb_ref, outf_ref, outb_ref,
                hf_s, cf_s, hb_s, cb_s):
    tt = gxf_s.shape[0]
    h_dim = hf_s.shape[1]

    @pl.when(pl.program_id(0) == 0)
    def _():
        hf_s[...] = jnp.zeros_like(hf_s)
        cf_s[...] = jnp.zeros_like(cf_s)
        hb_s[...] = jnp.zeros_like(hb_s)
        cb_s[...] = jnp.zeros_like(cb_s)

    def cell(gates, c_prev):
        i_g = jax.nn.sigmoid(gates[:, 0 * h_dim:1 * h_dim])
        f_g = jax.nn.sigmoid(gates[:, 1 * h_dim:2 * h_dim])
        g_g = jnp.tanh(gates[:, 2 * h_dim:3 * h_dim])
        o_g = jax.nn.sigmoid(gates[:, 3 * h_dim:4 * h_dim])
        c_new = f_g * c_prev + i_g * g_g
        h_new = o_g * jnp.tanh(c_new)
        return h_new, c_new

    def step(t, carry):
        hf, cf, hb, cb = carry
        # Forward direction: local time t within this chunk.
        gf = gxf_s[t] + jnp.dot(hf, whhf_ref[...],
                                preferred_element_type=jnp.float32)
        hf, cf = cell(gf, cf)
        outf_ref[t] = hf.astype(outf_ref.dtype)

        # Backward direction: its chunk was selected time-reversed by the
        # index_map; walk it from the chunk end toward the chunk start.
        tb = tt - 1 - t
        gb = gxb_s[tb] + jnp.dot(hb, whhb_ref[...],
                                 preferred_element_type=jnp.float32)
        hb, cb = cell(gb, cb)
        outb_ref[tb] = hb.astype(outb_ref.dtype)
        return (hf, cf, hb, cb)

    carry0 = (hf_s[...], cf_s[...], hb_s[...], cb_s[...])
    unroll = True if tt <= 16 else 8
    hf, cf, hb, cb = lax.fori_loop(0, tt, step, carry0, unroll=unroll)
    # State touches VMEM scratch only once per chunk (carried across the grid).
    hf_s[...] = hf
    cf_s[...] = cf
    hb_s[...] = hb
    cb_s[...] = cb


# -----------------------------------------------------------------------------
# Fused layer kernels: in-VMEM input projection + bidirectional recurrence.
# -----------------------------------------------------------------------------
def _bilstm_layer0_kernel(xf_ref, xb_ref, wif_ref, wib_ref, bf_ref, bb_ref,
                          whhf_ref, whhb_ref, outf_ref, outb_ref,
                          gxf_s, gxb_s, hf_s, cf_s, hb_s, cb_s):
    """Layer 0: x chunks (fwd & time-reversed) -> gx in VMEM -> recurrence."""
    tt = xf_ref.shape[0]

    def proj_step(t, carry):
        gxf_s[t] = (jnp.dot(xf_ref[t], wif_ref[...],
                            preferred_element_type=jnp.float32) + bf_ref[...])
        gxb_s[t] = (jnp.dot(xb_ref[t], wib_ref[...],
                            preferred_element_type=jnp.float32) + bb_ref[...])
        return carry

    # Independent per-step matmuls: no serial chain, MXU stays busy.
    lax.fori_loop(0, tt, proj_step, 0, unroll=True if tt <= 16 else 8)
    _recurrence(gxf_s, gxb_s, whhf_ref, whhb_ref, outf_ref, outb_ref,
                hf_s, cf_s, hb_s, cb_s)


def _bilstm_layern_kernel(hff_ref, hbf_ref, hfb_ref, hbb_ref,
                          wfa_ref, wfb_ref, wba_ref, wbb_ref,
                          bf_ref, bb_ref, whhf_ref, whhb_ref,
                          outf_ref, outb_ref,
                          gxf_s, gxb_s, hf_s, cf_s, hb_s, cb_s):
    """Layer >0: consumes un-concatenated fwd/bwd streams (row-split W_ih)."""
    tt = hff_ref.shape[0]

    def proj_step(t, carry):
        gxf_s[t] = (jnp.dot(hff_ref[t], wfa_ref[...],
                            preferred_element_type=jnp.float32)
                    + jnp.dot(hbf_ref[t], wfb_ref[...],
                              preferred_element_type=jnp.float32)
                    + bf_ref[...])
        gxb_s[t] = (jnp.dot(hfb_ref[t], wba_ref[...],
                            preferred_element_type=jnp.float32)
                    + jnp.dot(hbb_ref[t], wbb_ref[...],
                              preferred_element_type=jnp.float32)
                    + bb_ref[...])
        return carry

    lax.fori_loop(0, tt, proj_step, 0, unroll=True if tt <= 16 else 8)
    _recurrence(gxf_s, gxb_s, whhf_ref, whhb_ref, outf_ref, outb_ref,
                hf_s, cf_s, hb_s, cb_s)


def _fc_kernel(a_ref, b_ref, wa_ref, wb_ref, bias_ref, o_ref):
    """Linear head on the un-concatenated fwd/bwd streams (row-split weights)."""
    o_ref[...] = (
        jnp.dot(a_ref[...], wa_ref[...], preferred_element_type=jnp.float32)
        + jnp.dot(b_ref[...], wb_ref[...], preferred_element_type=jnp.float32)
        + bias_ref[...]
    ).astype(o_ref.dtype)


# -----------------------------------------------------------------------------
# pallas_call wrappers
# -----------------------------------------------------------------------------
def _layer_scratch(tt, b_dim, h):
    g = 4 * h
    return [pltpu.VMEM((tt, b_dim, g), jnp.float32),   # gx forward
            pltpu.VMEM((tt, b_dim, g), jnp.float32),   # gx backward
            pltpu.VMEM((b_dim, h), jnp.float32),       # h fwd
            pltpu.VMEM((b_dim, h), jnp.float32),       # c fwd
            pltpu.VMEM((b_dim, h), jnp.float32),       # h bwd
            pltpu.VMEM((b_dim, h), jnp.float32)]       # c bwd


def _run_bilstm_layer0(x_tm, w_ih_f, w_ih_b, b_f, b_b, w_hh_f, w_hh_b,
                       h, time_tile):
    t_len, b_dim, d_in = x_tm.shape
    g = 4 * h
    per_step = (2 * 2 * b_dim * d_in      # x chunks (fwd+bwd), double-buffered
                + 2 * 2 * b_dim * h       # outputs, double-buffered
                + 2 * b_dim * g) * 4      # gx VMEM scratch
    fixed = (2 * (2 * d_in * g + 2 * h * g + 2 * g)   # weights+biases (x2 buf)
             + 4 * b_dim * h) * 4 + (1 << 20)
    tt = time_tile if time_tile is not None else _pick_time_tile(
        t_len, per_step, fixed)
    assert t_len % tt == 0, f"time tile {tt} must divide T={t_len}"
    n_chunks = t_len // tt

    x_f = pl.BlockSpec((tt, b_dim, d_in), lambda i: (i, 0, 0))
    x_b = pl.BlockSpec((tt, b_dim, d_in), lambda i: (n_chunks - 1 - i, 0, 0))
    wih = pl.BlockSpec((d_in, g), lambda i: (0, 0))
    whh = pl.BlockSpec((h, g), lambda i: (0, 0))
    bia = pl.BlockSpec((1, g), lambda i: (0, 0))
    o_f = pl.BlockSpec((tt, b_dim, h), lambda i: (i, 0, 0))
    o_b = pl.BlockSpec((tt, b_dim, h), lambda i: (n_chunks - 1 - i, 0, 0))

    return pl.pallas_call(
        _bilstm_layer0_kernel,
        out_shape=(jax.ShapeDtypeStruct((t_len, b_dim, h), jnp.float32),
                   jax.ShapeDtypeStruct((t_len, b_dim, h), jnp.float32)),
        grid_spec=pltpu.PrefetchScalarGridSpec(
            num_scalar_prefetch=0, grid=(n_chunks,),
            in_specs=[x_f, x_b, wih, wih, bia, bia, whh, whh],
            out_specs=[o_f, o_b],
            scratch_shapes=_layer_scratch(tt, b_dim, h)),
        compiler_params=pltpu.CompilerParams(
            dimension_semantics=("arbitrary",),
            vmem_limit_bytes=_vmem_limit(fixed, per_step, tt)),
    )(x_tm, x_tm, w_ih_f, w_ih_b, b_f, b_b, w_hh_f, w_hh_b)


def _run_bilstm_layern(h_f, h_b, wfa, wfb, wba, wbb, b_f, b_b,
                       w_hh_f, w_hh_b, h, time_tile):
    t_len, b_dim, _ = h_f.shape
    g = 4 * h
    per_step = (4 * 2 * b_dim * h         # 4 input stream chunks, dbl-buffered
                + 2 * 2 * b_dim * h       # outputs, double-buffered
                + 2 * b_dim * g) * 4      # gx VMEM scratch
    fixed = (2 * (6 * h * g + 2 * g)      # 4 W_ih halves + 2 W_hh + biases
             + 4 * b_dim * h) * 4 + (1 << 20)
    tt = time_tile if time_tile is not None else _pick_time_tile(
        t_len, per_step, fixed)
    assert t_len % tt == 0, f"time tile {tt} must divide T={t_len}"
    n_chunks = t_len // tt

    s_f = pl.BlockSpec((tt, b_dim, h), lambda i: (i, 0, 0))
    s_b = pl.BlockSpec((tt, b_dim, h), lambda i: (n_chunks - 1 - i, 0, 0))
    wih = pl.BlockSpec((h, g), lambda i: (0, 0))
    whh = pl.BlockSpec((h, g), lambda i: (0, 0))
    bia = pl.BlockSpec((1, g), lambda i: (0, 0))
    o_f = pl.BlockSpec((tt, b_dim, h), lambda i: (i, 0, 0))
    o_b = pl.BlockSpec((tt, b_dim, h), lambda i: (n_chunks - 1 - i, 0, 0))

    return pl.pallas_call(
        _bilstm_layern_kernel,
        out_shape=(jax.ShapeDtypeStruct((t_len, b_dim, h), jnp.float32),
                   jax.ShapeDtypeStruct((t_len, b_dim, h), jnp.float32)),
        grid_spec=pltpu.PrefetchScalarGridSpec(
            num_scalar_prefetch=0, grid=(n_chunks,),
            in_specs=[s_f, s_f, s_b, s_b, wih, wih, wih, wih,
                      bia, bia, whh, whh],
            out_specs=[o_f, o_b],
            scratch_shapes=_layer_scratch(tt, b_dim, h)),
        compiler_params=pltpu.CompilerParams(
            dimension_semantics=("arbitrary",),
            vmem_limit_bytes=_vmem_limit(fixed, per_step, tt)),
    )(h_f, h_b, h_f, h_b, wfa, wfb, wba, wbb, b_f, b_b, w_hh_f, w_hh_b)


def _run_fc(a2d, b2d, w_a, w_b, bias):
    n, h = a2d.shape
    c = w_a.shape[1]
    # Lane-dense output: pad columns to a multiple of 128 (unmasked stores,
    # full MXU N fill); slice back outside the kernel.
    c_pad = max(128, -(-c // 128) * 128)
    if c_pad != c:
        w_a = jnp.pad(w_a, ((0, 0), (0, c_pad - c)))
        w_b = jnp.pad(w_b, ((0, 0), (0, c_pad - c)))
        bias = jnp.pad(bias, ((0, 0), (0, c_pad - c)))
    rn = _row_tile(n)
    grid = (n // rn,)
    row_spec = pl.BlockSpec((rn, h), lambda i: (i, 0))
    w_spec = pl.BlockSpec((h, c_pad), lambda i: (0, 0))
    b_spec = pl.BlockSpec((1, c_pad), lambda i: (0, 0))
    out_spec = pl.BlockSpec((rn, c_pad), lambda i: (i, 0))
    out = pl.pallas_call(
        _fc_kernel,
        out_shape=jax.ShapeDtypeStruct((n, c_pad), jnp.float32),
        grid_spec=pltpu.PrefetchScalarGridSpec(
            num_scalar_prefetch=0, grid=grid,
            in_specs=[row_spec, row_spec, w_spec, w_spec, b_spec],
            out_specs=out_spec),
        compiler_params=pltpu.CompilerParams(
            dimension_semantics=("parallel",),
            vmem_limit_bytes=32 << 20),
    )(a2d, b2d, w_a, w_b, bias)
    return out[:, :c] if c_pad != c else out


# -----------------------------------------------------------------------------
# Full forward pass
# -----------------------------------------------------------------------------
@functools.partial(jax.jit, static_argnames=("hidden_size", "time_tile"))
def blstm_forward(x, lstm_params, fc_w, fc_b, *, hidden_size, time_tile=None):
    """x: [B, T, D] -> [B, T, num_classes] (matches torch BLSTM.forward)."""
    b_dim, t_len, _ = x.shape
    h = hidden_size

    x_tm = jnp.transpose(x, (1, 0, 2))               # [T, B, Din] (once)
    h_f = h_b = None
    for layer_idx, (p_f, p_b) in enumerate(lstm_params):
        w_ih_f, w_hh_f, b_f = p_f
        w_ih_b, w_hh_b, b_b = p_b
        if layer_idx == 0:
            h_f, h_b = _run_bilstm_layer0(x_tm, w_ih_f, w_ih_b, b_f, b_b,
                                          w_hh_f, w_hh_b, h, time_tile)
        else:
            h_f, h_b = _run_bilstm_layern(
                h_f, h_b,
                w_ih_f[:h], w_ih_f[h:], w_ih_b[:h], w_ih_b[h:],
                b_f, b_b, w_hh_f, w_hh_b, h, time_tile)

    n = t_len * b_dim
    logits = _run_fc(h_f.reshape(n, h), h_b.reshape(n, h),
                     fc_w[:h], fc_w[h:], fc_b)        # [T*B, C]
    return jnp.transpose(logits.reshape(t_len, b_dim, -1), (1, 0, 2))


# -----------------------------------------------------------------------------
# Pure-JAX reference (same math, no Pallas) for validation
# -----------------------------------------------------------------------------
def blstm_reference(x, lstm_params, fc_w, fc_b, hidden_size):
    B, T, _ = x.shape
    layer_in = x
    for layer in lstm_params:
        dir_outs = []
        for direction, (w_ih, w_hh, b) in enumerate(layer):
            xt = jnp.transpose(layer_in, (1, 0, 2))
            if direction == 1:
                xt = jnp.flip(xt, axis=0)

            def step(carry, x_t):
                h, c = carry
                gates = x_t @ w_ih + h @ w_hh + b
                H = hidden_size
                i = jax.nn.sigmoid(gates[:, :H])
                f = jax.nn.sigmoid(gates[:, H:2 * H])
                g = jnp.tanh(gates[:, 2 * H:3 * H])
                o = jax.nn.sigmoid(gates[:, 3 * H:])
                c_new = f * c + i * g
                h_new = o * jnp.tanh(c_new)
                return (h_new, c_new), h_new

            h0 = jnp.zeros((B, hidden_size), jnp.float32)
            c0 = jnp.zeros((B, hidden_size), jnp.float32)
            _, out_t = lax.scan(step, (h0, c0), xt)
            if direction == 1:
                out_t = jnp.flip(out_t, axis=0)
            dir_outs.append(jnp.transpose(out_t, (1, 0, 2)))
        layer_in = jnp.concatenate(dir_outs, axis=-1)
    return (layer_in.reshape(B * T, -1) @ fc_w + fc_b).reshape(B, T, -1)


# -----------------------------------------------------------------------------
# Deterministic parameter construction (shapes from nn.LSTM / nn.Linear)
# -----------------------------------------------------------------------------
def make_params(key, input_size, hidden_size, num_layers, num_classes):
    scale = 1.0 / jnp.sqrt(hidden_size)
    lstm_params = []
    for layer in range(num_layers):
        d_in = input_size if layer == 0 else 2 * hidden_size
        layer_dirs = []
        for _ in range(2):  # forward, backward
            key, k1, k2, k3, k4 = jax.random.split(key, 5)
            w_ih = jax.random.uniform(k1, (d_in, 4 * hidden_size),
                                      jnp.float32, -scale, scale)
            w_hh = jax.random.uniform(k2, (hidden_size, 4 * hidden_size),
                                      jnp.float32, -scale, scale)
            b_ih = jax.random.uniform(k3, (4 * hidden_size,),
                                      jnp.float32, -scale, scale)
            b_hh = jax.random.uniform(k4, (4 * hidden_size,),
                                      jnp.float32, -scale, scale)
            b = (b_ih + b_hh).reshape(1, 4 * hidden_size)
            layer_dirs.append((w_ih, w_hh, b))
        lstm_params.append(tuple(layer_dirs))
    key, kw, kb = jax.random.split(key, 3)
    fc_scale = 1.0 / jnp.sqrt(2 * hidden_size)
    fc_w = jax.random.uniform(kw, (2 * hidden_size, num_classes),
                              jnp.float32, -fc_scale, fc_scale)
    fc_b = jax.random.uniform(kb, (1, num_classes),
                              jnp.float32, -fc_scale, fc_scale)
    return tuple(lstm_params), fc_w, fc_b


# -----------------------------------------------------------------------------
if __name__ == "__main__":
    batch, seq_len = 2, 8
    input_size, hidden_size, num_layers, num_classes = 16, 32, 2, 8

    key = jax.random.PRNGKey(0)
    key, kx = jax.random.split(key)
    x = jax.random.normal(kx, (batch, seq_len, input_size), jnp.float32)

    lstm_params, fc_w, fc_b = make_params(
        key, input_size, hidden_size, num_layers, num_classes)

    ref = jax.block_until_ready(
        blstm_reference(x, lstm_params, fc_w, fc_b, hidden_size))

    # Single time-chunk path (whole sequence per grid step).
    out = blstm_forward(x, lstm_params, fc_w, fc_b, hidden_size=hidden_size)
    out = jax.block_until_ready(out)
    assert out.shape == (batch, seq_len, num_classes), out.shape
    assert jnp.allclose(out, ref, atol=1e-2, rtol=1e-2), \
        float(jnp.max(jnp.abs(out - ref)))

    # Multi-chunk path: exercises the time-gridded recurrence (state carried in
    # VMEM scratch across grid steps; backward direction via reversed index_map).
    out2 = blstm_forward(x, lstm_params, fc_w, fc_b,
                         hidden_size=hidden_size, time_tile=2)
    out2 = jax.block_until_ready(out2)
    assert jnp.allclose(out2, ref, atol=1e-2, rtol=1e-2), \
        float(jnp.max(jnp.abs(out2 - ref)))

    print("KERNEL_OK")
</pallas_src>

<mosaic_0001>
module attributes {stable_mosaic.version = 11 : i64} {
  func.func @_bilstm_layern_kernel(%arg0: i32, %arg1: memref<8x2x32xf32, #tpu.memory_space<vmem>>, %arg2: memref<8x2x32xf32, #tpu.memory_space<vmem>>, %arg3: memref<8x2x32xf32, #tpu.memory_space<vmem>>, %arg4: memref<8x2x32xf32, #tpu.memory_space<vmem>>, %arg5: memref<32x128xf32, #tpu.memory_space<vmem>>, %arg6: memref<32x128xf32, #tpu.memory_space<vmem>>, %arg7: memref<32x128xf32, #tpu.memory_space<vmem>>, %arg8: memref<32x128xf32, #tpu.memory_space<vmem>>, %arg9: memref<1x128xf32, #tpu.memory_space<vmem>>, %arg10: memref<1x128xf32, #tpu.memory_space<vmem>>, %arg11: memref<32x128xf32, #tpu.memory_space<vmem>>, %arg12: memref<32x128xf32, #tpu.memory_space<vmem>>, %arg13: memref<8x2x32xf32, #tpu.memory_space<vmem>>, %arg14: memref<8x2x32xf32, #tpu.memory_space<vmem>>, %arg15: memref<8x2x128xf32, #tpu.memory_space<vmem>>, %arg16: memref<8x2x128xf32, #tpu.memory_space<vmem>>, %arg17: memref<2x32xf32, #tpu.memory_space<vmem>>, %arg18: memref<2x32xf32, #tpu.memory_space<vmem>>, %arg19: memref<2x32xf32, #tpu.memory_space<vmem>>, %arg20: memref<2x32xf32, #tpu.memory_space<vmem>>) attributes {dimension_semantics = [#tpu.dimension_semantics<arbitrary>], iteration_bounds = array<i64: 1>, scalar_prefetch = 0 : i64, scratch_operands = 6 : i64, tpu.core_type = #tpu.core_type<tc>, window_params = [{transform_indices = @transform_0, window_bounds = array<i64: 8, 2, 32>}, {transform_indices = @transform_1, window_bounds = array<i64: 8, 2, 32>}, {transform_indices = @transform_2, window_bounds = array<i64: 8, 2, 32>}, {transform_indices = @transform_3, window_bounds = array<i64: 8, 2, 32>}, {pipeline_mode = #tpu.pipeline_mode<synchronous>, transform_indices = @transform_4, window_bounds = array<i64: 32, 128>}, {pipeline_mode = #tpu.pipeline_mode<synchronous>, transform_indices = @transform_5, window_bounds = array<i64: 32, 128>}, {pipeline_mode = #tpu.pipeline_mode<synchronous>, transform_indices = @transform_6, window_bounds = array<i64: 32, 128>}, {pipeline_mode = #tpu.pipeline_mode<synchronous>, transform_indices = @transform_7, window_bounds = array<i64: 32, 128>}, {pipeline_mode = #tpu.pipeline_mode<synchronous>, transform_indices = @transform_8, window_bounds = array<i64: 1, 128>}, {pipeline_mode = #tpu.pipeline_mode<synchronous>, transform_indices = @transform_9, window_bounds = array<i64: 1, 128>}, {pipeline_mode = #tpu.pipeline_mode<synchronous>, transform_indices = @transform_10, window_bounds = array<i64: 32, 128>}, {pipeline_mode = #tpu.pipeline_mode<synchronous>, transform_indices = @transform_11, window_bounds = array<i64: 32, 128>}, {transform_indices = @transform_12, window_bounds = array<i64: 8, 2, 32>}, {transform_indices = @transform_13, window_bounds = array<i64: 8, 2, 32>}]} {
    %c0_i32 = arith.constant 0 : i32
    %0 = arith.index_cast %c0_i32 : i32 to index
    %c0 = arith.constant 0 : index
    %c0_0 = arith.constant 0 : index
    %1 = vector.load %arg1[%0, %c0, %c0_0] : memref<8x2x32xf32, #tpu.memory_space<vmem>>, vector<1x2x32xf32>
    %2 = vector.shape_cast %1 : vector<1x2x32xf32> to vector<2x32xf32>
    %c0_1 = arith.constant 0 : index
    %c0_2 = arith.constant 0 : index
    %3 = vector.load %arg5[%c0_1, %c0_2] : memref<32x128xf32, #tpu.memory_space<vmem>>, vector<32x128xf32>
    %cst = arith.constant dense<0.000000e+00> : vector<2x128xf32>
    %4 = tpu.matmul %2, %3, %cst {dimension_numbers = #tpu.dot_dimension_numbers<[1], [0], [0], [1], [0, 0, 1, 1], [], []>} : vector<2x32xf32>, vector<32x128xf32>, vector<2x128xf32> -> vector<2x128xf32>
    %5 = arith.index_cast %c0_i32 : i32 to index
    %c0_3 = arith.constant 0 : index
    %c0_4 = arith.constant 0 : index
    %6 = vector.load %arg2[%5, %c0_3, %c0_4] : memref<8x2x32xf32, #tpu.memory_space<vmem>>, vector<1x2x32xf32>
    %7 = vector.shape_cast %6 : vector<1x2x32xf32> to vector<2x32xf32>
    %c0_5 = arith.constant 0 : index
    %c0_6 = arith.constant 0 : index
    %8 = vector.load %arg6[%c0_5, %c0_6] : memref<32x128xf32, #tpu.memory_space<vmem>>, vector<32x128xf32>
    %cst_7 = arith.constant dense<0.000000e+00> : vector<2x128xf32>
    %9 = tpu.matmul %7, %8, %cst_7 {dimension_numbers = #tpu.dot_dimension_numbers<[1], [0], [0], [1], [0, 0, 1, 1], [], []>} : vector<2x32xf32>, vector<32x128xf32>, vector<2x128xf32> -> vector<2x128xf32>
    %10 = arith.addf %4, %9 : vector<2x128xf32>
    %c0_8 = arith.constant 0 : index
    %c0_9 = arith.constant 0 : index
    %11 = vector.load %arg9[%c0_8, %c0_9] : memref<1x128xf32, #tpu.memory_space<vmem>>, vector<1x128xf32>
    %12 = vector.broadcast %11 : vector<1x128xf32> to vector<2x128xf32>
    %13 = arith.addf %10, %12 : vector<2x128xf32>
    %14 = arith.index_cast %c0_i32 : i32 to index
    %c0_10 = arith.constant 0 : index
    %c0_11 = arith.constant 0 : index
    %15 = vector.load %arg15[%14, %c0_10, %c0_11] : memref<8x2x128xf32, #tpu.memory_space<vmem>>, vector<1x2x128xf32>
    %16 = vector.shape_cast %15 : vector<1x2x128xf32> to vector<2x128xf32>
    %17 = vector.shape_cast %13 : vector<2x128xf32> to vector<1x2x128xf32>
    tpu.vector_store %arg15[%14, %c0_10, %c0_11], %17 {strides = array<i32>} : memref<8x2x128xf32, #tpu.memory_space<vmem>>, vector<1x2x128xf32>,
    %18 = arith.index_cast %c0_i32 : i32 to index
    %c0_12 = arith.constant 0 : index
    %c0_13 = arith.constant 0 : index
    %19 = vector.load %arg3[%18, %c0_12, %c0_13] : memref<8x2x32xf32, #tpu.memory_space<vmem>>, vector<1x2x32xf32>
    %20 = vector.shape_cast %19 : vector<1x2x32xf32> to vector<2x32xf32>
    %c0_14 = arith.constant 0 : index
    %c0_15 = arith.constant 0 : index
    %21 = vector.load %arg7[%c0_14, %c0_15] : memref<32x128xf32, #tpu.memory_space<vmem>>, vector<32x128xf32>
    %cst_16 = arith.constant dense<0.000000e+00> : vector<2x128xf32>
    %22 = tpu.matmul %20, %21, %cst_16 {dimension_numbers = #tpu.dot_dimension_numbers<[1], [0], [0], [1], [0, 0, 1, 1], [], []>} : vector<2x32xf32>, vector<32x128xf32>, vector<2x128xf32> -> vector<2x128xf32>
    %23 = arith.index_cast %c0_i32 : i32 to index
    %c0_17 = arith.constant 0 : index
    %c0_18 = arith.constant 0 : index
    %24 = vector.load %arg4[%23, %c0_17, %c0_18] : memref<8x2x32xf32, #tpu.memory_space<vmem>>, vector<1x2x32xf32>
    %25 = vector.shape_cast %24 : vector<1x2x32xf32> to vector<2x32xf32>
    %c0_19 = arith.constant 0 : index
    %c0_20 = arith.constant 0 : index
    %26 = vector.load %arg8[%c0_19, %c0_20] : memref<32x128xf32, #tpu.memory_space<vmem>>, vector<32x128xf32>
    %cst_21 = arith.constant dense<0.000000e+00> : vector<2x128xf32>
    %27 = tpu.matmul %25, %26, %cst_21 {dimension_numbers = #tpu.dot_dimension_numbers<[1], [0], [0], [1], [0, 0, 1, 1], [], []>} : vector<2x32xf32>, vector<32x128xf32>, vector<2x128xf32> -> vector<2x128xf32>
    %28 = arith.addf %22, %27 : vector<2x128xf32>
    %c0_22 = arith.constant 0 : index
    %c0_23 = arith.constant 0 : index
    %29 = vector.load %arg10[%c0_22, %c0_23] : memref<1x128xf32, #tpu.memory_space<vmem>>, vector<1x128xf32>
    %30 = vector.broadcast %29 : vector<1x128xf32> to vector<2x128xf32>
    %31 = arith.addf %28, %30 : vector<2x128xf32>
    %32 = arith.index_cast %c0_i32 : i32 to index
    %c0_24 = arith.constant 0 : index
    %c0_25 = arith.constant 0 : index
    %33 = vector.load %arg16[%32, %c0_24, %c0_25] : memref<8x2x128xf32, #tpu.memory_space<vmem>>, vector<1x2x128xf32>
    %34 = vector.shape_cast %33 : vector<1x2x128xf32> to vector<2x128xf32>
    %35 = vector.shape_cast %31 : vector<2x128xf32> to vector<1x2x128xf32>
    tpu.vector_store %arg16[%32, %c0_24, %c0_25], %35 {strides = array<i32>} : memref<8x2x128xf32, #tpu.memory_space<vmem>>, vector<1x2x128xf32>,
    %c1_i32 = arith.constant 1 : i32
    %36 = arith.index_cast %c1_i32 : i32 to index
    %c0_26 = arith.constant 0 : index
    %c0_27 = arith.constant 0 : index
    %37 = vector.load %arg1[%36, %c0_26, %c0_27] : memref<8x2x32xf32, #tpu.memory_space<vmem>>, vector<1x2x32xf32>
    %38 = vector.shape_cast %37 : vector<1x2x32xf32> to vector<2x32xf32>
    %c0_28 = arith.constant 0 : index
    %c0_29 = arith.constant 0 : index
    %39 = vector.load %arg5[%c0_28, %c0_29] : memref<32x128xf32, #tpu.memory_space<vmem>>, vector<32x128xf32>
    %cst_30 = arith.constant dense<0.000000e+00> : vector<2x128xf32>
    %40 = tpu.matmul %38, %39, %cst_30 {dimension_numbers = #tpu.dot_dimension_numbers<[1], [0], [0], [1], [0, 0, 1, 1], [], []>} : vector<2x32xf32>, vector<32x128xf32>, vector<2x128xf32> -> vector<2x128xf32>
    %41 = arith.index_cast %c1_i32 : i32 to index
    %c0_31 = arith.constant 0 : index
    %c0_32 = arith.constant 0 : index
    %42 = vector.load %arg2[%41, %c0_31, %c0_32] : memref<8x2x32xf32, #tpu.memory_space<vmem>>, vector<1x2x32xf32>
    %43 = vector.shape_cast %42 : vector<1x2x32xf32> to vector<2x32xf32>
    %c0_33 = arith.constant 0 : index
    %c0_34 = arith.constant 0 : index
    %44 = vector.load %arg6[%c0_33, %c0_34] : memref<32x128xf32, #tpu.memory_space<vmem>>, vector<32x128xf32>
    %cst_35 = arith.constant dense<0.000000e+00> : vector<2x128xf32>
    %45 = tpu.matmul %43, %44, %cst_35 {dimension_numbers = #tpu.dot_dimension_numbers<[1], [0], [0], [1], [0, 0, 1, 1], [], []>} : vector<2x32xf32>, vector<32x128xf32>, vector<2x128xf32> -> vector<2x128xf32>
    %46 = arith.addf %40, %45 : vector<2x128xf32>
    %c0_36 = arith.constant 0 : index
    %c0_37 = arith.constant 0 : index
    %47 = vector.load %arg9[%c0_36, %c0_37] : memref<1x128xf32, #tpu.memory_space<vmem>>, vector<1x128xf32>
    %48 = vector.broadcast %47 : vector<1x128xf32> to vector<2x128xf32>
    %49 = arith.addf %46, %48 : vector<2x128xf32>
    %50 = arith.index_cast %c1_i32 : i32 to index
    %c0_38 = arith.constant 0 : index
    %c0_39 = arith.constant 0 : index
    %51 = vector.load %arg15[%50, %c0_38, %c0_39] : memref<8x2x128xf32, #tpu.memory_space<vmem>>, vector<1x2x128xf32>
    %52 = vector.shape_cast %51 : vector<1x2x128xf32> to vector<2x128xf32>
    %53 = vector.shape_cast %49 : vector<2x128xf32> to vector<1x2x128xf32>
    tpu.vector_store %arg15[%50, %c0_38, %c0_39], %53 {strides = array<i32>} : memref<8x2x128xf32, #tpu.memory_space<vmem>>, vector<1x2x128xf32>,
    %54 = arith.index_cast %c1_i32 : i32 to index
    %c0_40 = arith.constant 0 : index
    %c0_41 = arith.constant 0 : index
    %55 = vector.load %arg3[%54, %c0_40, %c0_41] : memref<8x2x32xf32, #tpu.memory_space<vmem>>, vector<1x2x32xf32>
    %56 = vector.shape_cast %55 : vector<1x2x32xf32> to vector<2x32xf32>
    %c0_42 = arith.constant 0 : index
    %c0_43 = arith.constant 0 : index
    %57 = vector.load %arg7[%c0_42, %c0_43] : memref<32x128xf32, #tpu.memory_space<vmem>>, vector<32x128xf32>
    %cst_44 = arith.constant dense<0.000000e+00> : vector<2x128xf32>
    %58 = tpu.matmul %56, %57, %cst_44 {dimension_numbers = #tpu.dot_dimension_numbers<[1], [0], [0], [1], [0, 0, 1, 1], [], []>} : vector<2x32xf32>, vector<32x128xf32>, vector<2x128xf32> -> vector<2x128xf32>
    %59 = arith.index_cast %c1_i32 : i32 to index
    %c0_45 = arith.constant 0 : index
    %c0_46 = arith.constant 0 : index
    %60 = vector.load %arg4[%59, %c0_45, %c0_46] : memref<8x2x32xf32, #tpu.memory_space<vmem>>, vector<1x2x32xf32>
    %61 = vector.shape_cast %60 : vector<1x2x32xf32> to vector<2x32xf32>
    %c0_47 = arith.constant 0 : index
    %c0_48 = arith.constant 0 : index
    %62 = vector.load %arg8[%c0_47, %c0_48] : memref<32x128xf32, #tpu.memory_space<vmem>>, vector<32x128xf32>
    %cst_49 = arith.constant dense<0.000000e+00> : vector<2x128xf32>
    %63 = tpu.matmul %61, %62, %cst_49 {dimension_numbers = #tpu.dot_dimension_numbers<[1], [0], [0], [1], [0, 0, 1, 1], [], []>} : vector<2x32xf32>, vector<32x128xf32>, vector<2x128xf32> -> vector<2x128xf32>
    %64 = arith.addf %58, %63 : vector<2x128xf32>
    %c0_50 = arith.constant 0 : index
    %c0_51 = arith.constant 0 : index
    %65 = vector.load %arg10[%c0_50, %c0_51] : memref<1x128xf32, #tpu.memory_space<vmem>>, vector<1x128xf32>
    %66 = vector.broadcast %65 : vector<1x128xf32> to vector<2x128xf32>
    %67 = arith.addf %64, %66 : vector<2x128xf32>
    %68 = arith.index_cast %c1_i32 : i32 to index
    %c0_52 = arith.constant 0 : index
    %c0_53 = arith.constant 0 : index
    %69 = vector.load %arg16[%68, %c0_52, %c0_53] : memref<8x2x128xf32, #tpu.memory_space<vmem>>, vector<1x2x128xf32>
    %70 = vector.shape_cast %69 : vector<1x2x128xf32> to vector<2x128xf32>
    %71 = vector.shape_cast %67 : vector<2x128xf32> to vector<1x2x128xf32>
    tpu.vector_store %arg16[%68, %c0_52, %c0_53], %71 {strides = array<i32>} : memref<8x2x128xf32, #tpu.memory_space<vmem>>, vector<1x2x128xf32>,
    %c2_i32 = arith.constant 2 : i32
    %72 = arith.index_cast %c2_i32 : i32 to index
    %c0_54 = arith.constant 0 : index
    %c0_55 = arith.constant 0 : index
    %73 = vector.load %arg1[%72, %c0_54, %c0_55] : memref<8x2x32xf32, #tpu.memory_space<vmem>>, vector<1x2x32xf32>
    %74 = vector.shape_cast %73 : vector<1x2x32xf32> to vector<2x32xf32>
    %c0_56 = arith.constant 0 : index
    %c0_57 = arith.constant 0 : index
    %75 = vector.load %arg5[%c0_56, %c0_57] : memref<32x128xf32, #tpu.memory_space<vmem>>, vector<32x128xf32>
    %cst_58 = arith.constant dense<0.000000e+00> : vector<2x128xf32>
    %76 = tpu.matmul %74, %75, %cst_58 {dimension_numbers = #tpu.dot_dimension_numbers<[1], [0], [0], [1], [0, 0, 1, 1], [], []>} : vector<2x32xf32>, vector<32x128xf32>, vector<2x128xf32> -> vector<2x128xf32>
    %77 = arith.index_cast %c2_i32 : i32 to index
    %c0_59 = arith.constant 0 : index
    %c0_60 = arith.constant 0 : index
    %78 = vector.load %arg2[%77, %c0_59, %c0_60] : memref<8x2x32xf32, #tpu.memory_space<vmem>>, vector<1x2x32xf32>
    %79 = vector.shape_cast %78 : vector<1x2x32xf32> to vector<2x32xf32>
    %c0_61 = arith.constant 0 : index
    %c0_62 = arith.constant 0 : index
    %80 = vector.load %arg6[%c0_61, %c0_62] : memref<32x128xf32, #tpu.memory_space<vmem>>, vector<32x128xf32>
    %cst_63 = arith.constant dense<0.000000e+00> : vector<2x128xf32>
    %81 = tpu.matmul %79, %80, %cst_63 {dimension_numbers = #tpu.dot_dimension_numbers<[1], [0], [0], [1], [0, 0, 1, 1], [], []>} : vector<2x32xf32>, vector<32x128xf32>, vector<2x128xf32> -> vector<2x128xf32>
    %82 = arith.addf %76, %81 : vector<2x128xf32>
    %c0_64 = arith.constant 0 : index
    %c0_65 = arith.constant 0 : index
    %83 = vector.load %arg9[%c0_64, %c0_65] : memref<1x128xf32, #tpu.memory_space<vmem>>, vector<1x128xf32>
    %84 = vector.broadcast %83 : vector<1x128xf32> to vector<2x128xf32>
    %85 = arith.addf %82, %84 : vector<2x128xf32>
    %86 = arith.index_cast %c2_i32 : i32 to index
    %c0_66 = arith.constant 0 : index
    %c0_67 = arith.constant 0 : index
    %87 = vector.load %arg15[%86, %c0_66, %c0_67] : memref<8x2x128xf32, #tpu.memory_space<vmem>>, vector<1x2x128xf32>
    %88 = vector.shape_cast %87 : vector<1x2x128xf32> to vector<2x128xf32>
    %89 = vector.shape_cast %85 : vector<2x128xf32> to vector<1x2x128xf32>
    tpu.vector_store %arg15[%86, %c0_66, %c0_67], %89 {strides = array<i32>} : memref<8x2x128xf32, #tpu.memory_space<vmem>>, vector<1x2x128xf32>,
    %90 = arith.index_cast %c2_i32 : i32 to index
    %c0_68 = arith.constant 0 : index
    %c0_69 = arith.constant 0 : index
    %91 = vector.load %arg3[%90, %c0_68, %c0_69] : memref<8x2x32xf32, #tpu.memory_space<vmem>>, vector<1x2x32xf32>
    %92 = vector.shape_cast %91 : vector<1x2x32xf32> to vector<2x32xf32>
    %c0_70 = arith.constant 0 : index
    %c0_71 = arith.constant 0 : index
    %93 = vector.load %arg7[%c0_70, %c0_71] : memref<32x128xf32, #tpu.memory_space<vmem>>, vector<32x128xf32>
    %cst_72 = arith.constant dense<0.000000e+00> : vector<2x128xf32>
    %94 = tpu.matmul %92, %93, %cst_72 {dimension_numbers = #tpu.dot_dimension_numbers<[1], [0], [0], [1], [0, 0, 1, 1], [], []>} : vector<2x32xf32>, vector<32x128xf32>, vector<2x128xf32> -> vector<2x128xf32>
    %95 = arith.index_cast %c2_i32 : i32 to index
    %c0_73 = arith.constant 0 : index
    %c0_74 = arith.constant 0 : index
    %96 = vector.load %arg4[%95, %c0_73, %c0_74] : memref<8x2x32xf32, #tpu.memory_space<vmem>>, vector<1x2x32xf32>
    %97 = vector.shape_cast %96 : vector<1x2x32xf32> to vector<2x32xf32>
    %c0_75 = arith.constant 0 : index
    %c0_76 = arith.constant 0 : index
    %98 = vector.load %arg8[%c0_75, %c0_76] : memref<32x128xf32, #tpu.memory_space<vmem>>, vector<32x128xf32>
    %cst_77 = arith.constant dense<0.000000e+00> : vector<2x128xf32>
    %99 = tpu.matmul %97, %98, %cst_77 {dimension_numbers = #tpu.dot_dimension_numbers<[1], [0], [0], [1], [0, 0, 1, 1], [], []>} : vector<2x32xf32>, vector<32x128xf32>, vector<2x128xf32> -> vector<2x128xf32>
    %100 = arith.addf %94, %99 : vector<2x128xf32>
    %c0_78 = arith.constant 0 : index
    %c0_79 = arith.constant 0 : index
    %101 = vector.load %arg10[%c0_78, %c0_79] : memref<1x128xf32, #tpu.memory_space<vmem>>, vector<1x128xf32>
    %102 = vector.broadcast %101 : vector<1x128xf32> to vector<2x128xf32>
    %103 = arith.addf %100, %102 : vector<2x128xf32>
    %104 = arith.index_cast %c2_i32 : i32 to index
    %c0_80 = arith.constant 0 : index
    %c0_81 = arith.constant 0 : index
    %105 = vector.load %arg16[%104, %c0_80, %c0_81] : memref<8x2x128xf32, #tpu.memory_space<vmem>>, vector<1x2x128xf32>
    %106 = vector.shape_cast %105 : vector<1x2x128xf32> to vector<2x128xf32>
    %107 = vector.shape_cast %103 : vector<2x128xf32> to vector<1x2x128xf32>
    tpu.vector_store %arg16[%104, %c0_80, %c0_81], %107 {strides = array<i32>} : memref<8x2x128xf32, #tpu.memory_space<vmem>>, vector<1x2x128xf32>,
    %c3_i32 = arith.constant 3 : i32
    %108 = arith.index_cast %c3_i32 : i32 to index
    %c0_82 = arith.constant 0 : index
    %c0_83 = arith.constant 0 : index
    %109 = vector.load %arg1[%108, %c0_82, %c0_83] : memref<8x2x32xf32, #tpu.memory_space<vmem>>, vector<1x2x32xf32>
    %110 = vector.shape_cast %109 : vector<1x2x32xf32> to vector<2x32xf32>
    %c0_84 = arith.constant 0 : index
    %c0_85 = arith.constant 0 : index
    %111 = vector.load %arg5[%c0_84, %c0_85] : memref<32x128xf32, #tpu.memory_space<vmem>>, vector<32x128xf32>
    %cst_86 = arith.constant dense<0.000000e+00> : vector<2x128xf32>
    %112 = tpu.matmul %110, %111, %cst_86 {dimension_numbers = #tpu.dot_dimension_numbers<[1], [0], [0], [1], [0, 0, 1, 1], [], []>} : vector<2x32xf32>, vector<32x128xf32>, vector<2x128xf32> -> vector<2x128xf32>
    %113 = arith.index_cast %c3_i32 : i32 to index
    %c0_87 = arith.constant 0 : index
    %c0_88 = arith.constant 0 : index
    %114 = vector.load %arg2[%113, %c0_87, %c0_88] : memref<8x2x32xf32, #tpu.memory_space<vmem>>, vector<1x2x32xf32>
    %115 = vector.shape_cast %114 : vector<1x2x32xf32> to vector<2x32xf32>
    %c0_89 = arith.constant 0 : index
    %c0_90 = arith.constant 0 : index
    %116 = vector.load %arg6[%c0_89, %c0_90] : memref<32x128xf32, #tpu.memory_space<vmem>>, vector<32x128xf32>
    %cst_91 = arith.constant dense<0.000000e+00> : vector<2x128xf32>
    %117 = tpu.matmul %115, %116, %cst_91 {dimension_numbers = #tpu.dot_dimension_numbers<[1], [0], [0], [1], [0, 0, 1, 1], [], []>} : vector<2x32xf32>, vector<32x128xf32>, vector<2x128xf32> -> vector<2x128xf32>
    %118 = arith.addf %112, %117 : vector<2x128xf32>
    %c0_92 = arith.constant 0 : index
    %c0_93 = arith.constant 0 : index
    %119 = vector.load %arg9[%c0_92, %c0_93] : memref<1x128xf32, #tpu.memory_space<vmem>>, vector<1x128xf32>
    %120 = vector.broadcast %119 : vector<1x128xf32> to vector<2x128xf32>
    %121 = arith.addf %118, %120 : vector<2x128xf32>
    %122 = arith.index_cast %c3_i32 : i32 to index
    %c0_94 = arith.constant 0 : index
    %c0_95 = arith.constant 0 : index
    %123 = vector.load %arg15[%122, %c0_94, %c0_95] : memref<8x2x128xf32, #tpu.memory_space<vmem>>, vector<1x2x128xf32>
    %124 = vector.shape_cast %123 : vector<1x2x128xf32> to vector<2x128xf32>
    %125 = vector.shape_cast %121 : vector<2x128xf32> to vector<1x2x128xf32>
    tpu.vector_store %arg15[%122, %c0_94, %c0_95], %125 {strides = array<i32>} : memref<8x2x128xf32, #tpu.memory_space<vmem>>, vector<1x2x128xf32>,
    %126 = arith.index_cast %c3_i32 : i32 to index
    %c0_96 = arith.constant 0 : index
    %c0_97 = arith.constant 0 : index
    %127 = vector.load %arg3[%126, %c0_96, %c0_97] : memref<8x2x32xf32, #tpu.memory_space<vmem>>, vector<1x2x32xf32>
    %128 = vector.shape_cast %127 : vector<1x2x32xf32> to vector<2x32xf32>
    %c0_98 = arith.constant 0 : index
    %c0_99 = arith.constant 0 : index
    %129 = vector.load %arg7[%c0_98, %c0_99] : memref<32x128xf32, #tpu.memory_space<vmem>>, vector<32x128xf32>
    %cst_100 = arith.constant dense<0.000000e+00> : vector<2x128xf32>
    %130 = tpu.matmul %128, %129, %cst_100 {dimension_numbers = #tpu.dot_dimension_numbers<[1], [0], [0], [1], [0, 0, 1, 1], [], []>} : vector<2x32xf32>, vector<32x128xf32>, vector<2x128xf32> -> vector<2x128xf32>
    %131 = arith.index_cast %c3_i32 : i32 to index
    %c0_101 = arith.constant 0 : index
    %c0_102 = arith.constant 0 : index
    %132 = vector.load %arg4[%131, %c0_101, %c0_102] : memref<8x2x32xf32, #tpu.memory_space<vmem>>, vector<1x2x32xf32>
    %133 = vector.shape_cast %132 : vector<1x2x32xf32> to vector<2x32xf32>
    %c0_103 = arith.constant 0 : index
    %c0_104 = arith.constant 0 : index
    %134 = vector.load %arg8[%c0_103, %c0_104] : memref<32x128xf32, #tpu.memory_space<vmem>>, vector<32x128xf32>
    %cst_105 = arith.constant dense<0.000000e+00> : vector<2x128xf32>
    %135 = tpu.matmul %133, %134, %cst_105 {dimension_numbers = #tpu.dot_dimension_numbers<[1], [0], [0], [1], [0, 0, 1, 1], [], []>} : vector<2x32xf32>, vector<32x128xf32>, vector<2x128xf32> -> vector<2x128xf32>
    %136 = arith.addf %130, %135 : vector<2x128xf32>
    %c0_106 = arith.constant 0 : index
    %c0_107 = arith.constant 0 : index
    %137 = vector.load %arg10[%c0_106, %c0_107] : memref<1x128xf32, #tpu.memory_space<vmem>>, vector<1x128xf32>
    %138 = vector.broadcast %137 : vector<1x128xf32> to vector<2x128xf32>
    %139 = arith.addf %136, %138 : vector<2x128xf32>
    %140 = arith.index_cast %c3_i32 : i32 to index
    %c0_108 = arith.constant 0 : index
    %c0_109 = arith.constant 0 : index
    %141 = vector.load %arg16[%140, %c0_108, %c0_109] : memref<8x2x128xf32, #tpu.memory_space<vmem>>, vector<1x2x128xf32>
    %142 = vector.shape_cast %141 : vector<1x2x128xf32> to vector<2x128xf32>
    %143 = vector.shape_cast %139 : vector<2x128xf32> to vector<1x2x128xf32>
    tpu.vector_store %arg16[%140, %c0_108, %c0_109], %143 {strides = array<i32>} : memref<8x2x128xf32, #tpu.memory_space<vmem>>, vector<1x2x128xf32>,
    %c4_i32 = arith.constant 4 : i32
    %144 = arith.index_cast %c4_i32 : i32 to index
    %c0_110 = arith.constant 0 : index
    %c0_111 = arith.constant 0 : index
    %145 = vector.load %arg1[%144, %c0_110, %c0_111] : memref<8x2x32xf32, #tpu.memory_space<vmem>>, vector<1x2x32xf32>
    %146 = vector.shape_cast %145 : vector<1x2x32xf32> to vector<2x32xf32>
    %c0_112 = arith.constant 0 : index
    %c0_113 = arith.constant 0 : index
    %147 = vector.load %arg5[%c0_112, %c0_113] : memref<32x128xf32, #tpu.memory_space<vmem>>, vector<32x128xf32>
    %cst_114 = arith.constant dense<0.000000e+00> : vector<2x128xf32>
    %148 = tpu.matmul %146, %147, %cst_114 {dimension_numbers = #tpu.dot_dimension_numbers<[1], [0], [0], [1], [0, 0, 1, 1], [], []>} : vector<2x32xf32>, vector<32x128xf32>, vector<2x128xf32> -> vector<2x128xf32>
    %149 = arith.index_cast %c4_i32 : i32 to index
    %c0_115 = arith.constant 0 : index
    %c0_116 = arith.constant 0 : index
    %150 = vector.load %arg2[%149, %c0_115, %c0_116] : memref<8x2x32xf32, #tpu.memory_space<vmem>>, vector<1x2x32xf32>
    %151 = vector.shape_cast %150 : vector<1x2x32xf32> to vector<2x32xf32>
    %c0_117 = arith.constant 0 : index
    %c0_118 = arith.constant 0 : index
    %152 = vector.load %arg6[%c0_117, %c0_118] : memref<32x128xf32, #tpu.memory_space<vmem>>, vector<32x128xf32>
    %cst_119 = arith.constant dense<0.000000e+00> : vector<2x128xf32>
    %153 = tpu.matmul %151, %152, %cst_119 {dimension_numbers = #tpu.dot_dimension_numbers<[1], [0], [0], [1], [0, 0, 1, 1], [], []>} : vector<2x32xf32>, vector<32x128xf32>, vector<2x128xf32> -> vector<2x128xf32>
    %154 = arith.addf %148, %153 : vector<2x128xf32>
    %c0_120 = arith.constant 0 : index
    %c0_121 = arith.constant 0 : index
    %155 = vector.load %arg9[%c0_120, %c0_121] : memref<1x128xf32, #tpu.memory_space<vmem>>, vector<1x128xf32>
    %156 = vector.broadcast %155 : vector<1x128xf32> to vector<2x128xf32>
    %157 = arith.addf %154, %156 : vector<2x128xf32>
    %158 = arith.index_cast %c4_i32 : i32 to index
    %c0_122 = arith.constant 0 : index
    %c0_123 = arith.constant 0 : index
    %159 = vector.load %arg15[%158, %c0_122, %c0_123] : memref<8x2x128xf32, #tpu.memory_space<vmem>>, vector<1x2x128xf32>
    %160 = vector.shape_cast %159 : vector<1x2x128xf32> to vector<2x128xf32>
    %161 = vector.shape_cast %157 : vector<2x128xf32> to vector<1x2x128xf32>
    tpu.vector_store %arg15[%158, %c0_122, %c0_123], %161 {strides = array<i32>} : memref<8x2x128xf32, #tpu.memory_space<vmem>>, vector<1x2x128xf32>,
    %162 = arith.index_cast %c4_i32 : i32 to index
    %c0_124 = arith.constant 0 : index
    %c0_125 = arith.constant 0 : index
    %163 = vector.load %arg3[%162, %c0_124, %c0_125] : memref<8x2x32xf32, #tpu.memory_space<vmem>>, vector<1x2x32xf32>
    %164 = vector.shape_cast %163 : vector<1x2x32xf32> to vector<2x32xf32>
    %c0_126 = arith.constant 0 : index
    %c0_127 = arith.constant 0 : index
    %165 = vector.load %arg7[%c0_126, %c0_127] : memref<32x128xf32, #tpu.memory_space<vmem>>, vector<32x128xf32>
    %cst_128 = arith.constant dense<0.000000e+00> : vector<2x128xf32>
    %166 = tpu.matmul %164, %165, %cst_128 {dimension_numbers = #tpu.dot_dimension_numbers<[1], [0], [0], [1], [0, 0, 1, 1], [], []>} : vector<2x32xf32>, vector<32x128xf32>, vector<2x128xf32> -> vector<2x128xf32>
    %167 = arith.index_cast %c4_i32 : i32 to index
    %c0_129 = arith.constant 0 : index
    %c0_130 = arith.constant 0 : index
    %168 = vector.load %arg4[%167, %c0_129, %c0_130] : memref<8x2x32xf32, #tpu.memory_space<vmem>>, vector<1x2x32xf32>
    %169 = vector.shape_cast %168 : vector<1x2x32xf32> to vector<2x32xf32>
    %c0_131 = arith.constant 0 : index
    %c0_132 = arith.constant 0 : index
    %170 = vector.load %arg8[%c0_131, %c0_132] : memref<32x128xf32, #tpu.memory_space<vmem>>, vector<32x128xf32>
    %cst_133 = arith.constant dense<0.000000e+00> : vector<2x128xf32>
    %171 = tpu.matmul %169, %170, %cst_133 {dimension_numbers = #tpu.dot_dimension_numbers<[1], [0], [0], [1], [0, 0, 1, 1], [], []>} : vector<2x32xf32>, vector<32x128xf32>, vector<2x128xf32> -> vector<2x128xf32>
    %172 = arith.addf %166, %171 : vector<2x128xf32>
    %c0_134 = arith.constant 0 : index
    %c0_135 = arith.constant 0 : index
    %173 = vector.load %arg10[%c0_134, %c0_135] : memref<1x128xf32, #tpu.memory_space<vmem>>, vector<1x128xf32>
    %174 = vector.broadcast %173 : vector<1x128xf32> to vector<2x128xf32>
    %175 = arith.addf %172, %174 : vector<2x128xf32>
    %176 = arith.index_cast %c4_i32 : i32 to index
    %c0_136 = arith.constant 0 : index
    %c0_137 = arith.constant 0 : index
    %177 = vector.load %arg16[%176, %c0_136, %c0_137] : memref<8x2x128xf32, #tpu.memory_space<vmem>>, vector<1x2x128xf32>
    %178 = vector.shape_cast %177 : vector<1x2x128xf32> to vector<2x128xf32>
    %179 = vector.shape_cast %175 : vector<2x128xf32> to vector<1x2x128xf32>
    tpu.vector_store %arg16[%176, %c0_136, %c0_137], %179 {strides = array<i32>} : memref<8x2x128xf32, #tpu.memory_space<vmem>>, vector<1x2x128xf32>,
    %c5_i32 = arith.constant 5 : i32
    %180 = arith.index_cast %c5_i32 : i32 to index
    %c0_138 = arith.constant 0 : index
    %c0_139 = arith.constant 0 : index
    %181 = vector.load %arg1[%180, %c0_138, %c0_139] : memref<8x2x32xf32, #tpu.memory_space<vmem>>, vector<1x2x32xf32>
    %182 = vector.shape_cast %181 : vector<1x2x32xf32> to vector<2x32xf32>
    %c0_140 = arith.constant 0 : index
    %c0_141 = arith.constant 0 : index
    %183 = vector.load %arg5[%c0_140, %c0_141] : memref<32x128xf32, #tpu.memory_space<vmem>>, vector<32x128xf32>
    %cst_142 = arith.constant dense<0.000000e+00> : vector<2x128xf32>
    %184 = tpu.matmul %182, %183, %cst_142 {dimension_numbers = #tpu.dot_dimension_numbers<[1], [0], [0], [1], [0, 0, 1, 1], [], []>} : vector<2x32xf32>, vector<32x128xf32>, vector<2x128xf32> -> vector<2x128xf32>
    %185 = arith.index_cast %c5_i32 : i32 to index
    %c0_143 = arith.constant 0 : index
    %c0_144 = arith.constant 0 : index
    %186 = vector.load %arg2[%185, %c0_143, %c0_144] : memref<8x2x32xf32, #tpu.memory_space<vmem>>, vector<1x2x32xf32>
    %187 = vector.shape_cast %186 : vector<1x2x32xf32> to vector<2x32xf32>
    %c0_145 = arith.constant 0 : index
    %c0_146 = arith.constant 0 : index
    %188 = vector.load %arg6[%c0_145, %c0_146] : memref<32x128xf32, #tpu.memory_space<vmem>>, vector<32x128xf32>
    %cst_147 = arith.constant dense<0.000000e+00> : vector<2x128xf32>
    %189 = tpu.matmul %187, %188, %cst_147 {dimension_numbers = #tpu.dot_dimension_numbers<[1], [0], [0], [1], [0, 0, 1, 1], [], []>} : vector<2x32xf32>, vector<32x128xf32>, vector<2x128xf32> -> vector<2x128xf32>
    %190 = arith.addf %184, %189 : vector<2x128xf32>
    %c0_148 = arith.constant 0 : index
    %c0_149 = arith.constant 0 : index
    %191 = vector.load %arg9[%c0_148, %c0_149] : memref<1x128xf32, #tpu.memory_space<vmem>>, vector<1x128xf32>
    %192 = vector.broadcast %191 : vector<1x128xf32> to vector<2x128xf32>
    %193 = arith.addf %190, %192 : vector<2x128xf32>
    %194 = arith.index_cast %c5_i32 : i32 to index
    %c0_150 = arith.constant 0 : index
    %c0_151 = arith.constant 0 : index
    %195 = vector.load %arg15[%194, %c0_150, %c0_151] : memref<8x2x128xf32, #tpu.memory_space<vmem>>, vector<1x2x128xf32>
    %196 = vector.shape_cast %195 : vector<1x2x128xf32> to vector<2x128xf32>
    %197 = vector.shape_cast %193 : vector<2x128xf32> to vector<1x2x128xf32>
    tpu.vector_store %arg15[%194, %c0_150, %c0_151], %197 {strides = array<i32>} : memref<8x2x128xf32, #tpu.memory_space<vmem>>, vector<1x2x128xf32>,
    %198 = arith.index_cast %c5_i32 : i32 to index
    %c0_152 = arith.constant 0 : index
    %c0_153 = arith.constant 0 : index
    %199 = vector.load %arg3[%198, %c0_152, %c0_153] : memref<8x2x32xf32, #tpu.memory_space<vmem>>, vector<1x2x32xf32>
    %200 = vector.shape_cast %199 : vector<1x2x32xf32> to vector<2x32xf32>
    %c0_154 = arith.constant 0 : index
    %c0_155 = arith.constant 0 : index
    %201 = vector.load %arg7[%c0_154, %c0_155] : memref<32x128xf32, #tpu.memory_space<vmem>>, vector<32x128xf32>
    %cst_156 = arith.constant dense<0.000000e+00> : vector<2x128xf32>
    %202 = tpu.matmul %200, %201, %cst_156 {dimension_numbers = #tpu.dot_dimension_numbers<[1], [0], [0], [1], [0, 0, 1, 1], [], []>} : vector<2x32xf32>, vector<32x128xf32>, vector<2x128xf32> -> vector<2x128xf32>
    %203 = arith.index_cast %c5_i32 : i32 to index
    %c0_157 = arith.constant 0 : index
    %c0_158 = arith.constant 0 : index
    %204 = vector.load %arg4[%203, %c0_157, %c0_158] : memref<8x2x32xf32, #tpu.memory_space<vmem>>, vector<1x2x32xf32>
    %205 = vector.shape_cast %204 : vector<1x2x32xf32> to vector<2x32xf32>
    %c0_159 = arith.constant 0 : index
    %c0_160 = arith.constant 0 : index
    %206 = vector.load %arg8[%c0_159, %c0_160] : memref<32x128xf32, #tpu.memory_space<vmem>>, vector<32x128xf32>
    %cst_161 = arith.constant dense<0.000000e+00> : vector<2x128xf32>
    %207 = tpu.matmul %205, %206, %cst_161 {dimension_numbers = #tpu.dot_dimension_numbers<[1], [0], [0], [1], [0, 0, 1, 1], [], []>} : vector<2x32xf32>, vector<32x128xf32>, vector<2x128xf32> -> vector<2x128xf32>
    %208 = arith.addf %202, %207 : vector<2x128xf32>
    %c0_162 = arith.constant 0 : index
    %c0_163 = arith.constant 0 : index
    %209 = vector.load %arg10[%c0_162, %c0_163] : memref<1x128xf32, #tpu.memory_space<vmem>>, vector<1x128xf32>
    %210 = vector.broadcast %209 : vector<1x128xf32> to vector<2x128xf32>
    %211 = arith.addf %208, %210 : vector<2x128xf32>
    %212 = arith.index_cast %c5_i32 : i32 to index
    %c0_164 = arith.constant 0 : index
    %c0_165 = arith.constant 0 : index
    %213 = vector.load %arg16[%212, %c0_164, %c0_165] : memref<8x2x128xf32, #tpu.memory_space<vmem>>, vector<1x2x128xf32>
    %214 = vector.shape_cast %213 : vector<1x2x128xf32> to vector<2x128xf32>
    %215 = vector.shape_cast %211 : vector<2x128xf32> to vector<1x2x128xf32>
    tpu.vector_store %arg16[%212, %c0_164, %c0_165], %215 {strides = array<i32>} : memref<8x2x128xf32, #tpu.memory_space<vmem>>, vector<1x2x128xf32>,
    %c6_i32 = arith.constant 6 : i32
    %216 = arith.index_cast %c6_i32 : i32 to index
    %c0_166 = arith.constant 0 : index
    %c0_167 = arith.constant 0 : index
    %217 = vector.load %arg1[%216, %c0_166, %c0_167] : memref<8x2x32xf32, #tpu.memory_space<vmem>>, vector<1x2x32xf32>
    %218 = vector.shape_cast %217 : vector<1x2x32xf32> to vector<2x32xf32>
    %c0_168 = arith.constant 0 : index
    %c0_169 = arith.constant 0 : index
    %219 = vector.load %arg5[%c0_168, %c0_169] : memref<32x128xf32, #tpu.memory_space<vmem>>, vector<32x128xf32>
    %cst_170 = arith.constant dense<0.000000e+00> : vector<2x128xf32>
    %220 = tpu.matmul %218, %219, %cst_170 {dimension_numbers = #tpu.dot_dimension_numbers<[1], [0], [0], [1], [0, 0, 1, 1], [], []>} : vector<2x32xf32>, vector<32x128xf32>, vector<2x128xf32> -> vector<2x128xf32>
    %221 = arith.index_cast %c6_i32 : i32 to index
    %c0_171 = arith.constant 0 : index
    %c0_172 = arith.constant 0 : index
    %222 = vector.load %arg2[%221, %c0_171, %c0_172] : memref<8x2x32xf32, #tpu.memory_space<vmem>>, vector<1x2x32xf32>
    %223 = vector.shape_cast %222 : vector<1x2x32xf32> to vector<2x32xf32>
    %c0_173 = arith.constant 0 : index
    %c0_174 = arith.constant 0 : index
    %224 = vector.load %arg6[%c0_173, %c0_174] : memref<32x128xf32, #tpu.memory_space<vmem>>, vector<32x128xf32>
    %cst_175 = arith.constant dense<0.000000e+00> : vector<2x128xf32>
    %225 = tpu.matmul %223, %224, %cst_175 {dimension_numbers = #tpu.dot_dimension_numbers<[1], [0], [0], [1], [0, 0, 1, 1], [], []>} : vector<2x32xf32>, vector<32x128xf32>, vector<2x128xf32> -> vector<2x128xf32>
    %226 = arith.addf %220, %225 : vector<2x128xf32>
    %c0_176 = arith.constant 0 : index
    %c0_177 = arith.constant 0 : index
    %227 = vector.load %arg9[%c0_176, %c0_177] : memref<1x128xf32, #tpu.memory_space<vmem>>, vector<1x128xf32>
    %228 = vector.broadcast %227 : vector<1x128xf32> to vector<2x128xf32>
    %229 = arith.addf %226, %228 : vector<2x128xf32>
    %230 = arith.index_cast %c6_i32 : i32 to index
    %c0_178 = arith.constant 0 : index
    %c0_179 = arith.constant 0 : index
    %231 = vector.load %arg15[%230, %c0_178, %c0_179] : memref<8x2x128xf32, #tpu.memory_space<vmem>>, vector<1x2x128xf32>
    %232 = vector.shape_cast %231 : vector<1x2x128xf32> to vector<2x128xf32>
    %233 = vector.shape_cast %229 : vector<2x128xf32> to vector<1x2x128xf32>
    tpu.vector_store %arg15[%230, %c0_178, %c0_179], %233 {strides = array<i32>} : memref<8x2x128xf32, #tpu.memory_space<vmem>>, vector<1x2x128xf32>,
    %234 = arith.index_cast %c6_i32 : i32 to index
    %c0_180 = arith.constant 0 : index
    %c0_181 = arith.constant 0 : index
    %235 = vector.load %arg3[%234, %c0_180, %c0_181] : memref<8x2x32xf32, #tpu.memory_space<vmem>>, vector<1x2x32xf32>
    %236 = vector.shape_cast %235 : vector<1x2x32xf32> to vector<2x32xf32>
    %c0_182 = arith.constant 0 : index
    %c0_183 = arith.constant 0 : index
    %237 = vector.load %arg7[%c0_182, %c0_183] : memref<32x128xf32, #tpu.memory_space<vmem>>, vector<32x128xf32>
    %cst_184 = arith.constant dense<0.000000e+00> : vector<2x128xf32>
    %238 = tpu.matmul %236, %237, %cst_184 {dimension_numbers = #tpu.dot_dimension_numbers<[1], [0], [0], [1], [0, 0, 1, 1], [], []>} : vector<2x32xf32>, vector<32x128xf32>, vector<2x128xf32> -> vector<2x128xf32>
    %239 = arith.index_cast %c6_i32 : i32 to index
    %c0_185 = arith.constant 0 : index
    %c0_186 = arith.constant 0 : index
    %240 = vector.load %arg4[%239, %c0_185, %c0_186] : memref<8x2x32xf32, #tpu.memory_space<vmem>>, vector<1x2x32xf32>
    %241 = vector.shape_cast %240 : vector<1x2x32xf32> to vector<2x32xf32>
    %c0_187 = arith.constant 0 : index
    %c0_188 = arith.constant 0 : index
    %242 = vector.load %arg8[%c0_187, %c0_188] : memref<32x128xf32, #tpu.memory_space<vmem>>, vector<32x128xf32>
    %cst_189 = arith.constant dense<0.000000e+00> : vector<2x128xf32>
    %243 = tpu.matmul %241, %242, %cst_189 {dimension_numbers = #tpu.dot_dimension_numbers<[1], [0], [0], [1], [0, 0, 1, 1], [], []>} : vector<2x32xf32>, vector<32x128xf32>, vector<2x128xf32> -> vector<2x128xf32>
    %244 = arith.addf %238, %243 : vector<2x128xf32>
    %c0_190 = arith.constant 0 : index
    %c0_191 = arith.constant 0 : index
    %245 = vector.load %arg10[%c0_190, %c0_191] : memref<1x128xf32, #tpu.memory_space<vmem>>, vector<1x128xf32>
    %246 = vector.broadcast %245 : vector<1x128xf32> to vector<2x128xf32>
    %247 = arith.addf %244, %246 : vector<2x128xf32>
    %248 = arith.index_cast %c6_i32 : i32 to index
    %c0_192 = arith.constant 0 : index
    %c0_193 = arith.constant 0 : index
    %249 = vector.load %arg16[%248, %c0_192, %c0_193] : memref<8x2x128xf32, #tpu.memory_space<vmem>>, vector<1x2x128xf32>
    %250 = vector.shape_cast %249 : vector<1x2x128xf32> to vector<2x128xf32>
    %251 = vector.shape_cast %247 : vector<2x128xf32> to vector<1x2x128xf32>
    tpu.vector_store %arg16[%248, %c0_192, %c0_193], %251 {strides = array<i32>} : memref<8x2x128xf32, #tpu.memory_space<vmem>>, vector<1x2x128xf32>,
    %c7_i32 = arith.constant 7 : i32
    %252 = arith.index_cast %c7_i32 : i32 to index
    %c0_194 = arith.constant 0 : index
    %c0_195 = arith.constant 0 : index
    %253 = vector.load %arg1[%252, %c0_194, %c0_195] : memref<8x2x32xf32, #tpu.memory_space<vmem>>, vector<1x2x32xf32>
    %254 = vector.shape_cast %253 : vector<1x2x32xf32> to vector<2x32xf32>
    %c0_196 = arith.constant 0 : index
    %c0_197 = arith.constant 0 : index
    %255 = vector.load %arg5[%c0_196, %c0_197] : memref<32x128xf32, #tpu.memory_space<vmem>>, vector<32x128xf32>
    %cst_198 = arith.constant dense<0.000000e+00> : vector<2x128xf32>
    %256 = tpu.matmul %254, %255, %cst_198 {dimension_numbers = #tpu.dot_dimension_numbers<[1], [0], [0], [1], [0, 0, 1, 1], [], []>} : vector<2x32xf32>, vector<32x128xf32>, vector<2x128xf32> -> vector<2x128xf32>
    %257 = arith.index_cast %c7_i32 : i32 to index
    %c0_199 = arith.constant 0 : index
    %c0_200 = arith.constant 0 : index
    %258 = vector.load %arg2[%257, %c0_199, %c0_200] : memref<8x2x32xf32, #tpu.memory_space<vmem>>, vector<1x2x32xf32>
    %259 = vector.shape_cast %258 : vector<1x2x32xf32> to vector<2x32xf32>
    %c0_201 = arith.constant 0 : index
    %c0_202 = arith.constant 0 : index
    %260 = vector.load %arg6[%c0_201, %c0_202] : memref<32x128xf32, #tpu.memory_space<vmem>>, vector<32x128xf32>
    %cst_203 = arith.constant dense<0.000000e+00> : vector<2x128xf32>
    %261 = tpu.matmul %259, %260, %cst_203 {dimension_numbers = #tpu.dot_dimension_numbers<[1], [0], [0], [1], [0, 0, 1, 1], [], []>} : vector<2x32xf32>, vector<32x128xf32>, vector<2x128xf32> -> vector<2x128xf32>
    %262 = arith.addf %256, %261 : vector<2x128xf32>
    %c0_204 = arith.constant 0 : index
    %c0_205 = arith.constant 0 : index
    %263 = vector.load %arg9[%c0_204, %c0_205] : memref<1x128xf32, #tpu.memory_space<vmem>>, vector<1x128xf32>
    %264 = vector.broadcast %263 : vector<1x128xf32> to vector<2x128xf32>
    %265 = arith.addf %262, %264 : vector<2x128xf32>
    %266 = arith.index_cast %c7_i32 : i32 to index
    %c0_206 = arith.constant 0 : index
    %c0_207 = arith.constant 0 : index
    %267 = vector.load %arg15[%266, %c0_206, %c0_207] : memref<8x2x128xf32, #tpu.memory_space<vmem>>, vector<1x2x128xf32>
    %268 = vector.shape_cast %267 : vector<1x2x128xf32> to vector<2x128xf32>
    %269 = vector.shape_cast %265 : vector<2x128xf32> to vector<1x2x128xf32>
    tpu.vector_store %arg15[%266, %c0_206, %c0_207], %269 {strides = array<i32>} : memref<8x2x128xf32, #tpu.memory_space<vmem>>, vector<1x2x128xf32>,
    %270 = arith.index_cast %c7_i32 : i32 to index
    %c0_208 = arith.constant 0 : index
    %c0_209 = arith.constant 0 : index
    %271 = vector.load %arg3[%270, %c0_208, %c0_209] : memref<8x2x32xf32, #tpu.memory_space<vmem>>, vector<1x2x32xf32>
    %272 = vector.shape_cast %271 : vector<1x2x32xf32> to vector<2x32xf32>
    %c0_210 = arith.constant 0 : index
    %c0_211 = arith.constant 0 : index
    %273 = vector.load %arg7[%c0_210, %c0_211] : memref<32x128xf32, #tpu.memory_space<vmem>>, vector<32x128xf32>
    %cst_212 = arith.constant dense<0.000000e+00> : vector<2x128xf32>
    %274 = tpu.matmul %272, %273, %cst_212 {dimension_numbers = #tpu.dot_dimension_numbers<[1], [0], [0], [1], [0, 0, 1, 1], [], []>} : vector<2x32xf32>, vector<32x128xf32>, vector<2x128xf32> -> vector<2x128xf32>
    %275 = arith.index_cast %c7_i32 : i32 to index
    %c0_213 = arith.constant 0 : index
    %c0_214 = arith.constant 0 : index
    %276 = vector.load %arg4[%275, %c0_213, %c0_214] : memref<8x2x32xf32, #tpu.memory_space<vmem>>, vector<1x2x32xf32>
    %277 = vector.shape_cast %276 : vector<1x2x32xf32> to vector<2x32xf32>
    %c0_215 = arith.constant 0 : index
    %c0_216 = arith.constant 0 : index
    %278 = vector.load %arg8[%c0_215, %c0_216] : memref<32x128xf32, #tpu.memory_space<vmem>>, vector<32x128xf32>
    %cst_217 = arith.constant dense<0.000000e+00> : vector<2x128xf32>
    %279 = tpu.matmul %277, %278, %cst_217 {dimension_numbers = #tpu.dot_dimension_numbers<[1], [0], [0], [1], [0, 0, 1, 1], [], []>} : vector<2x32xf32>, vector<32x128xf32>, vector<2x128xf32> -> vector<2x128xf32>
    %280 = arith.addf %274, %279 : vector<2x128xf32>
    %c0_218 = arith.constant 0 : index
    %c0_219 = arith.constant 0 : index
    %281 = vector.load %arg10[%c0_218, %c0_219] : memref<1x128xf32, #tpu.memory_space<vmem>>, vector<1x128xf32>
    %282 = vector.broadcast %281 : vector<1x128xf32> to vector<2x128xf32>
    %283 = arith.addf %280, %282 : vector<2x128xf32>
    %284 = arith.index_cast %c7_i32 : i32 to index
    %c0_220 = arith.constant 0 : index
    %c0_221 = arith.constant 0 : index
    %285 = vector.load %arg16[%284, %c0_220, %c0_221] : memref<8x2x128xf32, #tpu.memory_space<vmem>>, vector<1x2x128xf32>
    %286 = vector.shape_cast %285 : vector<1x2x128xf32> to vector<2x128xf32>
    %287 = vector.shape_cast %283 : vector<2x128xf32> to vector<1x2x128xf32>
    tpu.vector_store %arg16[%284, %c0_220, %c0_221], %287 {strides = array<i32>} : memref<8x2x128xf32, #tpu.memory_space<vmem>>, vector<1x2x128xf32>,
    %c8_i32 = arith.constant 8 : i32
    %c0_i32_222 = arith.constant 0 : i32
    %288 = arith.cmpi eq, %arg0, %c0_i32_222 : i32
    %289 = arith.extui %288 : i1 to i32
    %c0_i32_223 = arith.constant 0 : i32
    %290 = arith.cmpi ne, %289, %c0_i32_223 : i32
    scf.if %290 {
      %cst_417 = arith.constant 0.000000e+00 : f32
      %867 = vector.broadcast %cst_417 : f32 to vector<2x32xf32>
      %c0_418 = arith.constant 0 : index
      %c0_419 = arith.constant 0 : index
      %868 = vector.load %arg17[%c0_418, %c0_419] : memref<2x32xf32, #tpu.memory_space<vmem>>, vector<2x32xf32>
      tpu.vector_store %arg17[%c0_418, %c0_419], %867 {strides = array<i32>} : memref<2x32xf32, #tpu.memory_space<vmem>>, vector<2x32xf32>,
      %cst_420 = arith.constant 0.000000e+00 : f32
      %869 = vector.broadcast %cst_420 : f32 to vector<2x32xf32>
      %c0_421 = arith.constant 0 : index
      %c0_422 = arith.constant 0 : index
      %870 = vector.load %arg18[%c0_421, %c0_422] : memref<2x32xf32, #tpu.memory_space<vmem>>, vector<2x32xf32>
      tpu.vector_store %arg18[%c0_421, %c0_422], %869 {strides = array<i32>} : memref<2x32xf32, #tpu.memory_space<vmem>>, vector<2x32xf32>,
      %cst_423 = arith.constant 0.000000e+00 : f32
      %871 = vector.broadcast %cst_423 : f32 to vector<2x32xf32>
      %c0_424 = arith.constant 0 : index
      %c0_425 = arith.constant 0 : index
      %872 = vector.load %arg19[%c0_424, %c0_425] : memref<2x32xf32, #tpu.memory_space<vmem>>, vector<2x32xf32>
      tpu.vector_store %arg19[%c0_424, %c0_425], %871 {strides = array<i32>} : memref<2x32xf32, #tpu.memory_space<vmem>>, vector<2x32xf32>,
      %cst_426 = arith.constant 0.000000e+00 : f32
      %873 = vector.broadcast %cst_426 : f32 to vector<2x32xf32>
      %c0_427 = arith.constant 0 : index
      %c0_428 = arith.constant 0 : index
      %874 = vector.load %arg20[%c0_427, %c0_428] : memref<2x32xf32, #tpu.memory_space<vmem>>, vector<2x32xf32>
      tpu.vector_store %arg20[%c0_427, %c0_428], %873 {strides = array<i32>} : memref<2x32xf32, #tpu.memory_space<vmem>>, vector<2x32xf32>,
    } else {
    }
    %c0_224 = arith.constant 0 : index
    %c0_225 = arith.constant 0 : index
    %291 = vector.load %arg17[%c0_224, %c0_225] : memref<2x32xf32, #tpu.memory_space<vmem>>, vector<2x32xf32>
    %c0_226 = arith.constant 0 : index
    %c0_227 = arith.constant 0 : index
    %292 = vector.load %arg18[%c0_226, %c0_227] : memref<2x32xf32, #tpu.memory_space<vmem>>, vector<2x32xf32>
    %c0_228 = arith.constant 0 : index
    %c0_229 = arith.constant 0 : index
    %293 = vector.load %arg19[%c0_228, %c0_229] : memref<2x32xf32, #tpu.memory_space<vmem>>, vector<2x32xf32>
    %c0_230 = arith.constant 0 : index
    %c0_231 = arith.constant 0 : index
    %294 = vector.load %arg20[%c0_230, %c0_231] : memref<2x32xf32, #tpu.memory_space<vmem>>, vector<2x32xf32>
    %c0_i32_232 = arith.constant 0 : i32
    %295 = arith.index_cast %c0_i32_232 : i32 to index
    %c0_233 = arith.constant 0 : index
    %c0_234 = arith.constant 0 : index
    %296 = vector.load %arg15[%295, %c0_233, %c0_234] : memref<8x2x128xf32, #tpu.memory_space<vmem>>, vector<1x2x128xf32>
    %297 = vector.shape_cast %296 : vector<1x2x128xf32> to vector<2x128xf32>
    %c0_235 = arith.constant 0 : index
    %c0_236 = arith.constant 0 : index
    %298 = vector.load %arg11[%c0_235, %c0_236] : memref<32x128xf32, #tpu.memory_space<vmem>>, vector<32x128xf32>
    %cst_237 = arith.constant dense<0.000000e+00> : vector<2x128xf32>
    %299 = tpu.matmul %291, %298, %cst_237 {dimension_numbers = #tpu.dot_dimension_numbers<[1], [0], [0], [1], [0, 0, 1, 1], [], []>} : vector<2x32xf32>, vector<32x128xf32>, vector<2x128xf32> -> vector<2x128xf32>
    %300 = arith.addf %297, %299 : vector<2x128xf32>
    %301 = vector.extract_strided_slice %300 {offsets = [0, 0], sizes = [2, 32], strides = [1, 1]} : vector<2x128xf32> to vector<2x32xf32>
    %302 = arith.negf %301 : vector<2x32xf32>
    %303 = math.exp %302 : vector<2x32xf32>
    %cst_238 = arith.constant 1.000000e+00 : f32
    %304 = vector.broadcast %cst_238 : f32 to vector<2x32xf32>
    %305 = arith.addf %304, %303 : vector<2x32xf32>
    %306 = arith.divf %304, %305 : vector<2x32xf32>
    %307 = vector.extract_strided_slice %300 {offsets = [0, 32], sizes = [2, 32], strides = [1, 1]} : vector<2x128xf32> to vector<2x32xf32>
    %308 = arith.negf %307 : vector<2x32xf32>
    %309 = math.exp %308 : vector<2x32xf32>
    %cst_239 = arith.constant 1.000000e+00 : f32
    %310 = vector.broadcast %cst_239 : f32 to vector<2x32xf32>
    %311 = arith.addf %310, %309 : vector<2x32xf32>
    %312 = arith.divf %310, %311 : vector<2x32xf32>
    %313 = vector.extract_strided_slice %300 {offsets = [0, 64], sizes = [2, 32], strides = [1, 1]} : vector<2x128xf32> to vector<2x32xf32>
    %314 = math.tanh %313 : vector<2x32xf32>
    %315 = vector.extract_strided_slice %300 {offsets = [0, 96], sizes = [2, 32], strides = [1, 1]} : vector<2x128xf32> to vector<2x32xf32>
    %316 = arith.negf %315 : vector<2x32xf32>
    %317 = math.exp %316 : vector<2x32xf32>
    %cst_240 = arith.constant 1.000000e+00 : f32
    %318 = vector.broadcast %cst_240 : f32 to vector<2x32xf32>
    %319 = arith.addf %318, %317 : vector<2x32xf32>
    %320 = arith.divf %318, %319 : vector<2x32xf32>
    %321 = arith.mulf %312, %292 : vector<2x32xf32>
    %322 = arith.mulf %306, %314 : vector<2x32xf32>
    %323 = arith.addf %321, %322 : vector<2x32xf32>
    %324 = math.tanh %323 : vector<2x32xf32>
    %325 = arith.mulf %320, %324 : vector<2x32xf32>
    %326 = arith.index_cast %c0_i32_232 : i32 to index
    %c0_241 = arith.constant 0 : index
    %c0_242 = arith.constant 0 : index
    %327 = vector.load %arg13[%326, %c0_241, %c0_242] : memref<8x2x32xf32, #tpu.memory_space<vmem>>, vector<1x2x32xf32>
    %328 = vector.shape_cast %327 : vector<1x2x32xf32> to vector<2x32xf32>
    %329 = vector.shape_cast %325 : vector<2x32xf32> to vector<1x2x32xf32>
    tpu.vector_store %arg13[%326, %c0_241, %c0_242], %329 {strides = array<i32>} : memref<8x2x32xf32, #tpu.memory_space<vmem>>, vector<1x2x32xf32>,
    %c7_i32_243 = arith.constant 7 : i32
    %330 = arith.subi %c7_i32_243, %c0_i32_232 : i32
    %331 = arith.index_cast %330 : i32 to index
    %c0_244 = arith.constant 0 : index
    %c0_245 = arith.constant 0 : index
    %332 = vector.load %arg16[%331, %c0_244, %c0_245] : memref<8x2x128xf32, #tpu.memory_space<vmem>>, vector<1x2x128xf32>
    %333 = vector.shape_cast %332 : vector<1x2x128xf32> to vector<2x128xf32>
    %c0_246 = arith.constant 0 : index
    %c0_247 = arith.constant 0 : index
    %334 = vector.load %arg12[%c0_246, %c0_247] : memref<32x128xf32, #tpu.memory_space<vmem>>, vector<32x128xf32>
    %cst_248 = arith.constant dense<0.000000e+00> : vector<2x128xf32>
    %335 = tpu.matmul %293, %334, %cst_248 {dimension_numbers = #tpu.dot_dimension_numbers<[1], [0], [0], [1], [0, 0, 1, 1], [], []>} : vector<2x32xf32>, vector<32x128xf32>, vector<2x128xf32> -> vector<2x128xf32>
    %336 = arith.addf %333, %335 : vector<2x128xf32>
    %337 = vector.extract_strided_slice %336 {offsets = [0, 0], sizes = [2, 32], strides = [1, 1]} : vector<2x128xf32> to vector<2x32xf32>
    %338 = arith.negf %337 : vector<2x32xf32>
    %339 = math.exp %338 : vector<2x32xf32>
    %cst_249 = arith.constant 1.000000e+00 : f32
    %340 = vector.broadcast %cst_249 : f32 to vector<2x32xf32>
    %341 = arith.addf %340, %339 : vector<2x32xf32>
    %342 = arith.divf %340, %341 : vector<2x32xf32>
    %343 = vector.extract_strided_slice %336 {offsets = [0, 32], sizes = [2, 32], strides = [1, 1]} : vector<2x128xf32> to vector<2x32xf32>
    %344 = arith.negf %343 : vector<2x32xf32>
    %345 = math.exp %344 : vector<2x32xf32>
    %cst_250 = arith.constant 1.000000e+00 : f32
    %346 = vector.broadcast %cst_250 : f32 to vector<2x32xf32>
    %347 = arith.addf %346, %345 : vector<2x32xf32>
    %348 = arith.divf %346, %347 : vector<2x32xf32>
    %349 = vector.extract_strided_slice %336 {offsets = [0, 64], sizes = [2, 32], strides = [1, 1]} : vector<2x128xf32> to vector<2x32xf32>
    %350 = math.tanh %349 : vector<2x32xf32>
    %351 = vector.extract_strided_slice %336 {offsets = [0, 96], sizes = [2, 32], strides = [1, 1]} : vector<2x128xf32> to vector<2x32xf32>
    %352 = arith.negf %351 : vector<2x32xf32>
    %353 = math.exp %352 : vector<2x32xf32>
    %cst_251 = arith.constant 1.000000e+00 : f32
    %354 = vector.broadcast %cst_251 : f32 to vector<2x32xf32>
    %355 = arith.addf %354, %353 : vector<2x32xf32>
    %356 = arith.divf %354, %355 : vector<2x32xf32>
    %357 = arith.mulf %348, %294 : vector<2x32xf32>
    %358 = arith.mulf %342, %350 : vector<2x32xf32>
    %359 = arith.addf %357, %358 : vector<2x32xf32>
    %360 = math.tanh %359 : vector<2x32xf32>
    %361 = arith.mulf %356, %360 : vector<2x32xf32>
    %362 = arith.index_cast %330 : i32 to index
    %c0_252 = arith.constant 0 : index
    %c0_253 = arith.constant 0 : index
    %363 = vector.load %arg14[%362, %c0_252, %c0_253] : memref<8x2x32xf32, #tpu.memory_space<vmem>>, vector<1x2x32xf32>
    %364 = vector.shape_cast %363 : vector<1x2x32xf32> to vector<2x32xf32>
    %365 = vector.shape_cast %361 : vector<2x32xf32> to vector<1x2x32xf32>
    tpu.vector_store %arg14[%362, %c0_252, %c0_253], %365 {strides = array<i32>} : memref<8x2x32xf32, #tpu.memory_space<vmem>>, vector<1x2x32xf32>,
    %c1_i32_254 = arith.constant 1 : i32
    %366 = arith.index_cast %c1_i32_254 : i32 to index
    %c0_255 = arith.constant 0 : index
    %c0_256 = arith.constant 0 : index
    %367 = vector.load %arg15[%366, %c0_255, %c0_256] : memref<8x2x128xf32, #tpu.memory_space<vmem>>, vector<1x2x128xf32>
    %368 = vector.shape_cast %367 : vector<1x2x128xf32> to vector<2x128xf32>
    %c0_257 = arith.constant 0 : index
    %c0_258 = arith.constant 0 : index
    %369 = vector.load %arg11[%c0_257, %c0_258] : memref<32x128xf32, #tpu.memory_space<vmem>>, vector<32x128xf32>
    %cst_259 = arith.constant dense<0.000000e+00> : vector<2x128xf32>
    %370 = tpu.matmul %325, %369, %cst_259 {dimension_numbers = #tpu.dot_dimension_numbers<[1], [0], [0], [1], [0, 0, 1, 1], [], []>} : vector<2x32xf32>, vector<32x128xf32>, vector<2x128xf32> -> vector<2x128xf32>
    %371 = arith.addf %368, %370 : vector<2x128xf32>
    %372 = vector.extract_strided_slice %371 {offsets = [0, 0], sizes = [2, 32], strides = [1, 1]} : vector<2x128xf32> to vector<2x32xf32>
    %373 = arith.negf %372 : vector<2x32xf32>
    %374 = math.exp %373 : vector<2x32xf32>
    %cst_260 = arith.constant 1.000000e+00 : f32
    %375 = vector.broadcast %cst_260 : f32 to vector<2x32xf32>
    %376 = arith.addf %375, %374 : vector<2x32xf32>
    %377 = arith.divf %375, %376 : vector<2x32xf32>
    %378 = vector.extract_strided_slice %371 {offsets = [0, 32], sizes = [2, 32], strides = [1, 1]} : vector<2x128xf32> to vector<2x32xf32>
    %379 = arith.negf %378 : vector<2x32xf32>
    %380 = math.exp %379 : vector<2x32xf32>
    %cst_261 = arith.constant 1.000000e+00 : f32
    %381 = vector.broadcast %cst_261 : f32 to vector<2x32xf32>
    %382 = arith.addf %381, %380 : vector<2x32xf32>
    %383 = arith.divf %381, %382 : vector<2x32xf32>
    %384 = vector.extract_strided_slice %371 {offsets = [0, 64], sizes = [2, 32], strides = [1, 1]} : vector<2x128xf32> to vector<2x32xf32>
    %385 = math.tanh %384 : vector<2x32xf32>
    %386 = vector.extract_strided_slice %371 {offsets = [0, 96], sizes = [2, 32], strides = [1, 1]} : vector<2x128xf32> to vector<2x32xf32>
    %387 = arith.negf %386 : vector<2x32xf32>
    %388 = math.exp %387 : vector<2x32xf32>
    %cst_262 = arith.constant 1.000000e+00 : f32
    %389 = vector.broadcast %cst_262 : f32 to vector<2x32xf32>
    %390 = arith.addf %389, %388 : vector<2x32xf32>
    %391 = arith.divf %389, %390 : vector<2x32xf32>
    %392 = arith.mulf %383, %323 : vector<2x32xf32>
    %393 = arith.mulf %377, %385 : vector<2x32xf32>
    %394 = arith.addf %392, %393 : vector<2x32xf32>
    %395 = math.tanh %394 : vector<2x32xf32>
    %396 = arith.mulf %391, %395 : vector<2x32xf32>
    %397 = arith.index_cast %c1_i32_254 : i32 to index
    %c0_263 = arith.constant 0 : index
    %c0_264 = arith.constant 0 : index
    %398 = vector.load %arg13[%397, %c0_263, %c0_264] : memref<8x2x32xf32, #tpu.memory_space<vmem>>, vector<1x2x32xf32>
    %399 = vector.shape_cast %398 : vector<1x2x32xf32> to vector<2x32xf32>
    %400 = vector.shape_cast %396 : vector<2x32xf32> to vector<1x2x32xf32>
    tpu.vector_store %arg13[%397, %c0_263, %c0_264], %400 {strides = array<i32>} : memref<8x2x32xf32, #tpu.memory_space<vmem>>, vector<1x2x32xf32>,
    %c7_i32_265 = arith.constant 7 : i32
    %401 = arith.subi %c7_i32_265, %c1_i32_254 : i32
    %402 = arith.index_cast %401 : i32 to index
    %c0_266 = arith.constant 0 : index
    %c0_267 = arith.constant 0 : index
    %403 = vector.load %arg16[%402, %c0_266, %c0_267] : memref<8x2x128xf32, #tpu.memory_space<vmem>>, vector<1x2x128xf32>
    %404 = vector.shape_cast %403 : vector<1x2x128xf32> to vector<2x128xf32>
    %c0_268 = arith.constant 0 : index
    %c0_269 = arith.constant 0 : index
    %405 = vector.load %arg12[%c0_268, %c0_269] : memref<32x128xf32, #tpu.memory_space<vmem>>, vector<32x128xf32>
    %cst_270 = arith.constant dense<0.000000e+00> : vector<2x128xf32>
    %406 = tpu.matmul %361, %405, %cst_270 {dimension_numbers = #tpu.dot_dimension_numbers<[1], [0], [0], [1], [0, 0, 1, 1], [], []>} : vector<2x32xf32>, vector<32x128xf32>, vector<2x128xf32> -> vector<2x128xf32>
    %407 = arith.addf %404, %406 : vector<2x128xf32>
    %408 = vector.extract_strided_slice %407 {offsets = [0, 0], sizes = [2, 32], strides = [1, 1]} : vector<2x128xf32> to vector<2x32xf32>
    %409 = arith.negf %408 : vector<2x32xf32>
    %410 = math.exp %409 : vector<2x32xf32>
    %cst_271 = arith.constant 1.000000e+00 : f32
    %411 = vector.broadcast %cst_271 : f32 to vector<2x32xf32>
    %412 = arith.addf %411, %410 : vector<2x32xf32>
    %413 = arith.divf %411, %412 : vector<2x32xf32>
    %414 = vector.extract_strided_slice %407 {offsets = [0, 32], sizes = [2, 32], strides = [1, 1]} : vector<2x128xf32> to vector<2x32xf32>
    %415 = arith.negf %414 : vector<2x32xf32>
    %416 = math.exp %415 : vector<2x32xf32>
    %cst_272 = arith.constant 1.000000e+00 : f32
    %417 = vector.broadcast %cst_272 : f32 to vector<2x32xf32>
    %418 = arith.addf %417, %416 : vector<2x32xf32>
    %419 = arith.divf %417, %418 : vector<2x32xf32>
    %420 = vector.extract_strided_slice %407 {offsets = [0, 64], sizes = [2, 32], strides = [1, 1]} : vector<2x128xf32> to vector<2x32xf32>
    %421 = math.tanh %420 : vector<2x32xf32>
    %422 = vector.extract_strided_slice %407 {offsets = [0, 96], sizes = [2, 32], strides = [1, 1]} : vector<2x128xf32> to vector<2x32xf32>
    %423 = arith.negf %422 : vector<2x32xf32>
    %424 = math.exp %423 : vector<2x32xf32>
    %cst_273 = arith.constant 1.000000e+00 : f32
    %425 = vector.broadcast %cst_273 : f32 to vector<2x32xf32>
    %426 = arith.addf %425, %424 : vector<2x32xf32>
    %427 = arith.divf %425, %426 : vector<2x32xf32>
    %428 = arith.mulf %419, %359 : vector<2x32xf32>
    %429 = arith.mulf %413, %421 : vector<2x32xf32>
    %430 = arith.addf %428, %429 : vector<2x32xf32>
    %431 = math.tanh %430 : vector<2x32xf32>
    %432 = arith.mulf %427, %431 : vector<2x32xf32>
    %433 = arith.index_cast %401 : i32 to index
    %c0_274 = arith.constant 0 : index
    %c0_275 = arith.constant 0 : index
    %434 = vector.load %arg14[%433, %c0_274, %c0_275] : memref<8x2x32xf32, #tpu.memory_space<vmem>>, vector<1x2x32xf32>
    %435 = vector.shape_cast %434 : vector<1x2x32xf32> to vector<2x32xf32>
    %436 = vector.shape_cast %432 : vector<2x32xf32> to vector<1x2x32xf32>
    tpu.vector_store %arg14[%433, %c0_274, %c0_275], %436 {strides = array<i32>} : memref<8x2x32xf32, #tpu.memory_space<vmem>>, vector<1x2x32xf32>,
    %c2_i32_276 = arith.constant 2 : i32
    %437 = arith.index_cast %c2_i32_276 : i32 to index
    %c0_277 = arith.constant 0 : index
    %c0_278 = arith.constant 0 : index
    %438 = vector.load %arg15[%437, %c0_277, %c0_278] : memref<8x2x128xf32, #tpu.memory_space<vmem>>, vector<1x2x128xf32>
    %439 = vector.shape_cast %438 : vector<1x2x128xf32> to vector<2x128xf32>
    %c0_279 = arith.constant 0 : index
    %c0_280 = arith.constant 0 : index
    %440 = vector.load %arg11[%c0_279, %c0_280] : memref<32x128xf32, #tpu.memory_space<vmem>>, vector<32x128xf32>
    %cst_281 = arith.constant dense<0.000000e+00> : vector<2x128xf32>
    %441 = tpu.matmul %396, %440, %cst_281 {dimension_numbers = #tpu.dot_dimension_numbers<[1], [0], [0], [1], [0, 0, 1, 1], [], []>} : vector<2x32xf32>, vector<32x128xf32>, vector<2x128xf32> -> vector<2x128xf32>
    %442 = arith.addf %439, %441 : vector<2x128xf32>
    %443 = vector.extract_strided_slice %442 {offsets = [0, 0], sizes = [2, 32], strides = [1, 1]} : vector<2x128xf32> to vector<2x32xf32>
    %444 = arith.negf %443 : vector<2x32xf32>
    %445 = math.exp %444 : vector<2x32xf32>
    %cst_282 = arith.constant 1.000000e+00 : f32
    %446 = vector.broadcast %cst_282 : f32 to vector<2x32xf32>
    %447 = arith.addf %446, %445 : vector<2x32xf32>
    %448 = arith.divf %446, %447 : vector<2x32xf32>
    %449 = vector.extract_strided_slice %442 {offsets = [0, 32], sizes = [2, 32], strides = [1, 1]} : vector<2x128xf32> to vector<2x32xf32>
    %450 = arith.negf %449 : vector<2x32xf32>
    %451 = math.exp %450 : vector<2x32xf32>
    %cst_283 = arith.constant 1.000000e+00 : f32
    %452 = vector.broadcast %cst_283 : f32 to vector<2x32xf32>
    %453 = arith.addf %452, %451 : vector<2x32xf32>
    %454 = arith.divf %452, %453 : vector<2x32xf32>
    %455 = vector.extract_strided_slice %442 {offsets = [0, 64], sizes = [2, 32], strides = [1, 1]} : vector<2x128xf32> to vector<2x32xf32>
    %456 = math.tanh %455 : vector<2x32xf32>
    %457 = vector.extract_strided_slice %442 {offsets = [0, 96], sizes = [2, 32], strides = [1, 1]} : vector<2x128xf32> to vector<2x32xf32>
    %458 = arith.negf %457 : vector<2x32xf32>
    %459 = math.exp %458 : vector<2x32xf32>
    %cst_284 = arith.constant 1.000000e+00 : f32
    %460 = vector.broadcast %cst_284 : f32 to vector<2x32xf32>
    %461 = arith.addf %460, %459 : vector<2x32xf32>
    %462 = arith.divf %460, %461 : vector<2x32xf32>
    %463 = arith.mulf %454, %394 : vector<2x32xf32>
    %464 = arith.mulf %448, %456 : vector<2x32xf32>
    %465 = arith.addf %463, %464 : vector<2x32xf32>
    %466 = math.tanh %465 : vector<2x32xf32>
    %467 = arith.mulf %462, %466 : vector<2x32xf32>
    %468 = arith.index_cast %c2_i32_276 : i32 to index
    %c0_285 = arith.constant 0 : index
    %c0_286 = arith.constant 0 : index
    %469 = vector.load %arg13[%468, %c0_285, %c0_286] : memref<8x2x32xf32, #tpu.memory_space<vmem>>, vector<1x2x32xf32>
    %470 = vector.shape_cast %469 : vector<1x2x32xf32> to vector<2x32xf32>
    %471 = vector.shape_cast %467 : vector<2x32xf32> to vector<1x2x32xf32>
    tpu.vector_store %arg13[%468, %c0_285, %c0_286], %471 {strides = array<i32>} : memref<8x2x32xf32, #tpu.memory_space<vmem>>, vector<1x2x32xf32>,
    %c7_i32_287 = arith.constant 7 : i32
    %472 = arith.subi %c7_i32_287, %c2_i32_276 : i32
    %473 = arith.index_cast %472 : i32 to index
    %c0_288 = arith.constant 0 : index
    %c0_289 = arith.constant 0 : index
    %474 = vector.load %arg16[%473, %c0_288, %c0_289] : memref<8x2x128xf32, #tpu.memory_space<vmem>>, vector<1x2x128xf32>
    %475 = vector.shape_cast %474 : vector<1x2x128xf32> to vector<2x128xf32>
    %c0_290 = arith.constant 0 : index
    %c0_291 = arith.constant 0 : index
    %476 = vector.load %arg12[%c0_290, %c0_291] : memref<32x128xf32, #tpu.memory_space<vmem>>, vector<32x128xf32>
    %cst_292 = arith.constant dense<0.000000e+00> : vector<2x128xf32>
    %477 = tpu.matmul %432, %476, %cst_292 {dimension_numbers = #tpu.dot_dimension_numbers<[1], [0], [0], [1], [0, 0, 1, 1], [], []>} : vector<2x32xf32>, vector<32x128xf32>, vector<2x128xf32> -> vector<2x128xf32>
    %478 = arith.addf %475, %477 : vector<2x128xf32>
    %479 = vector.extract_strided_slice %478 {offsets = [0, 0], sizes = [2, 32], strides = [1, 1]} : vector<2x128xf32> to vector<2x32xf32>
    %480 = arith.negf %479 : vector<2x32xf32>
    %481 = math.exp %480 : vector<2x32xf32>
    %cst_293 = arith.constant 1.000000e+00 : f32
    %482 = vector.broadcast %cst_293 : f32 to vector<2x32xf32>
    %483 = arith.addf %482, %481 : vector<2x32xf32>
    %484 = arith.divf %482, %483 : vector<2x32xf32>
    %485 = vector.extract_strided_slice %478 {offsets = [0, 32], sizes = [2, 32], strides = [1, 1]} : vector<2x128xf32> to vector<2x32xf32>
    %486 = arith.negf %485 : vector<2x32xf32>
    %487 = math.exp %486 : vector<2x32xf32>
    %cst_294 = arith.constant 1.000000e+00 : f32
    %488 = vector.broadcast %cst_294 : f32 to vector<2x32xf32>
    %489 = arith.addf %488, %487 : vector<2x32xf32>
    %490 = arith.divf %488, %489 : vector<2x32xf32>
    %491 = vector.extract_strided_slice %478 {offsets = [0, 64], sizes = [2, 32], strides = [1, 1]} : vector<2x128xf32> to vector<2x32xf32>
    %492 = math.tanh %491 : vector<2x32xf32>
    %493 = vector.extract_strided_slice %478 {offsets = [0, 96], sizes = [2, 32], strides = [1, 1]} : vector<2x128xf32> to vector<2x32xf32>
    %494 = arith.negf %493 : vector<2x32xf32>
    %495 = math.exp %494 : vector<2x32xf32>
    %cst_295 = arith.constant 1.000000e+00 : f32
    %496 = vector.broadcast %cst_295 : f32 to vector<2x32xf32>
    %497 = arith.addf %496, %495 : vector<2x32xf32>
    %498 = arith.divf %496, %497 : vector<2x32xf32>
    %499 = arith.mulf %490, %430 : vector<2x32xf32>
    %500 = arith.mulf %484, %492 : vector<2x32xf32>
    %501 = arith.addf %499, %500 : vector<2x32xf32>
    %502 = math.tanh %501 : vector<2x32xf32>
    %503 = arith.mulf %498, %502 : vector<2x32xf32>
    %504 = arith.index_cast %472 : i32 to index
    %c0_296 = arith.constant 0 : index
    %c0_297 = arith.constant 0 : index
    %505 = vector.load %arg14[%504, %c0_296, %c0_297] : memref<8x2x32xf32, #tpu.memory_space<vmem>>, vector<1x2x32xf32>
    %506 = vector.shape_cast %505 : vector<1x2x32xf32> to vector<2x32xf32>
    %507 = vector.shape_cast %503 : vector<2x32xf32> to vector<1x2x32xf32>
    tpu.vector_store %arg14[%504, %c0_296, %c0_297], %507 {strides = array<i32>} : memref<8x2x32xf32, #tpu.memory_space<vmem>>, vector<1x2x32xf32>,
    %c3_i32_298 = arith.constant 3 : i32
    %508 = arith.index_cast %c3_i32_298 : i32 to index
    %c0_299 = arith.constant 0 : index
    %c0_300 = arith.constant 0 : index
    %509 = vector.load %arg15[%508, %c0_299, %c0_300] : memref<8x2x128xf32, #tpu.memory_space<vmem>>, vector<1x2x128xf32>
    %510 = vector.shape_cast %509 : vector<1x2x128xf32> to vector<2x128xf32>
    %c0_301 = arith.constant 0 : index
    %c0_302 = arith.constant 0 : index
    %511 = vector.load %arg11[%c0_301, %c0_302] : memref<32x128xf32, #tpu.memory_space<vmem>>, vector<32x128xf32>
    %cst_303 = arith.constant dense<0.000000e+00> : vector<2x128xf32>
    %512 = tpu.matmul %467, %511, %cst_303 {dimension_numbers = #tpu.dot_dimension_numbers<[1], [0], [0], [1], [0, 0, 1, 1], [], []>} : vector<2x32xf32>, vector<32x128xf32>, vector<2x128xf32> -> vector<2x128xf32>
    %513 = arith.addf %510, %512 : vector<2x128xf32>
    %514 = vector.extract_strided_slice %513 {offsets = [0, 0], sizes = [2, 32], strides = [1, 1]} : vector<2x128xf32> to vector<2x32xf32>
    %515 = arith.negf %514 : vector<2x32xf32>
    %516 = math.exp %515 : vector<2x32xf32>
    %cst_304 = arith.constant 1.000000e+00 : f32
    %517 = vector.broadcast %cst_304 : f32 to vector<2x32xf32>
    %518 = arith.addf %517, %516 : vector<2x32xf32>
    %519 = arith.divf %517, %518 : vector<2x32xf32>
    %520 = vector.extract_strided_slice %513 {offsets = [0, 32], sizes = [2, 32], strides = [1, 1]} : vector<2x128xf32> to vector<2x32xf32>
    %521 = arith.negf %520 : vector<2x32xf32>
    %522 = math.exp %521 : vector<2x32xf32>
    %cst_305 = arith.constant 1.000000e+00 : f32
    %523 = vector.broadcast %cst_305 : f32 to vector<2x32xf32>
    %524 = arith.addf %523, %522 : vector<2x32xf32>
    %525 = arith.divf %523, %524 : vector<2x32xf32>
    %526 = vector.extract_strided_slice %513 {offsets = [0, 64], sizes = [2, 32], strides = [1, 1]} : vector<2x128xf32> to vector<2x32xf32>
    %527 = math.tanh %526 : vector<2x32xf32>
    %528 = vector.extract_strided_slice %513 {offsets = [0, 96], sizes = [2, 32], strides = [1, 1]} : vector<2x128xf32> to vector<2x32xf32>
    %529 = arith.negf %528 : vector<2x32xf32>
    %530 = math.exp %529 : vector<2x32xf32>
    %cst_306 = arith.constant 1.000000e+00 : f32
    %531 = vector.broadcast %cst_306 : f32 to vector<2x32xf32>
    %532 = arith.addf %531, %530 : vector<2x32xf32>
    %533 = arith.divf %531, %532 : vector<2x32xf32>
    %534 = arith.mulf %525, %465 : vector<2x32xf32>
    %535 = arith.mulf %519, %527 : vector<2x32xf32>
    %536 = arith.addf %534, %535 : vector<2x32xf32>
    %537 = math.tanh %536 : vector<2x32xf32>
    %538 = arith.mulf %533, %537 : vector<2x32xf32>
    %539 = arith.index_cast %c3_i32_298 : i32 to index
    %c0_307 = arith.constant 0 : index
    %c0_308 = arith.constant 0 : index
    %540 = vector.load %arg13[%539, %c0_307, %c0_308] : memref<8x2x32xf32, #tpu.memory_space<vmem>>, vector<1x2x32xf32>
    %541 = vector.shape_cast %540 : vector<1x2x32xf32> to vector<2x32xf32>
    %542 = vector.shape_cast %538 : vector<2x32xf32> to vector<1x2x32xf32>
    tpu.vector_store %arg13[%539, %c0_307, %c0_308], %542 {strides = array<i32>} : memref<8x2x32xf32, #tpu.memory_space<vmem>>, vector<1x2x32xf32>,
    %c7_i32_309 = arith.constant 7 : i32
    %543 = arith.subi %c7_i32_309, %c3_i32_298 : i32
    %544 = arith.index_cast %543 : i32 to index
    %c0_310 = arith.constant 0 : index
    %c0_311 = arith.constant 0 : index
    %545 = vector.load %arg16[%544, %c0_310, %c0_311] : memref<8x2x128xf32, #tpu.memory_space<vmem>>, vector<1x2x128xf32>
    %546 = vector.shape_cast %545 : vector<1x2x128xf32> to vector<2x128xf32>
    %c0_312 = arith.constant 0 : index
    %c0_313 = arith.constant 0 : index
    %547 = vector.load %arg12[%c0_312, %c0_313] : memref<32x128xf32, #tpu.memory_space<vmem>>, vector<32x128xf32>
    %cst_314 = arith.constant dense<0.000000e+00> : vector<2x128xf32>
    %548 = tpu.matmul %503, %547, %cst_314 {dimension_numbers = #tpu.dot_dimension_numbers<[1], [0], [0], [1], [0, 0, 1, 1], [], []>} : vector<2x32xf32>, vector<32x128xf32>, vector<2x128xf32> -> vector<2x128xf32>
    %549 = arith.addf %546, %548 : vector<2x128xf32>
    %550 = vector.extract_strided_slice %549 {offsets = [0, 0], sizes = [2, 32], strides = [1, 1]} : vector<2x128xf32> to vector<2x32xf32>
    %551 = arith.negf %550 : vector<2x32xf32>
    %552 = math.exp %551 : vector<2x32xf32>
    %cst_315 = arith.constant 1.000000e+00 : f32
    %553 = vector.broadcast %cst_315 : f32 to vector<2x32xf32>
    %554 = arith.addf %553, %552 : vector<2x32xf32>
    %555 = arith.divf %553, %554 : vector<2x32xf32>
    %556 = vector.extract_strided_slice %549 {offsets = [0, 32], sizes = [2, 32], strides = [1, 1]} : vector<2x128xf32> to vector<2x32xf32>
    %557 = arith.negf %556 : vector<2x32xf32>
    %558 = math.exp %557 : vector<2x32xf32>
    %cst_316 = arith.constant 1.000000e+00 : f32
    %559 = vector.broadcast %cst_316 : f32 to vector<2x32xf32>
    %560 = arith.addf %559, %558 : vector<2x32xf32>
    %561 = arith.divf %559, %560 : vector<2x32xf32>
    %562 = vector.extract_strided_slice %549 {offsets = [0, 64], sizes = [2, 32], strides = [1, 1]} : vector<2x128xf32> to vector<2x32xf32>
    %563 = math.tanh %562 : vector<2x32xf32>
    %564 = vector.extract_strided_slice %549 {offsets = [0, 96], sizes = [2, 32], strides = [1, 1]} : vector<2x128xf32> to vector<2x32xf32>
    %565 = arith.negf %564 : vector<2x32xf32>
    %566 = math.exp %565 : vector<2x32xf32>
    %cst_317 = arith.constant 1.000000e+00 : f32
    %567 = vector.broadcast %cst_317 : f32 to vector<2x32xf32>
    %568 = arith.addf %567, %566 : vector<2x32xf32>
    %569 = arith.divf %567, %568 : vector<2x32xf32>
    %570 = arith.mulf %561, %501 : vector<2x32xf32>
    %571 = arith.mulf %555, %563 : vector<2x32xf32>
    %572 = arith.addf %570, %571 : vector<2x32xf32>
    %573 = math.tanh %572 : vector<2x32xf32>
    %574 = arith.mulf %569, %573 : vector<2x32xf32>
    %575 = arith.index_cast %543 : i32 to index
    %c0_318 = arith.constant 0 : index
    %c0_319 = arith.constant 0 : index
    %576 = vector.load %arg14[%575, %c0_318, %c0_319] : memref<8x2x32xf32, #tpu.memory_space<vmem>>, vector<1x2x32xf32>
    %577 = vector.shape_cast %576 : vector<1x2x32xf32> to vector<2x32xf32>
    %578 = vector.shape_cast %574 : vector<2x32xf32> to vector<1x2x32xf32>
    tpu.vector_store %arg14[%575, %c0_318, %c0_319], %578 {strides = array<i32>} : memref<8x2x32xf32, #tpu.memory_space<vmem>>, vector<1x2x32xf32>,
    %c4_i32_320 = arith.constant 4 : i32
    %579 = arith.index_cast %c4_i32_320 : i32 to index
    %c0_321 = arith.constant 0 : index
    %c0_322 = arith.constant 0 : index
    %580 = vector.load %arg15[%579, %c0_321, %c0_322] : memref<8x2x128xf32, #tpu.memory_space<vmem>>, vector<1x2x128xf32>
    %581 = vector.shape_cast %580 : vector<1x2x128xf32> to vector<2x128xf32>
    %c0_323 = arith.constant 0 : index
    %c0_324 = arith.constant 0 : index
    %582 = vector.load %arg11[%c0_323, %c0_324] : memref<32x128xf32, #tpu.memory_space<vmem>>, vector<32x128xf32>
    %cst_325 = arith.constant dense<0.000000e+00> : vector<2x128xf32>
    %583 = tpu.matmul %538, %582, %cst_325 {dimension_numbers = #tpu.dot_dimension_numbers<[1], [0], [0], [1], [0, 0, 1, 1], [], []>} : vector<2x32xf32>, vector<32x128xf32>, vector<2x128xf32> -> vector<2x128xf32>
    %584 = arith.addf %581, %583 : vector<2x128xf32>
    %585 = vector.extract_strided_slice %584 {offsets = [0, 0], sizes = [2, 32], strides = [1, 1]} : vector<2x128xf32> to vector<2x32xf32>
    %586 = arith.negf %585 : vector<2x32xf32>
    %587 = math.exp %586 : vector<2x32xf32>
    %cst_326 = arith.constant 1.000000e+00 : f32
    %588 = vector.broadcast %cst_326 : f32 to vector<2x32xf32>
    %589 = arith.addf %588, %587 : vector<2x32xf32>
    %590 = arith.divf %588, %589 : vector<2x32xf32>
    %591 = vector.extract_strided_slice %584 {offsets = [0, 32], sizes = [2, 32], strides = [1, 1]} : vector<2x128xf32> to vector<2x32xf32>
    %592 = arith.negf %591 : vector<2x32xf32>
    %593 = math.exp %592 : vector<2x32xf32>
    %cst_327 = arith.constant 1.000000e+00 : f32
    %594 = vector.broadcast %cst_327 : f32 to vector<2x32xf32>
    %595 = arith.addf %594, %593 : vector<2x32xf32>
    %596 = arith.divf %594, %595 : vector<2x32xf32>
    %597 = vector.extract_strided_slice %584 {offsets = [0, 64], sizes = [2, 32], strides = [1, 1]} : vector<2x128xf32> to vector<2x32xf32>
    %598 = math.tanh %597 : vector<2x32xf32>
    %599 = vector.extract_strided_slice %584 {offsets = [0, 96], sizes = [2, 32], strides = [1, 1]} : vector<2x128xf32> to vector<2x32xf32>
    %600 = arith.negf %599 : vector<2x32xf32>
    %601 = math.exp %600 : vector<2x32xf32>
    %cst_328 = arith.constant 1.000000e+00 : f32
    %602 = vector.broadcast %cst_328 : f32 to vector<2x32xf32>
    %603 = arith.addf %602, %601 : vector<2x32xf32>
    %604 = arith.divf %602, %603 : vector<2x32xf32>
    %605 = arith.mulf %596, %536 : vector<2x32xf32>
    %606 = arith.mulf %590, %598 : vector<2x32xf32>
    %607 = arith.addf %605, %606 : vector<2x32xf32>
    %608 = math.tanh %607 : vector<2x32xf32>
    %609 = arith.mulf %604, %608 : vector<2x32xf32>
    %610 = arith.index_cast %c4_i32_320 : i32 to index
    %c0_329 = arith.constant 0 : index
    %c0_330 = arith.constant 0 : index
    %611 = vector.load %arg13[%610, %c0_329, %c0_330] : memref<8x2x32xf32, #tpu.memory_space<vmem>>, vector<1x2x32xf32>
    %612 = vector.shape_cast %611 : vector<1x2x32xf32> to vector<2x32xf32>
    %613 = vector.shape_cast %609 : vector<2x32xf32> to vector<1x2x32xf32>
    tpu.vector_store %arg13[%610, %c0_329, %c0_330], %613 {strides = array<i32>} : memref<8x2x32xf32, #tpu.memory_space<vmem>>, vector<1x2x32xf32>,
    %c7_i32_331 = arith.constant 7 : i32
    %614 = arith.subi %c7_i32_331, %c4_i32_320 : i32
    %615 = arith.index_cast %614 : i32 to index
    %c0_332 = arith.constant 0 : index
    %c0_333 = arith.constant 0 : index
    %616 = vector.load %arg16[%615, %c0_332, %c0_333] : memref<8x2x128xf32, #tpu.memory_space<vmem>>, vector<1x2x128xf32>
    %617 = vector.shape_cast %616 : vector<1x2x128xf32> to vector<2x128xf32>
    %c0_334 = arith.constant 0 : index
    %c0_335 = arith.constant 0 : index
    %618 = vector.load %arg12[%c0_334, %c0_335] : memref<32x128xf32, #tpu.memory_space<vmem>>, vector<32x128xf32>
    %cst_336 = arith.constant dense<0.000000e+00> : vector<2x128xf32>
    %619 = tpu.matmul %574, %618, %cst_336 {dimension_numbers = #tpu.dot_dimension_numbers<[1], [0], [0], [1], [0, 0, 1, 1], [], []>} : vector<2x32xf32>, vector<32x128xf32>, vector<2x128xf32> -> vector<2x128xf32>
    %620 = arith.addf %617, %619 : vector<2x128xf32>
    %621 = vector.extract_strided_slice %620 {offsets = [0, 0], sizes = [2, 32], strides = [1, 1]} : vector<2x128xf32> to vector<2x32xf32>
    %622 = arith.negf %621 : vector<2x32xf32>
    %623 = math.exp %622 : vector<2x32xf32>
    %cst_337 = arith.constant 1.000000e+00 : f32
    %624 = vector.broadcast %cst_337 : f32 to vector<2x32xf32>
    %625 = arith.addf %624, %623 : vector<2x32xf32>
    %626 = arith.divf %624, %625 : vector<2x32xf32>
    %627 = vector.extract_strided_slice %620 {offsets = [0, 32], sizes = [2, 32], strides = [1, 1]} : vector<2x128xf32> to vector<2x32xf32>
    %628 = arith.negf %627 : vector<2x32xf32>
    %629 = math.exp %628 : vector<2x32xf32>
    %cst_338 = arith.constant 1.000000e+00 : f32
    %630 = vector.broadcast %cst_338 : f32 to vector<2x32xf32>
    %631 = arith.addf %630, %629 : vector<2x32xf32>
    %632 = arith.divf %630, %631 : vector<2x32xf32>
    %633 = vector.extract_strided_slice %620 {offsets = [0, 64], sizes = [2, 32], strides = [1, 1]} : vector<2x128xf32> to vector<2x32xf32>
    %634 = math.tanh %633 : vector<2x32xf32>
    %635 = vector.extract_strided_slice %620 {offsets = [0, 96], sizes = [2, 32], strides = [1, 1]} : vector<2x128xf32> to vector<2x32xf32>
    %636 = arith.negf %635 : vector<2x32xf32>
    %637 = math.exp %636 : vector<2x32xf32>
    %cst_339 = arith.constant 1.000000e+00 : f32
    %638 = vector.broadcast %cst_339 : f32 to vector<2x32xf32>
    %639 = arith.addf %638, %637 : vector<2x32xf32>
    %640 = arith.divf %638, %639 : vector<2x32xf32>
    %641 = arith.mulf %632, %572 : vector<2x32xf32>
    %642 = arith.mulf %626, %634 : vector<2x32xf32>
    %643 = arith.addf %641, %642 : vector<2x32xf32>
    %644 = math.tanh %643 : vector<2x32xf32>
    %645 = arith.mulf %640, %644 : vector<2x32xf32>
    %646 = arith.index_cast %614 : i32 to index
    %c0_340 = arith.constant 0 : index
    %c0_341 = arith.constant 0 : index
    %647 = vector.load %arg14[%646, %c0_340, %c0_341] : memref<8x2x32xf32, #tpu.memory_space<vmem>>, vector<1x2x32xf32>
    %648 = vector.shape_cast %647 : vector<1x2x32xf32> to vector<2x32xf32>
    %649 = vector.shape_cast %645 : vector<2x32xf32> to vector<1x2x32xf32>
    tpu.vector_store %arg14[%646, %c0_340, %c0_341], %649 {strides = array<i32>} : memref<8x2x32xf32, #tpu.memory_space<vmem>>, vector<1x2x32xf32>,
    %c5_i32_342 = arith.constant 5 : i32
    %650 = arith.index_cast %c5_i32_342 : i32 to index
    %c0_343 = arith.constant 0 : index
    %c0_344 = arith.constant 0 : index
    %651 = vector.load %arg15[%650, %c0_343, %c0_344] : memref<8x2x128xf32, #tpu.memory_space<vmem>>, vector<1x2x128xf32>
    %652 = vector.shape_cast %651 : vector<1x2x128xf32> to vector<2x128xf32>
    %c0_345 = arith.constant 0 : index
    %c0_346 = arith.constant 0 : index
    %653 = vector.load %arg11[%c0_345, %c0_346] : memref<32x128xf32, #tpu.memory_space<vmem>>, vector<32x128xf32>
    %cst_347 = arith.constant dense<0.000000e+00> : vector<2x128xf32>
    %654 = tpu.matmul %609, %653, %cst_347 {dimension_numbers = #tpu.dot_dimension_numbers<[1], [0], [0], [1], [0, 0, 1, 1], [], []>} : vector<2x32xf32>, vector<32x128xf32>, vector<2x128xf32> -> vector<2x128xf32>
    %655 = arith.addf %652, %654 : vector<2x128xf32>
    %656 = vector.extract_strided_slice %655 {offsets = [0, 0], sizes = [2, 32], strides = [1, 1]} : vector<2x128xf32> to vector<2x32xf32>
    %657 = arith.negf %656 : vector<2x32xf32>
    %658 = math.exp %657 : vector<2x32xf32>
    %cst_348 = arith.constant 1.000000e+00 : f32
    %659 = vector.broadcast %cst_348 : f32 to vector<2x32xf32>
    %660 = arith.addf %659, %658 : vector<2x32xf32>
    %661 = arith.divf %659, %660 : vector<2x32xf32>
    %662 = vector.extract_strided_slice %655 {offsets = [0, 32], sizes = [2, 32], strides = [1, 1]} : vector<2x128xf32> to vector<2x32xf32>
    %663 = arith.negf %662 : vector<2x32xf32>
    %664 = math.exp %663 : vector<2x32xf32>
    %cst_349 = arith.constant 1.000000e+00 : f32
    %665 = vector.broadcast %cst_349 : f32 to vector<2x32xf32>
    %666 = arith.addf %665, %664 : vector<2x32xf32>
    %667 = arith.divf %665, %666 : vector<2x32xf32>
    %668 = vector.extract_strided_slice %655 {offsets = [0, 64], sizes = [2, 32], strides = [1, 1]} : vector<2x128xf32> to vector<2x32xf32>
    %669 = math.tanh %668 : vector<2x32xf32>
    %670 = vector.extract_strided_slice %655 {offsets = [0, 96], sizes = [2, 32], strides = [1, 1]} : vector<2x128xf32> to vector<2x32xf32>
    %671 = arith.negf %670 : vector<2x32xf32>
    %672 = math.exp %671 : vector<2x32xf32>
    %cst_350 = arith.constant 1.000000e+00 : f32
    %673 = vector.broadcast %cst_350 : f32 to vector<2x32xf32>
    %674 = arith.addf %673, %672 : vector<2x32xf32>
    %675 = arith.divf %673, %674 : vector<2x32xf32>
    %676 = arith.mulf %667, %607 : vector<2x32xf32>
    %677 = arith.mulf %661, %669 : vector<2x32xf32>
    %678 = arith.addf %676, %677 : vector<2x32xf32>
    %679 = math.tanh %678 : vector<2x32xf32>
    %680 = arith.mulf %675, %679 : vector<2x32xf32>
    %681 = arith.index_cast %c5_i32_342 : i32 to index
    %c0_351 = arith.constant 0 : index
    %c0_352 = arith.constant 0 : index
    %682 = vector.load %arg13[%681, %c0_351, %c0_352] : memref<8x2x32xf32, #tpu.memory_space<vmem>>, vector<1x2x32xf32>
    %683 = vector.shape_cast %682 : vector<1x2x32xf32> to vector<2x32xf32>
    %684 = vector.shape_cast %680 : vector<2x32xf32> to vector<1x2x32xf32>
    tpu.vector_store %arg13[%681, %c0_351, %c0_352], %684 {strides = array<i32>} : memref<8x2x32xf32, #tpu.memory_space<vmem>>, vector<1x2x32xf32>,
    %c7_i32_353 = arith.constant 7 : i32
    %685 = arith.subi %c7_i32_353, %c5_i32_342 : i32
    %686 = arith.index_cast %685 : i32 to index
    %c0_354 = arith.constant 0 : index
    %c0_355 = arith.constant 0 : index
    %687 = vector.load %arg16[%686, %c0_354, %c0_355] : memref<8x2x128xf32, #tpu.memory_space<vmem>>, vector<1x2x128xf32>
    %688 = vector.shape_cast %687 : vector<1x2x128xf32> to vector<2x128xf32>
    %c0_356 = arith.constant 0 : index
    %c0_357 = arith.constant 0 : index
    %689 = vector.load %arg12[%c0_356, %c0_357] : memref<32x128xf32, #tpu.memory_space<vmem>>, vector<32x128xf32>
    %cst_358 = arith.constant dense<0.000000e+00> : vector<2x128xf32>
    %690 = tpu.matmul %645, %689, %cst_358 {dimension_numbers = #tpu.dot_dimension_numbers<[1], [0], [0], [1], [0, 0, 1, 1], [], []>} : vector<2x32xf32>, vector<32x128xf32>, vector<2x128xf32> -> vector<2x128xf32>
    %691 = arith.addf %688, %690 : vector<2x128xf32>
    %692 = vector.extract_strided_slice %691 {offsets = [0, 0], sizes = [2, 32], strides = [1, 1]} : vector<2x128xf32> to vector<2x32xf32>
    %693 = arith.negf %692 : vector<2x32xf32>
    %694 = math.exp %693 : vector<2x32xf32>
    %cst_359 = arith.constant 1.000000e+00 : f32
    %695 = vector.broadcast %cst_359 : f32 to vector<2x32xf32>
    %696 = arith.addf %695, %694 : vector<2x32xf32>
    %697 = arith.divf %695, %696 : vector<2x32xf32>
    %698 = vector.extract_strided_slice %691 {offsets = [0, 32], sizes = [2, 32], strides = [1, 1]} : vector<2x128xf32> to vector<2x32xf32>
    %699 = arith.negf %698 : vector<2x32xf32>
    %700 = math.exp %699 : vector<2x32xf32>
    %cst_360 = arith.constant 1.000000e+00 : f32
    %701 = vector.broadcast %cst_360 : f32 to vector<2x32xf32>
    %702 = arith.addf %701, %700 : vector<2x32xf32>
    %703 = arith.divf %701, %702 : vector<2x32xf32>
    %704 = vector.extract_strided_slice %691 {offsets = [0, 64], sizes = [2, 32], strides = [1, 1]} : vector<2x128xf32> to vector<2x32xf32>
    %705 = math.tanh %704 : vector<2x32xf32>
    %706 = vector.extract_strided_slice %691 {offsets = [0, 96], sizes = [2, 32], strides = [1, 1]} : vector<2x128xf32> to vector<2x32xf32>
    %707 = arith.negf %706 : vector<2x32xf32>
    %708 = math.exp %707 : vector<2x32xf32>
    %cst_361 = arith.constant 1.000000e+00 : f32
    %709 = vector.broadcast %cst_361 : f32 to vector<2x32xf32>
    %710 = arith.addf %709, %708 : vector<2x32xf32>
    %711 = arith.divf %709, %710 : vector<2x32xf32>
    %712 = arith.mulf %703, %643 : vector<2x32xf32>
    %713 = arith.mulf %697, %705 : vector<2x32xf32>
    %714 = arith.addf %712, %713 : vector<2x32xf32>
    %715 = math.tanh %714 : vector<2x32xf32>
    %716 = arith.mulf %711, %715 : vector<2x32xf32>
    %717 = arith.index_cast %685 : i32 to index
    %c0_362 = arith.constant 0 : index
    %c0_363 = arith.constant 0 : index
    %718 = vector.load %arg14[%717, %c0_362, %c0_363] : memref<8x2x32xf32, #tpu.memory_space<vmem>>, vector<1x2x32xf32>
    %719 = vector.shape_cast %718 : vector<1x2x32xf32> to vector<2x32xf32>
    %720 = vector.shape_cast %716 : vector<2x32xf32> to vector<1x2x32xf32>
    tpu.vector_store %arg14[%717, %c0_362, %c0_363], %720 {strides = array<i32>} : memref<8x2x32xf32, #tpu.memory_space<vmem>>, vector<1x2x32xf32>,
    %c6_i32_364 = arith.constant 6 : i32
    %721 = arith.index_cast %c6_i32_364 : i32 to index
    %c0_365 = arith.constant 0 : index
    %c0_366 = arith.constant 0 : index
    %722 = vector.load %arg15[%721, %c0_365, %c0_366] : memref<8x2x128xf32, #tpu.memory_space<vmem>>, vector<1x2x128xf32>
    %723 = vector.shape_cast %722 : vector<1x2x128xf32> to vector<2x128xf32>
    %c0_367 = arith.constant 0 : index
    %c0_368 = arith.constant 0 : index
    %724 = vector.load %arg11[%c0_367, %c0_368] : memref<32x128xf32, #tpu.memory_space<vmem>>, vector<32x128xf32>
    %cst_369 = arith.constant dense<0.000000e+00> : vector<2x128xf32>
    %725 = tpu.matmul %680, %724, %cst_369 {dimension_numbers = #tpu.dot_dimension_numbers<[1], [0], [0], [1], [0, 0, 1, 1], [], []>} : vector<2x32xf32>, vector<32x128xf32>, vector<2x128xf32> -> vector<2x128xf32>
    %726 = arith.addf %723, %725 : vector<2x128xf32>
    %727 = vector.extract_strided_slice %726 {offsets = [0, 0], sizes = [2, 32], strides = [1, 1]} : vector<2x128xf32> to vector<2x32xf32>
    %728 = arith.negf %727 : vector<2x32xf32>
    %729 = math.exp %728 : vector<2x32xf32>
    %cst_370 = arith.constant 1.000000e+00 : f32
    %730 = vector.broadcast %cst_370 : f32 to vector<2x32xf32>
    %731 = arith.addf %730, %729 : vector<2x32xf32>
    %732 = arith.divf %730, %731 : vector<2x32xf32>
    %733 = vector.extract_strided_slice %726 {offsets = [0, 32], sizes = [2, 32], strides = [1, 1]} : vector<2x128xf32> to vector<2x32xf32>
    %734 = arith.negf %733 : vector<2x32xf32>
    %735 = math.exp %734 : vector<2x32xf32>
    %cst_371 = arith.constant 1.000000e+00 : f32
    %736 = vector.broadcast %cst_371 : f32 to vector<2x32xf32>
    %737 = arith.addf %736, %735 : vector<2x32xf32>
    %738 = arith.divf %736, %737 : vector<2x32xf32>
    %739 = vector.extract_strided_slice %726 {offsets = [0, 64], sizes = [2, 32], strides = [1, 1]} : vector<2x128xf32> to vector<2x32xf32>
    %740 = math.tanh %739 : vector<2x32xf32>
    %741 = vector.extract_strided_slice %726 {offsets = [0, 96], sizes = [2, 32], strides = [1, 1]} : vector<2x128xf32> to vector<2x32xf32>
    %742 = arith.negf %741 : vector<2x32xf32>
    %743 = math.exp %742 : vector<2x32xf32>
    %cst_372 = arith.constant 1.000000e+00 : f32
    %744 = vector.broadcast %cst_372 : f32 to vector<2x32xf32>
    %745 = arith.addf %744, %743 : vector<2x32xf32>
    %746 = arith.divf %744, %745 : vector<2x32xf32>
    %747 = arith.mulf %738, %678 : vector<2x32xf32>
    %748 = arith.mulf %732, %740 : vector<2x32xf32>
    %749 = arith.addf %747, %748 : vector<2x32xf32>
    %750 = math.tanh %749 : vector<2x32xf32>
    %751 = arith.mulf %746, %750 : vector<2x32xf32>
    %752 = arith.index_cast %c6_i32_364 : i32 to index
    %c0_373 = arith.constant 0 : index
    %c0_374 = arith.constant 0 : index
    %753 = vector.load %arg13[%752, %c0_373, %c0_374] : memref<8x2x32xf32, #tpu.memory_space<vmem>>, vector<1x2x32xf32>
    %754 = vector.shape_cast %753 : vector<1x2x32xf32> to vector<2x32xf32>
    %755 = vector.shape_cast %751 : vector<2x32xf32> to vector<1x2x32xf32>
    tpu.vector_store %arg13[%752, %c0_373, %c0_374], %755 {strides = array<i32>} : memref<8x2x32xf32, #tpu.memory_space<vmem>>, vector<1x2x32xf32>,
    %c7_i32_375 = arith.constant 7 : i32
    %756 = arith.subi %c7_i32_375, %c6_i32_364 : i32
    %757 = arith.index_cast %756 : i32 to index
    %c0_376 = arith.constant 0 : index
    %c0_377 = arith.constant 0 : index
    %758 = vector.load %arg16[%757, %c0_376, %c0_377] : memref<8x2x128xf32, #tpu.memory_space<vmem>>, vector<1x2x128xf32>
    %759 = vector.shape_cast %758 : vector<1x2x128xf32> to vector<2x128xf32>
    %c0_378 = arith.constant 0 : index
    %c0_379 = arith.constant 0 : index
    %760 = vector.load %arg12[%c0_378, %c0_379] : memref<32x128xf32, #tpu.memory_space<vmem>>, vector<32x128xf32>
    %cst_380 = arith.constant dense<0.000000e+00> : vector<2x128xf32>
    %761 = tpu.matmul %716, %760, %cst_380 {dimension_numbers = #tpu.dot_dimension_numbers<[1], [0], [0], [1], [0, 0, 1, 1], [], []>} : vector<2x32xf32>, vector<32x128xf32>, vector<2x128xf32> -> vector<2x128xf32>
    %762 = arith.addf %759, %761 : vector<2x128xf32>
    %763 = vector.extract_strided_slice %762 {offsets = [0, 0], sizes = [2, 32], strides = [1, 1]} : vector<2x128xf32> to vector<2x32xf32>
    %764 = arith.negf %763 : vector<2x32xf32>
    %765 = math.exp %764 : vector<2x32xf32>
    %cst_381 = arith.constant 1.000000e+00 : f32
    %766 = vector.broadcast %cst_381 : f32 to vector<2x32xf32>
    %767 = arith.addf %766, %765 : vector<2x32xf32>
    %768 = arith.divf %766, %767 : vector<2x32xf32>
    %769 = vector.extract_strided_slice %762 {offsets = [0, 32], sizes = [2, 32], strides = [1, 1]} : vector<2x128xf32> to vector<2x32xf32>
    %770 = arith.negf %769 : vector<2x32xf32>
    %771 = math.exp %770 : vector<2x32xf32>
    %cst_382 = arith.constant 1.000000e+00 : f32
    %772 = vector.broadcast %cst_382 : f32 to vector<2x32xf32>
    %773 = arith.addf %772, %771 : vector<2x32xf32>
    %774 = arith.divf %772, %773 : vector<2x32xf32>
    %775 = vector.extract_strided_slice %762 {offsets = [0, 64], sizes = [2, 32], strides = [1, 1]} : vector<2x128xf32> to vector<2x32xf32>
    %776 = math.tanh %775 : vector<2x32xf32>
    %777 = vector.extract_strided_slice %762 {offsets = [0, 96], sizes = [2, 32], strides = [1, 1]} : vector<2x128xf32> to vector<2x32xf32>
    %778 = arith.negf %777 : vector<2x32xf32>
    %779 = math.exp %778 : vector<2x32xf32>
    %cst_383 = arith.constant 1.000000e+00 : f32
    %780 = vector.broadcast %cst_383 : f32 to vector<2x32xf32>
    %781 = arith.addf %780, %779 : vector<2x32xf32>
    %782 = arith.divf %780, %781 : vector<2x32xf32>
    %783 = arith.mulf %774, %714 : vector<2x32xf32>
    %784 = arith.mulf %768, %776 : vector<2x32xf32>
    %785 = arith.addf %783, %784 : vector<2x32xf32>
    %786 = math.tanh %785 : vector<2x32xf32>
    %787 = arith.mulf %782, %786 : vector<2x32xf32>
    %788 = arith.index_cast %756 : i32 to index
    %c0_384 = arith.constant 0 : index
    %c0_385 = arith.constant 0 : index
    %789 = vector.load %arg14[%788, %c0_384, %c0_385] : memref<8x2x32xf32, #tpu.memory_space<vmem>>, vector<1x2x32xf32>
    %790 = vector.shape_cast %789 : vector<1x2x32xf32> to vector<2x32xf32>
    %791 = vector.shape_cast %787 : vector<2x32xf32> to vector<1x2x32xf32>
    tpu.vector_store %arg14[%788, %c0_384, %c0_385], %791 {strides = array<i32>} : memref<8x2x32xf32, #tpu.memory_space<vmem>>, vector<1x2x32xf32>,
    %c7_i32_386 = arith.constant 7 : i32
    %792 = arith.index_cast %c7_i32_386 : i32 to index
    %c0_387 = arith.constant 0 : index
    %c0_388 = arith.constant 0 : index
    %793 = vector.load %arg15[%792, %c0_387, %c0_388] : memref<8x2x128xf32, #tpu.memory_space<vmem>>, vector<1x2x128xf32>
    %794 = vector.shape_cast %793 : vector<1x2x128xf32> to vector<2x128xf32>
    %c0_389 = arith.constant 0 : index
    %c0_390 = arith.constant 0 : index
    %795 = vector.load %arg11[%c0_389, %c0_390] : memref<32x128xf32, #tpu.memory_space<vmem>>, vector<32x128xf32>
    %cst_391 = arith.constant dense<0.000000e+00> : vector<2x128xf32>
    %796 = tpu.matmul %751, %795, %cst_391 {dimension_numbers = #tpu.dot_dimension_numbers<[1], [0], [0], [1], [0, 0, 1, 1], [], []>} : vector<2x32xf32>, vector<32x128xf32>, vector<2x128xf32> -> vector<2x128xf32>
    %797 = arith.addf %794, %796 : vector<2x128xf32>
    %798 = vector.extract_strided_slice %797 {offsets = [0, 0], sizes = [2, 32], strides = [1, 1]} : vector<2x128xf32> to vector<2x32xf32>
    %799 = arith.negf %798 : vector<2x32xf32>
    %800 = math.exp %799 : vector<2x32xf32>
    %cst_392 = arith.constant 1.000000e+00 : f32
    %801 = vector.broadcast %cst_392 : f32 to vector<2x32xf32>
    %802 = arith.addf %801, %800 : vector<2x32xf32>
    %803 = arith.divf %801, %802 : vector<2x32xf32>
    %804 = vector.extract_strided_slice %797 {offsets = [0, 32], sizes = [2, 32], strides = [1, 1]} : vector<2x128xf32> to vector<2x32xf32>
    %805 = arith.negf %804 : vector<2x32xf32>
    %806 = math.exp %805 : vector<2x32xf32>
    %cst_393 = arith.constant 1.000000e+00 : f32
    %807 = vector.broadcast %cst_393 : f32 to vector<2x32xf32>
    %808 = arith.addf %807, %806 : vector<2x32xf32>
    %809 = arith.divf %807, %808 : vector<2x32xf32>
    %810 = vector.extract_strided_slice %797 {offsets = [0, 64], sizes = [2, 32], strides = [1, 1]} : vector<2x128xf32> to vector<2x32xf32>
    %811 = math.tanh %810 : vector<2x32xf32>
    %812 = vector.extract_strided_slice %797 {offsets = [0, 96], sizes = [2, 32], strides = [1, 1]} : vector<2x128xf32> to vector<2x32xf32>
    %813 = arith.negf %812 : vector<2x32xf32>
    %814 = math.exp %813 : vector<2x32xf32>
    %cst_394 = arith.constant 1.000000e+00 : f32
    %815 = vector.broadcast %cst_394 : f32 to vector<2x32xf32>
    %816 = arith.addf %815, %814 : vector<2x32xf32>
    %817 = arith.divf %815, %816 : vector<2x32xf32>
    %818 = arith.mulf %809, %749 : vector<2x32xf32>
    %819 = arith.mulf %803, %811 : vector<2x32xf32>
    %820 = arith.addf %818, %819 : vector<2x32xf32>
    %821 = math.tanh %820 : vector<2x32xf32>
    %822 = arith.mulf %817, %821 : vector<2x32xf32>
    %823 = arith.index_cast %c7_i32_386 : i32 to index
    %c0_395 = arith.constant 0 : index
    %c0_396 = arith.constant 0 : index
    %824 = vector.load %arg13[%823, %c0_395, %c0_396] : memref<8x2x32xf32, #tpu.memory_space<vmem>>, vector<1x2x32xf32>
    %825 = vector.shape_cast %824 : vector<1x2x32xf32> to vector<2x32xf32>
    %826 = vector.shape_cast %822 : vector<2x32xf32> to vector<1x2x32xf32>
    tpu.vector_store %arg13[%823, %c0_395, %c0_396], %826 {strides = array<i32>} : memref<8x2x32xf32, #tpu.memory_space<vmem>>, vector<1x2x32xf32>,
    %c7_i32_397 = arith.constant 7 : i32
    %827 = arith.subi %c7_i32_397, %c7_i32_386 : i32
    %828 = arith.index_cast %827 : i32 to index
    %c0_398 = arith.constant 0 : index
    %c0_399 = arith.constant 0 : index
    %829 = vector.load %arg16[%828, %c0_398, %c0_399] : memref<8x2x128xf32, #tpu.memory_space<vmem>>, vector<1x2x128xf32>
    %830 = vector.shape_cast %829 : vector<1x2x128xf32> to vector<2x128xf32>
    %c0_400 = arith.constant 0 : index
    %c0_401 = arith.constant 0 : index
    %831 = vector.load %arg12[%c0_400, %c0_401] : memref<32x128xf32, #tpu.memory_space<vmem>>, vector<32x128xf32>
    %cst_402 = arith.constant dense<0.000000e+00> : vector<2x128xf32>
    %832 = tpu.matmul %787, %831, %cst_402 {dimension_numbers = #tpu.dot_dimension_numbers<[1], [0], [0], [1], [0, 0, 1, 1], [], []>} : vector<2x32xf32>, vector<32x128xf32>, vector<2x128xf32> -> vector<2x128xf32>
    %833 = arith.addf %830, %832 : vector<2x128xf32>
    %834 = vector.extract_strided_slice %833 {offsets = [0, 0], sizes = [2, 32], strides = [1, 1]} : vector<2x128xf32> to vector<2x32xf32>
    %835 = arith.negf %834 : vector<2x32xf32>
    %836 = math.exp %835 : vector<2x32xf32>
    %cst_403 = arith.constant 1.000000e+00 : f32
    %837 = vector.broadcast %cst_403 : f32 to vector<2x32xf32>
    %838 = arith.addf %837, %836 : vector<2x32xf32>
    %839 = arith.divf %837, %838 : vector<2x32xf32>
    %840 = vector.extract_strided_slice %833 {offsets = [0, 32], sizes = [2, 32], strides = [1, 1]} : vector<2x128xf32> to vector<2x32xf32>
    %841 = arith.negf %840 : vector<2x32xf32>
    %842 = math.exp %841 : vector<2x32xf32>
    %cst_404 = arith.constant 1.000000e+00 : f32
    %843 = vector.broadcast %cst_404 : f32 to vector<2x32xf32>
    %844 = arith.addf %843, %842 : vector<2x32xf32>
    %845 = arith.divf %843, %844 : vector<2x32xf32>
    %846 = vector.extract_strided_slice %833 {offsets = [0, 64], sizes = [2, 32], strides = [1, 1]} : vector<2x128xf32> to vector<2x32xf32>
    %847 = math.tanh %846 : vector<2x32xf32>
    %848 = vector.extract_strided_slice %833 {offsets = [0, 96], sizes = [2, 32], strides = [1, 1]} : vector<2x128xf32> to vector<2x32xf32>
    %849 = arith.negf %848 : vector<2x32xf32>
    %850 = math.exp %849 : vector<2x32xf32>
    %cst_405 = arith.constant 1.000000e+00 : f32
    %851 = vector.broadcast %cst_405 : f32 to vector<2x32xf32>
    %852 = arith.addf %851, %850 : vector<2x32xf32>
    %853 = arith.divf %851, %852 : vector<2x32xf32>
    %854 = arith.mulf %845, %785 : vector<2x32xf32>
    %855 = arith.mulf %839, %847 : vector<2x32xf32>
    %856 = arith.addf %854, %855 : vector<2x32xf32>
    %857 = math.tanh %856 : vector<2x32xf32>
    %858 = arith.mulf %853, %857 : vector<2x32xf32>
    %859 = arith.index_cast %827 : i32 to index
    %c0_406 = arith.constant 0 : index
    %c0_407 = arith.constant 0 : index
    %860 = vector.load %arg14[%859, %c0_406, %c0_407] : memref<8x2x32xf32, #tpu.memory_space<vmem>>, vector<1x2x32xf32>
    %861 = vector.shape_cast %860 : vector<1x2x32xf32> to vector<2x32xf32>
    %862 = vector.shape_cast %858 : vector<2x32xf32> to vector<1x2x32xf32>
    tpu.vector_store %arg14[%859, %c0_406, %c0_407], %862 {strides = array<i32>} : memref<8x2x32xf32, #tpu.memory_space<vmem>>, vector<1x2x32xf32>,
    %c8_i32_408 = arith.constant 8 : i32
    %c0_409 = arith.constant 0 : index
    %c0_410 = arith.constant 0 : index
    %863 = vector.load %arg17[%c0_409, %c0_410] : memref<2x32xf32, #tpu.memory_space<vmem>>, vector<2x32xf32>
    tpu.vector_store %arg17[%c0_409, %c0_410], %822 {strides = array<i32>} : memref<2x32xf32, #tpu.memory_space<vmem>>, vector<2x32xf32>,
    %c0_411 = arith.constant 0 : index
    %c0_412 = arith.constant 0 : index
    %864 = vector.load %arg18[%c0_411, %c0_412] : memref<2x32xf32, #tpu.memory_space<vmem>>, vector<2x32xf32>
    tpu.vector_store %arg18[%c0_411, %c0_412], %820 {strides = array<i32>} : memref<2x32xf32, #tpu.memory_space<vmem>>, vector<2x32xf32>,
    %c0_413 = arith.constant 0 : index
    %c0_414 = arith.constant 0 : index
    %865 = vector.load %arg19[%c0_413, %c0_414] : memref<2x32xf32, #tpu.memory_space<vmem>>, vector<2x32xf32>
    tpu.vector_store %arg19[%c0_413, %c0_414], %858 {strides = array<i32>} : memref<2x32xf32, #tpu.memory_space<vmem>>, vector<2x32xf32>,
    %c0_415 = arith.constant 0 : index
    %c0_416 = arith.constant 0 : index
    %866 = vector.load %arg20[%c0_415, %c0_416] : memref<2x32xf32, #tpu.memory_space<vmem>>, vector<2x32xf32>
    tpu.vector_store %arg20[%c0_415, %c0_416], %856 {strides = array<i32>} : memref<2x32xf32, #tpu.memory_space<vmem>>, vector<2x32xf32>,
    return
  }
  func.func @transform_0(%arg0: i32) -> (i32, i32, i32) {
    %c0_i32 = arith.constant 0 : i32
    %c0_i32_0 = arith.constant 0 : i32
    %c0_i32_1 = arith.constant 0 : i32
    return %arg0, %c0_i32, %c0_i32_0 : i32, i32, i32
  }
  func.func @transform_1(%arg0: i32) -> (i32, i32, i32) {
    %c0_i32 = arith.constant 0 : i32
    %c0_i32_0 = arith.constant 0 : i32
    %c0_i32_1 = arith.constant 0 : i32
    return %arg0, %c0_i32, %c0_i32_0 : i32, i32, i32
  }
  func.func @transform_2(%arg0: i32) -> (i32, i32, i32) {
    %c0_i32 = arith.constant 0 : i32
    %0 = arith.subi %c0_i32, %arg0 : i32
    %c0_i32_0 = arith.constant 0 : i32
    %c0_i32_1 = arith.constant 0 : i32
    %c0_i32_2 = arith.constant 0 : i32
    return %0, %c0_i32_0, %c0_i32_1 : i32, i32, i32
  }
  func.func @transform_3(%arg0: i32) -> (i32, i32, i32) {
    %c0_i32 = arith.constant 0 : i32
    %0 = arith.subi %c0_i32, %arg0 : i32
    %c0_i32_0 = arith.constant 0 : i32
    %c0_i32_1 = arith.constant 0 : i32
    %c0_i32_2 = arith.constant 0 : i32
    return %0, %c0_i32_0, %c0_i32_1 : i32, i32, i32
  }
  func.func @transform_4(%arg0: i32) -> (i32, i32) {
    %c0_i32 = arith.constant 0 : i32
    %c0_i32_0 = arith.constant 0 : i32
    %c0_i32_1 = arith.constant 0 : i32
    return %c0_i32, %c0_i32_0 : i32, i32
  }
  func.func @transform_5(%arg0: i32) -> (i32, i32) {
    %c0_i32 = arith.constant 0 : i32
    %c0_i32_0 = arith.constant 0 : i32
    %c0_i32_1 = arith.constant 0 : i32
    return %c0_i32, %c0_i32_0 : i32, i32
  }
  func.func @transform_6(%arg0: i32) -> (i32, i32) {
    %c0_i32 = arith.constant 0 : i32
    %c0_i32_0 = arith.constant 0 : i32
    %c0_i32_1 = arith.constant 0 : i32
    return %c0_i32, %c0_i32_0 : i32, i32
  }
  func.func @transform_7(%arg0: i32) -> (i32, i32) {
    %c0_i32 = arith.constant 0 : i32
    %c0_i32_0 = arith.constant 0 : i32
    %c0_i32_1 = arith.constant 0 : i32
    return %c0_i32, %c0_i32_0 : i32, i32
  }
  func.func @transform_8(%arg0: i32) -> (i32, i32) {
    %c0_i32 = arith.constant 0 : i32
    %c0_i32_0 = arith.constant 0 : i32
    %c0_i32_1 = arith.constant 0 : i32
    return %c0_i32, %c0_i32_0 : i32, i32
  }
  func.func @transform_9(%arg0: i32) -> (i32, i32) {
    %c0_i32 = arith.constant 0 : i32
    %c0_i32_0 = arith.constant 0 : i32
    %c0_i32_1 = arith.constant 0 : i32
    return %c0_i32, %c0_i32_0 : i32, i32
  }
  func.func @transform_10(%arg0: i32) -> (i32, i32) {
    %c0_i32 = arith.constant 0 : i32
    %c0_i32_0 = arith.constant 0 : i32
    %c0_i32_1 = arith.constant 0 : i32
    return %c0_i32, %c0_i32_0 : i32, i32
  }
  func.func @transform_11(%arg0: i32) -> (i32, i32) {
    %c0_i32 = arith.constant 0 : i32
    %c0_i32_0 = arith.constant 0 : i32
    %c0_i32_1 = arith.constant 0 : i32
    return %c0_i32, %c0_i32_0 : i32, i32
  }
  func.func @transform_12(%arg0: i32) -> (i32, i32, i32) {
    %c0_i32 = arith.constant 0 : i32
    %c0_i32_0 = arith.constant 0 : i32
    %c0_i32_1 = arith.constant 0 : i32
    return %arg0, %c0_i32, %c0_i32_0 : i32, i32, i32
  }
  func.func @transform_13(%arg0: i32) -> (i32, i32, i32) {
    %c0_i32 = arith.constant 0 : i32
    %0 = arith.subi %c0_i32, %arg0 : i32
    %c0_i32_0 = arith.constant 0 : i32
    %c0_i32_1 = arith.constant 0 : i32
    %c0_i32_2 = arith.constant 0 : i32
    return %0, %c0_i32_0, %c0_i32_1 : i32, i32, i32
  }
}

module attributes {stable_mosaic.version = 11 : i64} {
  func.func @_bilstm_layer0_kernel(%arg0: i32, %arg1: memref<8x2x16xf32, #tpu.memory_space<vmem>>, %arg2: memref<8x2x16xf32, #tpu.memory_space<vmem>>, %arg3: memref<16x128xf32, #tpu.memory_space<vmem>>, %arg4: memref<16x128xf32, #tpu.memory_space<vmem>>, %arg5: memref<1x128xf32, #tpu.memory_space<vmem>>, %arg6: memref<1x128xf32, #tpu.memory_space<vmem>>, %arg7: memref<32x128xf32, #tpu.memory_space<vmem>>, %arg8: memref<32x128xf32, #tpu.memory_space<vmem>>, %arg9: memref<8x2x32xf32, #tpu.memory_space<vmem>>, %arg10: memref<8x2x32xf32, #tpu.memory_space<vmem>>, %arg11: memref<8x2x128xf32, #tpu.memory_space<vmem>>, %arg12: memref<8x2x128xf32, #tpu.memory_space<vmem>>, %arg13: memref<2x32xf32, #tpu.memory_space<vmem>>, %arg14: memref<2x32xf32, #tpu.memory_space<vmem>>, %arg15: memref<2x32xf32, #tpu.memory_space<vmem>>, %arg16: memref<2x32xf32, #tpu.memory_space<vmem>>) attributes {dimension_semantics = [#tpu.dimension_semantics<arbitrary>], iteration_bounds = array<i64: 1>, scalar_prefetch = 0 : i64, scratch_operands = 6 : i64, tpu.core_type = #tpu.core_type<tc>, window_params = [{transform_indices = @transform_0, window_bounds = array<i64: 8, 2, 16>}, {transform_indices = @transform_1, window_bounds = array<i64: 8, 2, 16>}, {pipeline_mode = #tpu.pipeline_mode<synchronous>, transform_indices = @transform_2, window_bounds = array<i64: 16, 128>}, {pipeline_mode = #tpu.pipeline_mode<synchronous>, transform_indices = @transform_3, window_bounds = array<i64: 16, 128>}, {pipeline_mode = #tpu.pipeline_mode<synchronous>, transform_indices = @transform_4, window_bounds = array<i64: 1, 128>}, {pipeline_mode = #tpu.pipeline_mode<synchronous>, transform_indices = @transform_5, window_bounds = array<i64: 1, 128>}, {pipeline_mode = #tpu.pipeline_mode<synchronous>, transform_indices = @transform_6, window_bounds = array<i64: 32, 128>}, {pipeline_mode = #tpu.pipeline_mode<synchronous>, transform_indices = @transform_7, window_bounds = array<i64: 32, 128>}, {transform_indices = @transform_8, window_bounds = array<i64: 8, 2, 32>}, {transform_indices = @transform_9, window_bounds = array<i64: 8, 2, 32>}]} {
    %c0_i32 = arith.constant 0 : i32
    %0 = arith.index_cast %c0_i32 : i32 to index
    %c0 = arith.constant 0 : index
    %c0_0 = arith.constant 0 : index
    %1 = vector.load %arg1[%0, %c0, %c0_0] : memref<8x2x16xf32, #tpu.memory_space<vmem>>, vector<1x2x16xf32>
    %2 = vector.shape_cast %1 : vector<1x2x16xf32> to vector<2x16xf32>
    %c0_1 = arith.constant 0 : index
    %c0_2 = arith.constant 0 : index
    %3 = vector.load %arg3[%c0_1, %c0_2] : memref<16x128xf32, #tpu.memory_space<vmem>>, vector<16x128xf32>
    %cst = arith.constant dense<0.000000e+00> : vector<2x128xf32>
    %4 = tpu.matmul %2, %3, %cst {dimension_numbers = #tpu.dot_dimension_numbers<[1], [0], [0], [1], [0, 0, 1, 1], [], []>} : vector<2x16xf32>, vector<16x128xf32>, vector<2x128xf32> -> vector<2x128xf32>
    %c0_3 = arith.constant 0 : index
    %c0_4 = arith.constant 0 : index
    %5 = vector.load %arg5[%c0_3, %c0_4] : memref<1x128xf32, #tpu.memory_space<vmem>>, vector<1x128xf32>
    %6 = vector.broadcast %5 : vector<1x128xf32> to vector<2x128xf32>
    %7 = arith.addf %4, %6 : vector<2x128xf32>
    %8 = arith.index_cast %c0_i32 : i32 to index
    %c0_5 = arith.constant 0 : index
    %c0_6 = arith.constant 0 : index
    %9 = vector.load %arg11[%8, %c0_5, %c0_6] : memref<8x2x128xf32, #tpu.memory_space<vmem>>, vector<1x2x128xf32>
    %10 = vector.shape_cast %9 : vector<1x2x128xf32> to vector<2x128xf32>
    %11 = vector.shape_cast %7 : vector<2x128xf32> to vector<1x2x128xf32>
    tpu.vector_store %arg11[%8, %c0_5, %c0_6], %11 {strides = array<i32>} : memref<8x2x128xf32, #tpu.memory_space<vmem>>, vector<1x2x128xf32>,
    %12 = arith.index_cast %c0_i32 : i32 to index
    %c0_7 = arith.constant 0 : index
    %c0_8 = arith.constant 0 : index
    %13 = vector.load %arg2[%12, %c0_7, %c0_8] : memref<8x2x16xf32, #tpu.memory_space<vmem>>, vector<1x2x16xf32>
    %14 = vector.shape_cast %13 : vector<1x2x16xf32> to vector<2x16xf32>
    %c0_9 = arith.constant 0 : index
    %c0_10 = arith.constant 0 : index
    %15 = vector.load %arg4[%c0_9, %c0_10] : memref<16x128xf32, #tpu.memory_space<vmem>>, vector<16x128xf32>
    %cst_11 = arith.constant dense<0.000000e+00> : vector<2x128xf32>
    %16 = tpu.matmul %14, %15, %cst_11 {dimension_numbers = #tpu.dot_dimension_numbers<[1], [0], [0], [1], [0, 0, 1, 1], [], []>} : vector<2x16xf32>, vector<16x128xf32>, vector<2x128xf32> -> vector<2x128xf32>
    %c0_12 = arith.constant 0 : index
    %c0_13 = arith.constant 0 : index
    %17 = vector.load %arg6[%c0_12, %c0_13] : memref<1x128xf32, #tpu.memory_space<vmem>>, vector<1x128xf32>
    %18 = vector.broadcast %17 : vector<1x128xf32> to vector<2x128xf32>
    %19 = arith.addf %16, %18 : vector<2x128xf32>
    %20 = arith.index_cast %c0_i32 : i32 to index
    %c0_14 = arith.constant 0 : index
    %c0_15 = arith.constant 0 : index
    %21 = vector.load %arg12[%20, %c0_14, %c0_15] : memref<8x2x128xf32, #tpu.memory_space<vmem>>, vector<1x2x128xf32>
    %22 = vector.shape_cast %21 : vector<1x2x128xf32> to vector<2x128xf32>
    %23 = vector.shape_cast %19 : vector<2x128xf32> to vector<1x2x128xf32>
    tpu.vector_store %arg12[%20, %c0_14, %c0_15], %23 {strides = array<i32>} : memref<8x2x128xf32, #tpu.memory_space<vmem>>, vector<1x2x128xf32>,
    %c1_i32 = arith.constant 1 : i32
    %24 = arith.index_cast %c1_i32 : i32 to index
    %c0_16 = arith.constant 0 : index
    %c0_17 = arith.constant 0 : index
    %25 = vector.load %arg1[%24, %c0_16, %c0_17] : memref<8x2x16xf32, #tpu.memory_space<vmem>>, vector<1x2x16xf32>
    %26 = vector.shape_cast %25 : vector<1x2x16xf32> to vector<2x16xf32>
    %c0_18 = arith.constant 0 : index
    %c0_19 = arith.constant 0 : index
    %27 = vector.load %arg3[%c0_18, %c0_19] : memref<16x128xf32, #tpu.memory_space<vmem>>, vector<16x128xf32>
    %cst_20 = arith.constant dense<0.000000e+00> : vector<2x128xf32>
    %28 = tpu.matmul %26, %27, %cst_20 {dimension_numbers = #tpu.dot_dimension_numbers<[1], [0], [0], [1], [0, 0, 1, 1], [], []>} : vector<2x16xf32>, vector<16x128xf32>, vector<2x128xf32> -> vector<2x128xf32>
    %c0_21 = arith.constant 0 : index
    %c0_22 = arith.constant 0 : index
    %29 = vector.load %arg5[%c0_21, %c0_22] : memref<1x128xf32, #tpu.memory_space<vmem>>, vector<1x128xf32>
    %30 = vector.broadcast %29 : vector<1x128xf32> to vector<2x128xf32>
    %31 = arith.addf %28, %30 : vector<2x128xf32>
    %32 = arith.index_cast %c1_i32 : i32 to index
    %c0_23 = arith.constant 0 : index
    %c0_24 = arith.constant 0 : index
    %33 = vector.load %arg11[%32, %c0_23, %c0_24] : memref<8x2x128xf32, #tpu.memory_space<vmem>>, vector<1x2x128xf32>
    %34 = vector.shape_cast %33 : vector<1x2x128xf32> to vector<2x128xf32>
    %35 = vector.shape_cast %31 : vector<2x128xf32> to vector<1x2x128xf32>
    tpu.vector_store %arg11[%32, %c0_23, %c0_24], %35 {strides = array<i32>} : memref<8x2x128xf32, #tpu.memory_space<vmem>>, vector<1x2x128xf32>,
    %36 = arith.index_cast %c1_i32 : i32 to index
    %c0_25 = arith.constant 0 : index
    %c0_26 = arith.constant 0 : index
    %37 = vector.load %arg2[%36, %c0_25, %c0_26] : memref<8x2x16xf32, #tpu.memory_space<vmem>>, vector<1x2x16xf32>
    %38 = vector.shape_cast %37 : vector<1x2x16xf32> to vector<2x16xf32>
    %c0_27 = arith.constant 0 : index
    %c0_28 = arith.constant 0 : index
    %39 = vector.load %arg4[%c0_27, %c0_28] : memref<16x128xf32, #tpu.memory_space<vmem>>, vector<16x128xf32>
    %cst_29 = arith.constant dense<0.000000e+00> : vector<2x128xf32>
    %40 = tpu.matmul %38, %39, %cst_29 {dimension_numbers = #tpu.dot_dimension_numbers<[1], [0], [0], [1], [0, 0, 1, 1], [], []>} : vector<2x16xf32>, vector<16x128xf32>, vector<2x128xf32> -> vector<2x128xf32>
    %c0_30 = arith.constant 0 : index
    %c0_31 = arith.constant 0 : index
    %41 = vector.load %arg6[%c0_30, %c0_31] : memref<1x128xf32, #tpu.memory_space<vmem>>, vector<1x128xf32>
    %42 = vector.broadcast %41 : vector<1x128xf32> to vector<2x128xf32>
    %43 = arith.addf %40, %42 : vector<2x128xf32>
    %44 = arith.index_cast %c1_i32 : i32 to index
    %c0_32 = arith.constant 0 : index
    %c0_33 = arith.constant 0 : index
    %45 = vector.load %arg12[%44, %c0_32, %c0_33] : memref<8x2x128xf32, #tpu.memory_space<vmem>>, vector<1x2x128xf32>
    %46 = vector.shape_cast %45 : vector<1x2x128xf32> to vector<2x128xf32>
    %47 = vector.shape_cast %43 : vector<2x128xf32> to vector<1x2x128xf32>
    tpu.vector_store %arg12[%44, %c0_32, %c0_33], %47 {strides = array<i32>} : memref<8x2x128xf32, #tpu.memory_space<vmem>>, vector<1x2x128xf32>,
    %c2_i32 = arith.constant 2 : i32
    %48 = arith.index_cast %c2_i32 : i32 to index
    %c0_34 = arith.constant 0 : index
    %c0_35 = arith.constant 0 : index
    %49 = vector.load %arg1[%48, %c0_34, %c0_35] : memref<8x2x16xf32, #tpu.memory_space<vmem>>, vector<1x2x16xf32>
    %50 = vector.shape_cast %49 : vector<1x2x16xf32> to vector<2x16xf32>
    %c0_36 = arith.constant 0 : index
    %c0_37 = arith.constant 0 : index
    %51 = vector.load %arg3[%c0_36, %c0_37] : memref<16x128xf32, #tpu.memory_space<vmem>>, vector<16x128xf32>
    %cst_38 = arith.constant dense<0.000000e+00> : vector<2x128xf32>
    %52 = tpu.matmul %50, %51, %cst_38 {dimension_numbers = #tpu.dot_dimension_numbers<[1], [0], [0], [1], [0, 0, 1, 1], [], []>} : vector<2x16xf32>, vector<16x128xf32>, vector<2x128xf32> -> vector<2x128xf32>
    %c0_39 = arith.constant 0 : index
    %c0_40 = arith.constant 0 : index
    %53 = vector.load %arg5[%c0_39, %c0_40] : memref<1x128xf32, #tpu.memory_space<vmem>>, vector<1x128xf32>
    %54 = vector.broadcast %53 : vector<1x128xf32> to vector<2x128xf32>
    %55 = arith.addf %52, %54 : vector<2x128xf32>
    %56 = arith.index_cast %c2_i32 : i32 to index
    %c0_41 = arith.constant 0 : index
    %c0_42 = arith.constant 0 : index
    %57 = vector.load %arg11[%56, %c0_41, %c0_42] : memref<8x2x128xf32, #tpu.memory_space<vmem>>, vector<1x2x128xf32>
    %58 = vector.shape_cast %57 : vector<1x2x128xf32> to vector<2x128xf32>
    %59 = vector.shape_cast %55 : vector<2x128xf32> to vector<1x2x128xf32>
    tpu.vector_store %arg11[%56, %c0_41, %c0_42], %59 {strides = array<i32>} : memref<8x2x128xf32, #tpu.memory_space<vmem>>, vector<1x2x128xf32>,
    %60 = arith.index_cast %c2_i32 : i32 to index
    %c0_43 = arith.constant 0 : index
    %c0_44 = arith.constant 0 : index
    %61 = vector.load %arg2[%60, %c0_43, %c0_44] : memref<8x2x16xf32, #tpu.memory_space<vmem>>, vector<1x2x16xf32>
    %62 = vector.shape_cast %61 : vector<1x2x16xf32> to vector<2x16xf32>
    %c0_45 = arith.constant 0 : index
    %c0_46 = arith.constant 0 : index
    %63 = vector.load %arg4[%c0_45, %c0_46] : memref<16x128xf32, #tpu.memory_space<vmem>>, vector<16x128xf32>
    %cst_47 = arith.constant dense<0.000000e+00> : vector<2x128xf32>
    %64 = tpu.matmul %62, %63, %cst_47 {dimension_numbers = #tpu.dot_dimension_numbers<[1], [0], [0], [1], [0, 0, 1, 1], [], []>} : vector<2x16xf32>, vector<16x128xf32>, vector<2x128xf32> -> vector<2x128xf32>
    %c0_48 = arith.constant 0 : index
    %c0_49 = arith.constant 0 : index
    %65 = vector.load %arg6[%c0_48, %c0_49] : memref<1x128xf32, #tpu.memory_space<vmem>>, vector<1x128xf32>
    %66 = vector.broadcast %65 : vector<1x128xf32> to vector<2x128xf32>
    %67 = arith.addf %64, %66 : vector<2x128xf32>
    %68 = arith.index_cast %c2_i32 : i32 to index
    %c0_50 = arith.constant 0 : index
    %c0_51 = arith.constant 0 : index
    %69 = vector.load %arg12[%68, %c0_50, %c0_51] : memref<8x2x128xf32, #tpu.memory_space<vmem>>, vector<1x2x128xf32>
    %70 = vector.shape_cast %69 : vector<1x2x128xf32> to vector<2x128xf32>
    %71 = vector.shape_cast %67 : vector<2x128xf32> to vector<1x2x128xf32>
    tpu.vector_store %arg12[%68, %c0_50, %c0_51], %71 {strides = array<i32>} : memref<8x2x128xf32, #tpu.memory_space<vmem>>, vector<1x2x128xf32>,
    %c3_i32 = arith.constant 3 : i32
    %72 = arith.index_cast %c3_i32 : i32 to index
    %c0_52 = arith.constant 0 : index
    %c0_53 = arith.constant 0 : index
    %73 = vector.load %arg1[%72, %c0_52, %c0_53] : memref<8x2x16xf32, #tpu.memory_space<vmem>>, vector<1x2x16xf32>
    %74 = vector.shape_cast %73 : vector<1x2x16xf32> to vector<2x16xf32>
    %c0_54 = arith.constant 0 : index
    %c0_55 = arith.constant 0 : index
    %75 = vector.load %arg3[%c0_54, %c0_55] : memref<16x128xf32, #tpu.memory_space<vmem>>, vector<16x128xf32>
    %cst_56 = arith.constant dense<0.000000e+00> : vector<2x128xf32>
    %76 = tpu.matmul %74, %75, %cst_56 {dimension_numbers = #tpu.dot_dimension_numbers<[1], [0], [0], [1], [0, 0, 1, 1], [], []>} : vector<2x16xf32>, vector<16x128xf32>, vector<2x128xf32> -> vector<2x128xf32>
    %c0_57 = arith.constant 0 : index
    %c0_58 = arith.constant 0 : index
    %77 = vector.load %arg5[%c0_57, %c0_58] : memref<1x128xf32, #tpu.memory_space<vmem>>, vector<1x128xf32>
    %78 = vector.broadcast %77 : vector<1x128xf32> to vector<2x128xf32>
    %79 = arith.addf %76, %78 : vector<2x128xf32>
    %80 = arith.index_cast %c3_i32 : i32 to index
    %c0_59 = arith.constant 0 : index
    %c0_60 = arith.constant 0 : index
    %81 = vector.load %arg11[%80, %c0_59, %c0_60] : memref<8x2x128xf32, #tpu.memory_space<vmem>>, vector<1x2x128xf32>
    %82 = vector.shape_cast %81 : vector<1x2x128xf32> to vector<2x128xf32>
    %83 = vector.shape_cast %79 : vector<2x128xf32> to vector<1x2x128xf32>
    tpu.vector_store %arg11[%80, %c0_59, %c0_60], %83 {strides = array<i32>} : memref<8x2x128xf32, #tpu.memory_space<vmem>>, vector<1x2x128xf32>,
    %84 = arith.index_cast %c3_i32 : i32 to index
    %c0_61 = arith.constant 0 : index
    %c0_62 = arith.constant 0 : index
    %85 = vector.load %arg2[%84, %c0_61, %c0_62] : memref<8x2x16xf32, #tpu.memory_space<vmem>>, vector<1x2x16xf32>
    %86 = vector.shape_cast %85 : vector<1x2x16xf32> to vector<2x16xf32>
    %c0_63 = arith.constant 0 : index
    %c0_64 = arith.constant 0 : index
    %87 = vector.load %arg4[%c0_63, %c0_64] : memref<16x128xf32, #tpu.memory_space<vmem>>, vector<16x128xf32>
    %cst_65 = arith.constant dense<0.000000e+00> : vector<2x128xf32>
    %88 = tpu.matmul %86, %87, %cst_65 {dimension_numbers = #tpu.dot_dimension_numbers<[1], [0], [0], [1], [0, 0, 1, 1], [], []>} : vector<2x16xf32>, vector<16x128xf32>, vector<2x128xf32> -> vector<2x128xf32>
    %c0_66 = arith.constant 0 : index
    %c0_67 = arith.constant 0 : index
    %89 = vector.load %arg6[%c0_66, %c0_67] : memref<1x128xf32, #tpu.memory_space<vmem>>, vector<1x128xf32>
    %90 = vector.broadcast %89 : vector<1x128xf32> to vector<2x128xf32>
    %91 = arith.addf %88, %90 : vector<2x128xf32>
    %92 = arith.index_cast %c3_i32 : i32 to index
    %c0_68 = arith.constant 0 : index
    %c0_69 = arith.constant 0 : index
    %93 = vector.load %arg12[%92, %c0_68, %c0_69] : memref<8x2x128xf32, #tpu.memory_space<vmem>>, vector<1x2x128xf32>
    %94 = vector.shape_cast %93 : vector<1x2x128xf32> to vector<2x128xf32>
    %95 = vector.shape_cast %91 : vector<2x128xf32> to vector<1x2x128xf32>
    tpu.vector_store %arg12[%92, %c0_68, %c0_69], %95 {strides = array<i32>} : memref<8x2x128xf32, #tpu.memory_space<vmem>>, vector<1x2x128xf32>,
    %c4_i32 = arith.constant 4 : i32
    %96 = arith.index_cast %c4_i32 : i32 to index
    %c0_70 = arith.constant 0 : index
    %c0_71 = arith.constant 0 : index
    %97 = vector.load %arg1[%96, %c0_70, %c0_71] : memref<8x2x16xf32, #tpu.memory_space<vmem>>, vector<1x2x16xf32>
    %98 = vector.shape_cast %97 : vector<1x2x16xf32> to vector<2x16xf32>
    %c0_72 = arith.constant 0 : index
    %c0_73 = arith.constant 0 : index
    %99 = vector.load %arg3[%c0_72, %c0_73] : memref<16x128xf32, #tpu.memory_space<vmem>>, vector<16x128xf32>
    %cst_74 = arith.constant dense<0.000000e+00> : vector<2x128xf32>
    %100 = tpu.matmul %98, %99, %cst_74 {dimension_numbers = #tpu.dot_dimension_numbers<[1], [0], [0], [1], [0, 0, 1, 1], [], []>} : vector<2x16xf32>, vector<16x128xf32>, vector<2x128xf32> -> vector<2x128xf32>
    %c0_75 = arith.constant 0 : index
    %c0_76 = arith.constant 0 : index
    %101 = vector.load %arg5[%c0_75, %c0_76] : memref<1x128xf32, #tpu.memory_space<vmem>>, vector<1x128xf32>
    %102 = vector.broadcast %101 : vector<1x128xf32> to vector<2x128xf32>
    %103 = arith.addf %100, %102 : vector<2x128xf32>
    %104 = arith.index_cast %c4_i32 : i32 to index
    %c0_77 = arith.constant 0 : index
    %c0_78 = arith.constant 0 : index
    %105 = vector.load %arg11[%104, %c0_77, %c0_78] : memref<8x2x128xf32, #tpu.memory_space<vmem>>, vector<1x2x128xf32>
    %106 = vector.shape_cast %105 : vector<1x2x128xf32> to vector<2x128xf32>
    %107 = vector.shape_cast %103 : vector<2x128xf32> to vector<1x2x128xf32>
    tpu.vector_store %arg11[%104, %c0_77, %c0_78], %107 {strides = array<i32>} : memref<8x2x128xf32, #tpu.memory_space<vmem>>, vector<1x2x128xf32>,
    %108 = arith.index_cast %c4_i32 : i32 to index
    %c0_79 = arith.constant 0 : index
    %c0_80 = arith.constant 0 : index
    %109 = vector.load %arg2[%108, %c0_79, %c0_80] : memref<8x2x16xf32, #tpu.memory_space<vmem>>, vector<1x2x16xf32>
    %110 = vector.shape_cast %109 : vector<1x2x16xf32> to vector<2x16xf32>
    %c0_81 = arith.constant 0 : index
    %c0_82 = arith.constant 0 : index
    %111 = vector.load %arg4[%c0_81, %c0_82] : memref<16x128xf32, #tpu.memory_space<vmem>>, vector<16x128xf32>
    %cst_83 = arith.constant dense<0.000000e+00> : vector<2x128xf32>
    %112 = tpu.matmul %110, %111, %cst_83 {dimension_numbers = #tpu.dot_dimension_numbers<[1], [0], [0], [1], [0, 0, 1, 1], [], []>} : vector<2x16xf32>, vector<16x128xf32>, vector<2x128xf32> -> vector<2x128xf32>
    %c0_84 = arith.constant 0 : index
    %c0_85 = arith.constant 0 : index
    %113 = vector.load %arg6[%c0_84, %c0_85] : memref<1x128xf32, #tpu.memory_space<vmem>>, vector<1x128xf32>
    %114 = vector.broadcast %113 : vector<1x128xf32> to vector<2x128xf32>
    %115 = arith.addf %112, %114 : vector<2x128xf32>
    %116 = arith.index_cast %c4_i32 : i32 to index
    %c0_86 = arith.constant 0 : index
    %c0_87 = arith.constant 0 : index
    %117 = vector.load %arg12[%116, %c0_86, %c0_87] : memref<8x2x128xf32, #tpu.memory_space<vmem>>, vector<1x2x128xf32>
    %118 = vector.shape_cast %117 : vector<1x2x128xf32> to vector<2x128xf32>
    %119 = vector.shape_cast %115 : vector<2x128xf32> to vector<1x2x128xf32>
    tpu.vector_store %arg12[%116, %c0_86, %c0_87], %119 {strides = array<i32>} : memref<8x2x128xf32, #tpu.memory_space<vmem>>, vector<1x2x128xf32>,
    %c5_i32 = arith.constant 5 : i32
    %120 = arith.index_cast %c5_i32 : i32 to index
    %c0_88 = arith.constant 0 : index
    %c0_89 = arith.constant 0 : index
    %121 = vector.load %arg1[%120, %c0_88, %c0_89] : memref<8x2x16xf32, #tpu.memory_space<vmem>>, vector<1x2x16xf32>
    %122 = vector.shape_cast %121 : vector<1x2x16xf32> to vector<2x16xf32>
    %c0_90 = arith.constant 0 : index
    %c0_91 = arith.constant 0 : index
    %123 = vector.load %arg3[%c0_90, %c0_91] : memref<16x128xf32, #tpu.memory_space<vmem>>, vector<16x128xf32>
    %cst_92 = arith.constant dense<0.000000e+00> : vector<2x128xf32>
    %124 = tpu.matmul %122, %123, %cst_92 {dimension_numbers = #tpu.dot_dimension_numbers<[1], [0], [0], [1], [0, 0, 1, 1], [], []>} : vector<2x16xf32>, vector<16x128xf32>, vector<2x128xf32> -> vector<2x128xf32>
    %c0_93 = arith.constant 0 : index
    %c0_94 = arith.constant 0 : index
    %125 = vector.load %arg5[%c0_93, %c0_94] : memref<1x128xf32, #tpu.memory_space<vmem>>, vector<1x128xf32>
    %126 = vector.broadcast %125 : vector<1x128xf32> to vector<2x128xf32>
    %127 = arith.addf %124, %126 : vector<2x128xf32>
    %128 = arith.index_cast %c5_i32 : i32 to index
    %c0_95 = arith.constant 0 : index
    %c0_96 = arith.constant 0 : index
    %129 = vector.load %arg11[%128, %c0_95, %c0_96] : memref<8x2x128xf32, #tpu.memory_space<vmem>>, vector<1x2x128xf32>
    %130 = vector.shape_cast %129 : vector<1x2x128xf32> to vector<2x128xf32>
    %131 = vector.shape_cast %127 : vector<2x128xf32> to vector<1x2x128xf32>
    tpu.vector_store %arg11[%128, %c0_95, %c0_96], %131 {strides = array<i32>} : memref<8x2x128xf32, #tpu.memory_space<vmem>>, vector<1x2x128xf32>,
    %132 = arith.index_cast %c5_i32 : i32 to index
    %c0_97 = arith.constant 0 : index
    %c0_98 = arith.constant 0 : index
    %133 = vector.load %arg2[%132, %c0_97, %c0_98] : memref<8x2x16xf32, #tpu.memory_space<vmem>>, vector<1x2x16xf32>
    %134 = vector.shape_cast %133 : vector<1x2x16xf32> to vector<2x16xf32>
    %c0_99 = arith.constant 0 : index
    %c0_100 = arith.constant 0 : index
    %135 = vector.load %arg4[%c0_99, %c0_100] : memref<16x128xf32, #tpu.memory_space<vmem>>, vector<16x128xf32>
    %cst_101 = arith.constant dense<0.000000e+00> : vector<2x128xf32>
    %136 = tpu.matmul %134, %135, %cst_101 {dimension_numbers = #tpu.dot_dimension_numbers<[1], [0], [0], [1], [0, 0, 1, 1], [], []>} : vector<2x16xf32>, vector<16x128xf32>, vector<2x128xf32> -> vector<2x128xf32>
    %c0_102 = arith.constant 0 : index
    %c0_103 = arith.constant 0 : index
    %137 = vector.load %arg6[%c0_102, %c0_103] : memref<1x128xf32, #tpu.memory_space<vmem>>, vector<1x128xf32>
    %138 = vector.broadcast %137 : vector<1x128xf32> to vector<2x128xf32>
    %139 = arith.addf %136, %138 : vector<2x128xf32>
    %140 = arith.index_cast %c5_i32 : i32 to index
    %c0_104 = arith.constant 0 : index
    %c0_105 = arith.constant 0 : index
    %141 = vector.load %arg12[%140, %c0_104, %c0_105] : memref<8x2x128xf32, #tpu.memory_space<vmem>>, vector<1x2x128xf32>
    %142 = vector.shape_cast %141 : vector<1x2x128xf32> to vector<2x128xf32>
    %143 = vector.shape_cast %139 : vector<2x128xf32> to vector<1x2x128xf32>
    tpu.vector_store %arg12[%140, %c0_104, %c0_105], %143 {strides = array<i32>} : memref<8x2x128xf32, #tpu.memory_space<vmem>>, vector<1x2x128xf32>,
    %c6_i32 = arith.constant 6 : i32
    %144 = arith.index_cast %c6_i32 : i32 to index
    %c0_106 = arith.constant 0 : index
    %c0_107 = arith.constant 0 : index
    %145 = vector.load %arg1[%144, %c0_106, %c0_107] : memref<8x2x16xf32, #tpu.memory_space<vmem>>, vector<1x2x16xf32>
    %146 = vector.shape_cast %145 : vector<1x2x16xf32> to vector<2x16xf32>
    %c0_108 = arith.constant 0 : index
    %c0_109 = arith.constant 0 : index
    %147 = vector.load %arg3[%c0_108, %c0_109] : memref<16x128xf32, #tpu.memory_space<vmem>>, vector<16x128xf32>
    %cst_110 = arith.constant dense<0.000000e+00> : vector<2x128xf32>
    %148 = tpu.matmul %146, %147, %cst_110 {dimension_numbers = #tpu.dot_dimension_numbers<[1], [0], [0], [1], [0, 0, 1, 1], [], []>} : vector<2x16xf32>, vector<16x128xf32>, vector<2x128xf32> -> vector<2x128xf32>
    %c0_111 = arith.constant 0 : index
    %c0_112 = arith.constant 0 : index
    %149 = vector.load %arg5[%c0_111, %c0_112] : memref<1x128xf32, #tpu.memory_space<vmem>>, vector<1x128xf32>
    %150 = vector.broadcast %149 : vector<1x128xf32> to vector<2x128xf32>
    %151 = arith.addf %148, %150 : vector<2x128xf32>
    %152 = arith.index_cast %c6_i32 : i32 to index
    %c0_113 = arith.constant 0 : index
    %c0_114 = arith.constant 0 : index
    %153 = vector.load %arg11[%152, %c0_113, %c0_114] : memref<8x2x128xf32, #tpu.memory_space<vmem>>, vector<1x2x128xf32>
    %154 = vector.shape_cast %153 : vector<1x2x128xf32> to vector<2x128xf32>
    %155 = vector.shape_cast %151 : vector<2x128xf32> to vector<1x2x128xf32>
    tpu.vector_store %arg11[%152, %c0_113, %c0_114], %155 {strides = array<i32>} : memref<8x2x128xf32, #tpu.memory_space<vmem>>, vector<1x2x128xf32>,
    %156 = arith.index_cast %c6_i32 : i32 to index
    %c0_115 = arith.constant 0 : index
    %c0_116 = arith.constant 0 : index
    %157 = vector.load %arg2[%156, %c0_115, %c0_116] : memref<8x2x16xf32, #tpu.memory_space<vmem>>, vector<1x2x16xf32>
    %158 = vector.shape_cast %157 : vector<1x2x16xf32> to vector<2x16xf32>
    %c0_117 = arith.constant 0 : index
    %c0_118 = arith.constant 0 : index
    %159 = vector.load %arg4[%c0_117, %c0_118] : memref<16x128xf32, #tpu.memory_space<vmem>>, vector<16x128xf32>
    %cst_119 = arith.constant dense<0.000000e+00> : vector<2x128xf32>
    %160 = tpu.matmul %158, %159, %cst_119 {dimension_numbers = #tpu.dot_dimension_numbers<[1], [0], [0], [1], [0, 0, 1, 1], [], []>} : vector<2x16xf32>, vector<16x128xf32>, vector<2x128xf32> -> vector<2x128xf32>
    %c0_120 = arith.constant 0 : index
    %c0_121 = arith.constant 0 : index
    %161 = vector.load %arg6[%c0_120, %c0_121] : memref<1x128xf32, #tpu.memory_space<vmem>>, vector<1x128xf32>
    %162 = vector.broadcast %161 : vector<1x128xf32> to vector<2x128xf32>
    %163 = arith.addf %160, %162 : vector<2x128xf32>
    %164 = arith.index_cast %c6_i32 : i32 to index
    %c0_122 = arith.constant 0 : index
    %c0_123 = arith.constant 0 : index
    %165 = vector.load %arg12[%164, %c0_122, %c0_123] : memref<8x2x128xf32, #tpu.memory_space<vmem>>, vector<1x2x128xf32>
    %166 = vector.shape_cast %165 : vector<1x2x128xf32> to vector<2x128xf32>
    %167 = vector.shape_cast %163 : vector<2x128xf32> to vector<1x2x128xf32>
    tpu.vector_store %arg12[%164, %c0_122, %c0_123], %167 {strides = array<i32>} : memref<8x2x128xf32, #tpu.memory_space<vmem>>, vector<1x2x128xf32>,
    %c7_i32 = arith.constant 7 : i32
    %168 = arith.index_cast %c7_i32 : i32 to index
    %c0_124 = arith.constant 0 : index
    %c0_125 = arith.constant 0 : index
    %169 = vector.load %arg1[%168, %c0_124, %c0_125] : memref<8x2x16xf32, #tpu.memory_space<vmem>>, vector<1x2x16xf32>
    %170 = vector.shape_cast %169 : vector<1x2x16xf32> to vector<2x16xf32>
    %c0_126 = arith.constant 0 : index
    %c0_127 = arith.constant 0 : index
    %171 = vector.load %arg3[%c0_126, %c0_127] : memref<16x128xf32, #tpu.memory_space<vmem>>, vector<16x128xf32>
    %cst_128 = arith.constant dense<0.000000e+00> : vector<2x128xf32>
    %172 = tpu.matmul %170, %171, %cst_128 {dimension_numbers = #tpu.dot_dimension_numbers<[1], [0], [0], [1], [0, 0, 1, 1], [], []>} : vector<2x16xf32>, vector<16x128xf32>, vector<2x128xf32> -> vector<2x128xf32>
    %c0_129 = arith.constant 0 : index
    %c0_130 = arith.constant 0 : index
    %173 = vector.load %arg5[%c0_129, %c0_130] : memref<1x128xf32, #tpu.memory_space<vmem>>, vector<1x128xf32>
    %174 = vector.broadcast %173 : vector<1x128xf32> to vector<2x128xf32>
    %175 = arith.addf %172, %174 : vector<2x128xf32>
    %176 = arith.index_cast %c7_i32 : i32 to index
    %c0_131 = arith.constant 0 : index
    %c0_132 = arith.constant 0 : index
    %177 = vector.load %arg11[%176, %c0_131, %c0_132] : memref<8x2x128xf32, #tpu.memory_space<vmem>>, vector<1x2x128xf32>
    %178 = vector.shape_cast %177 : vector<1x2x128xf32> to vector<2x128xf32>
    %179 = vector.shape_cast %175 : vector<2x128xf32> to vector<1x2x128xf32>
    tpu.vector_store %arg11[%176, %c0_131, %c0_132], %179 {strides = array<i32>} : memref<8x2x128xf32, #tpu.memory_space<vmem>>, vector<1x2x128xf32>,
    %180 = arith.index_cast %c7_i32 : i32 to index
    %c0_133 = arith.constant 0 : index
    %c0_134 = arith.constant 0 : index
    %181 = vector.load %arg2[%180, %c0_133, %c0_134] : memref<8x2x16xf32, #tpu.memory_space<vmem>>, vector<1x2x16xf32>
    %182 = vector.shape_cast %181 : vector<1x2x16xf32> to vector<2x16xf32>
    %c0_135 = arith.constant 0 : index
    %c0_136 = arith.constant 0 : index
    %183 = vector.load %arg4[%c0_135, %c0_136] : memref<16x128xf32, #tpu.memory_space<vmem>>, vector<16x128xf32>
    %cst_137 = arith.constant dense<0.000000e+00> : vector<2x128xf32>
    %184 = tpu.matmul %182, %183, %cst_137 {dimension_numbers = #tpu.dot_dimension_numbers<[1], [0], [0], [1], [0, 0, 1, 1], [], []>} : vector<2x16xf32>, vector<16x128xf32>, vector<2x128xf32> -> vector<2x128xf32>
    %c0_138 = arith.constant 0 : index
    %c0_139 = arith.constant 0 : index
    %185 = vector.load %arg6[%c0_138, %c0_139] : memref<1x128xf32, #tpu.memory_space<vmem>>, vector<1x128xf32>
    %186 = vector.broadcast %185 : vector<1x128xf32> to vector<2x128xf32>
    %187 = arith.addf %184, %186 : vector<2x128xf32>
    %188 = arith.index_cast %c7_i32 : i32 to index
    %c0_140 = arith.constant 0 : index
    %c0_141 = arith.constant 0 : index
    %189 = vector.load %arg12[%188, %c0_140, %c0_141] : memref<8x2x128xf32, #tpu.memory_space<vmem>>, vector<1x2x128xf32>
    %190 = vector.shape_cast %189 : vector<1x2x128xf32> to vector<2x128xf32>
    %191 = vector.shape_cast %187 : vector<2x128xf32> to vector<1x2x128xf32>
    tpu.vector_store %arg12[%188, %c0_140, %c0_141], %191 {strides = array<i32>} : memref<8x2x128xf32, #tpu.memory_space<vmem>>, vector<1x2x128xf32>,
    %c8_i32 = arith.constant 8 : i32
    %c0_i32_142 = arith.constant 0 : i32
    %192 = arith.cmpi eq, %arg0, %c0_i32_142 : i32
    %193 = arith.extui %192 : i1 to i32
    %c0_i32_143 = arith.constant 0 : i32
    %194 = arith.cmpi ne, %193, %c0_i32_143 : i32
    scf.if %194 {
      %cst_337 = arith.constant 0.000000e+00 : f32
      %771 = vector.broadcast %cst_337 : f32 to vector<2x32xf32>
      %c0_338 = arith.constant 0 : index
      %c0_339 = arith.constant 0 : index
      %772 = vector.load %arg13[%c0_338, %c0_339] : memref<2x32xf32, #tpu.memory_space<vmem>>, vector<2x32xf32>
      tpu.vector_store %arg13[%c0_338, %c0_339], %771 {strides = array<i32>} : memref<2x32xf32, #tpu.memory_space<vmem>>, vector<2x32xf32>,
      %cst_340 = arith.constant 0.000000e+00 : f32
      %773 = vector.broadcast %cst_340 : f32 to vector<2x32xf32>
      %c0_341 = arith.constant 0 : index
      %c0_342 = arith.constant 0 : index
      %774 = vector.load %arg14[%c0_341, %c0_342] : memref<2x32xf32, #tpu.memory_space<vmem>>, vector<2x32xf32>
      tpu.vector_store %arg14[%c0_341, %c0_342], %773 {strides = array<i32>} : memref<2x32xf32, #tpu.memory_space<vmem>>, vector<2x32xf32>,
      %cst_343 = arith.constant 0.000000e+00 : f32
      %775 = vector.broadcast %cst_343 : f32 to vector<2x32xf32>
      %c0_344 = arith.constant 0 : index
      %c0_345 = arith.constant 0 : index
      %776 = vector.load %arg15[%c0_344, %c0_345] : memref<2x32xf32, #tpu.memory_space<vmem>>, vector<2x32xf32>
      tpu.vector_store %arg15[%c0_344, %c0_345], %775 {strides = array<i32>} : memref<2x32xf32, #tpu.memory_space<vmem>>, vector<2x32xf32>,
      %cst_346 = arith.constant 0.000000e+00 : f32
      %777 = vector.broadcast %cst_346 : f32 to vector<2x32xf32>
      %c0_347 = arith.constant 0 : index
      %c0_348 = arith.constant 0 : index
      %778 = vector.load %arg16[%c0_347, %c0_348] : memref<2x32xf32, #tpu.memory_space<vmem>>, vector<2x32xf32>
      tpu.vector_store %arg16[%c0_347, %c0_348], %777 {strides = array<i32>} : memref<2x32xf32, #tpu.memory_space<vmem>>, vector<2x32xf32>,
    } else {
    }
    %c0_144 = arith.constant 0 : index
    %c0_145 = arith.constant 0 : index
    %195 = vector.load %arg13[%c0_144, %c0_145] : memref<2x32xf32, #tpu.memory_space<vmem>>, vector<2x32xf32>
    %c0_146 = arith.constant 0 : index
    %c0_147 = arith.constant 0 : index
    %196 = vector.load %arg14[%c0_146, %c0_147] : memref<2x32xf32, #tpu.memory_space<vmem>>, vector<2x32xf32>
    %c0_148 = arith.constant 0 : index
    %c0_149 = arith.constant 0 : index
    %197 = vector.load %arg15[%c0_148, %c0_149] : memref<2x32xf32, #tpu.memory_space<vmem>>, vector<2x32xf32>
    %c0_150 = arith.constant 0 : index
    %c0_151 = arith.constant 0 : index
    %198 = vector.load %arg16[%c0_150, %c0_151] : memref<2x32xf32, #tpu.memory_space<vmem>>, vector<2x32xf32>
    %c0_i32_152 = arith.constant 0 : i32
    %199 = arith.index_cast %c0_i32_152 : i32 to index
    %c0_153 = arith.constant 0 : index
    %c0_154 = arith.constant 0 : index
    %200 = vector.load %arg11[%199, %c0_153, %c0_154] : memref<8x2x128xf32, #tpu.memory_space<vmem>>, vector<1x2x128xf32>
    %201 = vector.shape_cast %200 : vector<1x2x128xf32> to vector<2x128xf32>
    %c0_155 = arith.constant 0 : index
    %c0_156 = arith.constant 0 : index
    %202 = vector.load %arg7[%c0_155, %c0_156] : memref<32x128xf32, #tpu.memory_space<vmem>>, vector<32x128xf32>
    %cst_157 = arith.constant dense<0.000000e+00> : vector<2x128xf32>
    %203 = tpu.matmul %195, %202, %cst_157 {dimension_numbers = #tpu.dot_dimension_numbers<[1], [0], [0], [1], [0, 0, 1, 1], [], []>} : vector<2x32xf32>, vector<32x128xf32>, vector<2x128xf32> -> vector<2x128xf32>
    %204 = arith.addf %201, %203 : vector<2x128xf32>
    %205 = vector.extract_strided_slice %204 {offsets = [0, 0], sizes = [2, 32], strides = [1, 1]} : vector<2x128xf32> to vector<2x32xf32>
    %206 = arith.negf %205 : vector<2x32xf32>
    %207 = math.exp %206 : vector<2x32xf32>
    %cst_158 = arith.constant 1.000000e+00 : f32
    %208 = vector.broadcast %cst_158 : f32 to vector<2x32xf32>
    %209 = arith.addf %208, %207 : vector<2x32xf32>
    %210 = arith.divf %208, %209 : vector<2x32xf32>
    %211 = vector.extract_strided_slice %204 {offsets = [0, 32], sizes = [2, 32], strides = [1, 1]} : vector<2x128xf32> to vector<2x32xf32>
    %212 = arith.negf %211 : vector<2x32xf32>
    %213 = math.exp %212 : vector<2x32xf32>
    %cst_159 = arith.constant 1.000000e+00 : f32
    %214 = vector.broadcast %cst_159 : f32 to vector<2x32xf32>
    %215 = arith.addf %214, %213 : vector<2x32xf32>
    %216 = arith.divf %214, %215 : vector<2x32xf32>
    %217 = vector.extract_strided_slice %204 {offsets = [0, 64], sizes = [2, 32], strides = [1, 1]} : vector<2x128xf32> to vector<2x32xf32>
    %218 = math.tanh %217 : vector<2x32xf32>
    %219 = vector.extract_strided_slice %204 {offsets = [0, 96], sizes = [2, 32], strides = [1, 1]} : vector<2x128xf32> to vector<2x32xf32>
    %220 = arith.negf %219 : vector<2x32xf32>
    %221 = math.exp %220 : vector<2x32xf32>
    %cst_160 = arith.constant 1.000000e+00 : f32
    %222 = vector.broadcast %cst_160 : f32 to vector<2x32xf32>
    %223 = arith.addf %222, %221 : vector<2x32xf32>
    %224 = arith.divf %222, %223 : vector<2x32xf32>
    %225 = arith.mulf %216, %196 : vector<2x32xf32>
    %226 = arith.mulf %210, %218 : vector<2x32xf32>
    %227 = arith.addf %225, %226 : vector<2x32xf32>
    %228 = math.tanh %227 : vector<2x32xf32>
    %229 = arith.mulf %224, %228 : vector<2x32xf32>
    %230 = arith.index_cast %c0_i32_152 : i32 to index
    %c0_161 = arith.constant 0 : index
    %c0_162 = arith.constant 0 : index
    %231 = vector.load %arg9[%230, %c0_161, %c0_162] : memref<8x2x32xf32, #tpu.memory_space<vmem>>, vector<1x2x32xf32>
    %232 = vector.shape_cast %231 : vector<1x2x32xf32> to vector<2x32xf32>
    %233 = vector.shape_cast %229 : vector<2x32xf32> to vector<1x2x32xf32>
    tpu.vector_store %arg9[%230, %c0_161, %c0_162], %233 {strides = array<i32>} : memref<8x2x32xf32, #tpu.memory_space<vmem>>, vector<1x2x32xf32>,
    %c7_i32_163 = arith.constant 7 : i32
    %234 = arith.subi %c7_i32_163, %c0_i32_152 : i32
    %235 = arith.index_cast %234 : i32 to index
    %c0_164 = arith.constant 0 : index
    %c0_165 = arith.constant 0 : index
    %236 = vector.load %arg12[%235, %c0_164, %c0_165] : memref<8x2x128xf32, #tpu.memory_space<vmem>>, vector<1x2x128xf32>
    %237 = vector.shape_cast %236 : vector<1x2x128xf32> to vector<2x128xf32>
    %c0_166 = arith.constant 0 : index
    %c0_167 = arith.constant 0 : index
    %238 = vector.load %arg8[%c0_166, %c0_167] : memref<32x128xf32, #tpu.memory_space<vmem>>, vector<32x128xf32>
    %cst_168 = arith.constant dense<0.000000e+00> : vector<2x128xf32>
    %239 = tpu.matmul %197, %238, %cst_168 {dimension_numbers = #tpu.dot_dimension_numbers<[1], [0], [0], [1], [0, 0, 1, 1], [], []>} : vector<2x32xf32>, vector<32x128xf32>, vector<2x128xf32> -> vector<2x128xf32>
    %240 = arith.addf %237, %239 : vector<2x128xf32>
    %241 = vector.extract_strided_slice %240 {offsets = [0, 0], sizes = [2, 32], strides = [1, 1]} : vector<2x128xf32> to vector<2x32xf32>
    %242 = arith.negf %241 : vector<2x32xf32>
    %243 = math.exp %242 : vector<2x32xf32>
    %cst_169 = arith.constant 1.000000e+00 : f32
    %244 = vector.broadcast %cst_169 : f32 to vector<2x32xf32>
    %245 = arith.addf %244, %243 : vector<2x32xf32>
    %246 = arith.divf %244, %245 : vector<2x32xf32>
    %247 = vector.extract_strided_slice %240 {offsets = [0, 32], sizes = [2, 32], strides = [1, 1]} : vector<2x128xf32> to vector<2x32xf32>
    %248 = arith.negf %247 : vector<2x32xf32>
    %249 = math.exp %248 : vector<2x32xf32>
    %cst_170 = arith.constant 1.000000e+00 : f32
    %250 = vector.broadcast %cst_170 : f32 to vector<2x32xf32>
    %251 = arith.addf %250, %249 : vector<2x32xf32>
    %252 = arith.divf %250, %251 : vector<2x32xf32>
    %253 = vector.extract_strided_slice %240 {offsets = [0, 64], sizes = [2, 32], strides = [1, 1]} : vector<2x128xf32> to vector<2x32xf32>
    %254 = math.tanh %253 : vector<2x32xf32>
    %255 = vector.extract_strided_slice %240 {offsets = [0, 96], sizes = [2, 32], strides = [1, 1]} : vector<2x128xf32> to vector<2x32xf32>
    %256 = arith.negf %255 : vector<2x32xf32>
    %257 = math.exp %256 : vector<2x32xf32>
    %cst_171 = arith.constant 1.000000e+00 : f32
    %258 = vector.broadcast %cst_171 : f32 to vector<2x32xf32>
    %259 = arith.addf %258, %257 : vector<2x32xf32>
    %260 = arith.divf %258, %259 : vector<2x32xf32>
    %261 = arith.mulf %252, %198 : vector<2x32xf32>
    %262 = arith.mulf %246, %254 : vector<2x32xf32>
    %263 = arith.addf %261, %262 : vector<2x32xf32>
    %264 = math.tanh %263 : vector<2x32xf32>
    %265 = arith.mulf %260, %264 : vector<2x32xf32>
    %266 = arith.index_cast %234 : i32 to index
    %c0_172 = arith.constant 0 : index
    %c0_173 = arith.constant 0 : index
    %267 = vector.load %arg10[%266, %c0_172, %c0_173] : memref<8x2x32xf32, #tpu.memory_space<vmem>>, vector<1x2x32xf32>
    %268 = vector.shape_cast %267 : vector<1x2x32xf32> to vector<2x32xf32>
    %269 = vector.shape_cast %265 : vector<2x32xf32> to vector<1x2x32xf32>
    tpu.vector_store %arg10[%266, %c0_172, %c0_173], %269 {strides = array<i32>} : memref<8x2x32xf32, #tpu.memory_space<vmem>>, vector<1x2x32xf32>,
    %c1_i32_174 = arith.constant 1 : i32
    %270 = arith.index_cast %c1_i32_174 : i32 to index
    %c0_175 = arith.constant 0 : index
    %c0_176 = arith.constant 0 : index
    %271 = vector.load %arg11[%270, %c0_175, %c0_176] : memref<8x2x128xf32, #tpu.memory_space<vmem>>, vector<1x2x128xf32>
    %272 = vector.shape_cast %271 : vector<1x2x128xf32> to vector<2x128xf32>
    %c0_177 = arith.constant 0 : index
    %c0_178 = arith.constant 0 : index
    %273 = vector.load %arg7[%c0_177, %c0_178] : memref<32x128xf32, #tpu.memory_space<vmem>>, vector<32x128xf32>
    %cst_179 = arith.constant dense<0.000000e+00> : vector<2x128xf32>
    %274 = tpu.matmul %229, %273, %cst_179 {dimension_numbers = #tpu.dot_dimension_numbers<[1], [0], [0], [1], [0, 0, 1, 1], [], []>} : vector<2x32xf32>, vector<32x128xf32>, vector<2x128xf32> -> vector<2x128xf32>
    %275 = arith.addf %272, %274 : vector<2x128xf32>
    %276 = vector.extract_strided_slice %275 {offsets = [0, 0], sizes = [2, 32], strides = [1, 1]} : vector<2x128xf32> to vector<2x32xf32>
    %277 = arith.negf %276 : vector<2x32xf32>
    %278 = math.exp %277 : vector<2x32xf32>
    %cst_180 = arith.constant 1.000000e+00 : f32
    %279 = vector.broadcast %cst_180 : f32 to vector<2x32xf32>
    %280 = arith.addf %279, %278 : vector<2x32xf32>
    %281 = arith.divf %279, %280 : vector<2x32xf32>
    %282 = vector.extract_strided_slice %275 {offsets = [0, 32], sizes = [2, 32], strides = [1, 1]} : vector<2x128xf32> to vector<2x32xf32>
    %283 = arith.negf %282 : vector<2x32xf32>
    %284 = math.exp %283 : vector<2x32xf32>
    %cst_181 = arith.constant 1.000000e+00 : f32
    %285 = vector.broadcast %cst_181 : f32 to vector<2x32xf32>
    %286 = arith.addf %285, %284 : vector<2x32xf32>
    %287 = arith.divf %285, %286 : vector<2x32xf32>
    %288 = vector.extract_strided_slice %275 {offsets = [0, 64], sizes = [2, 32], strides = [1, 1]} : vector<2x128xf32> to vector<2x32xf32>
    %289 = math.tanh %288 : vector<2x32xf32>
    %290 = vector.extract_strided_slice %275 {offsets = [0, 96], sizes = [2, 32], strides = [1, 1]} : vector<2x128xf32> to vector<2x32xf32>
    %291 = arith.negf %290 : vector<2x32xf32>
    %292 = math.exp %291 : vector<2x32xf32>
    %cst_182 = arith.constant 1.000000e+00 : f32
    %293 = vector.broadcast %cst_182 : f32 to vector<2x32xf32>
    %294 = arith.addf %293, %292 : vector<2x32xf32>
    %295 = arith.divf %293, %294 : vector<2x32xf32>
    %296 = arith.mulf %287, %227 : vector<2x32xf32>
    %297 = arith.mulf %281, %289 : vector<2x32xf32>
    %298 = arith.addf %296, %297 : vector<2x32xf32>
    %299 = math.tanh %298 : vector<2x32xf32>
    %300 = arith.mulf %295, %299 : vector<2x32xf32>
    %301 = arith.index_cast %c1_i32_174 : i32 to index
    %c0_183 = arith.constant 0 : index
    %c0_184 = arith.constant 0 : index
    %302 = vector.load %arg9[%301, %c0_183, %c0_184] : memref<8x2x32xf32, #tpu.memory_space<vmem>>, vector<1x2x32xf32>
    %303 = vector.shape_cast %302 : vector<1x2x32xf32> to vector<2x32xf32>
    %304 = vector.shape_cast %300 : vector<2x32xf32> to vector<1x2x32xf32>
    tpu.vector_store %arg9[%301, %c0_183, %c0_184], %304 {strides = array<i32>} : memref<8x2x32xf32, #tpu.memory_space<vmem>>, vector<1x2x32xf32>,
    %c7_i32_185 = arith.constant 7 : i32
    %305 = arith.subi %c7_i32_185, %c1_i32_174 : i32
    %306 = arith.index_cast %305 : i32 to index
    %c0_186 = arith.constant 0 : index
    %c0_187 = arith.constant 0 : index
    %307 = vector.load %arg12[%306, %c0_186, %c0_187] : memref<8x2x128xf32, #tpu.memory_space<vmem>>, vector<1x2x128xf32>
    %308 = vector.shape_cast %307 : vector<1x2x128xf32> to vector<2x128xf32>
    %c0_188 = arith.constant 0 : index
    %c0_189 = arith.constant 0 : index
    %309 = vector.load %arg8[%c0_188, %c0_189] : memref<32x128xf32, #tpu.memory_space<vmem>>, vector<32x128xf32>
    %cst_190 = arith.constant dense<0.000000e+00> : vector<2x128xf32>
    %310 = tpu.matmul %265, %309, %cst_190 {dimension_numbers = #tpu.dot_dimension_numbers<[1], [0], [0], [1], [0, 0, 1, 1], [], []>} : vector<2x32xf32>, vector<32x128xf32>, vector<2x128xf32> -> vector<2x128xf32>
    %311 = arith.addf %308, %310 : vector<2x128xf32>
    %312 = vector.extract_strided_slice %311 {offsets = [0, 0], sizes = [2, 32], strides = [1, 1]} : vector<2x128xf32> to vector<2x32xf32>
    %313 = arith.negf %312 : vector<2x32xf32>
    %314 = math.exp %313 : vector<2x32xf32>
    %cst_191 = arith.constant 1.000000e+00 : f32
    %315 = vector.broadcast %cst_191 : f32 to vector<2x32xf32>
    %316 = arith.addf %315, %314 : vector<2x32xf32>
    %317 = arith.divf %315, %316 : vector<2x32xf32>
    %318 = vector.extract_strided_slice %311 {offsets = [0, 32], sizes = [2, 32], strides = [1, 1]} : vector<2x128xf32> to vector<2x32xf32>
    %319 = arith.negf %318 : vector<2x32xf32>
    %320 = math.exp %319 : vector<2x32xf32>
    %cst_192 = arith.constant 1.000000e+00 : f32
    %321 = vector.broadcast %cst_192 : f32 to vector<2x32xf32>
    %322 = arith.addf %321, %320 : vector<2x32xf32>
    %323 = arith.divf %321, %322 : vector<2x32xf32>
    %324 = vector.extract_strided_slice %311 {offsets = [0, 64], sizes = [2, 32], strides = [1, 1]} : vector<2x128xf32> to vector<2x32xf32>
    %325 = math.tanh %324 : vector<2x32xf32>
    %326 = vector.extract_strided_slice %311 {offsets = [0, 96], sizes = [2, 32], strides = [1, 1]} : vector<2x128xf32> to vector<2x32xf32>
    %327 = arith.negf %326 : vector<2x32xf32>
    %328 = math.exp %327 : vector<2x32xf32>
    %cst_193 = arith.constant 1.000000e+00 : f32
    %329 = vector.broadcast %cst_193 : f32 to vector<2x32xf32>
    %330 = arith.addf %329, %328 : vector<2x32xf32>
    %331 = arith.divf %329, %330 : vector<2x32xf32>
    %332 = arith.mulf %323, %263 : vector<2x32xf32>
    %333 = arith.mulf %317, %325 : vector<2x32xf32>
    %334 = arith.addf %332, %333 : vector<2x32xf32>
    %335 = math.tanh %334 : vector<2x32xf32>
    %336 = arith.mulf %331, %335 : vector<2x32xf32>
    %337 = arith.index_cast %305 : i32 to index
    %c0_194 = arith.constant 0 : index
    %c0_195 = arith.constant 0 : index
    %338 = vector.load %arg10[%337, %c0_194, %c0_195] : memref<8x2x32xf32, #tpu.memory_space<vmem>>, vector<1x2x32xf32>
    %339 = vector.shape_cast %338 : vector<1x2x32xf32> to vector<2x32xf32>
    %340 = vector.shape_cast %336 : vector<2x32xf32> to vector<1x2x32xf32>
    tpu.vector_store %arg10[%337, %c0_194, %c0_195], %340 {strides = array<i32>} : memref<8x2x32xf32, #tpu.memory_space<vmem>>, vector<1x2x32xf32>,
    %c2_i32_196 = arith.constant 2 : i32
    %341 = arith.index_cast %c2_i32_196 : i32 to index
    %c0_197 = arith.constant 0 : index
    %c0_198 = arith.constant 0 : index
    %342 = vector.load %arg11[%341, %c0_197, %c0_198] : memref<8x2x128xf32, #tpu.memory_space<vmem>>, vector<1x2x128xf32>
    %343 = vector.shape_cast %342 : vector<1x2x128xf32> to vector<2x128xf32>
    %c0_199 = arith.constant 0 : index
    %c0_200 = arith.constant 0 : index
    %344 = vector.load %arg7[%c0_199, %c0_200] : memref<32x128xf32, #tpu.memory_space<vmem>>, vector<32x128xf32>
    %cst_201 = arith.constant dense<0.000000e+00> : vector<2x128xf32>
    %345 = tpu.matmul %300, %344, %cst_201 {dimension_numbers = #tpu.dot_dimension_numbers<[1], [0], [0], [1], [0, 0, 1, 1], [], []>} : vector<2x32xf32>, vector<32x128xf32>, vector<2x128xf32> -> vector<2x128xf32>
    %346 = arith.addf %343, %345 : vector<2x128xf32>
    %347 = vector.extract_strided_slice %346 {offsets = [0, 0], sizes = [2, 32], strides = [1, 1]} : vector<2x128xf32> to vector<2x32xf32>
    %348 = arith.negf %347 : vector<2x32xf32>
    %349 = math.exp %348 : vector<2x32xf32>
    %cst_202 = arith.constant 1.000000e+00 : f32
    %350 = vector.broadcast %cst_202 : f32 to vector<2x32xf32>
    %351 = arith.addf %350, %349 : vector<2x32xf32>
    %352 = arith.divf %350, %351 : vector<2x32xf32>
    %353 = vector.extract_strided_slice %346 {offsets = [0, 32], sizes = [2, 32], strides = [1, 1]} : vector<2x128xf32> to vector<2x32xf32>
    %354 = arith.negf %353 : vector<2x32xf32>
    %355 = math.exp %354 : vector<2x32xf32>
    %cst_203 = arith.constant 1.000000e+00 : f32
    %356 = vector.broadcast %cst_203 : f32 to vector<2x32xf32>
    %357 = arith.addf %356, %355 : vector<2x32xf32>
    %358 = arith.divf %356, %357 : vector<2x32xf32>
    %359 = vector.extract_strided_slice %346 {offsets = [0, 64], sizes = [2, 32], strides = [1, 1]} : vector<2x128xf32> to vector<2x32xf32>
    %360 = math.tanh %359 : vector<2x32xf32>
    %361 = vector.extract_strided_slice %346 {offsets = [0, 96], sizes = [2, 32], strides = [1, 1]} : vector<2x128xf32> to vector<2x32xf32>
    %362 = arith.negf %361 : vector<2x32xf32>
    %363 = math.exp %362 : vector<2x32xf32>
    %cst_204 = arith.constant 1.000000e+00 : f32
    %364 = vector.broadcast %cst_204 : f32 to vector<2x32xf32>
    %365 = arith.addf %364, %363 : vector<2x32xf32>
    %366 = arith.divf %364, %365 : vector<2x32xf32>
    %367 = arith.mulf %358, %298 : vector<2x32xf32>
    %368 = arith.mulf %352, %360 : vector<2x32xf32>
    %369 = arith.addf %367, %368 : vector<2x32xf32>
    %370 = math.tanh %369 : vector<2x32xf32>
    %371 = arith.mulf %366, %370 : vector<2x32xf32>
    %372 = arith.index_cast %c2_i32_196 : i32 to index
    %c0_205 = arith.constant 0 : index
    %c0_206 = arith.constant 0 : index
    %373 = vector.load %arg9[%372, %c0_205, %c0_206] : memref<8x2x32xf32, #tpu.memory_space<vmem>>, vector<1x2x32xf32>
    %374 = vector.shape_cast %373 : vector<1x2x32xf32> to vector<2x32xf32>
    %375 = vector.shape_cast %371 : vector<2x32xf32> to vector<1x2x32xf32>
    tpu.vector_store %arg9[%372, %c0_205, %c0_206], %375 {strides = array<i32>} : memref<8x2x32xf32, #tpu.memory_space<vmem>>, vector<1x2x32xf32>,
    %c7_i32_207 = arith.constant 7 : i32
    %376 = arith.subi %c7_i32_207, %c2_i32_196 : i32
    %377 = arith.index_cast %376 : i32 to index
    %c0_208 = arith.constant 0 : index
    %c0_209 = arith.constant 0 : index
    %378 = vector.load %arg12[%377, %c0_208, %c0_209] : memref<8x2x128xf32, #tpu.memory_space<vmem>>, vector<1x2x128xf32>
    %379 = vector.shape_cast %378 : vector<1x2x128xf32> to vector<2x128xf32>
    %c0_210 = arith.constant 0 : index
    %c0_211 = arith.constant 0 : index
    %380 = vector.load %arg8[%c0_210, %c0_211] : memref<32x128xf32, #tpu.memory_space<vmem>>, vector<32x128xf32>
    %cst_212 = arith.constant dense<0.000000e+00> : vector<2x128xf32>
    %381 = tpu.matmul %336, %380, %cst_212 {dimension_numbers = #tpu.dot_dimension_numbers<[1], [0], [0], [1], [0, 0, 1, 1], [], []>} : vector<2x32xf32>, vector<32x128xf32>, vector<2x128xf32> -> vector<2x128xf32>
    %382 = arith.addf %379, %381 : vector<2x128xf32>
    %383 = vector.extract_strided_slice %382 {offsets = [0, 0], sizes = [2, 32], strides = [1, 1]} : vector<2x128xf32> to vector<2x32xf32>
    %384 = arith.negf %383 : vector<2x32xf32>
    %385 = math.exp %384 : vector<2x32xf32>
    %cst_213 = arith.constant 1.000000e+00 : f32
    %386 = vector.broadcast %cst_213 : f32 to vector<2x32xf32>
    %387 = arith.addf %386, %385 : vector<2x32xf32>
    %388 = arith.divf %386, %387 : vector<2x32xf32>
    %389 = vector.extract_strided_slice %382 {offsets = [0, 32], sizes = [2, 32], strides = [1, 1]} : vector<2x128xf32> to vector<2x32xf32>
    %390 = arith.negf %389 : vector<2x32xf32>
    %391 = math.exp %390 : vector<2x32xf32>
    %cst_214 = arith.constant 1.000000e+00 : f32
    %392 = vector.broadcast %cst_214 : f32 to vector<2x32xf32>
    %393 = arith.addf %392, %391 : vector<2x32xf32>
    %394 = arith.divf %392, %393 : vector<2x32xf32>
    %395 = vector.extract_strided_slice %382 {offsets = [0, 64], sizes = [2, 32], strides = [1, 1]} : vector<2x128xf32> to vector<2x32xf32>
    %396 = math.tanh %395 : vector<2x32xf32>
    %397 = vector.extract_strided_slice %382 {offsets = [0, 96], sizes = [2, 32], strides = [1, 1]} : vector<2x128xf32> to vector<2x32xf32>
    %398 = arith.negf %397 : vector<2x32xf32>
    %399 = math.exp %398 : vector<2x32xf32>
    %cst_215 = arith.constant 1.000000e+00 : f32
    %400 = vector.broadcast %cst_215 : f32 to vector<2x32xf32>
    %401 = arith.addf %400, %399 : vector<2x32xf32>
    %402 = arith.divf %400, %401 : vector<2x32xf32>
    %403 = arith.mulf %394, %334 : vector<2x32xf32>
    %404 = arith.mulf %388, %396 : vector<2x32xf32>
    %405 = arith.addf %403, %404 : vector<2x32xf32>
    %406 = math.tanh %405 : vector<2x32xf32>
    %407 = arith.mulf %402, %406 : vector<2x32xf32>
    %408 = arith.index_cast %376 : i32 to index
    %c0_216 = arith.constant 0 : index
    %c0_217 = arith.constant 0 : index
    %409 = vector.load %arg10[%408, %c0_216, %c0_217] : memref<8x2x32xf32, #tpu.memory_space<vmem>>, vector<1x2x32xf32>
    %410 = vector.shape_cast %409 : vector<1x2x32xf32> to vector<2x32xf32>
    %411 = vector.shape_cast %407 : vector<2x32xf32> to vector<1x2x32xf32>
    tpu.vector_store %arg10[%408, %c0_216, %c0_217], %411 {strides = array<i32>} : memref<8x2x32xf32, #tpu.memory_space<vmem>>, vector<1x2x32xf32>,
    %c3_i32_218 = arith.constant 3 : i32
    %412 = arith.index_cast %c3_i32_218 : i32 to index
    %c0_219 = arith.constant 0 : index
    %c0_220 = arith.constant 0 : index
    %413 = vector.load %arg11[%412, %c0_219, %c0_220] : memref<8x2x128xf32, #tpu.memory_space<vmem>>, vector<1x2x128xf32>
    %414 = vector.shape_cast %413 : vector<1x2x128xf32> to vector<2x128xf32>
    %c0_221 = arith.constant 0 : index
    %c0_222 = arith.constant 0 : index
    %415 = vector.load %arg7[%c0_221, %c0_222] : memref<32x128xf32, #tpu.memory_space<vmem>>, vector<32x128xf32>
    %cst_223 = arith.constant dense<0.000000e+00> : vector<2x128xf32>
    %416 = tpu.matmul %371, %415, %cst_223 {dimension_numbers = #tpu.dot_dimension_numbers<[1], [0], [0], [1], [0, 0, 1, 1], [], []>} : vector<2x32xf32>, vector<32x128xf32>, vector<2x128xf32> -> vector<2x128xf32>
    %417 = arith.addf %414, %416 : vector<2x128xf32>
    %418 = vector.extract_strided_slice %417 {offsets = [0, 0], sizes = [2, 32], strides = [1, 1]} : vector<2x128xf32> to vector<2x32xf32>
    %419 = arith.negf %418 : vector<2x32xf32>
    %420 = math.exp %419 : vector<2x32xf32>
    %cst_224 = arith.constant 1.000000e+00 : f32
    %421 = vector.broadcast %cst_224 : f32 to vector<2x32xf32>
    %422 = arith.addf %421, %420 : vector<2x32xf32>
    %423 = arith.divf %421, %422 : vector<2x32xf32>
    %424 = vector.extract_strided_slice %417 {offsets = [0, 32], sizes = [2, 32], strides = [1, 1]} : vector<2x128xf32> to vector<2x32xf32>
    %425 = arith.negf %424 : vector<2x32xf32>
    %426 = math.exp %425 : vector<2x32xf32>
    %cst_225 = arith.constant 1.000000e+00 : f32
    %427 = vector.broadcast %cst_225 : f32 to vector<2x32xf32>
    %428 = arith.addf %427, %426 : vector<2x32xf32>
    %429 = arith.divf %427, %428 : vector<2x32xf32>
    %430 = vector.extract_strided_slice %417 {offsets = [0, 64], sizes = [2, 32], strides = [1, 1]} : vector<2x128xf32> to vector<2x32xf32>
    %431 = math.tanh %430 : vector<2x32xf32>
    %432 = vector.extract_strided_slice %417 {offsets = [0, 96], sizes = [2, 32], strides = [1, 1]} : vector<2x128xf32> to vector<2x32xf32>
    %433 = arith.negf %432 : vector<2x32xf32>
    %434 = math.exp %433 : vector<2x32xf32>
    %cst_226 = arith.constant 1.000000e+00 : f32
    %435 = vector.broadcast %cst_226 : f32 to vector<2x32xf32>
    %436 = arith.addf %435, %434 : vector<2x32xf32>
    %437 = arith.divf %435, %436 : vector<2x32xf32>
    %438 = arith.mulf %429, %369 : vector<2x32xf32>
    %439 = arith.mulf %423, %431 : vector<2x32xf32>
    %440 = arith.addf %438, %439 : vector<2x32xf32>
    %441 = math.tanh %440 : vector<2x32xf32>
    %442 = arith.mulf %437, %441 : vector<2x32xf32>
    %443 = arith.index_cast %c3_i32_218 : i32 to index
    %c0_227 = arith.constant 0 : index
    %c0_228 = arith.constant 0 : index
    %444 = vector.load %arg9[%443, %c0_227, %c0_228] : memref<8x2x32xf32, #tpu.memory_space<vmem>>, vector<1x2x32xf32>
    %445 = vector.shape_cast %444 : vector<1x2x32xf32> to vector<2x32xf32>
    %446 = vector.shape_cast %442 : vector<2x32xf32> to vector<1x2x32xf32>
    tpu.vector_store %arg9[%443, %c0_227, %c0_228], %446 {strides = array<i32>} : memref<8x2x32xf32, #tpu.memory_space<vmem>>, vector<1x2x32xf32>,
    %c7_i32_229 = arith.constant 7 : i32
    %447 = arith.subi %c7_i32_229, %c3_i32_218 : i32
    %448 = arith.index_cast %447 : i32 to index
    %c0_230 = arith.constant 0 : index
    %c0_231 = arith.constant 0 : index
    %449 = vector.load %arg12[%448, %c0_230, %c0_231] : memref<8x2x128xf32, #tpu.memory_space<vmem>>, vector<1x2x128xf32>
    %450 = vector.shape_cast %449 : vector<1x2x128xf32> to vector<2x128xf32>
    %c0_232 = arith.constant 0 : index
    %c0_233 = arith.constant 0 : index
    %451 = vector.load %arg8[%c0_232, %c0_233] : memref<32x128xf32, #tpu.memory_space<vmem>>, vector<32x128xf32>
    %cst_234 = arith.constant dense<0.000000e+00> : vector<2x128xf32>
    %452 = tpu.matmul %407, %451, %cst_234 {dimension_numbers = #tpu.dot_dimension_numbers<[1], [0], [0], [1], [0, 0, 1, 1], [], []>} : vector<2x32xf32>, vector<32x128xf32>, vector<2x128xf32> -> vector<2x128xf32>
    %453 = arith.addf %450, %452 : vector<2x128xf32>
    %454 = vector.extract_strided_slice %453 {offsets = [0, 0], sizes = [2, 32], strides = [1, 1]} : vector<2x128xf32> to vector<2x32xf32>
    %455 = arith.negf %454 : vector<2x32xf32>
    %456 = math.exp %455 : vector<2x32xf32>
    %cst_235 = arith.constant 1.000000e+00 : f32
    %457 = vector.broadcast %cst_235 : f32 to vector<2x32xf32>
    %458 = arith.addf %457, %456 : vector<2x32xf32>
    %459 = arith.divf %457, %458 : vector<2x32xf32>
    %460 = vector.extract_strided_slice %453 {offsets = [0, 32], sizes = [2, 32], strides = [1, 1]} : vector<2x128xf32> to vector<2x32xf32>
    %461 = arith.negf %460 : vector<2x32xf32>
    %462 = math.exp %461 : vector<2x32xf32>
    %cst_236 = arith.constant 1.000000e+00 : f32
    %463 = vector.broadcast %cst_236 : f32 to vector<2x32xf32>
    %464 = arith.addf %463, %462 : vector<2x32xf32>
    %465 = arith.divf %463, %464 : vector<2x32xf32>
    %466 = vector.extract_strided_slice %453 {offsets = [0, 64], sizes = [2, 32], strides = [1, 1]} : vector<2x128xf32> to vector<2x32xf32>
    %467 = math.tanh %466 : vector<2x32xf32>
    %468 = vector.extract_strided_slice %453 {offsets = [0, 96], sizes = [2, 32], strides = [1, 1]} : vector<2x128xf32> to vector<2x32xf32>
    %469 = arith.negf %468 : vector<2x32xf32>
    %470 = math.exp %469 : vector<2x32xf32>
    %cst_237 = arith.constant 1.000000e+00 : f32
    %471 = vector.broadcast %cst_237 : f32 to vector<2x32xf32>
    %472 = arith.addf %471, %470 : vector<2x32xf32>
    %473 = arith.divf %471, %472 : vector<2x32xf32>
    %474 = arith.mulf %465, %405 : vector<2x32xf32>
    %475 = arith.mulf %459, %467 : vector<2x32xf32>
    %476 = arith.addf %474, %475 : vector<2x32xf32>
    %477 = math.tanh %476 : vector<2x32xf32>
    %478 = arith.mulf %473, %477 : vector<2x32xf32>
    %479 = arith.index_cast %447 : i32 to index
    %c0_238 = arith.constant 0 : index
    %c0_239 = arith.constant 0 : index
    %480 = vector.load %arg10[%479, %c0_238, %c0_239] : memref<8x2x32xf32, #tpu.memory_space<vmem>>, vector<1x2x32xf32>
    %481 = vector.shape_cast %480 : vector<1x2x32xf32> to vector<2x32xf32>
    %482 = vector.shape_cast %478 : vector<2x32xf32> to vector<1x2x32xf32>
    tpu.vector_store %arg10[%479, %c0_238, %c0_239], %482 {strides = array<i32>} : memref<8x2x32xf32, #tpu.memory_space<vmem>>, vector<1x2x32xf32>,
    %c4_i32_240 = arith.constant 4 : i32
    %483 = arith.index_cast %c4_i32_240 : i32 to index
    %c0_241 = arith.constant 0 : index
    %c0_242 = arith.constant 0 : index
    %484 = vector.load %arg11[%483, %c0_241, %c0_242] : memref<8x2x128xf32, #tpu.memory_space<vmem>>, vector<1x2x128xf32>
    %485 = vector.shape_cast %484 : vector<1x2x128xf32> to vector<2x128xf32>
    %c0_243 = arith.constant 0 : index
    %c0_244 = arith.constant 0 : index
    %486 = vector.load %arg7[%c0_243, %c0_244] : memref<32x128xf32, #tpu.memory_space<vmem>>, vector<32x128xf32>
    %cst_245 = arith.constant dense<0.000000e+00> : vector<2x128xf32>
    %487 = tpu.matmul %442, %486, %cst_245 {dimension_numbers = #tpu.dot_dimension_numbers<[1], [0], [0], [1], [0, 0, 1, 1], [], []>} : vector<2x32xf32>, vector<32x128xf32>, vector<2x128xf32> -> vector<2x128xf32>
    %488 = arith.addf %485, %487 : vector<2x128xf32>
    %489 = vector.extract_strided_slice %488 {offsets = [0, 0], sizes = [2, 32], strides = [1, 1]} : vector<2x128xf32> to vector<2x32xf32>
    %490 = arith.negf %489 : vector<2x32xf32>
    %491 = math.exp %490 : vector<2x32xf32>
    %cst_246 = arith.constant 1.000000e+00 : f32
    %492 = vector.broadcast %cst_246 : f32 to vector<2x32xf32>
    %493 = arith.addf %492, %491 : vector<2x32xf32>
    %494 = arith.divf %492, %493 : vector<2x32xf32>
    %495 = vector.extract_strided_slice %488 {offsets = [0, 32], sizes = [2, 32], strides = [1, 1]} : vector<2x128xf32> to vector<2x32xf32>
    %496 = arith.negf %495 : vector<2x32xf32>
    %497 = math.exp %496 : vector<2x32xf32>
    %cst_247 = arith.constant 1.000000e+00 : f32
    %498 = vector.broadcast %cst_247 : f32 to vector<2x32xf32>
    %499 = arith.addf %498, %497 : vector<2x32xf32>
    %500 = arith.divf %498, %499 : vector<2x32xf32>
    %501 = vector.extract_strided_slice %488 {offsets = [0, 64], sizes = [2, 32], strides = [1, 1]} : vector<2x128xf32> to vector<2x32xf32>
    %502 = math.tanh %501 : vector<2x32xf32>
    %503 = vector.extract_strided_slice %488 {offsets = [0, 96], sizes = [2, 32], strides = [1, 1]} : vector<2x128xf32> to vector<2x32xf32>
    %504 = arith.negf %503 : vector<2x32xf32>
    %505 = math.exp %504 : vector<2x32xf32>
    %cst_248 = arith.constant 1.000000e+00 : f32
    %506 = vector.broadcast %cst_248 : f32 to vector<2x32xf32>
    %507 = arith.addf %506, %505 : vector<2x32xf32>
    %508 = arith.divf %506, %507 : vector<2x32xf32>
    %509 = arith.mulf %500, %440 : vector<2x32xf32>
    %510 = arith.mulf %494, %502 : vector<2x32xf32>
    %511 = arith.addf %509, %510 : vector<2x32xf32>
    %512 = math.tanh %511 : vector<2x32xf32>
    %513 = arith.mulf %508, %512 : vector<2x32xf32>
    %514 = arith.index_cast %c4_i32_240 : i32 to index
    %c0_249 = arith.constant 0 : index
    %c0_250 = arith.constant 0 : index
    %515 = vector.load %arg9[%514, %c0_249, %c0_250] : memref<8x2x32xf32, #tpu.memory_space<vmem>>, vector<1x2x32xf32>
    %516 = vector.shape_cast %515 : vector<1x2x32xf32> to vector<2x32xf32>
    %517 = vector.shape_cast %513 : vector<2x32xf32> to vector<1x2x32xf32>
    tpu.vector_store %arg9[%514, %c0_249, %c0_250], %517 {strides = array<i32>} : memref<8x2x32xf32, #tpu.memory_space<vmem>>, vector<1x2x32xf32>,
    %c7_i32_251 = arith.constant 7 : i32
    %518 = arith.subi %c7_i32_251, %c4_i32_240 : i32
    %519 = arith.index_cast %518 : i32 to index
    %c0_252 = arith.constant 0 : index
    %c0_253 = arith.constant 0 : index
    %520 = vector.load %arg12[%519, %c0_252, %c0_253] : memref<8x2x128xf32, #tpu.memory_space<vmem>>, vector<1x2x128xf32>
    %521 = vector.shape_cast %520 : vector<1x2x128xf32> to vector<2x128xf32>
    %c0_254 = arith.constant 0 : index
    %c0_255 = arith.constant 0 : index
    %522 = vector.load %arg8[%c0_254, %c0_255] : memref<32x128xf32, #tpu.memory_space<vmem>>, vector<32x128xf32>
    %cst_256 = arith.constant dense<0.000000e+00> : vector<2x128xf32>
    %523 = tpu.matmul %478, %522, %cst_256 {dimension_numbers = #tpu.dot_dimension_numbers<[1], [0], [0], [1], [0, 0, 1, 1], [], []>} : vector<2x32xf32>, vector<32x128xf32>, vector<2x128xf32> -> vector<2x128xf32>
    %524 = arith.addf %521, %523 : vector<2x128xf32>
    %525 = vector.extract_strided_slice %524 {offsets = [0, 0], sizes = [2, 32], strides = [1, 1]} : vector<2x128xf32> to vector<2x32xf32>
    %526 = arith.negf %525 : vector<2x32xf32>
    %527 = math.exp %526 : vector<2x32xf32>
    %cst_257 = arith.constant 1.000000e+00 : f32
    %528 = vector.broadcast %cst_257 : f32 to vector<2x32xf32>
    %529 = arith.addf %528, %527 : vector<2x32xf32>
    %530 = arith.divf %528, %529 : vector<2x32xf32>
    %531 = vector.extract_strided_slice %524 {offsets = [0, 32], sizes = [2, 32], strides = [1, 1]} : vector<2x128xf32> to vector<2x32xf32>
    %532 = arith.negf %531 : vector<2x32xf32>
    %533 = math.exp %532 : vector<2x32xf32>
    %cst_258 = arith.constant 1.000000e+00 : f32
    %534 = vector.broadcast %cst_258 : f32 to vector<2x32xf32>
    %535 = arith.addf %534, %533 : vector<2x32xf32>
    %536 = arith.divf %534, %535 : vector<2x32xf32>
    %537 = vector.extract_strided_slice %524 {offsets = [0, 64], sizes = [2, 32], strides = [1, 1]} : vector<2x128xf32> to vector<2x32xf32>
    %538 = math.tanh %537 : vector<2x32xf32>
    %539 = vector.extract_strided_slice %524 {offsets = [0, 96], sizes = [2, 32], strides = [1, 1]} : vector<2x128xf32> to vector<2x32xf32>
    %540 = arith.negf %539 : vector<2x32xf32>
    %541 = math.exp %540 : vector<2x32xf32>
    %cst_259 = arith.constant 1.000000e+00 : f32
    %542 = vector.broadcast %cst_259 : f32 to vector<2x32xf32>
    %543 = arith.addf %542, %541 : vector<2x32xf32>
    %544 = arith.divf %542, %543 : vector<2x32xf32>
    %545 = arith.mulf %536, %476 : vector<2x32xf32>
    %546 = arith.mulf %530, %538 : vector<2x32xf32>
    %547 = arith.addf %545, %546 : vector<2x32xf32>
    %548 = math.tanh %547 : vector<2x32xf32>
    %549 = arith.mulf %544, %548 : vector<2x32xf32>
    %550 = arith.index_cast %518 : i32 to index
    %c0_260 = arith.constant 0 : index
    %c0_261 = arith.constant 0 : index
    %551 = vector.load %arg10[%550, %c0_260, %c0_261] : memref<8x2x32xf32, #tpu.memory_space<vmem>>, vector<1x2x32xf32>
    %552 = vector.shape_cast %551 : vector<1x2x32xf32> to vector<2x32xf32>
    %553 = vector.shape_cast %549 : vector<2x32xf32> to vector<1x2x32xf32>
    tpu.vector_store %arg10[%550, %c0_260, %c0_261], %553 {strides = array<i32>} : memref<8x2x32xf32, #tpu.memory_space<vmem>>, vector<1x2x32xf32>,
    %c5_i32_262 = arith.constant 5 : i32
    %554 = arith.index_cast %c5_i32_262 : i32 to index
    %c0_263 = arith.constant 0 : index
    %c0_264 = arith.constant 0 : index
    %555 = vector.load %arg11[%554, %c0_263, %c0_264] : memref<8x2x128xf32, #tpu.memory_space<vmem>>, vector<1x2x128xf32>
    %556 = vector.shape_cast %555 : vector<1x2x128xf32> to vector<2x128xf32>
    %c0_265 = arith.constant 0 : index
    %c0_266 = arith.constant 0 : index
    %557 = vector.load %arg7[%c0_265, %c0_266] : memref<32x128xf32, #tpu.memory_space<vmem>>, vector<32x128xf32>
    %cst_267 = arith.constant dense<0.000000e+00> : vector<2x128xf32>
    %558 = tpu.matmul %513, %557, %cst_267 {dimension_numbers = #tpu.dot_dimension_numbers<[1], [0], [0], [1], [0, 0, 1, 1], [], []>} : vector<2x32xf32>, vector<32x128xf32>, vector<2x128xf32> -> vector<2x128xf32>
    %559 = arith.addf %556, %558 : vector<2x128xf32>
    %560 = vector.extract_strided_slice %559 {offsets = [0, 0], sizes = [2, 32], strides = [1, 1]} : vector<2x128xf32> to vector<2x32xf32>
    %561 = arith.negf %560 : vector<2x32xf32>
    %562 = math.exp %561 : vector<2x32xf32>
    %cst_268 = arith.constant 1.000000e+00 : f32
    %563 = vector.broadcast %cst_268 : f32 to vector<2x32xf32>
    %564 = arith.addf %563, %562 : vector<2x32xf32>
    %565 = arith.divf %563, %564 : vector<2x32xf32>
    %566 = vector.extract_strided_slice %559 {offsets = [0, 32], sizes = [2, 32], strides = [1, 1]} : vector<2x128xf32> to vector<2x32xf32>
    %567 = arith.negf %566 : vector<2x32xf32>
    %568 = math.exp %567 : vector<2x32xf32>
    %cst_269 = arith.constant 1.000000e+00 : f32
    %569 = vector.broadcast %cst_269 : f32 to vector<2x32xf32>
    %570 = arith.addf %569, %568 : vector<2x32xf32>
    %571 = arith.divf %569, %570 : vector<2x32xf32>
    %572 = vector.extract_strided_slice %559 {offsets = [0, 64], sizes = [2, 32], strides = [1, 1]} : vector<2x128xf32> to vector<2x32xf32>
    %573 = math.tanh %572 : vector<2x32xf32>
    %574 = vector.extract_strided_slice %559 {offsets = [0, 96], sizes = [2, 32], strides = [1, 1]} : vector<2x128xf32> to vector<2x32xf32>
    %575 = arith.negf %574 : vector<2x32xf32>
    %576 = math.exp %575 : vector<2x32xf32>
    %cst_270 = arith.constant 1.000000e+00 : f32
    %577 = vector.broadcast %cst_270 : f32 to vector<2x32xf32>
    %578 = arith.addf %577, %576 : vector<2x32xf32>
    %579 = arith.divf %577, %578 : vector<2x32xf32>
    %580 = arith.mulf %571, %511 : vector<2x32xf32>
    %581 = arith.mulf %565, %573 : vector<2x32xf32>
    %582 = arith.addf %580, %581 : vector<2x32xf32>
    %583 = math.tanh %582 : vector<2x32xf32>
    %584 = arith.mulf %579, %583 : vector<2x32xf32>
    %585 = arith.index_cast %c5_i32_262 : i32 to index
    %c0_271 = arith.constant 0 : index
    %c0_272 = arith.constant 0 : index
    %586 = vector.load %arg9[%585, %c0_271, %c0_272] : memref<8x2x32xf32, #tpu.memory_space<vmem>>, vector<1x2x32xf32>
    %587 = vector.shape_cast %586 : vector<1x2x32xf32> to vector<2x32xf32>
    %588 = vector.shape_cast %584 : vector<2x32xf32> to vector<1x2x32xf32>
    tpu.vector_store %arg9[%585, %c0_271, %c0_272], %588 {strides = array<i32>} : memref<8x2x32xf32, #tpu.memory_space<vmem>>, vector<1x2x32xf32>,
    %c7_i32_273 = arith.constant 7 : i32
    %589 = arith.subi %c7_i32_273, %c5_i32_262 : i32
    %590 = arith.index_cast %589 : i32 to index
    %c0_274 = arith.constant 0 : index
    %c0_275 = arith.constant 0 : index
    %591 = vector.load %arg12[%590, %c0_274, %c0_275] : memref<8x2x128xf32, #tpu.memory_space<vmem>>, vector<1x2x128xf32>
    %592 = vector.shape_cast %591 : vector<1x2x128xf32> to vector<2x128xf32>
    %c0_276 = arith.constant 0 : index
    %c0_277 = arith.constant 0 : index
    %593 = vector.load %arg8[%c0_276, %c0_277] : memref<32x128xf32, #tpu.memory_space<vmem>>, vector<32x128xf32>
    %cst_278 = arith.constant dense<0.000000e+00> : vector<2x128xf32>
    %594 = tpu.matmul %549, %593, %cst_278 {dimension_numbers = #tpu.dot_dimension_numbers<[1], [0], [0], [1], [0, 0, 1, 1], [], []>} : vector<2x32xf32>, vector<32x128xf32>, vector<2x128xf32> -> vector<2x128xf32>
    %595 = arith.addf %592, %594 : vector<2x128xf32>
    %596 = vector.extract_strided_slice %595 {offsets = [0, 0], sizes = [2, 32], strides = [1, 1]} : vector<2x128xf32> to vector<2x32xf32>
    %597 = arith.negf %596 : vector<2x32xf32>
    %598 = math.exp %597 : vector<2x32xf32>
    %cst_279 = arith.constant 1.000000e+00 : f32
    %599 = vector.broadcast %cst_279 : f32 to vector<2x32xf32>
    %600 = arith.addf %599, %598 : vector<2x32xf32>
    %601 = arith.divf %599, %600 : vector<2x32xf32>
    %602 = vector.extract_strided_slice %595 {offsets = [0, 32], sizes = [2, 32], strides = [1, 1]} : vector<2x128xf32> to vector<2x32xf32>
    %603 = arith.negf %602 : vector<2x32xf32>
    %604 = math.exp %603 : vector<2x32xf32>
    %cst_280 = arith.constant 1.000000e+00 : f32
    %605 = vector.broadcast %cst_280 : f32 to vector<2x32xf32>
    %606 = arith.addf %605, %604 : vector<2x32xf32>
    %607 = arith.divf %605, %606 : vector<2x32xf32>
    %608 = vector.extract_strided_slice %595 {offsets = [0, 64], sizes = [2, 32], strides = [1, 1]} : vector<2x128xf32> to vector<2x32xf32>
    %609 = math.tanh %608 : vector<2x32xf32>
    %610 = vector.extract_strided_slice %595 {offsets = [0, 96], sizes = [2, 32], strides = [1, 1]} : vector<2x128xf32> to vector<2x32xf32>
    %611 = arith.negf %610 : vector<2x32xf32>
    %612 = math.exp %611 : vector<2x32xf32>
    %cst_281 = arith.constant 1.000000e+00 : f32
    %613 = vector.broadcast %cst_281 : f32 to vector<2x32xf32>
    %614 = arith.addf %613, %612 : vector<2x32xf32>
    %615 = arith.divf %613, %614 : vector<2x32xf32>
    %616 = arith.mulf %607, %547 : vector<2x32xf32>
    %617 = arith.mulf %601, %609 : vector<2x32xf32>
    %618 = arith.addf %616, %617 : vector<2x32xf32>
    %619 = math.tanh %618 : vector<2x32xf32>
    %620 = arith.mulf %615, %619 : vector<2x32xf32>
    %621 = arith.index_cast %589 : i32 to index
    %c0_282 = arith.constant 0 : index
    %c0_283 = arith.constant 0 : index
    %622 = vector.load %arg10[%621, %c0_282, %c0_283] : memref<8x2x32xf32, #tpu.memory_space<vmem>>, vector<1x2x32xf32>
    %623 = vector.shape_cast %622 : vector<1x2x32xf32> to vector<2x32xf32>
    %624 = vector.shape_cast %620 : vector<2x32xf32> to vector<1x2x32xf32>
    tpu.vector_store %arg10[%621, %c0_282, %c0_283], %624 {strides = array<i32>} : memref<8x2x32xf32, #tpu.memory_space<vmem>>, vector<1x2x32xf32>,
    %c6_i32_284 = arith.constant 6 : i32
    %625 = arith.index_cast %c6_i32_284 : i32 to index
    %c0_285 = arith.constant 0 : index
    %c0_286 = arith.constant 0 : index
    %626 = vector.load %arg11[%625, %c0_285, %c0_286] : memref<8x2x128xf32, #tpu.memory_space<vmem>>, vector<1x2x128xf32>
    %627 = vector.shape_cast %626 : vector<1x2x128xf32> to vector<2x128xf32>
    %c0_287 = arith.constant 0 : index
    %c0_288 = arith.constant 0 : index
    %628 = vector.load %arg7[%c0_287, %c0_288] : memref<32x128xf32, #tpu.memory_space<vmem>>, vector<32x128xf32>
    %cst_289 = arith.constant dense<0.000000e+00> : vector<2x128xf32>
    %629 = tpu.matmul %584, %628, %cst_289 {dimension_numbers = #tpu.dot_dimension_numbers<[1], [0], [0], [1], [0, 0, 1, 1], [], []>} : vector<2x32xf32>, vector<32x128xf32>, vector<2x128xf32> -> vector<2x128xf32>
    %630 = arith.addf %627, %629 : vector<2x128xf32>
    %631 = vector.extract_strided_slice %630 {offsets = [0, 0], sizes = [2, 32], strides = [1, 1]} : vector<2x128xf32> to vector<2x32xf32>
    %632 = arith.negf %631 : vector<2x32xf32>
    %633 = math.exp %632 : vector<2x32xf32>
    %cst_290 = arith.constant 1.000000e+00 : f32
    %634 = vector.broadcast %cst_290 : f32 to vector<2x32xf32>
    %635 = arith.addf %634, %633 : vector<2x32xf32>
    %636 = arith.divf %634, %635 : vector<2x32xf32>
    %637 = vector.extract_strided_slice %630 {offsets = [0, 32], sizes = [2, 32], strides = [1, 1]} : vector<2x128xf32> to vector<2x32xf32>
    %638 = arith.negf %637 : vector<2x32xf32>
    %639 = math.exp %638 : vector<2x32xf32>
    %cst_291 = arith.constant 1.000000e+00 : f32
    %640 = vector.broadcast %cst_291 : f32 to vector<2x32xf32>
    %641 = arith.addf %640, %639 : vector<2x32xf32>
    %642 = arith.divf %640, %641 : vector<2x32xf32>
    %643 = vector.extract_strided_slice %630 {offsets = [0, 64], sizes = [2, 32], strides = [1, 1]} : vector<2x128xf32> to vector<2x32xf32>
    %644 = math.tanh %643 : vector<2x32xf32>
    %645 = vector.extract_strided_slice %630 {offsets = [0, 96], sizes = [2, 32], strides = [1, 1]} : vector<2x128xf32> to vector<2x32xf32>
    %646 = arith.negf %645 : vector<2x32xf32>
    %647 = math.exp %646 : vector<2x32xf32>
    %cst_292 = arith.constant 1.000000e+00 : f32
    %648 = vector.broadcast %cst_292 : f32 to vector<2x32xf32>
    %649 = arith.addf %648, %647 : vector<2x32xf32>
    %650 = arith.divf %648, %649 : vector<2x32xf32>
    %651 = arith.mulf %642, %582 : vector<2x32xf32>
    %652 = arith.mulf %636, %644 : vector<2x32xf32>
    %653 = arith.addf %651, %652 : vector<2x32xf32>
    %654 = math.tanh %653 : vector<2x32xf32>
    %655 = arith.mulf %650, %654 : vector<2x32xf32>
    %656 = arith.index_cast %c6_i32_284 : i32 to index
    %c0_293 = arith.constant 0 : index
    %c0_294 = arith.constant 0 : index
    %657 = vector.load %arg9[%656, %c0_293, %c0_294] : memref<8x2x32xf32, #tpu.memory_space<vmem>>, vector<1x2x32xf32>
    %658 = vector.shape_cast %657 : vector<1x2x32xf32> to vector<2x32xf32>
    %659 = vector.shape_cast %655 : vector<2x32xf32> to vector<1x2x32xf32>
    tpu.vector_store %arg9[%656, %c0_293, %c0_294], %659 {strides = array<i32>} : memref<8x2x32xf32, #tpu.memory_space<vmem>>, vector<1x2x32xf32>,
    %c7_i32_295 = arith.constant 7 : i32
    %660 = arith.subi %c7_i32_295, %c6_i32_284 : i32
    %661 = arith.index_cast %660 : i32 to index
    %c0_296 = arith.constant 0 : index
    %c0_297 = arith.constant 0 : index
    %662 = vector.load %arg12[%661, %c0_296, %c0_297] : memref<8x2x128xf32, #tpu.memory_space<vmem>>, vector<1x2x128xf32>
    %663 = vector.shape_cast %662 : vector<1x2x128xf32> to vector<2x128xf32>
    %c0_298 = arith.constant 0 : index
    %c0_299 = arith.constant 0 : index
    %664 = vector.load %arg8[%c0_298, %c0_299] : memref<32x128xf32, #tpu.memory_space<vmem>>, vector<32x128xf32>
    %cst_300 = arith.constant dense<0.000000e+00> : vector<2x128xf32>
    %665 = tpu.matmul %620, %664, %cst_300 {dimension_numbers = #tpu.dot_dimension_numbers<[1], [0], [0], [1], [0, 0, 1, 1], [], []>} : vector<2x32xf32>, vector<32x128xf32>, vector<2x128xf32> -> vector<2x128xf32>
    %666 = arith.addf %663, %665 : vector<2x128xf32>
    %667 = vector.extract_strided_slice %666 {offsets = [0, 0], sizes = [2, 32], strides = [1, 1]} : vector<2x128xf32> to vector<2x32xf32>
    %668 = arith.negf %667 : vector<2x32xf32>
    %669 = math.exp %668 : vector<2x32xf32>
    %cst_301 = arith.constant 1.000000e+00 : f32
    %670 = vector.broadcast %cst_301 : f32 to vector<2x32xf32>
    %671 = arith.addf %670, %669 : vector<2x32xf32>
    %672 = arith.divf %670, %671 : vector<2x32xf32>
    %673 = vector.extract_strided_slice %666 {offsets = [0, 32], sizes = [2, 32], strides = [1, 1]} : vector<2x128xf32> to vector<2x32xf32>
    %674 = arith.negf %673 : vector<2x32xf32>
    %675 = math.exp %674 : vector<2x32xf32>
    %cst_302 = arith.constant 1.000000e+00 : f32
    %676 = vector.broadcast %cst_302 : f32 to vector<2x32xf32>
    %677 = arith.addf %676, %675 : vector<2x32xf32>
    %678 = arith.divf %676, %677 : vector<2x32xf32>
    %679 = vector.extract_strided_slice %666 {offsets = [0, 64], sizes = [2, 32], strides = [1, 1]} : vector<2x128xf32> to vector<2x32xf32>
    %680 = math.tanh %679 : vector<2x32xf32>
    %681 = vector.extract_strided_slice %666 {offsets = [0, 96], sizes = [2, 32], strides = [1, 1]} : vector<2x128xf32> to vector<2x32xf32>
    %682 = arith.negf %681 : vector<2x32xf32>
    %683 = math.exp %682 : vector<2x32xf32>
    %cst_303 = arith.constant 1.000000e+00 : f32
    %684 = vector.broadcast %cst_303 : f32 to vector<2x32xf32>
    %685 = arith.addf %684, %683 : vector<2x32xf32>
    %686 = arith.divf %684, %685 : vector<2x32xf32>
    %687 = arith.mulf %678, %618 : vector<2x32xf32>
    %688 = arith.mulf %672, %680 : vector<2x32xf32>
    %689 = arith.addf %687, %688 : vector<2x32xf32>
    %690 = math.tanh %689 : vector<2x32xf32>
    %691 = arith.mulf %686, %690 : vector<2x32xf32>
    %692 = arith.index_cast %660 : i32 to index
    %c0_304 = arith.constant 0 : index
    %c0_305 = arith.constant 0 : index
    %693 = vector.load %arg10[%692, %c0_304, %c0_305] : memref<8x2x32xf32, #tpu.memory_space<vmem>>, vector<1x2x32xf32>
    %694 = vector.shape_cast %693 : vector<1x2x32xf32> to vector<2x32xf32>
    %695 = vector.shape_cast %691 : vector<2x32xf32> to vector<1x2x32xf32>
    tpu.vector_store %arg10[%692, %c0_304, %c0_305], %695 {strides = array<i32>} : memref<8x2x32xf32, #tpu.memory_space<vmem>>, vector<1x2x32xf32>,
    %c7_i32_306 = arith.constant 7 : i32
    %696 = arith.index_cast %c7_i32_306 : i32 to index
    %c0_307 = arith.constant 0 : index
    %c0_308 = arith.constant 0 : index
    %697 = vector.load %arg11[%696, %c0_307, %c0_308] : memref<8x2x128xf32, #tpu.memory_space<vmem>>, vector<1x2x128xf32>
    %698 = vector.shape_cast %697 : vector<1x2x128xf32> to vector<2x128xf32>
    %c0_309 = arith.constant 0 : index
    %c0_310 = arith.constant 0 : index
    %699 = vector.load %arg7[%c0_309, %c0_310] : memref<32x128xf32, #tpu.memory_space<vmem>>, vector<32x128xf32>
    %cst_311 = arith.constant dense<0.000000e+00> : vector<2x128xf32>
    %700 = tpu.matmul %655, %699, %cst_311 {dimension_numbers = #tpu.dot_dimension_numbers<[1], [0], [0], [1], [0, 0, 1, 1], [], []>} : vector<2x32xf32>, vector<32x128xf32>, vector<2x128xf32> -> vector<2x128xf32>
    %701 = arith.addf %698, %700 : vector<2x128xf32>
    %702 = vector.extract_strided_slice %701 {offsets = [0, 0], sizes = [2, 32], strides = [1, 1]} : vector<2x128xf32> to vector<2x32xf32>
    %703 = arith.negf %702 : vector<2x32xf32>
    %704 = math.exp %703 : vector<2x32xf32>
    %cst_312 = arith.constant 1.000000e+00 : f32
    %705 = vector.broadcast %cst_312 : f32 to vector<2x32xf32>
    %706 = arith.addf %705, %704 : vector<2x32xf32>
    %707 = arith.divf %705, %706 : vector<2x32xf32>
    %708 = vector.extract_strided_slice %701 {offsets = [0, 32], sizes = [2, 32], strides = [1, 1]} : vector<2x128xf32> to vector<2x32xf32>
    %709 = arith.negf %708 : vector<2x32xf32>
    %710 = math.exp %709 : vector<2x32xf32>
    %cst_313 = arith.constant 1.000000e+00 : f32
    %711 = vector.broadcast %cst_313 : f32 to vector<2x32xf32>
    %712 = arith.addf %711, %710 : vector<2x32xf32>
    %713 = arith.divf %711, %712 : vector<2x32xf32>
    %714 = vector.extract_strided_slice %701 {offsets = [0, 64], sizes = [2, 32], strides = [1, 1]} : vector<2x128xf32> to vector<2x32xf32>
    %715 = math.tanh %714 : vector<2x32xf32>
    %716 = vector.extract_strided_slice %701 {offsets = [0, 96], sizes = [2, 32], strides = [1, 1]} : vector<2x128xf32> to vector<2x32xf32>
    %717 = arith.negf %716 : vector<2x32xf32>
    %718 = math.exp %717 : vector<2x32xf32>
    %cst_314 = arith.constant 1.000000e+00 : f32
    %719 = vector.broadcast %cst_314 : f32 to vector<2x32xf32>
    %720 = arith.addf %719, %718 : vector<2x32xf32>
    %721 = arith.divf %719, %720 : vector<2x32xf32>
    %722 = arith.mulf %713, %653 : vector<2x32xf32>
    %723 = arith.mulf %707, %715 : vector<2x32xf32>
    %724 = arith.addf %722, %723 : vector<2x32xf32>
    %725 = math.tanh %724 : vector<2x32xf32>
    %726 = arith.mulf %721, %725 : vector<2x32xf32>
    %727 = arith.index_cast %c7_i32_306 : i32 to index
    %c0_315 = arith.constant 0 : index
    %c0_316 = arith.constant 0 : index
    %728 = vector.load %arg9[%727, %c0_315, %c0_316] : memref<8x2x32xf32, #tpu.memory_space<vmem>>, vector<1x2x32xf32>
    %729 = vector.shape_cast %728 : vector<1x2x32xf32> to vector<2x32xf32>
    %730 = vector.shape_cast %726 : vector<2x32xf32> to vector<1x2x32xf32>
    tpu.vector_store %arg9[%727, %c0_315, %c0_316], %730 {strides = array<i32>} : memref<8x2x32xf32, #tpu.memory_space<vmem>>, vector<1x2x32xf32>,
    %c7_i32_317 = arith.constant 7 : i32
    %731 = arith.subi %c7_i32_317, %c7_i32_306 : i32
    %732 = arith.index_cast %731 : i32 to index
    %c0_318 = arith.constant 0 : index
    %c0_319 = arith.constant 0 : index
    %733 = vector.load %arg12[%732, %c0_318, %c0_319] : memref<8x2x128xf32, #tpu.memory_space<vmem>>, vector<1x2x128xf32>
    %734 = vector.shape_cast %733 : vector<1x2x128xf32> to vector<2x128xf32>
    %c0_320 = arith.constant 0 : index
    %c0_321 = arith.constant 0 : index
    %735 = vector.load %arg8[%c0_320, %c0_321] : memref<32x128xf32, #tpu.memory_space<vmem>>, vector<32x128xf32>
    %cst_322 = arith.constant dense<0.000000e+00> : vector<2x128xf32>
    %736 = tpu.matmul %691, %735, %cst_322 {dimension_numbers = #tpu.dot_dimension_numbers<[1], [0], [0], [1], [0, 0, 1, 1], [], []>} : vector<2x32xf32>, vector<32x128xf32>, vector<2x128xf32> -> vector<2x128xf32>
    %737 = arith.addf %734, %736 : vector<2x128xf32>
    %738 = vector.extract_strided_slice %737 {offsets = [0, 0], sizes = [2, 32], strides = [1, 1]} : vector<2x128xf32> to vector<2x32xf32>
    %739 = arith.negf %738 : vector<2x32xf32>
    %740 = math.exp %739 : vector<2x32xf32>
    %cst_323 = arith.constant 1.000000e+00 : f32
    %741 = vector.broadcast %cst_323 : f32 to vector<2x32xf32>
    %742 = arith.addf %741, %740 : vector<2x32xf32>
    %743 = arith.divf %741, %742 : vector<2x32xf32>
    %744 = vector.extract_strided_slice %737 {offsets = [0, 32], sizes = [2, 32], strides = [1, 1]} : vector<2x128xf32> to vector<2x32xf32>
    %745 = arith.negf %744 : vector<2x32xf32>
    %746 = math.exp %745 : vector<2x32xf32>
    %cst_324 = arith.constant 1.000000e+00 : f32
    %747 = vector.broadcast %cst_324 : f32 to vector<2x32xf32>
    %748 = arith.addf %747, %746 : vector<2x32xf32>
    %749 = arith.divf %747, %748 : vector<2x32xf32>
    %750 = vector.extract_strided_slice %737 {offsets = [0, 64], sizes = [2, 32], strides = [1, 1]} : vector<2x128xf32> to vector<2x32xf32>
    %751 = math.tanh %750 : vector<2x32xf32>
    %752 = vector.extract_strided_slice %737 {offsets = [0, 96], sizes = [2, 32], strides = [1, 1]} : vector<2x128xf32> to vector<2x32xf32>
    %753 = arith.negf %752 : vector<2x32xf32>
    %754 = math.exp %753 : vector<2x32xf32>
    %cst_325 = arith.constant 1.000000e+00 : f32
    %755 = vector.broadcast %cst_325 : f32 to vector<2x32xf32>
    %756 = arith.addf %755, %754 : vector<2x32xf32>
    %757 = arith.divf %755, %756 : vector<2x32xf32>
    %758 = arith.mulf %749, %689 : vector<2x32xf32>
    %759 = arith.mulf %743, %751 : vector<2x32xf32>
    %760 = arith.addf %758, %759 : vector<2x32xf32>
    %761 = math.tanh %760 : vector<2x32xf32>
    %762 = arith.mulf %757, %761 : vector<2x32xf32>
    %763 = arith.index_cast %731 : i32 to index
    %c0_326 = arith.constant 0 : index
    %c0_327 = arith.constant 0 : index
    %764 = vector.load %arg10[%763, %c0_326, %c0_327] : memref<8x2x32xf32, #tpu.memory_space<vmem>>, vector<1x2x32xf32>
    %765 = vector.shape_cast %764 : vector<1x2x32xf32> to vector<2x32xf32>
    %766 = vector.shape_cast %762 : vector<2x32xf32> to vector<1x2x32xf32>
    tpu.vector_store %arg10[%763, %c0_326, %c0_327], %766 {strides = array<i32>} : memref<8x2x32xf32, #tpu.memory_space<vmem>>, vector<1x2x32xf32>,
    %c8_i32_328 = arith.constant 8 : i32
    %c0_329 = arith.constant 0 : index
    %c0_330 = arith.constant 0 : index
    %767 = vector.load %arg13[%c0_329, %c0_330] : memref<2x32xf32, #tpu.memory_space<vmem>>, vector<2x32xf32>
    tpu.vector_store %arg13[%c0_329, %c0_330], %726 {strides = array<i32>} : memref<2x32xf32, #tpu.memory_space<vmem>>, vector<2x32xf32>,
    %c0_331 = arith.constant 0 : index
    %c0_332 = arith.constant 0 : index
    %768 = vector.load %arg14[%c0_331, %c0_332] : memref<2x32xf32, #tpu.memory_space<vmem>>, vector<2x32xf32>
    tpu.vector_store %arg14[%c0_331, %c0_332], %724 {strides = array<i32>} : memref<2x32xf32, #tpu.memory_space<vmem>>, vector<2x32xf32>,
    %c0_333 = arith.constant 0 : index
    %c0_334 = arith.constant 0 : index
    %769 = vector.load %arg15[%c0_333, %c0_334] : memref<2x32xf32, #tpu.memory_space<vmem>>, vector<2x32xf32>
    tpu.vector_store %arg15[%c0_333, %c0_334], %762 {strides = array<i32>} : memref<2x32xf32, #tpu.memory_space<vmem>>, vector<2x32xf32>,
    %c0_335 = arith.constant 0 : index
    %c0_336 = arith.constant 0 : index
    %770 = vector.load %arg16[%c0_335, %c0_336] : memref<2x32xf32, #tpu.memory_space<vmem>>, vector<2x32xf32>
    tpu.vector_store %arg16[%c0_335, %c0_336], %760 {strides = array<i32>} : memref<2x32xf32, #tpu.memory_space<vmem>>, vector<2x32xf32>,
    return
  }
  func.func @transform_0(%arg0: i32) -> (i32, i32, i32) {
    %c0_i32 = arith.constant 0 : i32
    %c0_i32_0 = arith.constant 0 : i32
    %c0_i32_1 = arith.constant 0 : i32
    return %arg0, %c0_i32, %c0_i32_0 : i32, i32, i32
  }
  func.func @transform_1(%arg0: i32) -> (i32, i32, i32) {
    %c0_i32 = arith.constant 0 : i32
    %0 = arith.subi %c0_i32, %arg0 : i32
    %c0_i32_0 = arith.constant 0 : i32
    %c0_i32_1 = arith.constant 0 : i32
    %c0_i32_2 = arith.constant 0 : i32
    return %0, %c0_i32_0, %c0_i32_1 : i32, i32, i32
  }
  func.func @transform_2(%arg0: i32) -> (i32, i32) {
    %c0_i32 = arith.constant 0 : i32
    %c0_i32_0 = arith.constant 0 : i32
    %c0_i32_1 = arith.constant 0 : i32
    return %c0_i32, %c0_i32_0 : i32, i32
  }
  func.func @transform_3(%arg0: i32) -> (i32, i32) {
    %c0_i32 = arith.constant 0 : i32
    %c0_i32_0 = arith.constant 0 : i32
    %c0_i32_1 = arith.constant 0 : i32
    return %c0_i32, %c0_i32_0 : i32, i32
  }
  func.func @transform_4(%arg0: i32) -> (i32, i32) {
    %c0_i32 = arith.constant 0 : i32
    %c0_i32_0 = arith.constant 0 : i32
    %c0_i32_1 = arith.constant 0 : i32
    return %c0_i32, %c0_i32_0 : i32, i32
  }
  func.func @transform_5(%arg0: i32) -> (i32, i32) {
    %c0_i32 = arith.constant 0 : i32
    %c0_i32_0 = arith.constant 0 : i32
    %c0_i32_1 = arith.constant 0 : i32
    return %c0_i32, %c0_i32_0 : i32, i32
  }
  func.func @transform_6(%arg0: i32) -> (i32, i32) {
    %c0_i32 = arith.constant 0 : i32
    %c0_i32_0 = arith.constant 0 : i32
    %c0_i32_1 = arith.constant 0 : i32
    return %c0_i32, %c0_i32_0 : i32, i32
  }
  func.func @transform_7(%arg0: i32) -> (i32, i32) {
    %c0_i32 = arith.constant 0 : i32
    %c0_i32_0 = arith.constant 0 : i32
    %c0_i32_1 = arith.constant 0 : i32
    return %c0_i32, %c0_i32_0 : i32, i32
  }
  func.func @transform_8(%arg0: i32) -> (i32, i32, i32) {
    %c0_i32 = arith.constant 0 : i32
    %c0_i32_0 = arith.constant 0 : i32
    %c0_i32_1 = arith.constant 0 : i32
    return %arg0, %c0_i32, %c0_i32_0 : i32, i32, i32
  }
  func.func @transform_9(%arg0: i32) -> (i32, i32, i32) {
    %c0_i32 = arith.constant 0 : i32
    %0 = arith.subi %c0_i32, %arg0 : i32
    %c0_i32_0 = arith.constant 0 : i32
    %c0_i32_1 = arith.constant 0 : i32
    %c0_i32_2 = arith.constant 0 : i32
    return %0, %c0_i32_0, %c0_i32_1 : i32, i32, i32
  }
}

module attributes {stable_mosaic.version = 11 : i64} {
  func.func @_fc_kernel(%arg0: i32, %arg1: memref<16x32xf32, #tpu.memory_space<vmem>>, %arg2: memref<16x32xf32, #tpu.memory_space<vmem>>, %arg3: memref<32x128xf32, #tpu.memory_space<vmem>>, %arg4: memref<32x128xf32, #tpu.memory_space<vmem>>, %arg5: memref<1x128xf32, #tpu.memory_space<vmem>>, %arg6: memref<16x128xf32, #tpu.memory_space<vmem>>) attributes {dimension_semantics = [#tpu.dimension_semantics<parallel>], iteration_bounds = array<i64: 1>, scalar_prefetch = 0 : i64, scratch_operands = 0 : i64, tpu.core_type = #tpu.core_type<tc>, window_params = [{transform_indices = @transform_0, window_bounds = array<i64: 16, 32>}, {transform_indices = @transform_1, window_bounds = array<i64: 16, 32>}, {pipeline_mode = #tpu.pipeline_mode<synchronous>, transform_indices = @transform_2, window_bounds = array<i64: 32, 128>}, {pipeline_mode = #tpu.pipeline_mode<synchronous>, transform_indices = @transform_3, window_bounds = array<i64: 32, 128>}, {pipeline_mode = #tpu.pipeline_mode<synchronous>, transform_indices = @transform_4, window_bounds = array<i64: 1, 128>}, {transform_indices = @transform_5, window_bounds = array<i64: 16, 128>}]} {
    %c0 = arith.constant 0 : index
    %c0_0 = arith.constant 0 : index
    %0 = vector.load %arg1[%c0, %c0_0] : memref<16x32xf32, #tpu.memory_space<vmem>>, vector<16x32xf32>
    %c0_1 = arith.constant 0 : index
    %c0_2 = arith.constant 0 : index
    %1 = vector.load %arg3[%c0_1, %c0_2] : memref<32x128xf32, #tpu.memory_space<vmem>>, vector<32x128xf32>
    %cst = arith.constant dense<0.000000e+00> : vector<16x128xf32>
    %2 = tpu.matmul %0, %1, %cst {dimension_numbers = #tpu.dot_dimension_numbers<[1], [0], [0], [1], [0, 0, 1, 1], [], []>} : vector<16x32xf32>, vector<32x128xf32>, vector<16x128xf32> -> vector<16x128xf32>
    %c0_3 = arith.constant 0 : index
    %c0_4 = arith.constant 0 : index
    %3 = vector.load %arg2[%c0_3, %c0_4] : memref<16x32xf32, #tpu.memory_space<vmem>>, vector<16x32xf32>
    %c0_5 = arith.constant 0 : index
    %c0_6 = arith.constant 0 : index
    %4 = vector.load %arg4[%c0_5, %c0_6] : memref<32x128xf32, #tpu.memory_space<vmem>>, vector<32x128xf32>
    %cst_7 = arith.constant dense<0.000000e+00> : vector<16x128xf32>
    %5 = tpu.matmul %3, %4, %cst_7 {dimension_numbers = #tpu.dot_dimension_numbers<[1], [0], [0], [1], [0, 0, 1, 1], [], []>} : vector<16x32xf32>, vector<32x128xf32>, vector<16x128xf32> -> vector<16x128xf32>
    %6 = arith.addf %2, %5 : vector<16x128xf32>
    %c0_8 = arith.constant 0 : index
    %c0_9 = arith.constant 0 : index
    %7 = vector.load %arg5[%c0_8, %c0_9] : memref<1x128xf32, #tpu.memory_space<vmem>>, vector<1x128xf32>
    %8 = vector.broadcast %7 : vector<1x128xf32> to vector<16x128xf32>
    %9 = arith.addf %6, %8 : vector<16x128xf32>
    %c0_10 = arith.constant 0 : index
    %c0_11 = arith.constant 0 : index
    %10 = vector.load %arg6[%c0_10, %c0_11] : memref<16x128xf32, #tpu.memory_space<vmem>>, vector<16x128xf32>
    tpu.vector_store %arg6[%c0_10, %c0_11], %9 {strides = array<i32>} : memref<16x128xf32, #tpu.memory_space<vmem>>, vector<16x128xf32>,
    return
  }
  func.func @transform_0(%arg0: i32) -> (i32, i32) {
    %c0_i32 = arith.constant 0 : i32
    %c0_i32_0 = arith.constant 0 : i32
    return %arg0, %c0_i32 : i32, i32
  }
  func.func @transform_1(%arg0: i32) -> (i32, i32) {
    %c0_i32 = arith.constant 0 : i32
    %c0_i32_0 = arith.constant 0 : i32
    return %arg0, %c0_i32 : i32, i32
  }
  func.func @transform_2(%arg0: i32) -> (i32, i32) {
    %c0_i32 = arith.constant 0 : i32
    %c0_i32_0 = arith.constant 0 : i32
    %c0_i32_1 = arith.constant 0 : i32
    return %c0_i32, %c0_i32_0 : i32, i32
  }
  func.func @transform_3(%arg0: i32) -> (i32, i32) {
    %c0_i32 = arith.constant 0 : i32
    %c0_i32_0 = arith.constant 0 : i32
    %c0_i32_1 = arith.constant 0 : i32
    return %c0_i32, %c0_i32_0 : i32, i32
  }
  func.func @transform_4(%arg0: i32) -> (i32, i32) {
    %c0_i32 = arith.constant 0 : i32
    %c0_i32_0 = arith.constant 0 : i32
    %c0_i32_1 = arith.constant 0 : i32
    return %c0_i32, %c0_i32_0 : i32, i32
  }
  func.func @transform_5(%arg0: i32) -> (i32, i32) {
    %c0_i32 = arith.constant 0 : i32
    %c0_i32_0 = arith.constant 0 : i32
    return %arg0, %c0_i32 : i32, i32
  }
}

</mosaic_0001>

<llo_original>
// kernel: blstm_forward.5
$region0: #{blstm_forward.5}
  #allocation0 [shape = 'u32[]', space=smem, size = 0x4, offset = 0x4, fixed_abs, tag = 'smem constant byte address 0x4 - core index']
  #allocation1 [shape = 'u32[144,128]{1,0:T(1,128)}', space=vmem, size = 0x12000, scoped, tag = 'internal scratch']
  %s0 = inlined_call_operand.vmem [shape: f32[16,32], index: 0, kind: input, shape index: {}]
  %s1 = inlined_call_operand.vmem [shape: f32[16,32], index: 1, kind: input, shape index: {}]
  %s2 = inlined_call_operand.vmem [shape: f32[32,128], index: 2, kind: input, shape index: {}]
  %s3 = inlined_call_operand.vmem [shape: f32[32,128], index: 3, kind: input, shape index: {}]
  %s4 = inlined_call_operand.vmem [shape: f32[1,128], index: 4, kind: input, shape index: {}]
  %s5 = inlined_call_operand.vmem [shape: f32[16,128], index: 5, kind: output, shape index: {}]
  %s6 = sld [smem:[#allocation0]]
  $region30: #{blstm_forward.5} parent=0
    _
  %s8 = ssub.s32 1, %s6
  %s9 = scalar_select 0, %s8, %s6
  // Predicated region
  $region2: #{blstm_forward.5} parent=0 // pred_check
    _
  $region3: #{blstm_forward.5} parent=0 // pred_check_branch
    %11 = sbr.rel (0) target = $region5
  $region4: #{blstm_forward.5} parent=0 // pred_region
    _
  $region5: #{blstm_forward.5} parent=0 // pred_fallthru
    _
  // Predicated region
  $region6: #{blstm_forward.5} parent=0 // pred_check
    _
  $region7: #{blstm_forward.5} parent=0 // pred_check_branch
    %13 = sbr.rel (0) target = $region9
  $region8: #{blstm_forward.5} parent=0 // pred_region
    _
  $region9: #{blstm_forward.5} parent=0 // pred_fallthru
    _
  // Predicated region
  $region10: #{blstm_forward.5} parent=0 // pred_check
    _
  $region11: #{blstm_forward.5} parent=0 // pred_check_branch
    %15 = sbr.rel (0) target = $region13
  $region12: #{blstm_forward.5} parent=0 // pred_region
    _
  $region13: #{blstm_forward.5} parent=0 // pred_fallthru
    _
  // Predicated region
  $region14: #{blstm_forward.5} parent=0 // pred_check
    _
  $region15: #{blstm_forward.5} parent=0 // pred_check_branch
    %17 = sbr.rel (0) target = $region17
  $region16: #{blstm_forward.5} parent=0 // pred_region
    _
  $region17: #{blstm_forward.5} parent=0 // pred_fallthru
    _
  // Predicated region
  $region18: #{blstm_forward.5} parent=0 // pred_check
    _
  $region19: #{blstm_forward.5} parent=0 // pred_check_branch
    %19 = sbr.rel (0) target = $region21
  $region20: #{blstm_forward.5} parent=0 // pred_region
    _
  $region21: #{blstm_forward.5} parent=0 // pred_fallthru
    _
  %v20 = vld [vmem:[%s0] sm:$0xff]
  %v21 = vld [vmem:[%s0 + $0x8] sm:$0xff]
  %v22 = vld [vmem:[%s2] sm:$0xff]
  %v23 = vld [vmem:[%s2 + $0x8] sm:$0xff]
  %v24 = vld [vmem:[%s2 + $0x10] sm:$0xff]
  %v25 = vld [vmem:[%s2 + $0x18] sm:$0xff]
  %v26 = vld [vmem:[%s1] sm:$0xff]
  %v27 = vld [vmem:[%s1 + $0x8] sm:$0xff]
  %v28 = vld [vmem:[%s3] sm:$0xff]
  %v29 = vld [vmem:[%s3 + $0x8] sm:$0xff]
  %v30 = vld [vmem:[%s3 + $0x10] sm:$0xff]
  %v31 = vld [vmem:[%s3 + $0x18] sm:$0xff]
  %vm32 = vcmask 261120
  %v34 = vsel %vm32, %v26, 0
  %v37 = vsel %vm32, %v27, 0
  %39 = vmatprep.subr.mxu0 0.0
  %40 = vmatpush1.msra.mxu0 %v28
  %41 = vmatprep.subr.mxu0 0.0
  %42 = vmatpush1.msra.mxu0 %v29
  %43 = vmatprep.subr.mxu0 0.0
  %44 = vmatpush1.msra.mxu0 %v30
  %45 = vmatprep.subr.mxu0 0.0
  %46 = vmatpush1.msra.mxu0 %v31
  %47 = vmatprep.subr.mxu0 0.0
  %48 = vmatpush1.msra.mxu0 0.0
  %49 = vmatprep.subr.mxu0 0.0
  %50 = vmatpush1.msra.mxu0 0.0
  %51 = vmatprep.subr.mxu0 0.0
  %52 = vmatpush1.msra.mxu0 0.0
  %53 = vmatprep.subr.mxu0 0.0
  %54 = vmatpush1.msra.mxu0 0.0
  %55 = vmatprep.subr.mxu0 0.0
  %56 = vmatpush1.msra.mxu0 0.0
  %57 = vmatprep.subr.mxu0 0.0
  %58 = vmatpush1.msra.mxu0 0.0
  %59 = vmatprep.subr.mxu0 0.0
  %60 = vmatpush1.msra.mxu0 0.0
  %61 = vmatprep.subr.mxu0 0.0
  %62 = vmatpush1.msra.mxu0 0.0
  %63 = vmatprep.subr.mxu0 0.0
  %64 = vmatpush1.msra.mxu0 0.0
  %65 = vmatprep.subr.mxu0 0.0
  %66 = vmatpush1.msra.mxu0 0.0
  %67 = vmatprep.subr.mxu0 0.0
  %68 = vmatpush1.msra.mxu0 0.0
  %69 = vmatprep.subr.mxu0 0.0
  %70 = vmatpush1.msra.mxu0 0.0
  %71 = vmatprep.subr.mxu0 0.0
  %72 = vmatpush1.msra.mxu0 0.0
  %73 = vmatprep.subr.mxu0 0.0
  %74 = vmatpush1.msra.mxu0 0.0
  %75 = vmatprep.subr.mxu0 0.0
  %76 = vmatpush1.msra.mxu0 0.0
  %77 = vmatprep.subr.mxu0 0.0
  %78 = vmatpush1.msra.mxu0 0.0
  %79 = vmatprep.subr.mxu0 0.0
  %80 = vmatpush1.msra.mxu0 0.0
  %81 = vmatprep.subr.mxu0 0.0
  %82 = vmatpush1.msra.mxu0 0.0
  %83 = vmatprep.subr.mxu0 0.0
  %84 = vmatpush1.msra.mxu0 0.0
  %85 = vmatprep.subr.mxu0 0.0
  %86 = vmatpush1.msra.mxu0 0.0
  %87 = vmatprep.subr.mxu0 0.0
  %88 = vmatpush1.msra.mxu0 0.0
  %89 = vmatprep.subr.mxu0 0.0
  %90 = vmatpush1.msra.mxu0 0.0
  %91 = vmatprep.subr.mxu0 0.0
  %92 = vmatpush1.msra.mxu0 0.0
  %93 = vmatprep.subr.mxu0 0.0
  %94 = vmatpush1.msra.mxu0 0.0
  %95 = vmatprep.subr.mxu0 0.0
  %96 = vmatpush1.msra.mxu0 0.0
  %97 = vmatprep.subr.mxu0 0.0
  %98 = vmatpush1.msra.mxu0 0.0
  %99 = vmatprep.subr.mxu0 0.0
  %100 = vmatpush1.msra.mxu0 0.0
  %101 = vmatprep.subr.mxu0 0.0
  %102 = vmatpush1.msra.mxu0 0.0
  %103 = vmatprep.mubr.f32.mxu0 0.0
  %104 = vmatmul.mubr.f32.gmra.mrb[0].mxu0 %v34
  %v105 = vpop.f32.mrb[0].mxu0
  %v106 = vadd.f32 0.0, %v105
  %v107 = vpop.f32.mrb[0].mxu0
  %108 = vmatprep.mubr.f32.mxu0 0.0
  %109 = vmatmul.mubr.f32.gmra.mrb[0].mxu0 %v37
  %v110 = vpop.f32.mrb[0].mxu0
  %v111 = vadd.f32 0.0, %v110
  %v112 = vpop.f32.mrb[0].mxu0
  %113 = vdwg.mxu0
  %v115 = vsel %vm32, %v20, 0
  %v118 = vsel %vm32, %v21, 0
  %120 = vmatprep.subr.mxu0 0.0
  %121 = vmatpush1.msra.mxu0 %v22
  %122 = vmatprep.subr.mxu0 0.0
  %123 = vmatpush1.msra.mxu0 %v23
  %124 = vmatprep.subr.mxu0 0.0
  %125 = vmatpush1.msra.mxu0 %v24
  %126 = vmatprep.subr.mxu0 0.0
  %127 = vmatpush1.msra.mxu0 %v25
  %128 = vmatprep.subr.mxu0 0.0
  %129 = vmatpush1.msra.mxu0 0.0
  %130 = vmatprep.subr.mxu0 0.0
  %131 = vmatpush1.msra.mxu0 0.0
  %132 = vmatprep.subr.mxu0 0.0
  %133 = vmatpush1.msra.mxu0 0.0
  %134 = vmatprep.subr.mxu0 0.0
  %135 = vmatpush1.msra.mxu0 0.0
  %136 = vmatprep.subr.mxu0 0.0
  %137 = vmatpush1.msra.mxu0 0.0
  %138 = vmatprep.subr.mxu0 0.0
  %139 = vmatpush1.msra.mxu0 0.0
  %140 = vmatprep.subr.mxu0 0.0
  %141 = vmatpush1.msra.mxu0 0.0
  %142 = vmatprep.subr.mxu0 0.0
  %143 = vmatpush1.msra.mxu0 0.0
  %144 = vmatprep.subr.mxu0 0.0
  %145 = vmatpush1.msra.mxu0 0.0
  %146 = vmatprep.subr.mxu0 0.0
  %147 = vmatpush1.msra.mxu0 0.0
  %148 = vmatprep.subr.mxu0 0.0
  %149 = vmatpush1.msra.mxu0 0.0
  %150 = vmatprep.subr.mxu0 0.0
  %151 = vmatpush1.msra.mxu0 0.0
  %152 = vmatprep.subr.mxu0 0.0
  %153 = vmatpush1.msra.mxu0 0.0
  %154 = vmatprep.subr.mxu0 0.0
  %155 = vmatpush1.msra.mxu0 0.0
  %156 = vmatprep.subr.mxu0 0.0
  %157 = vmatpush1.msra.mxu0 0.0
  %158 = vmatprep.subr.mxu0 0.0
  %159 = vmatpush1.msra.mxu0 0.0
  %160 = vmatprep.subr.mxu0 0.0
  %161 = vmatpush1.msra.mxu0 0.0
  %162 = vmatprep.subr.mxu0 0.0
  %163 = vmatpush1.msra.mxu0 0.0
  %164 = vmatprep.subr.mxu0 0.0
  %165 = vmatpush1.msra.mxu0 0.0
  %166 = vmatprep.subr.mxu0 0.0
  %167 = vmatpush1.msra.mxu0 0.0
  %168 = vmatprep.subr.mxu0 0.0
  %169 = vmatpush1.msra.mxu0 0.0
  %170 = vmatprep.subr.mxu0 0.0
  %171 = vmatpush1.msra.mxu0 0.0
  %172 = vmatprep.subr.mxu0 0.0
  %173 = vmatpush1.msra.mxu0 0.0
  %174 = vmatprep.subr.mxu0 0.0
  %175 = vmatpush1.msra.mxu0 0.0
  %176 = vmatprep.subr.mxu0 0.0
  %177 = vmatpush1.msra.mxu0 0.0
  %178 = vmatprep.subr.mxu0 0.0
  %179 = vmatpush1.msra.mxu0 0.0
  %180 = vmatprep.subr.mxu0 0.0
  %181 = vmatpush1.msra.mxu0 0.0
  %182 = vmatprep.subr.mxu0 0.0
  %183 = vmatpush1.msra.mxu0 0.0
  %184 = vmatprep.mubr.f32.mxu0 0.0
  %185 = vmatmul.mubr.f32.gmra.mrb[0].mxu0 %v115
  %v186 = vpop.f32.mrb[0].mxu0
  %v187 = vadd.f32 %v106, %v186
  %v188 = vpop.f32.mrb[0].mxu0
  %189 = vmatprep.mubr.f32.mxu0 0.0
  %190 = vmatmul.mubr.f32.gmra.mrb[0].mxu0 %v118
  %v191 = vpop.f32.mrb[0].mxu0
  %v192 = vadd.f32 %v111, %v191
  %v193 = vpop.f32.mrb[0].mxu0
  %194 = vdwg.mxu0
  %v195 = vld [vmem:[%s4] sm:$0x1]
  %v197 = vlaneseq
  %v198 = vshrl.u32 %v197, 7
  %v199 = vsub.s32 0, %v198
  %v200 = vrot.slane %v195, %v199
  %v202 = vadd.f32 %v187, %v200
  %v203 = vadd.f32 %v192, %v200
  %204 = vst [vmem:[%s5] sm:$0xff] %v202
  %205 = vst [vmem:[%s5 + $0x8] sm:$0xff] %v203
  // Predicated region
  $region22: #{blstm_forward.5} parent=0 // pred_check
    _
  $region23: #{blstm_forward.5} parent=0 // pred_check_branch
    %207 = sbr.rel (0) target = $region25
  $region24: #{blstm_forward.5} parent=0 // pred_region
    _
  $region25: #{blstm_forward.5} parent=0 // pred_fallthru
    _
  // Predicated region
  $region26: #{blstm_forward.5} parent=0 // pred_check
    _
  $region27: #{blstm_forward.5} parent=0 // pred_check_branch
    %209 = sbr.rel (0) target = $region29
  $region28: #{blstm_forward.5} parent=0 // pred_region
    _
  $region29: #{blstm_forward.5} parent=0 // pred_fallthru
    _

// kernel: blstm_forward.4
$region0: #{blstm_forward.4}
  #allocation0 [shape = 'u32[]', space=smem, size = 0x4, offset = 0x4, fixed_abs, tag = 'smem constant byte address 0x4 - core index']
  #allocation1 [shape = 'u32[144,128]{1,0:T(1,128)}', space=vmem, size = 0x12000, scoped, tag = 'internal scratch']
  #allocation2 [shape = 'f32[8,2,128]{2,1,0:T(2,128)}', space=vmem, size = 0x2000, scoped, tag = 'scratch operand']
  #allocation3 [shape = 'f32[8,2,128]{2,1,0:T(2,128)}', space=vmem, size = 0x2000, scoped, tag = 'scratch operand']
  #allocation4 [shape = 'f32[2,32]{1,0:T(2,128)}', space=vmem, size = 0x400, scoped, tag = 'scratch operand']
  #allocation5 [shape = 'f32[2,32]{1,0:T(2,128)}', space=vmem, size = 0x400, scoped, tag = 'scratch operand']
  #allocation6 [shape = 'f32[2,32]{1,0:T(2,128)}', space=vmem, size = 0x400, scoped, tag = 'scratch operand']
  #allocation7 [shape = 'f32[2,32]{1,0:T(2,128)}', space=vmem, size = 0x400, scoped, tag = 'scratch operand']
  %s0 = inlined_call_operand.vmem [shape: f32[8,2,32], index: 0, kind: input, shape index: {}, may-alias: {0,2}]
  %s1 = inlined_call_operand.vmem [shape: f32[8,2,32], index: 1, kind: input, shape index: {}, may-alias: {1,3}]
  %s2 = inlined_call_operand.vmem [shape: f32[8,2,32], index: 2, kind: input, shape index: {}, may-alias: {0,2}]
  %s3 = inlined_call_operand.vmem [shape: f32[8,2,32], index: 3, kind: input, shape index: {}, may-alias: {1,3}]
  %s4 = inlined_call_operand.vmem [shape: f32[32,128], index: 4, kind: input, shape index: {}]
  %s5 = inlined_call_operand.vmem [shape: f32[32,128], index: 5, kind: input, shape index: {}]
  %s6 = inlined_call_operand.vmem [shape: f32[32,128], index: 6, kind: input, shape index: {}]
  %s7 = inlined_call_operand.vmem [shape: f32[32,128], index: 7, kind: input, shape index: {}]
  %s8 = inlined_call_operand.vmem [shape: f32[1,128], index: 8, kind: input, shape index: {}]
  %s9 = inlined_call_operand.vmem [shape: f32[1,128], index: 9, kind: input, shape index: {}]
  %s10 = inlined_call_operand.vmem [shape: f32[32,128], index: 10, kind: input, shape index: {}]
  %s11 = inlined_call_operand.vmem [shape: f32[32,128], index: 11, kind: input, shape index: {}]
  %s12 = inlined_call_operand.vmem [shape: f32[8,2,32], index: 12, kind: output, shape index: {0}]
  %s13 = inlined_call_operand.vmem [shape: f32[8,2,32], index: 13, kind: output, shape index: {1}]
  %14 = xla_tuple %s12, %s13
  %s15 = sld [smem:[#allocation0]]
  $region70: #{blstm_forward.4} parent=0
    _
  %s17 = ssub.s32 1, %s15
  %s18 = scalar_select 0, %s17, %s15
  // Predicated region
  $region2: #{blstm_forward.4} parent=0 // pred_check
    _
  $region3: #{blstm_forward.4} parent=0 // pred_check_branch
    %20 = sbr.rel (0) target = $region5
  $region4: #{blstm_forward.4} parent=0 // pred_region
    _
  $region5: #{blstm_forward.4} parent=0 // pred_fallthru
    _
  // Predicated region
  $region6: #{blstm_forward.4} parent=0 // pred_check
    _
  $region7: #{blstm_forward.4} parent=0 // pred_check_branch
    %22 = sbr.rel (0) target = $region9
  $region8: #{blstm_forward.4} parent=0 // pred_region
    _
  $region9: #{blstm_forward.4} parent=0 // pred_fallthru
    _
  // Predicated region
  $region10: #{blstm_forward.4} parent=0 // pred_check
    _
  $region11: #{blstm_forward.4} parent=0 // pred_check_branch
    %24 = sbr.rel (0) target = $region13
  $region12: #{blstm_forward.4} parent=0 // pred_region
    %s25 = ssub.s32 0, 0
    %s26 = smul.u32 8, %s25
    %p27 = scmp.lt.s32.totalorder %s26, 7
    %s28 = scalar_select %p27, %s26, 7
    %s29 = smul.addr %s28, 2
    %s30 = scalar_lea.vmem %s2, %s29
    %s31 = ssub.s32 0, 0
    %s32 = smul.u32 8, %s31
  $region13: #{blstm_forward.4} parent=0 // pred_fallthru
    _
  // Predicated region
  $region14: #{blstm_forward.4} parent=0 // pred_check
    _
  $region15: #{blstm_forward.4} parent=0 // pred_check_branch
    %34 = sbr.rel (0) target = $region17
  $region16: #{blstm_forward.4} parent=0 // pred_region
    %s35 = ssub.s32 0, 0
    %s36 = smul.u32 8, %s35
    %p37 = scmp.lt.s32.totalorder %s36, 7
    %s38 = scalar_select %p37, %s36, 7
    %s39 = smul.addr %s38, 2
    %s40 = scalar_lea.vmem %s3, %s39
    %s41 = ssub.s32 0, 0
    %s42 = smul.u32 8, %s41
  $region17: #{blstm_forward.4} parent=0 // pred_fallthru
    _
  // Predicated region
  $region18: #{blstm_forward.4} parent=0 // pred_check
    _
  $region19: #{blstm_forward.4} parent=0 // pred_check_branch
    %44 = sbr.rel (0) target = $region21
  $region20: #{blstm_forward.4} parent=0 // pred_region
    _
  $region21: #{blstm_forward.4} parent=0 // pred_fallthru
    _
  // Predicated region
  $region22: #{blstm_forward.4} parent=0 // pred_check
    _
  $region23: #{blstm_forward.4} parent=0 // pred_check_branch
    %46 = sbr.rel (0) target = $region25
  $region24: #{blstm_forward.4} parent=0 // pred_region
    _
  $region25: #{blstm_forward.4} parent=0 // pred_fallthru
    _
  // Predicated region
  $region26: #{blstm_forward.4} parent=0 // pred_check
    _
  $region27: #{blstm_forward.4} parent=0 // pred_check_branch
    %48 = sbr.rel (0) target = $region29
  $region28: #{blstm_forward.4} parent=0 // pred_region
    _
  $region29: #{blstm_forward.4} parent=0 // pred_fallthru
    _
  // Predicated region
  $region30: #{blstm_forward.4} parent=0 // pred_check
    _
  $region31: #{blstm_forward.4} parent=0 // pred_check_branch
    %50 = sbr.rel (0) target = $region33
  $region32: #{blstm_forward.4} parent=0 // pred_region
    _
  $region33: #{blstm_forward.4} parent=0 // pred_fallthru
    _
  // Predicated region
  $region34: #{blstm_forward.4} parent=0 // pred_check
    _
  $region35: #{blstm_forward.4} parent=0 // pred_check_branch
    %52 = sbr.rel (0) target = $region37
  $region36: #{blstm_forward.4} parent=0 // pred_region
    _
  $region37: #{blstm_forward.4} parent=0 // pred_fallthru
    _
  // Predicated region
  $region38: #{blstm_forward.4} parent=0 // pred_check
    _
  $region39: #{blstm_forward.4} parent=0 // pred_check_branch
    %54 = sbr.rel (0) target = $region41
  $region40: #{blstm_forward.4} parent=0 // pred_region
    _
  $region41: #{blstm_forward.4} parent=0 // pred_fallthru
    _
  // Predicated region
  $region42: #{blstm_forward.4} parent=0 // pred_check
    _
  $region43: #{blstm_forward.4} parent=0 // pred_check_branch
    %56 = sbr.rel (0) target = $region45
  $region44: #{blstm_forward.4} parent=0 // pred_region
    _
  $region45: #{blstm_forward.4} parent=0 // pred_fallthru
    _
  // Predicated region
  $region46: #{blstm_forward.4} parent=0 // pred_check
    _
  $region47: #{blstm_forward.4} parent=0 // pred_check_branch
    %58 = sbr.rel (0) target = $region49
  $region48: #{blstm_forward.4} parent=0 // pred_region
    _
  $region49: #{blstm_forward.4} parent=0 // pred_fallthru
    _
  %s59 = ssub.s32 0, 0
  %s60 = smul.u32 8, %s59
  %p61 = scmp.lt.s32.totalorder %s60, 7
  %s62 = scalar_select %p61, %s60, 7
  %s63 = smul.addr %s62, 2
  %s64 = scalar_lea.vmem %s2, %s63
  %s65 = ssub.s32 0, 0
  %s66 = smul.u32 8, %s65
  %p67 = scmp.lt.s32.totalorder %s66, 7
  %s68 = scalar_select %p67, %s66, 7
  %s69 = smul.addr %s68, 2
  %s70 = scalar_lea.vmem %s3, %s69
  %s71 = ssub.s32 0, 0
  %s72 = smul.u32 8, %s71
  %p73 = scmp.lt.s32.totalorder %s72, 7
  %s74 = scalar_select %p73, %s72, 7
  %s75 = smul.addr %s74, 2
  %s76 = scalar_lea.vmem %s13, %s75
  %s77 = ssub.s32 0, 0
  %s78 = smul.u32 8, %s77
  %p79 = scmp.lt.s32.totalorder %s78, 7
  %s80 = scalar_select %p79, %s78, 7
  %s81 = smul.addr %s80, 2
  %s82 = scalar_lea.vmem %s2, %s81
  %s83 = ssub.s32 0, 0
  %s84 = smul.u32 8, %s83
  %s85 = ssub.s32 0, 0
  %s86 = smul.u32 8, %s85
  %p87 = scmp.lt.s32.totalorder %s86, 7
  %s88 = scalar_select %p87, %s86, 7
  %s89 = smul.addr %s88, 2
  %s90 = scalar_lea.vmem %s3, %s89
  %s91 = ssub.s32 0, 0
  %s92 = smul.u32 8, %s91
  %s93 = ssub.s32 0, 0
  %s94 = smul.u32 8, %s93
  %p95 = scmp.lt.s32.totalorder %s94, 7
  %s96 = scalar_select %p95, %s94, 7
  %s97 = smul.addr %s96, 2
  %s98 = scalar_lea.vmem %s13, %s97
  %s99 = ssub.s32 0, 0
  %s100 = smul.u32 8, %s99
  %v101 = vld [vmem:[%s0] sm:$0x3]
  %v102 = vld [vmem:[%s4] sm:$0xff]
  %v103 = vld [vmem:[%s4 + $0x8] sm:$0xff]
  %v104 = vld [vmem:[%s4 + $0x10] sm:$0xff]
  %v105 = vld [vmem:[%s4 + $0x18] sm:$0xff]
  %v106 = vld [vmem:[%s1] sm:$0x3]
  %v107 = vld [vmem:[%s5] sm:$0xff]
  %v108 = vld [vmem:[%s5 + $0x8] sm:$0xff]
  %v109 = vld [vmem:[%s5 + $0x10] sm:$0xff]
  %v110 = vld [vmem:[%s5 + $0x18] sm:$0xff]
  %vm111 = vcmask 261120
  %v113 = vsel %vm111, %v106, 0
  %115 = vmatprep.subr.mxu0 0.0
  %116 = vmatpush1.msra.mxu0 %v107
  %117 = vmatprep.subr.mxu0 0.0
  %118 = vmatpush1.msra.mxu0 %v108
  %119 = vmatprep.subr.mxu0 0.0
  %120 = vmatpush1.msra.mxu0 %v109
  %121 = vmatprep.subr.mxu0 0.0
  %122 = vmatpush1.msra.mxu0 %v110
  %123 = vmatprep.subr.mxu0 0.0
  %124 = vmatpush1.msra.mxu0 0.0
  %125 = vmatprep.subr.mxu0 0.0
  %126 = vmatpush1.msra.mxu0 0.0
  %127 = vmatprep.subr.mxu0 0.0
  %128 = vmatpush1.msra.mxu0 0.0
  %129 = vmatprep.subr.mxu0 0.0
  %130 = vmatpush1.msra.mxu0 0.0
  %131 = vmatprep.subr.mxu0 0.0
  %132 = vmatpush1.msra.mxu0 0.0
  %133 = vmatprep.subr.mxu0 0.0
  %134 = vmatpush1.msra.mxu0 0.0
  %135 = vmatprep.subr.mxu0 0.0
  %136 = vmatpush1.msra.mxu0 0.0
  %137 = vmatprep.subr.mxu0 0.0
  %138 = vmatpush1.msra.mxu0 0.0
  %139 = vmatprep.subr.mxu0 0.0
  %140 = vmatpush1.msra.mxu0 0.0
  %141 = vmatprep.subr.mxu0 0.0
  %142 = vmatpush1.msra.mxu0 0.0
  %143 = vmatprep.subr.mxu0 0.0
  %144 = vmatpush1.msra.mxu0 0.0
  %145 = vmatprep.subr.mxu0 0.0
  %146 = vmatpush1.msra.mxu0 0.0
  %147 = vmatprep.subr.mxu0 0.0
  %148 = vmatpush1.msra.mxu0 0.0
  %149 = vmatprep.subr.mxu0 0.0
  %150 = vmatpush1.msra.mxu0 0.0
  %151 = vmatprep.subr.mxu0 0.0
  %152 = vmatpush1.msra.mxu0 0.0
  %153 = vmatprep.subr.mxu0 0.0
  %154 = vmatpush1.msra.mxu0 0.0
  %155 = vmatprep.subr.mxu0 0.0
  %156 = vmatpush1.msra.mxu0 0.0
  %157 = vmatprep.subr.mxu0 0.0
  %158 = vmatpush1.msra.mxu0 0.0
  %159 = vmatprep.subr.mxu0 0.0
  %160 = vmatpush1.msra.mxu0 0.0
  %161 = vmatprep.subr.mxu0 0.0
  %162 = vmatpush1.msra.mxu0 0.0
  %163 = vmatprep.subr.mxu0 0.0
  %164 = vmatpush1.msra.mxu0 0.0
  %165 = vmatprep.subr.mxu0 0.0
  %166 = vmatpush1.msra.mxu0 0.0
  %167 = vmatprep.subr.mxu0 0.0
  %168 = vmatpush1.msra.mxu0 0.0
  %169 = vmatprep.subr.mxu0 0.0
  %170 = vmatpush1.msra.mxu0 0.0
  %171 = vmatprep.subr.mxu0 0.0
  %172 = vmatpush1.msra.mxu0 0.0
  %173 = vmatprep.subr.mxu0 0.0
  %174 = vmatpush1.msra.mxu0 0.0
  %175 = vmatprep.subr.mxu0 0.0
  %176 = vmatpush1.msra.mxu0 0.0
  %177 = vmatprep.subr.mxu0 0.0
  %178 = vmatpush1.msra.mxu0 0.0
  %179 = vmatprep.mubr.f32.mxu0 0.0
  %180 = vmatmul.mubr.f32.gmra.mrb[0].mxu0 %v113
  %v181 = vpop.f32.mrb[0].mxu0
  %v182 = vadd.f32 0.0, %v181
  %v183 = vpop.f32.mrb[0].mxu0
  %184 = vdwg.mxu0
  %v186 = vsel %vm111, %v101, 0
  %188 = vmatprep.subr.mxu0 0.0
  %189 = vmatpush1.msra.mxu0 %v102
  %190 = vmatprep.subr.mxu0 0.0
  %191 = vmatpush1.msra.mxu0 %v103
  %192 = vmatprep.subr.mxu0 0.0
  %193 = vmatpush1.msra.mxu0 %v104
  %194 = vmatprep.subr.mxu0 0.0
  %195 = vmatpush1.msra.mxu0 %v105
  %196 = vmatprep.subr.mxu0 0.0
  %197 = vmatpush1.msra.mxu0 0.0
  %198 = vmatprep.subr.mxu0 0.0
  %199 = vmatpush1.msra.mxu0 0.0
  %200 = vmatprep.subr.mxu0 0.0
  %201 = vmatpush1.msra.mxu0 0.0
  %202 = vmatprep.subr.mxu0 0.0
  %203 = vmatpush1.msra.mxu0 0.0
  %204 = vmatprep.subr.mxu0 0.0
  %205 = vmatpush1.msra.mxu0 0.0
  %206 = vmatprep.subr.mxu0 0.0
  %207 = vmatpush1.msra.mxu0 0.0
  %208 = vmatprep.subr.mxu0 0.0
  %209 = vmatpush1.msra.mxu0 0.0
  %210 = vmatprep.subr.mxu0 0.0
  %211 = vmatpush1.msra.mxu0 0.0
  %212 = vmatprep.subr.mxu0 0.0
  %213 = vmatpush1.msra.mxu0 0.0
  %214 = vmatprep.subr.mxu0 0.0
  %215 = vmatpush1.msra.mxu0 0.0
  %216 = vmatprep.subr.mxu0 0.0
  %217 = vmatpush1.msra.mxu0 0.0
  %218 = vmatprep.subr.mxu0 0.0
  %219 = vmatpush1.msra.mxu0 0.0
  %220 = vmatprep.subr.mxu0 0.0
  %221 = vmatpush1.msra.mxu0 0.0
  %222 = vmatprep.subr.mxu0 0.0
  %223 = vmatpush1.msra.mxu0 0.0
  %224 = vmatprep.subr.mxu0 0.0
  %225 = vmatpush1.msra.mxu0 0.0
  %226 = vmatprep.subr.mxu0 0.0
  %227 = vmatpush1.msra.mxu0 0.0
  %228 = vmatprep.subr.mxu0 0.0
  %229 = vmatpush1.msra.mxu0 0.0
  %230 = vmatprep.subr.mxu0 0.0
  %231 = vmatpush1.msra.mxu0 0.0
  %232 = vmatprep.subr.mxu0 0.0
  %233 = vmatpush1.msra.mxu0 0.0
  %234 = vmatprep.subr.mxu0 0.0
  %235 = vmatpush1.msra.mxu0 0.0
  %236 = vmatprep.subr.mxu0 0.0
  %237 = vmatpush1.msra.mxu0 0.0
  %238 = vmatprep.subr.mxu0 0.0
  %239 = vmatpush1.msra.mxu0 0.0
  %240 = vmatprep.subr.mxu0 0.0
  %241 = vmatpush1.msra.mxu0 0.0
  %242 = vmatprep.subr.mxu0 0.0
  %243 = vmatpush1.msra.mxu0 0.0
  %244 = vmatprep.subr.mxu0 0.0
  %245 = vmatpush1.msra.mxu0 0.0
  %246 = vmatprep.subr.mxu0 0.0
  %247 = vmatpush1.msra.mxu0 0.0
  %248 = vmatprep.subr.mxu0 0.0
  %249 = vmatpush1.msra.mxu0 0.0
  %250 = vmatprep.subr.mxu0 0.0
  %251 = vmatpush1.msra.mxu0 0.0
  %252 = vmatprep.mubr.f32.mxu0 0.0
  %253 = vmatmul.mubr.f32.gmra.mrb[0].mxu0 %v186
  %v254 = vpop.f32.mrb[0].mxu0
  %v255 = vadd.f32 %v182, %v254
  %v256 = vpop.f32.mrb[0].mxu0
  %257 = vdwg.mxu0
  %v258 = vld [vmem:[%s8] sm:$0x1]
  %v260 = vlaneseq
  %v261 = vshrl.u32 %v260, 7
  %v262 = vsub.s32 0, %v261
  %v263 = vrot.slane %v258, %v262
  %v265 = vadd.f32 %v255, %v263
  %266 = vst [vmem:[#allocation2] sm:$0x3] %v265
  %v267 = vld [vmem:[%s82] sm:$0x3]
  %v268 = vld [vmem:[%s6] sm:$0xff]
  %v269 = vld [vmem:[%s6 + $0x8] sm:$0xff]
  %v270 = vld [vmem:[%s6 + $0x10] sm:$0xff]
  %v271 = vld [vmem:[%s6 + $0x18] sm:$0xff]
  %v272 = vld [vmem:[%s90] sm:$0x3]
  %v273 = vld [vmem:[%s7] sm:$0xff]
  %v274 = vld [vmem:[%s7 + $0x8] sm:$0xff]
  %v275 = vld [vmem:[%s7 + $0x10] sm:$0xff]
  %v276 = vld [vmem:[%s7 + $0x18] sm:$0xff]
  %v278 = vsel %vm111, %v272, 0
  %280 = vmatprep.subr.mxu0 0.0
  %281 = vmatpush1.msra.mxu0 %v273
  %282 = vmatprep.subr.mxu0 0.0
  %283 = vmatpush1.msra.mxu0 %v274
  %284 = vmatprep.subr.mxu0 0.0
  %285 = vmatpush1.msra.mxu0 %v275
  %286 = vmatprep.subr.mxu0 0.0
  %287 = vmatpush1.msra.mxu0 %v276
  %288 = vmatprep.subr.mxu0 0.0
  %289 = vmatpush1.msra.mxu0 0.0
  %290 = vmatprep.subr.mxu0 0.0
  %291 = vmatpush1.msra.mxu0 0.0
  %292 = vmatprep.subr.mxu0 0.0
  %293 = vmatpush1.msra.mxu0 0.0
  %294 = vmatprep.subr.mxu0 0.0
  %295 = vmatpush1.msra.mxu0 0.0
  %296 = vmatprep.subr.mxu0 0.0
  %297 = vmatpush1.msra.mxu0 0.0
  %298 = vmatprep.subr.mxu0 0.0
  %299 = vmatpush1.msra.mxu0 0.0
  %300 = vmatprep.subr.mxu0 0.0
  %301 = vmatpush1.msra.mxu0 0.0
  %302 = vmatprep.subr.mxu0 0.0
  %303 = vmatpush1.msra.mxu0 0.0
  %304 = vmatprep.subr.mxu0 0.0
  %305 = vmatpush1.msra.mxu0 0.0
  %306 = vmatprep.subr.mxu0 0.0
  %307 = vmatpush1.msra.mxu0 0.0
  %308 = vmatprep.subr.mxu0 0.0
  %309 = vmatpush1.msra.mxu0 0.0
  %310 = vmatprep.subr.mxu0 0.0
  %311 = vmatpush1.msra.mxu0 0.0
  %312 = vmatprep.subr.mxu0 0.0
  %313 = vmatpush1.msra.mxu0 0.0
  %314 = vmatprep.subr.mxu0 0.0
  %315 = vmatpush1.msra.mxu0 0.0
  %316 = vmatprep.subr.mxu0 0.0
  %317 = vmatpush1.msra.mxu0 0.0
  %318 = vmatprep.subr.mxu0 0.0
  %319 = vmatpush1.msra.mxu0 0.0
  %320 = vmatprep.subr.mxu0 0.0
  %321 = vmatpush1.msra.mxu0 0.0
  %322 = vmatprep.subr.mxu0 0.0
  %323 = vmatpush1.msra.mxu0 0.0
  %324 = vmatprep.subr.mxu0 0.0
  %325 = vmatpush1.msra.mxu0 0.0
  %326 = vmatprep.subr.mxu0 0.0
  %327 = vmatpush1.msra.mxu0 0.0
  %328 = vmatprep.subr.mxu0 0.0
  %329 = vmatpush1.msra.mxu0 0.0
  %330 = vmatprep.subr.mxu0 0.0
  %331 = vmatpush1.msra.mxu0 0.0
  %332 = vmatprep.subr.mxu0 0.0
  %333 = vmatpush1.msra.mxu0 0.0
  %334 = vmatprep.subr.mxu0 0.0
  %335 = vmatpush1.msra.mxu0 0.0
  %336 = vmatprep.subr.mxu0 0.0
  %337 = vmatpush1.msra.mxu0 0.0
  %338 = vmatprep.subr.mxu0 0.0
  %339 = vmatpush1.msra.mxu0 0.0
  %340 = vmatprep.subr.mxu0 0.0
  %341 = vmatpush1.msra.mxu0 0.0
  %342 = vmatprep.subr.mxu0 0.0
  %343 = vmatpush1.msra.mxu0 0.0
  %344 = vmatprep.mubr.f32.mxu0 0.0
  %345 = vmatmul.mubr.f32.gmra.mrb[0].mxu0 %v278
  %v346 = vpop.f32.mrb[0].mxu0
  %v347 = vadd.f32 0.0, %v346
  %v348 = vpop.f32.mrb[0].mxu0
  %349 = vdwg.mxu0
  %v351 = vsel %vm111, %v267, 0
  %353 = vmatprep.subr.mxu0 0.0
  %354 = vmatpush1.msra.mxu0 %v268
  %355 = vmatprep.subr.mxu0 0.0
  %356 = vmatpush1.msra.mxu0 %v269
  %357 = vmatprep.subr.mxu0 0.0
  %358 = vmatpush1.msra.mxu0 %v270
  %359 = vmatprep.subr.mxu0 0.0
  %360 = vmatpush1.msra.mxu0 %v271
  %361 = vmatprep.subr.mxu0 0.0
  %362 = vmatpush1.msra.mxu0 0.0
  %363 = vmatprep.subr.mxu0 0.0
  %364 = vmatpush1.msra.mxu0 0.0
  %365 = vmatprep.subr.mxu0 0.0
  %366 = vmatpush1.msra.mxu0 0.0
  %367 = vmatprep.subr.mxu0 0.0
  %368 = vmatpush1.msra.mxu0 0.0
  %369 = vmatprep.subr.mxu0 0.0
  %370 = vmatpush1.msra.mxu0 0.0
  %371 = vmatprep.subr.mxu0 0.0
  %372 = vmatpush1.msra.mxu0 0.0
  %373 = vmatprep.subr.mxu0 0.0
  %374 = vmatpush1.msra.mxu0 0.0
  %375 = vmatprep.subr.mxu0 0.0
  %376 = vmatpush1.msra.mxu0 0.0
  %377 = vmatprep.subr.mxu0 0.0
  %378 = vmatpush1.msra.mxu0 0.0
  %379 = vmatprep.subr.mxu0 0.0
  %380 = vmatpush1.msra.mxu0 0.0
  %381 = vmatprep.subr.mxu0 0.0
  %382 = vmatpush1.msra.mxu0 0.0
  %383 = vmatprep.subr.mxu0 0.0
  %384 = vmatpush1.msra.mxu0 0.0
  %385 = vmatprep.subr.mxu0 0.0
  %386 = vmatpush1.msra.mxu0 0.0
  %387 = vmatprep.subr.mxu0 0.0
  %388 = vmatpush1.msra.mxu0 0.0
  %389 = vmatprep.subr.mxu0 0.0
  %390 = vmatpush1.msra.mxu0 0.0
  %391 = vmatprep.subr.mxu0 0.0
  %392 = vmatpush1.msra.mxu0 0.0
  %393 = vmatprep.subr.mxu0 0.0
  %394 = vmatpush1.msra.mxu0 0.0
  %395 = vmatprep.subr.mxu0 0.0
  %396 = vmatpush1.msra.mxu0 0.0
  %397 = vmatprep.subr.mxu0 0.0
  %398 = vmatpush1.msra.mxu0 0.0
  %399 = vmatprep.subr.mxu0 0.0
  %400 = vmatpush1.msra.mxu0 0.0
  %401 = vmatprep.subr.mxu0 0.0
  %402 = vmatpush1.msra.mxu0 0.0
  %403 = vmatprep.subr.mxu0 0.0
  %404 = vmatpush1.msra.mxu0 0.0
  %405 = vmatprep.subr.mxu0 0.0
  %406 = vmatpush1.msra.mxu0 0.0
  %407 = vmatprep.subr.mxu0 0.0
  %408 = vmatpush1.msra.mxu0 0.0
  %409 = vmatprep.subr.mxu0 0.0
  %410 = vmatpush1.msra.mxu0 0.0
  %411 = vmatprep.subr.mxu0 0.0
  %412 = vmatpush1.msra.mxu0 0.0
  %413 = vmatprep.subr.mxu0 0.0
  %414 = vmatpush1.msra.mxu0 0.0
  %415 = vmatprep.subr.mxu0 0.0
  %416 = vmatpush1.msra.mxu0 0.0
  %417 = vmatprep.mubr.f32.mxu0 0.0
  %418 = vmatmul.mubr.f32.gmra.mrb[0].mxu0 %v351
  %v419 = vpop.f32.mrb[0].mxu0
  %v420 = vadd.f32 %v347, %v419
  %v421 = vpop.f32.mrb[0].mxu0
  %422 = vdwg.mxu0
  %v423 = vld [vmem:[%s9] sm:$0x1]
  %v425 = vlaneseq
  %v426 = vshrl.u32 %v425, 7
  %v427 = vsub.s32 0, %v426
  %v428 = vrot.slane %v423, %v427
  %v430 = vadd.f32 %v420, %v428
  %431 = vst [vmem:[#allocation3] sm:$0x3] %v430
  %s432 = scalar_lea.vmem %s0, 2
  %v433 = vld [vmem:[%s432] sm:$0x3]
  %v434 = vld [vmem:[%s4] sm:$0xff]
  %v435 = vld [vmem:[%s4 + $0x8] sm:$0xff]
  %v436 = vld [vmem:[%s4 + $0x10] sm:$0xff]
  %v437 = vld [vmem:[%s4 + $0x18] sm:$0xff]
  %s438 = scalar_lea.vmem %s1, 2
  %v439 = vld [vmem:[%s438] sm:$0x3]
  %v440 = vld [vmem:[%s5] sm:$0xff]
  %v441 = vld [vmem:[%s5 + $0x8] sm:$0xff]
  %v442 = vld [vmem:[%s5 + $0x10] sm:$0xff]
  %v443 = vld [vmem:[%s5 + $0x18] sm:$0xff]
  %v445 = vsel %vm111, %v439, 0
  %447 = vmatprep.subr.mxu0 0.0
  %448 = vmatpush1.msra.mxu0 %v440
  %449 = vmatprep.subr.mxu0 0.0
  %450 = vmatpush1.msra.mxu0 %v441
  %451 = vmatprep.subr.mxu0 0.0
  %452 = vmatpush1.msra.mxu0 %v442
  %453 = vmatprep.subr.mxu0 0.0
  %454 = vmatpush1.msra.mxu0 %v443
  %455 = vmatprep.subr.mxu0 0.0
  %456 = vmatpush1.msra.mxu0 0.0
  %457 = vmatprep.subr.mxu0 0.0
  %458 = vmatpush1.msra.mxu0 0.0
  %459 = vmatprep.subr.mxu0 0.0
  %460 = vmatpush1.msra.mxu0 0.0
  %461 = vmatprep.subr.mxu0 0.0
  %462 = vmatpush1.msra.mxu0 0.0
  %463 = vmatprep.subr.mxu0 0.0
  %464 = vmatpush1.msra.mxu0 0.0
  %465 = vmatprep.subr.mxu0 0.0
  %466 = vmatpush1.msra.mxu0 0.0
  %467 = vmatprep.subr.mxu0 0.0
  %468 = vmatpush1.msra.mxu0 0.0
  %469 = vmatprep.subr.mxu0 0.0
  %470 = vmatpush1.msra.mxu0 0.0
  %471 = vmatprep.subr.mxu0 0.0
  %472 = vmatpush1.msra.mxu0 0.0
  %473 = vmatprep.subr.mxu0 0.0
  %474 = vmatpush1.msra.mxu0 0.0
  %475 = vmatprep.subr.mxu0 0.0
  %476 = vmatpush1.msra.mxu0 0.0
  %477 = vmatprep.subr.mxu0 0.0
  %478 = vmatpush1.msra.mxu0 0.0
  %479 = vmatprep.subr.mxu0 0.0
  %480 = vmatpush1.msra.mxu0 0.0
  %481 = vmatprep.subr.mxu0 0.0
  %482 = vmatpush1.msra.mxu0 0.0
  %483 = vmatprep.subr.mxu0 0.0
  %484 = vmatpush1.msra.mxu0 0.0
  %485 = vmatprep.subr.mxu0 0.0
  %486 = vmatpush1.msra.mxu0 0.0
  %487 = vmatprep.subr.mxu0 0.0
  %488 = vmatpush1.msra.mxu0 0.0
  %489 = vmatprep.subr.mxu0 0.0
  %490 = vmatpush1.msra.mxu0 0.0
  %491 = vmatprep.subr.mxu0 0.0
  %492 = vmatpush1.msra.mxu0 0.0
  %493 = vmatprep.subr.mxu0 0.0
  %494 = vmatpush1.msra.mxu0 0.0
  %495 = vmatprep.subr.mxu0 0.0
  %496 = vmatpush1.msra.mxu0 0.0
  %497 = vmatprep.subr.mxu0 0.0
  %498 = vmatpush1.msra.mxu0 0.0
  %499 = vmatprep.subr.mxu0 0.0
  %500 = vmatpush1.msra.mxu0 0.0
  %501 = vmatprep.subr.mxu0 0.0
  %502 = vmatpush1.msra.mxu0 0.0
  %503 = vmatprep.subr.mxu0 0.0
  %504 = vmatpush1.msra.mxu0 0.0
  %505 = vmatprep.subr.mxu0 0.0
  %506 = vmatpush1.msra.mxu0 0.0
  %507 = vmatprep.subr.mxu0 0.0
  %508 = vmatpush1.msra.mxu0 0.0
  %509 = vmatprep.subr.mxu0 0.0
  %510 = vmatpush1.msra.mxu0 0.0
  %511 = vmatprep.mubr.f32.mxu0 0.0
  %512 = vmatmul.mubr.f32.gmra.mrb[0].mxu0 %v445
  %v513 = vpop.f32.mrb[0].mxu0
  %v514 = vadd.f32 0.0, %v513
  %v515 = vpop.f32.mrb[0].mxu0
  %516 = vdwg.mxu0
  %v518 = vsel %vm111, %v433, 0
  %520 = vmatprep.subr.mxu0 0.0
  %521 = vmatpush1.msra.mxu0 %v434
  %522 = vmatprep.subr.mxu0 0.0
  %523 = vmatpush1.msra.mxu0 %v435
  %524 = vmatprep.subr.mxu0 0.0
  %525 = vmatpush1.msra.mxu0 %v436
  %526 = vmatprep.subr.mxu0 0.0
  %527 = vmatpush1.msra.mxu0 %v437
  %528 = vmatprep.subr.mxu0 0.0
  %529 = vmatpush1.msra.mxu0 0.0
  %530 = vmatprep.subr.mxu0 0.0
  %531 = vmatpush1.msra.mxu0 0.0
  %532 = vmatprep.subr.mxu0 0.0
  %533 = vmatpush1.msra.mxu0 0.0
  %534 = vmatprep.subr.mxu0 0.0
  %535 = vmatpush1.msra.mxu0 0.0
  %536 = vmatprep.subr.mxu0 0.0
  %537 = vmatpush1.msra.mxu0 0.0
  %538 = vmatprep.subr.mxu0 0.0
  %539 = vmatpush1.msra.mxu0 0.0
  %540 = vmatprep.subr.mxu0 0.0
  %541 = vmatpush1.msra.mxu0 0.0
  %542 = vmatprep.subr.mxu0 0.0
  %543 = vmatpush1.msra.mxu0 0.0
  %544 = vmatprep.subr.mxu0 0.0
  %545 = vmatpush1.msra.mxu0 0.0
  %546 = vmatprep.subr.mxu0 0.0
  %547 = vmatpush1.msra.mxu0 0.0
  %548 = vmatprep.subr.mxu0 0.0
  %549 = vmatpush1.msra.mxu0 0.0
  %550 = vmatprep.subr.mxu0 0.0
  %551 = vmatpush1.msra.mxu0 0.0
  %552 = vmatprep.subr.mxu0 0.0
  %553 = vmatpush1.msra.mxu0 0.0
  %554 = vmatprep.subr.mxu0 0.0
  %555 = vmatpush1.msra.mxu0 0.0
  %556 = vmatprep.subr.mxu0 0.0
  %557 = vmatpush1.msra.mxu0 0.0
  %558 = vmatprep.subr.mxu0 0.0
  %559 = vmatpush1.msra.mxu0 0.0
  %560 = vmatprep.subr.mxu0 0.0
  %561 = vmatpush1.msra.mxu0 0.0
  %562 = vmatprep.subr.mxu0 0.0
  %563 = vmatpush1.msra.mxu0 0.0
  %564 = vmatprep.subr.mxu0 0.0
  %565 = vmatpush1.msra.mxu0 0.0
  %566 = vmatprep.subr.mxu0 0.0
  %567 = vmatpush1.msra.mxu0 0.0
  %568 = vmatprep.subr.mxu0 0.0
  %569 = vmatpush1.msra.mxu0 0.0
  %570 = vmatprep.subr.mxu0 0.0
  %571 = vmatpush1.msra.mxu0 0.0
  %572 = vmatprep.subr.mxu0 0.0
  %573 = vmatpush1.msra.mxu0 0.0
  %574 = vmatprep.subr.mxu0 0.0
  %575 = vmatpush1.msra.mxu0 0.0
  %576 = vmatprep.subr.mxu0 0.0
  %577 = vmatpush1.msra.mxu0 0.0
  %578 = vmatprep.subr.mxu0 0.0
  %579 = vmatpush1.msra.mxu0 0.0
  %580 = vmatprep.subr.mxu0 0.0
  %581 = vmatpush1.msra.mxu0 0.0
  %582 = vmatprep.subr.mxu0 0.0
  %583 = vmatpush1.msra.mxu0 0.0
  %584 = vmatprep.mubr.f32.mxu0 0.0
  %585 = vmatmul.mubr.f32.gmra.mrb[0].mxu0 %v518
  %v586 = vpop.f32.mrb[0].mxu0
  %v587 = vadd.f32 %v514, %v586
  %v588 = vpop.f32.mrb[0].mxu0
  %589 = vdwg.mxu0
  %v590 = vld [vmem:[%s8] sm:$0x1]
  %v592 = vlaneseq
  %v593 = vshrl.u32 %v592, 7
  %v594 = vsub.s32 0, %v593
  %v595 = vrot.slane %v590, %v594
  %v597 = vadd.f32 %v587, %v595
  %s598 = scalar_lea.vmem [#allocation2], 2
  %599 = vst [vmem:[%s598] sm:$0x3] %v597
  %s600 = scalar_lea.vmem %s82, 2
  %v601 = vld [vmem:[%s600] sm:$0x3]
  %v602 = vld [vmem:[%s6] sm:$0xff]
  %v603 = vld [vmem:[%s6 + $0x8] sm:$0xff]
  %v604 = vld [vmem:[%s6 + $0x10] sm:$0xff]
  %v605 = vld [vmem:[%s6 + $0x18] sm:$0xff]
  %s606 = scalar_lea.vmem %s90, 2
  %v607 = vld [vmem:[%s606] sm:$0x3]
  %v608 = vld [vmem:[%s7] sm:$0xff]
  %v609 = vld [vmem:[%s7 + $0x8] sm:$0xff]
  %v610 = vld [vmem:[%s7 + $0x10] sm:$0xff]
  %v611 = vld [vmem:[%s7 + $0x18] sm:$0xff]
  %v613 = vsel %vm111, %v607, 0
  %615 = vmatprep.subr.mxu0 0.0
  %616 = vmatpush1.msra.mxu0 %v608
  %617 = vmatprep.subr.mxu0 0.0
  %618 = vmatpush1.msra.mxu0 %v609
  %619 = vmatprep.subr.mxu0 0.0
  %620 = vmatpush1.msra.mxu0 %v610
  %621 = vmatprep.subr.mxu0 0.0
  %622 = vmatpush1.msra.mxu0 %v611
  %623 = vmatprep.subr.mxu0 0.0
  %624 = vmatpush1.msra.mxu0 0.0
  %625 = vmatprep.subr.mxu0 0.0
  %626 = vmatpush1.msra.mxu0 0.0
  %627 = vmatprep.subr.mxu0 0.0
  %628 = vmatpush1.msra.mxu0 0.0
  %629 = vmatprep.subr.mxu0 0.0
  %630 = vmatpush1.msra.mxu0 0.0
  %631 = vmatprep.subr.mxu0 0.0
  %632 = vmatpush1.msra.mxu0 0.0
  %633 = vmatprep.subr.mxu0 0.0
  %634 = vmatpush1.msra.mxu0 0.0
  %635 = vmatprep.subr.mxu0 0.0
  %636 = vmatpush1.msra.mxu0 0.0
  %637 = vmatprep.subr.mxu0 0.0
  %638 = vmatpush1.msra.mxu0 0.0
  %639 = vmatprep.subr.mxu0 0.0
  %640 = vmatpush1.msra.mxu0 0.0
  %641 = vmatprep.subr.mxu0 0.0
  %642 = vmatpush1.msra.mxu0 0.0
  %643 = vmatprep.subr.mxu0 0.0
  %644 = vmatpush1.msra.mxu0 0.0
  %645 = vmatprep.subr.mxu0 0.0
  %646 = vmatpush1.msra.mxu0 0.0
  %647 = vmatprep.subr.mxu0 0.0
  %648 = vmatpush1.msra.mxu0 0.0
  %649 = vmatprep.subr.mxu0 0.0
  %650 = vmatpush1.msra.mxu0 0.0
  %651 = vmatprep.subr.mxu0 0.0
  %652 = vmatpush1.msra.mxu0 0.0
  %653 = vmatprep.subr.mxu0 0.0
  %654 = vmatpush1.msra.mxu0 0.0
  %655 = vmatprep.subr.mxu0 0.0
  %656 = vmatpush1.msra.mxu0 0.0
  %657 = vmatprep.subr.mxu0 0.0
  %658 = vmatpush1.msra.mxu0 0.0
  %659 = vmatprep.subr.mxu0 0.0
  %660 = vmatpush1.msra.mxu0 0.0
  %661 = vmatprep.subr.mxu0 0.0
  %662 = vmatpush1.msra.mxu0 0.0
  %663 = vmatprep.subr.mxu0 0.0
  %664 = vmatpush1.msra.mxu0 0.0
  %665 = vmatprep.subr.mxu0 0.0
  %666 = vmatpush1.msra.mxu0 0.0
  %667 = vmatprep.subr.mxu0 0.0
  %668 = vmatpush1.msra.mxu0 0.0
  %669 = vmatprep.subr.mxu0 0.0
  %670 = vmatpush1.msra.mxu0 0.0
  %671 = vmatprep.subr.mxu0 0.0
  %672 = vmatpush1.msra.mxu0 0.0
  %673 = vmatprep.subr.mxu0 0.0
  %674 = vmatpush1.msra.mxu0 0.0
  %675 = vmatprep.subr.mxu0 0.0
  %676 = vmatpush1.msra.mxu0 0.0
  %677 = vmatprep.subr.mxu0 0.0
  %678 = vmatpush1.msra.mxu0 0.0
  %679 = vmatprep.mubr.f32.mxu0 0.0
  %680 = vmatmul.mubr.f32.gmra.mrb[0].mxu0 %v613
  %v681 = vpop.f32.mrb[0].mxu0
  %v682 = vadd.f32 0.0, %v681
  %v683 = vpop.f32.mrb[0].mxu0
  %684 = vdwg.mxu0
  %v686 = vsel %vm111, %v601, 0
  %688 = vmatprep.subr.mxu0 0.0
  %689 = vmatpush1.msra.mxu0 %v602
  %690 = vmatprep.subr.mxu0 0.0
  %691 = vmatpush1.msra.mxu0 %v603
  %692 = vmatprep.subr.mxu0 0.0
  %693 = vmatpush1.msra.mxu0 %v604
  %694 = vmatprep.subr.mxu0 0.0
  %695 = vmatpush1.msra.mxu0 %v605
  %696 = vmatprep.subr.mxu0 0.0
  %697 = vmatpush1.msra.mxu0 0.0
  %698 = vmatprep.subr.mxu0 0.0
  %699 = vmatpush1.msra.mxu0 0.0
  %700 = vmatprep.subr.mxu0 0.0
  %701 = vmatpush1.msra.mxu0 0.0
  %702 = vmatprep.subr.mxu0 0.0
  %703 = vmatpush1.msra.mxu0 0.0
  %704 = vmatprep.subr.mxu0 0.0
  %705 = vmatpush1.msra.mxu0 0.0
  %706 = vmatprep.subr.mxu0 0.0
  %707 = vmatpush1.msra.mxu0 0.0
  %708 = vmatprep.subr.mxu0 0.0
  %709 = vmatpush1.msra.mxu0 0.0
  %710 = vmatprep.subr.mxu0 0.0
  %711 = vmatpush1.msra.mxu0 0.0
  %712 = vmatprep.subr.mxu0 0.0
  %713 = vmatpush1.msra.mxu0 0.0
  %714 = vmatprep.subr.mxu0 0.0
  %715 = vmatpush1.msra.mxu0 0.0
  %716 = vmatprep.subr.mxu0 0.0
  %717 = vmatpush1.msra.mxu0 0.0
  %718 = vmatprep.subr.mxu0 0.0
  %719 = vmatpush1.msra.mxu0 0.0
  %720 = vmatprep.subr.mxu0 0.0
  %721 = vmatpush1.msra.mxu0 0.0
  %722 = vmatprep.subr.mxu0 0.0
  %723 = vmatpush1.msra.mxu0 0.0
  %724 = vmatprep.subr.mxu0 0.0
  %725 = vmatpush1.msra.mxu0 0.0
  %726 = vmatprep.subr.mxu0 0.0
  %727 = vmatpush1.msra.mxu0 0.0
  %728 = vmatprep.subr.mxu0 0.0
  %729 = vmatpush1.msra.mxu0 0.0
  %730 = vmatprep.subr.mxu0 0.0
  %731 = vmatpush1.msra.mxu0 0.0
  %732 = vmatprep.subr.mxu0 0.0
  %733 = vmatpush1.msra.mxu0 0.0
  %734 = vmatprep.subr.mxu0 0.0
  %735 = vmatpush1.msra.mxu0 0.0
  %736 = vmatprep.subr.mxu0 0.0
  %737 = vmatpush1.msra.mxu0 0.0
  %738 = vmatprep.subr.mxu0 0.0
  %739 = vmatpush1.msra.mxu0 0.0
  %740 = vmatprep.subr.mxu0 0.0
  %741 = vmatpush1.msra.mxu0 0.0
  %742 = vmatprep.subr.mxu0 0.0
  %743 = vmatpush1.msra.mxu0 0.0
  %744 = vmatprep.subr.mxu0 0.0
  %745 = vmatpush1.msra.mxu0 0.0
  %746 = vmatprep.subr.mxu0 0.0
  %747 = vmatpush1.msra.mxu0 0.0
  %748 = vmatprep.subr.mxu0 0.0
  %749 = vmatpush1.msra.mxu0 0.0
  %750 = vmatprep.subr.mxu0 0.0
  %751 = vmatpush1.msra.mxu0 0.0
  %752 = vmatprep.mubr.f32.mxu0 0.0
  %753 = vmatmul.mubr.f32.gmra.mrb[0].mxu0 %v686
  %v754 = vpop.f32.mrb[0].mxu0
  %v755 = vadd.f32 %v682, %v754
  %v756 = vpop.f32.mrb[0].mxu0
  %757 = vdwg.mxu0
  %v758 = vld [vmem:[%s9] sm:$0x1]
  %v760 = vlaneseq
  %v761 = vshrl.u32 %v760, 7
  %v762 = vsub.s32 0, %v761
  %v763 = vrot.slane %v758, %v762
  %v765 = vadd.f32 %v755, %v763
  %s766 = scalar_lea.vmem [#allocation3], 2
  %767 = vst [vmem:[%s766] sm:$0x3] %v765
  %s768 = scalar_lea.vmem %s0, 4
  %v769 = vld [vmem:[%s768] sm:$0x3]
  %v770 = vld [vmem:[%s4] sm:$0xff]
  %v771 = vld [vmem:[%s4 + $0x8] sm:$0xff]
  %v772 = vld [vmem:[%s4 + $0x10] sm:$0xff]
  %v773 = vld [vmem:[%s4 + $0x18] sm:$0xff]
  %s774 = scalar_lea.vmem %s1, 4
  %v775 = vld [vmem:[%s774] sm:$0x3]
  %v776 = vld [vmem:[%s5] sm:$0xff]
  %v777 = vld [vmem:[%s5 + $0x8] sm:$0xff]
  %v778 = vld [vmem:[%s5 + $0x10] sm:$0xff]
  %v779 = vld [vmem:[%s5 + $0x18] sm:$0xff]
  %v781 = vsel %vm111, %v775, 0
  %783 = vmatprep.subr.mxu0 0.0
  %784 = vmatpush1.msra.mxu0 %v776
  %785 = vmatprep.subr.mxu0 0.0
  %786 = vmatpush1.msra.mxu0 %v777
  %787 = vmatprep.subr.mxu0 0.0
  %788 = vmatpush1.msra.mxu0 %v778
  %789 = vmatprep.subr.mxu0 0.0
  %790 = vmatpush1.msra.mxu0 %v779
  %791 = vmatprep.subr.mxu0 0.0
  %792 = vmatpush1.msra.mxu0 0.0
  %793 = vmatprep.subr.mxu0 0.0
  %794 = vmatpush1.msra.mxu0 0.0
  %795 = vmatprep.subr.mxu0 0.0
  %796 = vmatpush1.msra.mxu0 0.0
  %797 = vmatprep.subr.mxu0 0.0
  %798 = vmatpush1.msra.mxu0 0.0
  %799 = vmatprep.subr.mxu0 0.0
  %800 = vmatpush1.msra.mxu0 0.0
  %801 = vmatprep.subr.mxu0 0.0
  %802 = vmatpush1.msra.mxu0 0.0
  %803 = vmatprep.subr.mxu0 0.0
  %804 = vmatpush1.msra.mxu0 0.0
  %805 = vmatprep.subr.mxu0 0.0
  %806 = vmatpush1.msra.mxu0 0.0
  %807 = vmatprep.subr.mxu0 0.0
  %808 = vmatpush1.msra.mxu0 0.0
  %809 = vmatprep.subr.mxu0 0.0
  %810 = vmatpush1.msra.mxu0 0.0
  %811 = vmatprep.subr.mxu0 0.0
  %812 = vmatpush1.msra.mxu0 0.0
  %813 = vmatprep.subr.mxu0 0.0
  %814 = vmatpush1.msra.mxu0 0.0
  %815 = vmatprep.subr.mxu0 0.0
  %816 = vmatpush1.msra.mxu0 0.0
  %817 = vmatprep.subr.mxu0 0.0
  %818 = vmatpush1.msra.mxu0 0.0
  %819 = vmatprep.subr.mxu0 0.0
  %820 = vmatpush1.msra.mxu0 0.0
  %821 = vmatprep.subr.mxu0 0.0
  %822 = vmatpush1.msra.mxu0 0.0
  %823 = vmatprep.subr.mxu0 0.0
  %824 = vmatpush1.msra.mxu0 0.0
  %825 = vmatprep.subr.mxu0 0.0
  %826 = vmatpush1.msra.mxu0 0.0
  %827 = vmatprep.subr.mxu0 0.0
  %828 = vmatpush1.msra.mxu0 0.0
  %829 = vmatprep.subr.mxu0 0.0
  %830 = vmatpush1.msra.mxu0 0.0
  %831 = vmatprep.subr.mxu0 0.0
  %832 = vmatpush1.msra.mxu0 0.0
  %833 = vmatprep.subr.mxu0 0.0
  %834 = vmatpush1.msra.mxu0 0.0
  %835 = vmatprep.subr.mxu0 0.0
  %836 = vmatpush1.msra.mxu0 0.0
  %837 = vmatprep.subr.mxu0 0.0
  %838 = vmatpush1.msra.mxu0 0.0
  %839 = vmatprep.subr.mxu0 0.0
  %840 = vmatpush1.msra.mxu0 0.0
  %841 = vmatprep.subr.mxu0 0.0
  %842 = vmatpush1.msra.mxu0 0.0
  %843 = vmatprep.subr.mxu0 0.0
  %844 = vmatpush1.msra.mxu0 0.0
  %845 = vmatprep.subr.mxu0 0.0
  %846 = vmatpush1.msra.mxu0 0.0
  %847 = vmatprep.mubr.f32.mxu0 0.0
  %848 = vmatmul.mubr.f32.gmra.mrb[0].mxu0 %v781
  %v849 = vpop.f32.mrb[0].mxu0
  %v850 = vadd.f32 0.0, %v849
  %v851 = vpop.f32.mrb[0].mxu0
  %852 = vdwg.mxu0
  %v854 = vsel %vm111, %v769, 0
  %856 = vmatprep.subr.mxu0 0.0
  %857 = vmatpush1.msra.mxu0 %v770
  %858 = vmatprep.subr.mxu0 0.0
  %859 = vmatpush1.msra.mxu0 %v771
  %860 = vmatprep.subr.mxu0 0.0
  %861 = vmatpush1.msra.mxu0 %v772
  %862 = vmatprep.subr.mxu0 0.0
  %863 = vmatpush1.msra.mxu0 %v773
  %864 = vmatprep.subr.mxu0 0.0
  %865 = vmatpush1.msra.mxu0 0.0
  %866 = vmatprep.subr.mxu0 0.0
  %867 = vmatpush1.msra.mxu0 0.0
  %868 = vmatprep.subr.mxu0 0.0
  %869 = vmatpush1.msra.mxu0 0.0
  %870 = vmatprep.subr.mxu0 0.0
  %871 = vmatpush1.msra.mxu0 0.0
  %872 = vmatprep.subr.mxu0 0.0
  %873 = vmatpush1.msra.mxu0 0.0
  %874 = vmatprep.subr.mxu0 0.0
  %875 = vmatpush1.msra.mxu0 0.0
  %876 = vmatprep.subr.mxu0 0.0
  %877 = vmatpush1.msra.mxu0 0.0
  %878 = vmatprep.subr.mxu0 0.0
  %879 = vmatpush1.msra.mxu0 0.0
  %880 = vmatprep.subr.mxu0 0.0
  %881 = vmatpush1.msra.mxu0 0.0
  %882 = vmatprep.subr.mxu0 0.0
  %883 = vmatpush1.msra.mxu0 0.0
  %884 = vmatprep.subr.mxu0 0.0
  %885 = vmatpush1.msra.mxu0 0.0
  %886 = vmatprep.subr.mxu0 0.0
  %887 = vmatpush1.msra.mxu0 0.0
  %888 = vmatprep.subr.mxu0 0.0
  %889 = vmatpush1.msra.mxu0 0.0
  %890 = vmatprep.subr.mxu0 0.0
  %891 = vmatpush1.msra.mxu0 0.0
  %892 = vmatprep.subr.mxu0 0.0
  %893 = vmatpush1.msra.mxu0 0.0
  %894 = vmatprep.subr.mxu0 0.0
  %895 = vmatpush1.msra.mxu0 0.0
  %896 = vmatprep.subr.mxu0 0.0
  %897 = vmatpush1.msra.mxu0 0.0
  %898 = vmatprep.subr.mxu0 0.0
  %899 = vmatpush1.msra.mxu0 0.0
  %900 = vmatprep.subr.mxu0 0.0
  %901 = vmatpush1.msra.mxu0 0.0
  %902 = vmatprep.subr.mxu0 0.0
  %903 = vmatpush1.msra.mxu0 0.0
  %904 = vmatprep.subr.mxu0 0.0
  %905 = vmatpush1.msra.mxu0 0.0
  %906 = vmatprep.subr.mxu0 0.0
  %907 = vmatpush1.msra.mxu0 0.0
  %908 = vmatprep.subr.mxu0 0.0
  %909 = vmatpush1.msra.mxu0 0.0
  %910 = vmatprep.subr.mxu0 0.0
  %911 = vmatpush1.msra.mxu0 0.0
  %912 = vmatprep.subr.mxu0 0.0
  %913 = vmatpush1.msra.mxu0 0.0
  %914 = vmatprep.subr.mxu0 0.0
  %915 = vmatpush1.msra.mxu0 0.0
  %916 = vmatprep.subr.mxu0 0.0
  %917 = vmatpush1.msra.mxu0 0.0
  %918 = vmatprep.subr.mxu0 0.0
  %919 = vmatpush1.msra.mxu0 0.0
  %920 = vmatprep.mubr.f32.mxu0 0.0
  %921 = vmatmul.mubr.f32.gmra.mrb[0].mxu0 %v854
  %v922 = vpop.f32.mrb[0].mxu0
  %v923 = vadd.f32 %v850, %v922
  %v924 = vpop.f32.mrb[0].mxu0
  %925 = vdwg.mxu0
  %v926 = vld [vmem:[%s8] sm:$0x1]
  %v928 = vlaneseq
  %v929 = vshrl.u32 %v928, 7
  %v930 = vsub.s32 0, %v929
  %v931 = vrot.slane %v926, %v930
  %v933 = vadd.f32 %v923, %v931
  %s934 = scalar_lea.vmem [#allocation2], 4
  %935 = vst [vmem:[%s934] sm:$0x3] %v933
  %s936 = scalar_lea.vmem %s82, 4
  %v937 = vld [vmem:[%s936] sm:$0x3]
  %v938 = vld [vmem:[%s6] sm:$0xff]
  %v939 = vld [vmem:[%s6 + $0x8] sm:$0xff]
  %v940 = vld [vmem:[%s6 + $0x10] sm:$0xff]
  %v941 = vld [vmem:[%s6 + $0x18] sm:$0xff]
  %s942 = scalar_lea.vmem %s90, 4
  %v943 = vld [vmem:[%s942] sm:$0x3]
  %v944 = vld [vmem:[%s7] sm:$0xff]
  %v945 = vld [vmem:[%s7 + $0x8] sm:$0xff]
  %v946 = vld [vmem:[%s7 + $0x10] sm:$0xff]
  %v947 = vld [vmem:[%s7 + $0x18] sm:$0xff]
  %v949 = vsel %vm111, %v943, 0
  %951 = vmatprep.subr.mxu0 0.0
  %952 = vmatpush1.msra.mxu0 %v944
  %953 = vmatprep.subr.mxu0 0.0
  %954 = vmatpush1.msra.mxu0 %v945
  %955 = vmatprep.subr.mxu0 0.0
  %956 = vmatpush1.msra.mxu0 %v946
  %957 = vmatprep.subr.mxu0 0.0
  %958 = vmatpush1.msra.mxu0 %v947
  %959 = vmatprep.subr.mxu0 0.0
  %960 = vmatpush1.msra.mxu0 0.0
  %961 = vmatprep.subr.mxu0 0.0
  %962 = vmatpush1.msra.mxu0 0.0
  %963 = vmatprep.subr.mxu0 0.0
  %964 = vmatpush1.msra.mxu0 0.0
  %965 = vmatprep.subr.mxu0 0.0
  %966 = vmatpush1.msra.mxu0 0.0
  %967 = vmatprep.subr.mxu0 0.0
  %968 = vmatpush1.msra.mxu0 0.0
  %969 = vmatprep.subr.mxu0 0.0
  %970 = vmatpush1.msra.mxu0 0.0
  %971 = vmatprep.subr.mxu0 0.0
  %972 = vmatpush1.msra.mxu0 0.0
  %973 = vmatprep.subr.mxu0 0.0
  %974 = vmatpush1.msra.mxu0 0.0
  %975 = vmatprep.subr.mxu0 0.0
  %976 = vmatpush1.msra.mxu0 0.0
  %977 = vmatprep.subr.mxu0 0.0
  %978 = vmatpush1.msra.mxu0 0.0
  %979 = vmatprep.subr.mxu0 0.0
  %980 = vmatpush1.msra.mxu0 0.0
  %981 = vmatprep.subr.mxu0 0.0
  %982 = vmatpush1.msra.mxu0 0.0
  %983 = vmatprep.subr.mxu0 0.0
  %984 = vmatpush1.msra.mxu0 0.0
  %985 = vmatprep.subr.mxu0 0.0
  %986 = vmatpush1.msra.mxu0 0.0
  %987 = vmatprep.subr.mxu0 0.0
  %988 = vmatpush1.msra.mxu0 0.0
  %989 = vmatprep.subr.mxu0 0.0
  %990 = vmatpush1.msra.mxu0 0.0
  %991 = vmatprep.subr.mxu0 0.0
  %992 = vmatpush1.msra.mxu0 0.0
  %993 = vmatprep.subr.mxu0 0.0
  %994 = vmatpush1.msra.mxu0 0.0
  %995 = vmatprep.subr.mxu0 0.0
  %996 = vmatpush1.msra.mxu0 0.0
  %997 = vmatprep.subr.mxu0 0.0
  %998 = vmatpush1.msra.mxu0 0.0
  %999 = vmatprep.subr.mxu0 0.0
  %1000 = vmatpush1.msra.mxu0 0.0
  %1001 = vmatprep.subr.mxu0 0.0
  %1002 = vmatpush1.msra.mxu0 0.0
  %1003 = vmatprep.subr.mxu0 0.0
  %1004 = vmatpush1.msra.mxu0 0.0
  %1005 = vmatprep.subr.mxu0 0.0
  %1006 = vmatpush1.msra.mxu0 0.0
  %1007 = vmatprep.subr.mxu0 0.0
  %1008 = vmatpush1.msra.mxu0 0.0
  %1009 = vmatprep.subr.mxu0 0.0
  %1010 = vmatpush1.msra.mxu0 0.0
  %1011 = vmatprep.subr.mxu0 0.0
  %1012 = vmatpush1.msra.mxu0 0.0
  %1013 = vmatprep.subr.mxu0 0.0
  %1014 = vmatpush1.msra.mxu0 0.0
  %1015 = vmatprep.mubr.f32.mxu0 0.0
  %1016 = vmatmul.mubr.f32.gmra.mrb[0].mxu0 %v949
  %v1017 = vpop.f32.mrb[0].mxu0
  %v1018 = vadd.f32 0.0, %v1017
  %v1019 = vpop.f32.mrb[0].mxu0
  %1020 = vdwg.mxu0
  %v1022 = vsel %vm111, %v937, 0
  %1024 = vmatprep.subr.mxu0 0.0
  %1025 = vmatpush1.msra.mxu0 %v938
  %1026 = vmatprep.subr.mxu0 0.0
  %1027 = vmatpush1.msra.mxu0 %v939
  %1028 = vmatprep.subr.mxu0 0.0
  %1029 = vmatpush1.msra.mxu0 %v940
  %1030 = vmatprep.subr.mxu0 0.0
  %1031 = vmatpush1.msra.mxu0 %v941
  %1032 = vmatprep.subr.mxu0 0.0
  %1033 = vmatpush1.msra.mxu0 0.0
  %1034 = vmatprep.subr.mxu0 0.0
  %1035 = vmatpush1.msra.mxu0 0.0
  %1036 = vmatprep.subr.mxu0 0.0
  %1037 = vmatpush1.msra.mxu0 0.0
  %1038 = vmatprep.subr.mxu0 0.0
  %1039 = vmatpush1.msra.mxu0 0.0
  %1040 = vmatprep.subr.mxu0 0.0
  %1041 = vmatpush1.msra.mxu0 0.0
  %1042 = vmatprep.subr.mxu0 0.0
  %1043 = vmatpush1.msra.mxu0 0.0
  %1044 = vmatprep.subr.mxu0 0.0
  %1045 = vmatpush1.msra.mxu0 0.0
  %1046 = vmatprep.subr.mxu0 0.0
  %1047 = vmatpush1.msra.mxu0 0.0
  %1048 = vmatprep.subr.mxu0 0.0
  %1049 = vmatpush1.msra.mxu0 0.0
  %1050 = vmatprep.subr.mxu0 0.0
  %1051 = vmatpush1.msra.mxu0 0.0
  %1052 = vmatprep.subr.mxu0 0.0
  %1053 = vmatpush1.msra.mxu0 0.0
  %1054 = vmatprep.subr.mxu0 0.0
  %1055 = vmatpush1.msra.mxu0 0.0
  %1056 = vmatprep.subr.mxu0 0.0
  %1057 = vmatpush1.msra.mxu0 0.0
  %1058 = vmatprep.subr.mxu0 0.0
  %1059 = vmatpush1.msra.mxu0 0.0
  %1060 = vmatprep.subr.mxu0 0.0
  %1061 = vmatpush1.msra.mxu0 0.0
  %1062 = vmatprep.subr.mxu0 0.0
  %1063 = vmatpush1.msra.mxu0 0.0
  %1064 = vmatprep.subr.mxu0 0.0
  %1065 = vmatpush1.msra.mxu0 0.0
  %1066 = vmatprep.subr.mxu0 0.0
  %1067 = vmatpush1.msra.mxu0 0.0
  %1068 = vmatprep.subr.mxu0 0.0
  %1069 = vmatpush1.msra.mxu0 0.0
  %1070 = vmatprep.subr.mxu0 0.0
  %1071 = vmatpush1.msra.mxu0 0.0
  %1072 = vmatprep.subr.mxu0 0.0
  %1073 = vmatpush1.msra.mxu0 0.0
  %1074 = vmatprep.subr.mxu0 0.0
  %1075 = vmatpush1.msra.mxu0 0.0
  %1076 = vmatprep.subr.mxu0 0.0
  %1077 = vmatpush1.msra.mxu0 0.0
  %1078 = vmatprep.subr.mxu0 0.0
  %1079 = vmatpush1.msra.mxu0 0.0
  %1080 = vmatprep.subr.mxu0 0.0
  %1081 = vmatpush1.msra.mxu0 0.0
  %1082 = vmatprep.subr.mxu0 0.0
  %1083 = vmatpush1.msra.mxu0 0.0
  %1084 = vmatprep.subr.mxu0 0.0
  %1085 = vmatpush1.msra.mxu0 0.0
  %1086 = vmatprep.subr.mxu0 0.0
  %1087 = vmatpush1.msra.mxu0 0.0
  %1088 = vmatprep.mubr.f32.mxu0 0.0
  %1089 = vmatmul.mubr.f32.gmra.mrb[0].mxu0 %v1022
  %v1090 = vpop.f32.mrb[0].mxu0
  %v1091 = vadd.f32 %v1018, %v1090
  %v1092 = vpop.f32.mrb[0].mxu0
  %1093 = vdwg.mxu0
  %v1094 = vld [vmem:[%s9] sm:$0x1]
  %v1096 = vlaneseq
  %v1097 = vshrl.u32 %v1096, 7
  %v1098 = vsub.s32 0, %v1097
  %v1099 = vrot.slane %v1094, %v1098
  %v1101 = vadd.f32 %v1091, %v1099
  %s1102 = scalar_lea.vmem [#allocation3], 4
  %1103 = vst [vmem:[%s1102] sm:$0x3] %v1101
  %s1104 = scalar_lea.vmem %s0, 6
  %v1105 = vld [vmem:[%s1104] sm:$0x3]
  %v1106 = vld [vmem:[%s4] sm:$0xff]
  %v1107 = vld [vmem:[%s4 + $0x8] sm:$0xff]
  %v1108 = vld [vmem:[%s4 + $0x10] sm:$0xff]
  %v1109 = vld [vmem:[%s4 + $0x18] sm:$0xff]
  %s1110 = scalar_lea.vmem %s1, 6
  %v1111 = vld [vmem:[%s1110] sm:$0x3]
  %v1112 = vld [vmem:[%s5] sm:$0xff]
  %v1113 = vld [vmem:[%s5 + $0x8] sm:$0xff]
  %v1114 = vld [vmem:[%s5 + $0x10] sm:$0xff]
  %v1115 = vld [vmem:[%s5 + $0x18] sm:$0xff]
  %v1117 = vsel %vm111, %v1111, 0
  %1119 = vmatprep.subr.mxu0 0.0
  %1120 = vmatpush1.msra.mxu0 %v1112
  %1121 = vmatprep.subr.mxu0 0.0
  %1122 = vmatpush1.msra.mxu0 %v1113
  %1123 = vmatprep.subr.mxu0 0.0
  %1124 = vmatpush1.msra.mxu0 %v1114
  %1125 = vmatprep.subr.mxu0 0.0
  %1126 = vmatpush1.msra.mxu0 %v1115
  %1127 = vmatprep.subr.mxu0 0.0
  %1128 = vmatpush1.msra.mxu0 0.0
  %1129 = vmatprep.subr.mxu0 0.0
  %1130 = vmatpush1.msra.mxu0 0.0
  %1131 = vmatprep.subr.mxu0 0.0
  %1132 = vmatpush1.msra.mxu0 0.0
  %1133 = vmatprep.subr.mxu0 0.0
  %1134 = vmatpush1.msra.mxu0 0.0
  %1135 = vmatprep.subr.mxu0 0.0
  %1136 = vmatpush1.msra.mxu0 0.0
  %1137 = vmatprep.subr.mxu0 0.0
  %1138 = vmatpush1.msra.mxu0 0.0
  %1139 = vmatprep.subr.mxu0 0.0
  %1140 = vmatpush1.msra.mxu0 0.0
  %1141 = vmatprep.subr.mxu0 0.0
  %1142 = vmatpush1.msra.mxu0 0.0
  %1143 = vmatprep.subr.mxu0 0.0
  %1144 = vmatpush1.msra.mxu0 0.0
  %1145 = vmatprep.subr.mxu0 0.0
  %1146 = vmatpush1.msra.mxu0 0.0
  %1147 = vmatprep.subr.mxu0 0.0
  %1148 = vmatpush1.msra.mxu0 0.0
  %1149 = vmatprep.subr.mxu0 0.0
  %1150 = vmatpush1.msra.mxu0 0.0
  %1151 = vmatprep.subr.mxu0 0.0
  %1152 = vmatpush1.msra.mxu0 0.0
  %1153 = vmatprep.subr.mxu0 0.0
  %1154 = vmatpush1.msra.mxu0 0.0
  %1155 = vmatprep.subr.mxu0 0.0
  %1156 = vmatpush1.msra.mxu0 0.0
  %1157 = vmatprep.subr.mxu0 0.0
  %1158 = vmatpush1.msra.mxu0 0.0
  %1159 = vmatprep.subr.mxu0 0.0
  %1160 = vmatpush1.msra.mxu0 0.0
  %1161 = vmatprep.subr.mxu0 0.0
  %1162 = vmatpush1.msra.mxu0 0.0
  %1163 = vmatprep.subr.mxu0 0.0
  %1164 = vmatpush1.msra.mxu0 0.0
  %1165 = vmatprep.subr.mxu0 0.0
  %1166 = vmatpush1.msra.mxu0 0.0
  %1167 = vmatprep.subr.mxu0 0.0
  %1168 = vmatpush1.msra.mxu0 0.0
  %1169 = vmatprep.subr.mxu0 0.0
  %1170 = vmatpush1.msra.mxu0 0.0
  %1171 = vmatprep.subr.mxu0 0.0
  %1172 = vmatpush1.msra.mxu0 0.0
  %1173 = vmatprep.subr.mxu0 0.0
  %1174 = vmatpush1.msra.mxu0 0.0
  %1175 = vmatprep.subr.mxu0 0.0
  %1176 = vmatpush1.msra.mxu0 0.0
  %1177 = vmatprep.subr.mxu0 0.0
  %1178 = vmatpush1.msra.mxu0 0.0
  %1179 = vmatprep.subr.mxu0 0.0
  %1180 = vmatpush1.msra.mxu0 0.0
  %1181 = vmatprep.subr.mxu0 0.0
  %1182 = vmatpush1.msra.mxu0 0.0
  %1183 = vmatprep.mubr.f32.mxu0 0.0
  %1184 = vmatmul.mubr.f32.gmra.mrb[0].mxu0 %v1117
  %v1185 = vpop.f32.mrb[0].mxu0
  %v1186 = vadd.f32 0.0, %v1185
  %v1187 = vpop.f32.mrb[0].mxu0
  %1188 = vdwg.mxu0
  %v1190 = vsel %vm111, %v1105, 0
  %1192 = vmatprep.subr.mxu0 0.0
  %1193 = vmatpush1.msra.mxu0 %v1106
  %1194 = vmatprep.subr.mxu0 0.0
  %1195 = vmatpush1.msra.mxu0 %v1107
  %1196 = vmatprep.subr.mxu0 0.0
  %1197 = vmatpush1.msra.mxu0 %v1108
  %1198 = vmatprep.subr.mxu0 0.0
  %1199 = vmatpush1.msra.mxu0 %v1109
  %1200 = vmatprep.subr.mxu0 0.0
  %1201 = vmatpush1.msra.mxu0 0.0
  %1202 = vmatprep.subr.mxu0 0.0
  %1203 = vmatpush1.msra.mxu0 0.0
  %1204 = vmatprep.subr.mxu0 0.0
  %1205 = vmatpush1.msra.mxu0 0.0
  %1206 = vmatprep.subr.mxu0 0.0
  %1207 = vmatpush1.msra.mxu0 0.0
  %1208 = vmatprep.subr.mxu0 0.0
  %1209 = vmatpush1.msra.mxu0 0.0
  %1210 = vmatprep.subr.mxu0 0.0
  %1211 = vmatpush1.msra.mxu0 0.0
  %1212 = vmatprep.subr.mxu0 0.0
  %1213 = vmatpush1.msra.mxu0 0.0
  %1214 = vmatprep.subr.mxu0 0.0
  %1215 = vmatpush1.msra.mxu0 0.0
  %1216 = vmatprep.subr.mxu0 0.0
  %1217 = vmatpush1.msra.mxu0 0.0
  %1218 = vmatprep.subr.mxu0 0.0
  %1219 = vmatpush1.msra.mxu0 0.0
  %1220 = vmatprep.subr.mxu0 0.0
  %1221 = vmatpush1.msra.mxu0 0.0
  %1222 = vmatprep.subr.mxu0 0.0
  %1223 = vmatpush1.msra.mxu0 0.0
  %1224 = vmatprep.subr.mxu0 0.0
  %1225 = vmatpush1.msra.mxu0 0.0
  %1226 = vmatprep.subr.mxu0 0.0
  %1227 = vmatpush1.msra.mxu0 0.0
  %1228 = vmatprep.subr.mxu0 0.0
  %1229 = vmatpush1.msra.mxu0 0.0
  %1230 = vmatprep.subr.mxu0 0.0
  %1231 = vmatpush1.msra.mxu0 0.0
  %1232 = vmatprep.subr.mxu0 0.0
  %1233 = vmatpush1.msra.mxu0 0.0
  %1234 = vmatprep.subr.mxu0 0.0
  %1235 = vmatpush1.msra.mxu0 0.0
  %1236 = vmatprep.subr.mxu0 0.0
  %1237 = vmatpush1.msra.mxu0 0.0
  %1238 = vmatprep.subr.mxu0 0.0
  %1239 = vmatpush1.msra.mxu0 0.0
  %1240 = vmatprep.subr.mxu0 0.0
  %1241 = vmatpush1.msra.mxu0 0.0
  %1242 = vmatprep.subr.mxu0 0.0
  %1243 = vmatpush1.msra.mxu0 0.0
  %1244 = vmatprep.subr.mxu0 0.0
  %1245 = vmatpush1.msra.mxu0 0.0
  %1246 = vmatprep.subr.mxu0 0.0
  %1247 = vmatpush1.msra.mxu0 0.0
  %1248 = vmatprep.subr.mxu0 0.0
  %1249 = vmatpush1.msra.mxu0 0.0
  %1250 = vmatprep.subr.mxu0 0.0
  %1251 = vmatpush1.msra.mxu0 0.0
  %1252 = vmatprep.subr.mxu0 0.0
  %1253 = vmatpush1.msra.mxu0 0.0
  %1254 = vmatprep.subr.mxu0 0.0
  %1255 = vmatpush1.msra.mxu0 0.0
  %1256 = vmatprep.mubr.f32.mxu0 0.0
  %1257 = vmatmul.mubr.f32.gmra.mrb[0].mxu0 %v1190
  %v1258 = vpop.f32.mrb[0].mxu0
  %v1259 = vadd.f32 %v1186, %v1258
  %v1260 = vpop.f32.mrb[0].mxu0
  %1261 = vdwg.mxu0
  %v1262 = vld [vmem:[%s8] sm:$0x1]
  %v1264 = vlaneseq
  %v1265 = vshrl.u32 %v1264, 7
  %v1266 = vsub.s32 0, %v1265
  %v1267 = vrot.slane %v1262, %v1266
  %v1269 = vadd.f32 %v1259, %v1267
  %s1270 = scalar_lea.vmem [#allocation2], 6
  %1271 = vst [vmem:[%s1270] sm:$0x3] %v1269
  %s1272 = scalar_lea.vmem %s82, 6
  %v1273 = vld [vmem:[%s1272] sm:$0x3]
  %v1274 = vld [vmem:[%s6] sm:$0xff]
  %v1275 = vld [vmem:[%s6 + $0x8] sm:$0xff]
  %v1276 = vld [vmem:[%s6 + $0x10] sm:$0xff]
  %v1277 = vld [vmem:[%s6 + $0x18] sm:$0xff]
  %s1278 = scalar_lea.vmem %s90, 6
  %v1279 = vld [vmem:[%s1278] sm:$0x3]
  %v1280 = vld [vmem:[%s7] sm:$0xff]
  %v1281 = vld [vmem:[%s7 + $0x8] sm:$0xff]
  %v1282 = vld [vmem:[%s7 + $0x10] sm:$0xff]
  %v1283 = vld [vmem:[%s7 + $0x18] sm:$0xff]
  %v1285 = vsel %vm111, %v1279, 0
  %1287 = vmatprep.subr.mxu0 0.0
  %1288 = vmatpush1.msra.mxu0 %v1280
  %1289 = vmatprep.subr.mxu0 0.0
  %1290 = vmatpush1.msra.mxu0 %v1281
  %1291 = vmatprep.subr.mxu0 0.0
  %1292 = vmatpush1.msra.mxu0 %v1282
  %1293 = vmatprep.subr.mxu0 0.0
  %1294 = vmatpush1.msra.mxu0 %v1283
  %1295 = vmatprep.subr.mxu0 0.0
  %1296 = vmatpush1.msra.mxu0 0.0
  %1297 = vmatprep.subr.mxu0 0.0
  %1298 = vmatpush1.msra.mxu0 0.0
  %1299 = vmatprep.subr.mxu0 0.0
  %1300 = vmatpush1.msra.mxu0 0.0
  %1301 = vmatprep.subr.mxu0 0.0
  %1302 = vmatpush1.msra.mxu0 0.0
  %1303 = vmatprep.subr.mxu0 0.0
  %1304 = vmatpush1.msra.mxu0 0.0
  %1305 = vmatprep.subr.mxu0 0.0
  %1306 = vmatpush1.msra.mxu0 0.0
  %1307 = vmatprep.subr.mxu0 0.0
  %1308 = vmatpush1.msra.mxu0 0.0
  %1309 = vmatprep.subr.mxu0 0.0
  %1310 = vmatpush1.msra.mxu0 0.0
  %1311 = vmatprep.subr.mxu0 0.0
  %1312 = vmatpush1.msra.mxu0 0.0
  %1313 = vmatprep.subr.mxu0 0.0
  %1314 = vmatpush1.msra.mxu0 0.0
  %1315 = vmatprep.subr.mxu0 0.0
  %1316 = vmatpush1.msra.mxu0 0.0
  %1317 = vmatprep.subr.mxu0 0.0
  %1318 = vmatpush1.msra.mxu0 0.0
  %1319 = vmatprep.subr.mxu0 0.0
  %1320 = vmatpush1.msra.mxu0 0.0
  %1321 = vmatprep.subr.mxu0 0.0
  %1322 = vmatpush1.msra.mxu0 0.0
  %1323 = vmatprep.subr.mxu0 0.0
  %1324 = vmatpush1.msra.mxu0 0.0
  %1325 = vmatprep.subr.mxu0 0.0
  %1326 = vmatpush1.msra.mxu0 0.0
  %1327 = vmatprep.subr.mxu0 0.0
  %1328 = vmatpush1.msra.mxu0 0.0
  %1329 = vmatprep.subr.mxu0 0.0
  %1330 = vmatpush1.msra.mxu0 0.0
  %1331 = vmatprep.subr.mxu0 0.0
  %1332 = vmatpush1.msra.mxu0 0.0
  %1333 = vmatprep.subr.mxu0 0.0
  %1334 = vmatpush1.msra.mxu0 0.0
  %1335 = vmatprep.subr.mxu0 0.0
  %1336 = vmatpush1.msra.mxu0 0.0
  %1337 = vmatprep.subr.mxu0 0.0
  %1338 = vmatpush1.msra.mxu0 0.0
  %1339 = vmatprep.subr.mxu0 0.0
  %1340 = vmatpush1.msra.mxu0 0.0
  %1341 = vmatprep.subr.mxu0 0.0
  %1342 = vmatpush1.msra.mxu0 0.0
  %1343 = vmatprep.subr.mxu0 0.0
  %1344 = vmatpush1.msra.mxu0 0.0
  %1345 = vmatprep.subr.mxu0 0.0
  %1346 = vmatpush1.msra.mxu0 0.0
  %1347 = vmatprep.subr.mxu0 0.0
  %1348 = vmatpush1.msra.mxu0 0.0
  %1349 = vmatprep.subr.mxu0 0.0
  %1350 = vmatpush1.msra.mxu0 0.0
  %1351 = vmatprep.mubr.f32.mxu0 0.0
  %1352 = vmatmul.mubr.f32.gmra.mrb[0].mxu0 %v1285
  %v1353 = vpop.f32.mrb[0].mxu0
  %v1354 = vadd.f32 0.0, %v1353
  %v1355 = vpop.f32.mrb[0].mxu0
  %1356 = vdwg.mxu0
  %v1358 = vsel %vm111, %v1273, 0
  %1360 = vmatprep.subr.mxu0 0.0
  %1361 = vmatpush1.msra.mxu0 %v1274
  %1362 = vmatprep.subr.mxu0 0.0
  %1363 = vmatpush1.msra.mxu0 %v1275
  %1364 = vmatprep.subr.mxu0 0.0
  %1365 = vmatpush1.msra.mxu0 %v1276
  %1366 = vmatprep.subr.mxu0 0.0
  %1367 = vmatpush1.msra.mxu0 %v1277
  %1368 = vmatprep.subr.mxu0 0.0
  %1369 = vmatpush1.msra.mxu0 0.0
  %1370 = vmatprep.subr.mxu0 0.0
  %1371 = vmatpush1.msra.mxu0 0.0
  %1372 = vmatprep.subr.mxu0 0.0
  %1373 = vmatpush1.msra.mxu0 0.0
  %1374 = vmatprep.subr.mxu0 0.0
  %1375 = vmatpush1.msra.mxu0 0.0
  %1376 = vmatprep.subr.mxu0 0.0
  %1377 = vmatpush1.msra.mxu0 0.0
  %1378 = vmatprep.subr.mxu0 0.0
  %1379 = vmatpush1.msra.mxu0 0.0
  %1380 = vmatprep.subr.mxu0 0.0
  %1381 = vmatpush1.msra.mxu0 0.0
  %1382 = vmatprep.subr.mxu0 0.0
  %1383 = vmatpush1.msra.mxu0 0.0
  %1384 = vmatprep.subr.mxu0 0.0
  %1385 = vmatpush1.msra.mxu0 0.0
  %1386 = vmatprep.subr.mxu0 0.0
  %1387 = vmatpush1.msra.mxu0 0.0
  %1388 = vmatprep.subr.mxu0 0.0
  %1389 = vmatpush1.msra.mxu0 0.0
  %1390 = vmatprep.subr.mxu0 0.0
  %1391 = vmatpush1.msra.mxu0 0.0
  %1392 = vmatprep.subr.mxu0 0.0
  %1393 = vmatpush1.msra.mxu0 0.0
  %1394 = vmatprep.subr.mxu0 0.0
  %1395 = vmatpush1.msra.mxu0 0.0
  %1396 = vmatprep.subr.mxu0 0.0
  %1397 = vmatpush1.msra.mxu0 0.0
  %1398 = vmatprep.subr.mxu0 0.0
  %1399 = vmatpush1.msra.mxu0 0.0
  %1400 = vmatprep.subr.mxu0 0.0
  %1401 = vmatpush1.msra.mxu0 0.0
  %1402 = vmatprep.subr.mxu0 0.0
  %1403 = vmatpush1.msra.mxu0 0.0
  %1404 = vmatprep.subr.mxu0 0.0
  %1405 = vmatpush1.msra.mxu0 0.0
  %1406 = vmatprep.subr.mxu0 0.0
  %1407 = vmatpush1.msra.mxu0 0.0
  %1408 = vmatprep.subr.mxu0 0.0
  %1409 = vmatpush1.msra.mxu0 0.0
  %1410 = vmatprep.subr.mxu0 0.0
  %1411 = vmatpush1.msra.mxu0 0.0
  %1412 = vmatprep.subr.mxu0 0.0
  %1413 = vmatpush1.msra.mxu0 0.0
  %1414 = vmatprep.subr.mxu0 0.0
  %1415 = vmatpush1.msra.mxu0 0.0
  %1416 = vmatprep.subr.mxu0 0.0
  %1417 = vmatpush1.msra.mxu0 0.0
  %1418 = vmatprep.subr.mxu0 0.0
  %1419 = vmatpush1.msra.mxu0 0.0
  %1420 = vmatprep.subr.mxu0 0.0
  %1421 = vmatpush1.msra.mxu0 0.0
  %1422 = vmatprep.subr.mxu0 0.0
  %1423 = vmatpush1.msra.mxu0 0.0
  %1424 = vmatprep.mubr.f32.mxu0 0.0
  %1425 = vmatmul.mubr.f32.gmra.mrb[0].mxu0 %v1358
  %v1426 = vpop.f32.mrb[0].mxu0
  %v1427 = vadd.f32 %v1354, %v1426
  %v1428 = vpop.f32.mrb[0].mxu0
  %1429 = vdwg.mxu0
  %v1430 = vld [vmem:[%s9] sm:$0x1]
  %v1432 = vlaneseq
  %v1433 = vshrl.u32 %v1432, 7
  %v1434 = vsub.s32 0, %v1433
  %v1435 = vrot.slane %v1430, %v1434
  %v1437 = vadd.f32 %v1427, %v1435
  %s1438 = scalar_lea.vmem [#allocation3], 6
  %1439 = vst [vmem:[%s1438] sm:$0x3] %v1437
  %s1440 = scalar_lea.vmem %s0, 8
  %v1441 = vld [vmem:[%s1440] sm:$0x3]
  %v1442 = vld [vmem:[%s4] sm:$0xff]
  %v1443 = vld [vmem:[%s4 + $0x8] sm:$0xff]
  %v1444 = vld [vmem:[%s4 + $0x10] sm:$0xff]
  %v1445 = vld [vmem:[%s4 + $0x18] sm:$0xff]
  %s1446 = scalar_lea.vmem %s1, 8
  %v1447 = vld [vmem:[%s1446] sm:$0x3]
  %v1448 = vld [vmem:[%s5] sm:$0xff]
  %v1449 = vld [vmem:[%s5 + $0x8] sm:$0xff]
  %v1450 = vld [vmem:[%s5 + $0x10] sm:$0xff]
  %v1451 = vld [vmem:[%s5 + $0x18] sm:$0xff]
  %v1453 = vsel %vm111, %v1447, 0
  %1455 = vmatprep.subr.mxu0 0.0
  %1456 = vmatpush1.msra.mxu0 %v1448
  %1457 = vmatprep.subr.mxu0 0.0
  %1458 = vmatpush1.msra.mxu0 %v1449
  %1459 = vmatprep.subr.mxu0 0.0
  %1460 = vmatpush1.msra.mxu0 %v1450
  %1461 = vmatprep.subr.mxu0 0.0
  %1462 = vmatpush1.msra.mxu0 %v1451
  %1463 = vmatprep.subr.mxu0 0.0
  %1464 = vmatpush1.msra.mxu0 0.0
  %1465 = vmatprep.subr.mxu0 0.0
  %1466 = vmatpush1.msra.mxu0 0.0
  %1467 = vmatprep.subr.mxu0 0.0
  %1468 = vmatpush1.msra.mxu0 0.0
  %1469 = vmatprep.subr.mxu0 0.0
  %1470 = vmatpush1.msra.mxu0 0.0
  %1471 = vmatprep.subr.mxu0 0.0
  %1472 = vmatpush1.msra.mxu0 0.0
  %1473 = vmatprep.subr.mxu0 0.0
  %1474 = vmatpush1.msra.mxu0 0.0
  %1475 = vmatprep.subr.mxu0 0.0
  %1476 = vmatpush1.msra.mxu0 0.0
  %1477 = vmatprep.subr.mxu0 0.0
  %1478 = vmatpush1.msra.mxu0 0.0
  %1479 = vmatprep.subr.mxu0 0.0
  %1480 = vmatpush1.msra.mxu0 0.0
  %1481 = vmatprep.subr.mxu0 0.0
  %1482 = vmatpush1.msra.mxu0 0.0
  %1483 = vmatprep.subr.mxu0 0.0
  %1484 = vmatpush1.msra.mxu0 0.0
  %1485 = vmatprep.subr.mxu0 0.0
  %1486 = vmatpush1.msra.mxu0 0.0
  %1487 = vmatprep.subr.mxu0 0.0
  %1488 = vmatpush1.msra.mxu0 0.0
  %1489 = vmatprep.subr.mxu0 0.0
  %1490 = vmatpush1.msra.mxu0 0.0
  %1491 = vmatprep.subr.mxu0 0.0
  %1492 = vmatpush1.msra.mxu0 0.0
  %1493 = vmatprep.subr.mxu0 0.0
  %1494 = vmatpush1.msra.mxu0 0.0
  %1495 = vmatprep.subr.mxu0 0.0
  %1496 = vmatpush1.msra.mxu0 0.0
  %1497 = vmatprep.subr.mxu0 0.0
  %1498 = vmatpush1.msra.mxu0 0.0
  %1499 = vmatprep.subr.mxu0 0.0
  %1500 = vmatpush1.msra.mxu0 0.0
  %1501 = vmatprep.subr.mxu0 0.0
  %1502 = vmatpush1.msra.mxu0 0.0
  %1503 = vmatprep.subr.mxu0 0.0
  %1504 = vmatpush1.msra.mxu0 0.0
  %1505 = vmatprep.subr.mxu0 0.0
  %1506 = vmatpush1.msra.mxu0 0.0
  %1507 = vmatprep.subr.mxu0 0.0
  %1508 = vmatpush1.msra.mxu0 0.0
  %1509 = vmatprep.subr.mxu0 0.0
  %1510 = vmatpush1.msra.mxu0 0.0
  %1511 = vmatprep.subr.mxu0 0.0
  %1512 = vmatpush1.msra.mxu0 0.0
  %1513 = vmatprep.subr.mxu0 0.0
  %1514 = vmatpush1.msra.mxu0 0.0
  %1515 = vmatprep.subr.mxu0 0.0
  %1516 = vmatpush1.msra.mxu0 0.0
  %1517 = vmatprep.subr.mxu0 0.0
  %1518 = vmatpush1.msra.mxu0 0.0
  %1519 = vmatprep.mubr.f32.mxu0 0.0
  %1520 = vmatmul.mubr.f32.gmra.mrb[0].mxu0 %v1453
  %v1521 = vpop.f32.mrb[0].mxu0
  %v1522 = vadd.f32 0.0, %v1521
  %v1523 = vpop.f32.mrb[0].mxu0
  %1524 = vdwg.mxu0
  %v1526 = vsel %vm111, %v1441, 0
  %1528 = vmatprep.subr.mxu0 0.0
  %1529 = vmatpush1.msra.mxu0 %v1442
  %1530 = vmatprep.subr.mxu0 0.0
  %1531 = vmatpush1.msra.mxu0 %v1443
  %1532 = vmatprep.subr.mxu0 0.0
  %1533 = vmatpush1.msra.mxu0 %v1444
  %1534 = vmatprep.subr.mxu0 0.0
  %1535 = vmatpush1.msra.mxu0 %v1445
  %1536 = vmatprep.subr.mxu0 0.0
  %1537 = vmatpush1.msra.mxu0 0.0
  %1538 = vmatprep.subr.mxu0 0.0
  %1539 = vmatpush1.msra.mxu0 0.0
  %1540 = vmatprep.subr.mxu0 0.0
  %1541 = vmatpush1.msra.mxu0 0.0
  %1542 = vmatprep.subr.mxu0 0.0
  %1543 = vmatpush1.msra.mxu0 0.0
  %1544 = vmatprep.subr.mxu0 0.0
  %1545 = vmatpush1.msra.mxu0 0.0
  %1546 = vmatprep.subr.mxu0 0.0
  %1547 = vmatpush1.msra.mxu0 0.0
  %1548 = vmatprep.subr.mxu0 0.0
  %1549 = vmatpush1.msra.mxu0 0.0
  %1550 = vmatprep.subr.mxu0 0.0
  %1551 = vmatpush1.msra.mxu0 0.0
  %1552 = vmatprep.subr.mxu0 0.0
  %1553 = vmatpush1.msra.mxu0 0.0
  %1554 = vmatprep.subr.mxu0 0.0
  %1555 = vmatpush1.msra.mxu0 0.0
  %1556 = vmatprep.subr.mxu0 0.0
  %1557 = vmatpush1.msra.mxu0 0.0
  %1558 = vmatprep.subr.mxu0 0.0
  %1559 = vmatpush1.msra.mxu0 0.0
  %1560 = vmatprep.subr.mxu0 0.0
  %1561 = vmatpush1.msra.mxu0 0.0
  %1562 = vmatprep.subr.mxu0 0.0
  %1563 = vmatpush1.msra.mxu0 0.0
  %1564 = vmatprep.subr.mxu0 0.0
  %1565 = vmatpush1.msra.mxu0 0.0
  %1566 = vmatprep.subr.mxu0 0.0
  %1567 = vmatpush1.msra.mxu0 0.0
  %1568 = vmatprep.subr.mxu0 0.0
  %1569 = vmatpush1.msra.mxu0 0.0
  %1570 = vmatprep.subr.mxu0 0.0
  %1571 = vmatpush1.msra.mxu0 0.0
  %1572 = vmatprep.subr.mxu0 0.0
  %1573 = vmatpush1.msra.mxu0 0.0
  %1574 = vmatprep.subr.mxu0 0.0
  %1575 = vmatpush1.msra.mxu0 0.0
  %1576 = vmatprep.subr.mxu0 0.0
  %1577 = vmatpush1.msra.mxu0 0.0
  %1578 = vmatprep.subr.mxu0 0.0
  %1579 = vmatpush1.msra.mxu0 0.0
  %1580 = vmatprep.subr.mxu0 0.0
  %1581 = vmatpush1.msra.mxu0 0.0
  %1582 = vmatprep.subr.mxu0 0.0
  %1583 = vmatpush1.msra.mxu0 0.0
  %1584 = vmatprep.subr.mxu0 0.0
  %1585 = vmatpush1.msra.mxu0 0.0
  %1586 = vmatprep.subr.mxu0 0.0
  %1587 = vmatpush1.msra.mxu0 0.0
  %1588 = vmatprep.subr.mxu0 0.0
  %1589 = vmatpush1.msra.mxu0 0.0
  %1590 = vmatprep.subr.mxu0 0.0
  %1591 = vmatpush1.msra.mxu0 0.0
  %1592 = vmatprep.mubr.f32.mxu0 0.0
  %1593 = vmatmul.mubr.f32.gmra.mrb[0].mxu0 %v1526
  %v1594 = vpop.f32.mrb[0].mxu0
  %v1595 = vadd.f32 %v1522, %v1594
  %v1596 = vpop.f32.mrb[0].mxu0
  %1597 = vdwg.mxu0
  %v1598 = vld [vmem:[%s8] sm:$0x1]
  %v1600 = vlaneseq
  %v1601 = vshrl.u32 %v1600, 7
  %v1602 = vsub.s32 0, %v1601
  %v1603 = vrot.slane %v1598, %v1602
  %v1605 = vadd.f32 %v1595, %v1603
  %s1606 = scalar_lea.vmem [#allocation2], 8
  %1607 = vst [vmem:[%s1606] sm:$0x3] %v1605
  %s1608 = scalar_lea.vmem %s82, 8
  %v1609 = vld [vmem:[%s1608] sm:$0x3]
  %v1610 = vld [vmem:[%s6] sm:$0xff]
  %v1611 = vld [vmem:[%s6 + $0x8] sm:$0xff]
  %v1612 = vld [vmem:[%s6 + $0x10] sm:$0xff]
  %v1613 = vld [vmem:[%s6 + $0x18] sm:$0xff]
  %s1614 = scalar_lea.vmem %s90, 8
  %v1615 = vld [vmem:[%s1614] sm:$0x3]
  %v1616 = vld [vmem:[%s7] sm:$0xff]
  %v1617 = vld [vmem:[%s7 + $0x8] sm:$0xff]
  %v1618 = vld [vmem:[%s7 + $0x10] sm:$0xff]
  %v1619 = vld [vmem:[%s7 + $0x18] sm:$0xff]
  %v1621 = vsel %vm111, %v1615, 0
  %1623 = vmatprep.subr.mxu0 0.0
  %1624 = vmatpush1.msra.mxu0 %v1616
  %1625 = vmatprep.subr.mxu0 0.0
  %1626 = vmatpush1.msra.mxu0 %v1617
  %1627 = vmatprep.subr.mxu0 0.0
  %1628 = vmatpush1.msra.mxu0 %v1618
  %1629 = vmatprep.subr.mxu0 0.0
  %1630 = vmatpush1.msra.mxu0 %v1619
  %1631 = vmatprep.subr.mxu0 0.0
  %1632 = vmatpush1.msra.mxu0 0.0
  %1633 = vmatprep.subr.mxu0 0.0
  %1634 = vmatpush1.msra.mxu0 0.0
  %1635 = vmatprep.subr.mxu0 0.0
  %1636 = vmatpush1.msra.mxu0 0.0
  %1637 = vmatprep.subr.mxu0 0.0
  %1638 = vmatpush1.msra.mxu0 0.0
  %1639 = vmatprep.subr.mxu0 0.0
  %1640 = vmatpush1.msra.mxu0 0.0
  %1641 = vmatprep.subr.mxu0 0.0
  %1642 = vmatpush1.msra.mxu0 0.0
  %1643 = vmatprep.subr.mxu0 0.0
  %1644 = vmatpush1.msra.mxu0 0.0
  %1645 = vmatprep.subr.mxu0 0.0
  %1646 = vmatpush1.msra.mxu0 0.0
  %1647 = vmatprep.subr.mxu0 0.0
  %1648 = vmatpush1.msra.mxu0 0.0
  %1649 = vmatprep.subr.mxu0 0.0
  %1650 = vmatpush1.msra.mxu0 0.0
  %1651 = vmatprep.subr.mxu0 0.0
  %1652 = vmatpush1.msra.mxu0 0.0
  %1653 = vmatprep.subr.mxu0 0.0
  %1654 = vmatpush1.msra.mxu0 0.0
  %1655 = vmatprep.subr.mxu0 0.0
  %1656 = vmatpush1.msra.mxu0 0.0
  %1657 = vmatprep.subr.mxu0 0.0
  %1658 = vmatpush1.msra.mxu0 0.0
  %1659 = vmatprep.subr.mxu0 0.0
  %1660 = vmatpush1.msra.mxu0 0.0
  %1661 = vmatprep.subr.mxu0 0.0
  %1662 = vmatpush1.msra.mxu0 0.0
  %1663 = vmatprep.subr.mxu0 0.0
  %1664 = vmatpush1.msra.mxu0 0.0
  %1665 = vmatprep.subr.mxu0 0.0
  %1666 = vmatpush1.msra.mxu0 0.0
  %1667 = vmatprep.subr.mxu0 0.0
  %1668 = vmatpush1.msra.mxu0 0.0
  %1669 = vmatprep.subr.mxu0 0.0
  %1670 = vmatpush1.msra.mxu0 0.0
  %1671 = vmatprep.subr.mxu0 0.0
  %1672 = vmatpush1.msra.mxu0 0.0
  %1673 = vmatprep.subr.mxu0 0.0
  %1674 = vmatpush1.msra.mxu0 0.0
  %1675 = vmatprep.subr.mxu0 0.0
  %1676 = vmatpush1.msra.mxu0 0.0
  %1677 = vmatprep.subr.mxu0 0.0
  %1678 = vmatpush1.msra.mxu0 0.0
  %1679 = vmatprep.subr.mxu0 0.0
  %1680 = vmatpush1.msra.mxu0 0.0
  %1681 = vmatprep.subr.mxu0 0.0
  %1682 = vmatpush1.msra.mxu0 0.0
  %1683 = vmatprep.subr.mxu0 0.0
  %1684 = vmatpush1.msra.mxu0 0.0
  %1685 = vmatprep.subr.mxu0 0.0
  %1686 = vmatpush1.msra.mxu0 0.0
  %1687 = vmatprep.mubr.f32.mxu0 0.0
  %1688 = vmatmul.mubr.f32.gmra.mrb[0].mxu0 %v1621
  %v1689 = vpop.f32.mrb[0].mxu0
  %v1690 = vadd.f32 0.0, %v1689
  %v1691 = vpop.f32.mrb[0].mxu0
  %1692 = vdwg.mxu0
  %v1694 = vsel %vm111, %v1609, 0
  %1696 = vmatprep.subr.mxu0 0.0
  %1697 = vmatpush1.msra.mxu0 %v1610
  %1698 = vmatprep.subr.mxu0 0.0
  %1699 = vmatpush1.msra.mxu0 %v1611
  %1700 = vmatprep.subr.mxu0 0.0
  %1701 = vmatpush1.msra.mxu0 %v1612
  %1702 = vmatprep.subr.mxu0 0.0
  %1703 = vmatpush1.msra.mxu0 %v1613
  %1704 = vmatprep.subr.mxu0 0.0
  %1705 = vmatpush1.msra.mxu0 0.0
  %1706 = vmatprep.subr.mxu0 0.0
  %1707 = vmatpush1.msra.mxu0 0.0
  %1708 = vmatprep.subr.mxu0 0.0
  %1709 = vmatpush1.msra.mxu0 0.0
  %1710 = vmatprep.subr.mxu0 0.0
  %1711 = vmatpush1.msra.mxu0 0.0
  %1712 = vmatprep.subr.mxu0 0.0
  %1713 = vmatpush1.msra.mxu0 0.0
  %1714 = vmatprep.subr.mxu0 0.0
  %1715 = vmatpush1.msra.mxu0 0.0
  %1716 = vmatprep.subr.mxu0 0.0
  %1717 = vmatpush1.msra.mxu0 0.0
  %1718 = vmatprep.subr.mxu0 0.0
  %1719 = vmatpush1.msra.mxu0 0.0
  %1720 = vmatprep.subr.mxu0 0.0
  %1721 = vmatpush1.msra.mxu0 0.0
  %1722 = vmatprep.subr.mxu0 0.0
  %1723 = vmatpush1.msra.mxu0 0.0
  %1724 = vmatprep.subr.mxu0 0.0
  %1725 = vmatpush1.msra.mxu0 0.0
  %1726 = vmatprep.subr.mxu0 0.0
  %1727 = vmatpush1.msra.mxu0 0.0
  %1728 = vmatprep.subr.mxu0 0.0
  %1729 = vmatpush1.msra.mxu0 0.0
  %1730 = vmatprep.subr.mxu0 0.0
  %1731 = vmatpush1.msra.mxu0 0.0
  %1732 = vmatprep.subr.mxu0 0.0
  %1733 = vmatpush1.msra.mxu0 0.0
  %1734 = vmatprep.subr.mxu0 0.0
  %1735 = vmatpush1.msra.mxu0 0.0
  %1736 = vmatprep.subr.mxu0 0.0
  %1737 = vmatpush1.msra.mxu0 0.0
  %1738 = vmatprep.subr.mxu0 0.0
  %1739 = vmatpush1.msra.mxu0 0.0
  %1740 = vmatprep.subr.mxu0 0.0
  %1741 = vmatpush1.msra.mxu0 0.0
  %1742 = vmatprep.subr.mxu0 0.0
  %1743 = vmatpush1.msra.mxu0 0.0
  %1744 = vmatprep.subr.mxu0 0.0
  %1745 = vmatpush1.msra.mxu0 0.0
  %1746 = vmatprep.subr.mxu0 0.0
  %1747 = vmatpush1.msra.mxu0 0.0
  %1748 = vmatprep.subr.mxu0 0.0
  %1749 = vmatpush1.msra.mxu0 0.0
  %1750 = vmatprep.subr.mxu0 0.0
  %1751 = vmatpush1.msra.mxu0 0.0
  %1752 = vmatprep.subr.mxu0 0.0
  %1753 = vmatpush1.msra.mxu0 0.0
  %1754 = vmatprep.subr.mxu0 0.0
  %1755 = vmatpush1.msra.mxu0 0.0
  %1756 = vmatprep.subr.mxu0 0.0
  %1757 = vmatpush1.msra.mxu0 0.0
  %1758 = vmatprep.subr.mxu0 0.0
  %1759 = vmatpush1.msra.mxu0 0.0
  %1760 = vmatprep.mubr.f32.mxu0 0.0
  %1761 = vmatmul.mubr.f32.gmra.mrb[0].mxu0 %v1694
  %v1762 = vpop.f32.mrb[0].mxu0
  %v1763 = vadd.f32 %v1690, %v1762
  %v1764 = vpop.f32.mrb[0].mxu0
  %1765 = vdwg.mxu0
  %v1766 = vld [vmem:[%s9] sm:$0x1]
  %v1768 = vlaneseq
  %v1769 = vshrl.u32 %v1768, 7
  %v1770 = vsub.s32 0, %v1769
  %v1771 = vrot.slane %v1766, %v1770
  %v1773 = vadd.f32 %v1763, %v1771
  %s1774 = scalar_lea.vmem [#allocation3], 8
  %1775 = vst [vmem:[%s1774] sm:$0x3] %v1773
  %s1776 = scalar_lea.vmem %s0, 10
  %v1777 = vld [vmem:[%s1776] sm:$0x3]
  %v1778 = vld [vmem:[%s4] sm:$0xff]
  %v1779 = vld [vmem:[%s4 + $0x8] sm:$0xff]
  %v1780 = vld [vmem:[%s4 + $0x10] sm:$0xff]
  %v1781 = vld [vmem:[%s4 + $0x18] sm:$0xff]
  %s1782 = scalar_lea.vmem %s1, 10
  %v1783 = vld [vmem:[%s1782] sm:$0x3]
  %v1784 = vld [vmem:[%s5] sm:$0xff]
  %v1785 = vld [vmem:[%s5 + $0x8] sm:$0xff]
  %v1786 = vld [vmem:[%s5 + $0x10] sm:$0xff]
  %v1787 = vld [vmem:[%s5 + $0x18] sm:$0xff]
  %v1789 = vsel %vm111, %v1783, 0
  %1791 = vmatprep.subr.mxu0 0.0
  %1792 = vmatpush1.msra.mxu0 %v1784
  %1793 = vmatprep.subr.mxu0 0.0
  %1794 = vmatpush1.msra.mxu0 %v1785
  %1795 = vmatprep.subr.mxu0 0.0
  %1796 = vmatpush1.msra.mxu0 %v1786
  %1797 = vmatprep.subr.mxu0 0.0
  %1798 = vmatpush1.msra.mxu0 %v1787
  %1799 = vmatprep.subr.mxu0 0.0
  %1800 = vmatpush1.msra.mxu0 0.0
  %1801 = vmatprep.subr.mxu0 0.0
  %1802 = vmatpush1.msra.mxu0 0.0
  %1803 = vmatprep.subr.mxu0 0.0
  %1804 = vmatpush1.msra.mxu0 0.0
  %1805 = vmatprep.subr.mxu0 0.0
  %1806 = vmatpush1.msra.mxu0 0.0
  %1807 = vmatprep.subr.mxu0 0.0
  %1808 = vmatpush1.msra.mxu0 0.0
  %1809 = vmatprep.subr.mxu0 0.0
  %1810 = vmatpush1.msra.mxu0 0.0
  %1811 = vmatprep.subr.mxu0 0.0
  %1812 = vmatpush1.msra.mxu0 0.0
  %1813 = vmatprep.subr.mxu0 0.0
  %1814 = vmatpush1.msra.mxu0 0.0
  %1815 = vmatprep.subr.mxu0 0.0
  %1816 = vmatpush1.msra.mxu0 0.0
  %1817 = vmatprep.subr.mxu0 0.0
  %1818 = vmatpush1.msra.mxu0 0.0
  %1819 = vmatprep.subr.mxu0 0.0
  %1820 = vmatpush1.msra.mxu0 0.0
  %1821 = vmatprep.subr.mxu0 0.0
  %1822 = vmatpush1.msra.mxu0 0.0
  %1823 = vmatprep.subr.mxu0 0.0
  %1824 = vmatpush1.msra.mxu0 0.0
  %1825 = vmatprep.subr.mxu0 0.0
  %1826 = vmatpush1.msra.mxu0 0.0
  %1827 = vmatprep.subr.mxu0 0.0
  %1828 = vmatpush1.msra.mxu0 0.0
  %1829 = vmatprep.subr.mxu0 0.0
  %1830 = vmatpush1.msra.mxu0 0.0
  %1831 = vmatprep.subr.mxu0 0.0
  %1832 = vmatpush1.msra.mxu0 0.0
  %1833 = vmatprep.subr.mxu0 0.0
  %1834 = vmatpush1.msra.mxu0 0.0
  %1835 = vmatprep.subr.mxu0 0.0
  %1836 = vmatpush1.msra.mxu0 0.0
  %1837 = vmatprep.subr.mxu0 0.0
  %1838 = vmatpush1.msra.mxu0 0.0
  %1839 = vmatprep.subr.mxu0 0.0
  %1840 = vmatpush1.msra.mxu0 0.0
  %1841 = vmatprep.subr.mxu0 0.0
  %1842 = vmatpush1.msra.mxu0 0.0
  %1843 = vmatprep.subr.mxu0 0.0
  %1844 = vmatpush1.msra.mxu0 0.0
  %1845 = vmatprep.subr.mxu0 0.0
  %1846 = vmatpush1.msra.mxu0 0.0
  %1847 = vmatprep.subr.mxu0 0.0
  %1848 = vmatpush1.msra.mxu0 0.0
  %1849 = vmatprep.subr.mxu0 0.0
  %1850 = vmatpush1.msra.mxu0 0.0
  %1851 = vmatprep.subr.mxu0 0.0
  %1852 = vmatpush1.msra.mxu0 0.0
  %1853 = vmatprep.subr.mxu0 0.0
  %1854 = vmatpush1.msra.mxu0 0.0
  %1855 = vmatprep.mubr.f32.mxu0 0.0
  %1856 = vmatmul.mubr.f32.gmra.mrb[0].mxu0 %v1789
  %v1857 = vpop.f32.mrb[0].mxu0
  %v1858 = vadd.f32 0.0, %v1857
  %v1859 = vpop.f32.mrb[0].mxu0
  %1860 = vdwg.mxu0
  %v1862 = vsel %vm111, %v1777, 0
  %1864 = vmatprep.subr.mxu0 0.0
  %1865 = vmatpush1.msra.mxu0 %v1778
  %1866 = vmatprep.subr.mxu0 0.0
  %1867 = vmatpush1.msra.mxu0 %v1779
  %1868 = vmatprep.subr.mxu0 0.0
  %1869 = vmatpush1.msra.mxu0 %v1780
  %1870 = vmatprep.subr.mxu0 0.0
  %1871 = vmatpush1.msra.mxu0 %v1781
  %1872 = vmatprep.subr.mxu0 0.0
  %1873 = vmatpush1.msra.mxu0 0.0
  %1874 = vmatprep.subr.mxu0 0.0
  %1875 = vmatpush1.msra.mxu0 0.0
  %1876 = vmatprep.subr.mxu0 0.0
  %1877 = vmatpush1.msra.mxu0 0.0
  %1878 = vmatprep.subr.mxu0 0.0
  %1879 = vmatpush1.msra.mxu0 0.0
  %1880 = vmatprep.subr.mxu0 0.0
  %1881 = vmatpush1.msra.mxu0 0.0
  %1882 = vmatprep.subr.mxu0 0.0
  %1883 = vmatpush1.msra.mxu0 0.0
  %1884 = vmatprep.subr.mxu0 0.0
  %1885 = vmatpush1.msra.mxu0 0.0
  %1886 = vmatprep.subr.mxu0 0.0
  %1887 = vmatpush1.msra.mxu0 0.0
  %1888 = vmatprep.subr.mxu0 0.0
  %1889 = vmatpush1.msra.mxu0 0.0
  %1890 = vmatprep.subr.mxu0 0.0
  %1891 = vmatpush1.msra.mxu0 0.0
  %1892 = vmatprep.subr.mxu0 0.0
  %1893 = vmatpush1.msra.mxu0 0.0
  %1894 = vmatprep.subr.mxu0 0.0
  %1895 = vmatpush1.msra.mxu0 0.0
  %1896 = vmatprep.subr.mxu0 0.0
  %1897 = vmatpush1.msra.mxu0 0.0
  %1898 = vmatprep.subr.mxu0 0.0
  %1899 = vmatpush1.msra.mxu0 0.0
  %1900 = vmatprep.subr.mxu0 0.0
  %1901 = vmatpush1.msra.mxu0 0.0
  %1902 = vmatprep.subr.mxu0 0.0
  %1903 = vmatpush1.msra.mxu0 0.0
  %1904 = vmatprep.subr.mxu0 0.0
  %1905 = vmatpush1.msra.mxu0 0.0
  %1906 = vmatprep.subr.mxu0 0.0
  %1907 = vmatpush1.msra.mxu0 0.0
  %1908 = vmatprep.subr.mxu0 0.0
  %1909 = vmatpush1.msra.mxu0 0.0
  %1910 = vmatprep.subr.mxu0 0.0
  %1911 = vmatpush1.msra.mxu0 0.0
  %1912 = vmatprep.subr.mxu0 0.0
  %1913 = vmatpush1.msra.mxu0 0.0
  %1914 = vmatprep.subr.mxu0 0.0
  %1915 = vmatpush1.msra.mxu0 0.0
  %1916 = vmatprep.subr.mxu0 0.0
  %1917 = vmatpush1.msra.mxu0 0.0
  %1918 = vmatprep.subr.mxu0 0.0
  %1919 = vmatpush1.msra.mxu0 0.0
  %1920 = vmatprep.subr.mxu0 0.0
  %1921 = vmatpush1.msra.mxu0 0.0
  %1922 = vmatprep.subr.mxu0 0.0
  %1923 = vmatpush1.msra.mxu0 0.0
  %1924 = vmatprep.subr.mxu0 0.0
  %1925 = vmatpush1.msra.mxu0 0.0
  %1926 = vmatprep.subr.mxu0 0.0
  %1927 = vmatpush1.msra.mxu0 0.0
  %1928 = vmatprep.mubr.f32.mxu0 0.0
  %1929 = vmatmul.mubr.f32.gmra.mrb[0].mxu0 %v1862
  %v1930 = vpop.f32.mrb[0].mxu0
  %v1931 = vadd.f32 %v1858, %v1930
  %v1932 = vpop.f32.mrb[0].mxu0
  %1933 = vdwg.mxu0
  %v1934 = vld [vmem:[%s8] sm:$0x1]
  %v1936 = vlaneseq
  %v1937 = vshrl.u32 %v1936, 7
  %v1938 = vsub.s32 0, %v1937
  %v1939 = vrot.slane %v1934, %v1938
  %v1941 = vadd.f32 %v1931, %v1939
  %s1942 = scalar_lea.vmem [#allocation2], 10
  %1943 = vst [vmem:[%s1942] sm:$0x3] %v1941
  %s1944 = scalar_lea.vmem %s82, 10
  %v1945 = vld [vmem:[%s1944] sm:$0x3]
  %v1946 = vld [vmem:[%s6] sm:$0xff]
  %v1947 = vld [vmem:[%s6 + $0x8] sm:$0xff]
  %v1948 = vld [vmem:[%s6 + $0x10] sm:$0xff]
  %v1949 = vld [vmem:[%s6 + $0x18] sm:$0xff]
  %s1950 = scalar_lea.vmem %s90, 10
  %v1951 = vld [vmem:[%s1950] sm:$0x3]
  %v1952 = vld [vmem:[%s7] sm:$0xff]
  %v1953 = vld [vmem:[%s7 + $0x8] sm:$0xff]
  %v1954 = vld [vmem:[%s7 + $0x10] sm:$0xff]
  %v1955 = vld [vmem:[%s7 + $0x18] sm:$0xff]
  %v1957 = vsel %vm111, %v1951, 0
  %1959 = vmatprep.subr.mxu0 0.0
  %1960 = vmatpush1.msra.mxu0 %v1952
  %1961 = vmatprep.subr.mxu0 0.0
  %1962 = vmatpush1.msra.mxu0 %v1953
  %1963 = vmatprep.subr.mxu0 0.0
  %1964 = vmatpush1.msra.mxu0 %v1954
  %1965 = vmatprep.subr.mxu0 0.0
  %1966 = vmatpush1.msra.mxu0 %v1955
  %1967 = vmatprep.subr.mxu0 0.0
  %1968 = vmatpush1.msra.mxu0 0.0
  %1969 = vmatprep.subr.mxu0 0.0
  %1970 = vmatpush1.msra.mxu0 0.0
  %1971 = vmatprep.subr.mxu0 0.0
  %1972 = vmatpush1.msra.mxu0 0.0
  %1973 = vmatprep.subr.mxu0 0.0
  %1974 = vmatpush1.msra.mxu0 0.0
  %1975 = vmatprep.subr.mxu0 0.0
  %1976 = vmatpush1.msra.mxu0 0.0
  %1977 = vmatprep.subr.mxu0 0.0
  %1978 = vmatpush1.msra.mxu0 0.0
  %1979 = vmatprep.subr.mxu0 0.0
  %1980 = vmatpush1.msra.mxu0 0.0
  %1981 = vmatprep.subr.mxu0 0.0
  %1982 = vmatpush1.msra.mxu0 0.0
  %1983 = vmatprep.subr.mxu0 0.0
  %1984 = vmatpush1.msra.mxu0 0.0
  %1985 = vmatprep.subr.mxu0 0.0
  %1986 = vmatpush1.msra.mxu0 0.0
  %1987 = vmatprep.subr.mxu0 0.0
  %1988 = vmatpush1.msra.mxu0 0.0
  %1989 = vmatprep.subr.mxu0 0.0
  %1990 = vmatpush1.msra.mxu0 0.0
  %1991 = vmatprep.subr.mxu0 0.0
  %1992 = vmatpush1.msra.mxu0 0.0
  %1993 = vmatprep.subr.mxu0 0.0
  %1994 = vmatpush1.msra.mxu0 0.0
  %1995 = vmatprep.subr.mxu0 0.0
  %1996 = vmatpush1.msra.mxu0 0.0
  %1997 = vmatprep.subr.mxu0 0.0
  %1998 = vmatpush1.msra.mxu0 0.0
  %1999 = vmatprep.subr.mxu0 0.0
  %2000 = vmatpush1.msra.mxu0 0.0
  %2001 = vmatprep.subr.mxu0 0.0
  %2002 = vmatpush1.msra.mxu0 0.0
  %2003 = vmatprep.subr.mxu0 0.0
  %2004 = vmatpush1.msra.mxu0 0.0
  %2005 = vmatprep.subr.mxu0 0.0
  %2006 = vmatpush1.msra.mxu0 0.0
  %2007 = vmatprep.subr.mxu0 0.0
  %2008 = vmatpush1.msra.mxu0 0.0
  %2009 = vmatprep.subr.mxu0 0.0
  %2010 = vmatpush1.msra.mxu0 0.0
  %2011 = vmatprep.subr.mxu0 0.0
  %2012 = vmatpush1.msra.mxu0 0.0
  %2013 = vmatprep.subr.mxu0 0.0
  %2014 = vmatpush1.msra.mxu0 0.0
  %2015 = vmatprep.subr.mxu0 0.0
  %2016 = vmatpush1.msra.mxu0 0.0
  %2017 = vmatprep.subr.mxu0 0.0
  %2018 = vmatpush1.msra.mxu0 0.0
  %2019 = vmatprep.subr.mxu0 0.0
  %2020 = vmatpush1.msra.mxu0 0.0
  %2021 = vmatprep.subr.mxu0 0.0
  %2022 = vmatpush1.msra.mxu0 0.0
  %2023 = vmatprep.mubr.f32.mxu0 0.0
  %2024 = vmatmul.mubr.f32.gmra.mrb[0].mxu0 %v1957
  %v2025 = vpop.f32.mrb[0].mxu0
  %v2026 = vadd.f32 0.0, %v2025
  %v2027 = vpop.f32.mrb[0].mxu0
  %2028 = vdwg.mxu0
  %v2030 = vsel %vm111, %v1945, 0
  %2032 = vmatprep.subr.mxu0 0.0
  %2033 = vmatpush1.msra.mxu0 %v1946
  %2034 = vmatprep.subr.mxu0 0.0
  %2035 = vmatpush1.msra.mxu0 %v1947
  %2036 = vmatprep.subr.mxu0 0.0
  %2037 = vmatpush1.msra.mxu0 %v1948
  %2038 = vmatprep.subr.mxu0 0.0
  %2039 = vmatpush1.msra.mxu0 %v1949
  %2040 = vmatprep.subr.mxu0 0.0
  %2041 = vmatpush1.msra.mxu0 0.0
  %2042 = vmatprep.subr.mxu0 0.0
  %2043 = vmatpush1.msra.mxu0 0.0
  %2044 = vmatprep.subr.mxu0 0.0
  %2045 = vmatpush1.msra.mxu0 0.0
  %2046 = vmatprep.subr.mxu0 0.0
  %2047 = vmatpush1.msra.mxu0 0.0
  %2048 = vmatprep.subr.mxu0 0.0
  %2049 = vmatpush1.msra.mxu0 0.0
  %2050 = vmatprep.subr.mxu0 0.0
  %2051 = vmatpush1.msra.mxu0 0.0
  %2052 = vmatprep.subr.mxu0 0.0
  %2053 = vmatpush1.msra.mxu0 0.0
  %2054 = vmatprep.subr.mxu0 0.0
  %2055 = vmatpush1.msra.mxu0 0.0
  %2056 = vmatprep.subr.mxu0 0.0
  %2057 = vmatpush1.msra.mxu0 0.0
  %2058 = vmatprep.subr.mxu0 0.0
  %2059 = vmatpush1.msra.mxu0 0.0
  %2060 = vmatprep.subr.mxu0 0.0
  %2061 = vmatpush1.msra.mxu0 0.0
  %2062 = vmatprep.subr.mxu0 0.0
  %2063 = vmatpush1.msra.mxu0 0.0
  %2064 = vmatprep.subr.mxu0 0.0
  %2065 = vmatpush1.msra.mxu0 0.0
  %2066 = vmatprep.subr.mxu0 0.0
  %2067 = vmatpush1.msra.mxu0 0.0
  %2068 = vmatprep.subr.mxu0 0.0
  %2069 = vmatpush1.msra.mxu0 0.0
  %2070 = vmatprep.subr.mxu0 0.0
  %2071 = vmatpush1.msra.mxu0 0.0
  %2072 = vmatprep.subr.mxu0 0.0
  %2073 = vmatpush1.msra.mxu0 0.0
  %2074 = vmatprep.subr.mxu0 0.0
  %2075 = vmatpush1.msra.mxu0 0.0
  %2076 = vmatprep.subr.mxu0 0.0
  %2077 = vmatpush1.msra.mxu0 0.0
  %2078 = vmatprep.subr.mxu0 0.0
  %2079 = vmatpush1.msra.mxu0 0.0
  %2080 = vmatprep.subr.mxu0 0.0
  %2081 = vmatpush1.msra.mxu0 0.0
  %2082 = vmatprep.subr.mxu0 0.0
  %2083 = vmatpush1.msra.mxu0 0.0
  %2084 = vmatprep.subr.mxu0 0.0
  %2085 = vmatpush1.msra.mxu0 0.0
  %2086 = vmatprep.subr.mxu0 0.0
  %2087 = vmatpush1.msra.mxu0 0.0
  %2088 = vmatprep.subr.mxu0 0.0
  %2089 = vmatpush1.msra.mxu0 0.0
  %2090 = vmatprep.subr.mxu0 0.0
  %2091 = vmatpush1.msra.mxu0 0.0
  %2092 = vmatprep.subr.mxu0 0.0
  %2093 = vmatpush1.msra.mxu0 0.0
  %2094 = vmatprep.subr.mxu0 0.0
  %2095 = vmatpush1.msra.mxu0 0.0
  %2096 = vmatprep.mubr.f32.mxu0 0.0
  %2097 = vmatmul.mubr.f32.gmra.mrb[0].mxu0 %v2030
  %v2098 = vpop.f32.mrb[0].mxu0
  %v2099 = vadd.f32 %v2026, %v2098
  %v2100 = vpop.f32.mrb[0].mxu0
  %2101 = vdwg.mxu0
  %v2102 = vld [vmem:[%s9] sm:$0x1]
  %v2104 = vlaneseq
  %v2105 = vshrl.u32 %v2104, 7
  %v2106 = vsub.s32 0, %v2105
  %v2107 = vrot.slane %v2102, %v2106
  %v2109 = vadd.f32 %v2099, %v2107
  %s2110 = scalar_lea.vmem [#allocation3], 10
  %2111 = vst [vmem:[%s2110] sm:$0x3] %v2109
  %s2112 = scalar_lea.vmem %s0, 12
  %v2113 = vld [vmem:[%s2112] sm:$0x3]
  %v2114 = vld [vmem:[%s4] sm:$0xff]
  %v2115 = vld [vmem:[%s4 + $0x8] sm:$0xff]
  %v2116 = vld [vmem:[%s4 + $0x10] sm:$0xff]
  %v2117 = vld [vmem:[%s4 + $0x18] sm:$0xff]
  %s2118 = scalar_lea.vmem %s1, 12
  %v2119 = vld [vmem:[%s2118] sm:$0x3]
  %v2120 = vld [vmem:[%s5] sm:$0xff]
  %v2121 = vld [vmem:[%s5 + $0x8] sm:$0xff]
  %v2122 = vld [vmem:[%s5 + $0x10] sm:$0xff]
  %v2123 = vld [vmem:[%s5 + $0x18] sm:$0xff]
  %v2125 = vsel %vm111, %v2119, 0
  %2127 = vmatprep.subr.mxu0 0.0
  %2128 = vmatpush1.msra.mxu0 %v2120
  %2129 = vmatprep.subr.mxu0 0.0
  %2130 = vmatpush1.msra.mxu0 %v2121
  %2131 = vmatprep.subr.mxu0 0.0
  %2132 = vmatpush1.msra.mxu0 %v2122
  %2133 = vmatprep.subr.mxu0 0.0
  %2134 = vmatpush1.msra.mxu0 %v2123
  %2135 = vmatprep.subr.mxu0 0.0
  %2136 = vmatpush1.msra.mxu0 0.0
  %2137 = vmatprep.subr.mxu0 0.0
  %2138 = vmatpush1.msra.mxu0 0.0
  %2139 = vmatprep.subr.mxu0 0.0
  %2140 = vmatpush1.msra.mxu0 0.0
  %2141 = vmatprep.subr.mxu0 0.0
  %2142 = vmatpush1.msra.mxu0 0.0
  %2143 = vmatprep.subr.mxu0 0.0
  %2144 = vmatpush1.msra.mxu0 0.0
  %2145 = vmatprep.subr.mxu0 0.0
  %2146 = vmatpush1.msra.mxu0 0.0
  %2147 = vmatprep.subr.mxu0 0.0
  %2148 = vmatpush1.msra.mxu0 0.0
  %2149 = vmatprep.subr.mxu0 0.0
  %2150 = vmatpush1.msra.mxu0 0.0
  %2151 = vmatprep.subr.mxu0 0.0
  %2152 = vmatpush1.msra.mxu0 0.0
  %2153 = vmatprep.subr.mxu0 0.0
  %2154 = vmatpush1.msra.mxu0 0.0
  %2155 = vmatprep.subr.mxu0 0.0
  %2156 = vmatpush1.msra.mxu0 0.0
  %2157 = vmatprep.subr.mxu0 0.0
  %2158 = vmatpush1.msra.mxu0 0.0
  %2159 = vmatprep.subr.mxu0 0.0
  %2160 = vmatpush1.msra.mxu0 0.0
  %2161 = vmatprep.subr.mxu0 0.0
  %2162 = vmatpush1.msra.mxu0 0.0
  %2163 = vmatprep.subr.mxu0 0.0
  %2164 = vmatpush1.msra.mxu0 0.0
  %2165 = vmatprep.subr.mxu0 0.0
  %2166 = vmatpush1.msra.mxu0 0.0
  %2167 = vmatprep.subr.mxu0 0.0
  %2168 = vmatpush1.msra.mxu0 0.0
  %2169 = vmatprep.subr.mxu0 0.0
  %2170 = vmatpush1.msra.mxu0 0.0
  %2171 = vmatprep.subr.mxu0 0.0
  %2172 = vmatpush1.msra.mxu0 0.0
  %2173 = vmatprep.subr.mxu0 0.0
  %2174 = vmatpush1.msra.mxu0 0.0
  %2175 = vmatprep.subr.mxu0 0.0
  %2176 = vmatpush1.msra.mxu0 0.0
  %2177 = vmatprep.subr.mxu0 0.0
  %2178 = vmatpush1.msra.mxu0 0.0
  %2179 = vmatprep.subr.mxu0 0.0
  %2180 = vmatpush1.msra.mxu0 0.0
  %2181 = vmatprep.subr.mxu0 0.0
  %2182 = vmatpush1.msra.mxu0 0.0
  %2183 = vmatprep.subr.mxu0 0.0
  %2184 = vmatpush1.msra.mxu0 0.0
  %2185 = vmatprep.subr.mxu0 0.0
  %2186 = vmatpush1.msra.mxu0 0.0
  %2187 = vmatprep.subr.mxu0 0.0
  %2188 = vmatpush1.msra.mxu0 0.0
  %2189 = vmatprep.subr.mxu0 0.0
  %2190 = vmatpush1.msra.mxu0 0.0
  %2191 = vmatprep.mubr.f32.mxu0 0.0
  %2192 = vmatmul.mubr.f32.gmra.mrb[0].mxu0 %v2125
  %v2193 = vpop.f32.mrb[0].mxu0
  %v2194 = vadd.f32 0.0, %v2193
  %v2195 = vpop.f32.mrb[0].mxu0
  %2196 = vdwg.mxu0
  %v2198 = vsel %vm111, %v2113, 0
  %2200 = vmatprep.subr.mxu0 0.0
  %2201 = vmatpush1.msra.mxu0 %v2114
  %2202 = vmatprep.subr.mxu0 0.0
  %2203 = vmatpush1.msra.mxu0 %v2115
  %2204 = vmatprep.subr.mxu0 0.0
  %2205 = vmatpush1.msra.mxu0 %v2116
  %2206 = vmatprep.subr.mxu0 0.0
  %2207 = vmatpush1.msra.mxu0 %v2117
  %2208 = vmatprep.subr.mxu0 0.0
  %2209 = vmatpush1.msra.mxu0 0.0
  %2210 = vmatprep.subr.mxu0 0.0
  %2211 = vmatpush1.msra.mxu0 0.0
  %2212 = vmatprep.subr.mxu0 0.0
  %2213 = vmatpush1.msra.mxu0 0.0
  %2214 = vmatprep.subr.mxu0 0.0
  %2215 = vmatpush1.msra.mxu0 0.0
  %2216 = vmatprep.subr.mxu0 0.0
  %2217 = vmatpush1.msra.mxu0 0.0
  %2218 = vmatprep.subr.mxu0 0.0
  %2219 = vmatpush1.msra.mxu0 0.0
  %2220 = vmatprep.subr.mxu0 0.0
  %2221 = vmatpush1.msra.mxu0 0.0
  %2222 = vmatprep.subr.mxu0 0.0
  %2223 = vmatpush1.msra.mxu0 0.0
  %2224 = vmatprep.subr.mxu0 0.0
  %2225 = vmatpush1.msra.mxu0 0.0
  %2226 = vmatprep.subr.mxu0 0.0
  %2227 = vmatpush1.msra.mxu0 0.0
  %2228 = vmatprep.subr.mxu0 0.0
  %2229 = vmatpush1.msra.mxu0 0.0
  %2230 = vmatprep.subr.mxu0 0.0
  %2231 = vmatpush1.msra.mxu0 0.0
  %2232 = vmatprep.subr.mxu0 0.0
  %2233 = vmatpush1.msra.mxu0 0.0
  %2234 = vmatprep.subr.mxu0 0.0
  %2235 = vmatpush1.msra.mxu0 0.0
  %2236 = vmatprep.subr.mxu0 0.0
  %2237 = vmatpush1.msra.mxu0 0.0
  %2238 = vmatprep.subr.mxu0 0.0
  %2239 = vmatpush1.msra.mxu0 0.0
  %2240 = vmatprep.subr.mxu0 0.0
  %2241 = vmatpush1.msra.mxu0 0.0
  %2242 = vmatprep.subr.mxu0 0.0
  %2243 = vmatpush1.msra.mxu0 0.0
  %2244 = vmatprep.subr.mxu0 0.0
  %2245 = vmatpush1.msra.mxu0 0.0
  %2246 = vmatprep.subr.mxu0 0.0
  %2247 = vmatpush1.msra.mxu0 0.0
  %2248 = vmatprep.subr.mxu0 0.0
  %2249 = vmatpush1.msra.mxu0 0.0
  %2250 = vmatprep.subr.mxu0 0.0
  %2251 = vmatpush1.msra.mxu0 0.0
  %2252 = vmatprep.subr.mxu0 0.0
  %2253 = vmatpush1.msra.mxu0 0.0
  %2254 = vmatprep.subr.mxu0 0.0
  %2255 = vmatpush1.msra.mxu0 0.0
  %2256 = vmatprep.subr.mxu0 0.0
  %2257 = vmatpush1.msra.mxu0 0.0
  %2258 = vmatprep.subr.mxu0 0.0
  %2259 = vmatpush1.msra.mxu0 0.0
  %2260 = vmatprep.subr.mxu0 0.0
  %2261 = vmatpush1.msra.mxu0 0.0
  %2262 = vmatprep.subr.mxu0 0.0
  %2263 = vmatpush1.msra.mxu0 0.0
  %2264 = vmatprep.mubr.f32.mxu0 0.0
  %2265 = vmatmul.mubr.f32.gmra.mrb[0].mxu0 %v2198
  %v2266 = vpop.f32.mrb[0].mxu0
  %v2267 = vadd.f32 %v2194, %v2266
  %v2268 = vpop.f32.mrb[0].mxu0
  %2269 = vdwg.mxu0
  %v2270 = vld [vmem:[%s8] sm:$0x1]
  %v2272 = vlaneseq
  %v2273 = vshrl.u32 %v2272, 7
  %v2274 = vsub.s32 0, %v2273
  %v2275 = vrot.slane %v2270, %v2274
  %v2277 = vadd.f32 %v2267, %v2275
  %s2278 = scalar_lea.vmem [#allocation2], 12
  %2279 = vst [vmem:[%s2278] sm:$0x3] %v2277
  %s2280 = scalar_lea.vmem %s82, 12
  %v2281 = vld [vmem:[%s2280] sm:$0x3]
  %v2282 = vld [vmem:[%s6] sm:$0xff]
  %v2283 = vld [vmem:[%s6 + $0x8] sm:$0xff]
  %v2284 = vld [vmem:[%s6 + $0x10] sm:$0xff]
  %v2285 = vld [vmem:[%s6 + $0x18] sm:$0xff]
  %s2286 = scalar_lea.vmem %s90, 12
  %v2287 = vld [vmem:[%s2286] sm:$0x3]
  %v2288 = vld [vmem:[%s7] sm:$0xff]
  %v2289 = vld [vmem:[%s7 + $0x8] sm:$0xff]
  %v2290 = vld [vmem:[%s7 + $0x10] sm:$0xff]
  %v2291 = vld [vmem:[%s7 + $0x18] sm:$0xff]
  %v2293 = vsel %vm111, %v2287, 0
  %2295 = vmatprep.subr.mxu0 0.0
  %2296 = vmatpush1.msra.mxu0 %v2288
  %2297 = vmatprep.subr.mxu0 0.0
  %2298 = vmatpush1.msra.mxu0 %v2289
  %2299 = vmatprep.subr.mxu0 0.0
  %2300 = vmatpush1.msra.mxu0 %v2290
  %2301 = vmatprep.subr.mxu0 0.0
  %2302 = vmatpush1.msra.mxu0 %v2291
  %2303 = vmatprep.subr.mxu0 0.0
  %2304 = vmatpush1.msra.mxu0 0.0
  %2305 = vmatprep.subr.mxu0 0.0
  %2306 = vmatpush1.msra.mxu0 0.0
  %2307 = vmatprep.subr.mxu0 0.0
  %2308 = vmatpush1.msra.mxu0 0.0
  %2309 = vmatprep.subr.mxu0 0.0
  %2310 = vmatpush1.msra.mxu0 0.0
  %2311 = vmatprep.subr.mxu0 0.0
  %2312 = vmatpush1.msra.mxu0 0.0
  %2313 = vmatprep.subr.mxu0 0.0
  %2314 = vmatpush1.msra.mxu0 0.0
  %2315 = vmatprep.subr.mxu0 0.0
  %2316 = vmatpush1.msra.mxu0 0.0
  %2317 = vmatprep.subr.mxu0 0.0
  %2318 = vmatpush1.msra.mxu0 0.0
  %2319 = vmatprep.subr.mxu0 0.0
  %2320 = vmatpush1.msra.mxu0 0.0
  %2321 = vmatprep.subr.mxu0 0.0
  %2322 = vmatpush1.msra.mxu0 0.0
  %2323 = vmatprep.subr.mxu0 0.0
  %2324 = vmatpush1.msra.mxu0 0.0
  %2325 = vmatprep.subr.mxu0 0.0
  %2326 = vmatpush1.msra.mxu0 0.0
  %2327 = vmatprep.subr.mxu0 0.0
  %2328 = vmatpush1.msra.mxu0 0.0
  %2329 = vmatprep.subr.mxu0 0.0
  %2330 = vmatpush1.msra.mxu0 0.0
  %2331 = vmatprep.subr.mxu0 0.0
  %2332 = vmatpush1.msra.mxu0 0.0
  %2333 = vmatprep.subr.mxu0 0.0
  %2334 = vmatpush1.msra.mxu0 0.0
  %2335 = vmatprep.subr.mxu0 0.0
  %2336 = vmatpush1.msra.mxu0 0.0
  %2337 = vmatprep.subr.mxu0 0.0
  %2338 = vmatpush1.msra.mxu0 0.0
  %2339 = vmatprep.subr.mxu0 0.0
  %2340 = vmatpush1.msra.mxu0 0.0
  %2341 = vmatprep.subr.mxu0 0.0
  %2342 = vmatpush1.msra.mxu0 0.0
  %2343 = vmatprep.subr.mxu0 0.0
  %2344 = vmatpush1.msra.mxu0 0.0
  %2345 = vmatprep.subr.mxu0 0.0
  %2346 = vmatpush1.msra.mxu0 0.0
  %2347 = vmatprep.subr.mxu0 0.0
  %2348 = vmatpush1.msra.mxu0 0.0
  %2349 = vmatprep.subr.mxu0 0.0
  %2350 = vmatpush1.msra.mxu0 0.0
  %2351 = vmatprep.subr.mxu0 0.0
  %2352 = vmatpush1.msra.mxu0 0.0
  %2353 = vmatprep.subr.mxu0 0.0
  %2354 = vmatpush1.msra.mxu0 0.0
  %2355 = vmatprep.subr.mxu0 0.0
  %2356 = vmatpush1.msra.mxu0 0.0
  %2357 = vmatprep.subr.mxu0 0.0
  %2358 = vmatpush1.msra.mxu0 0.0
  %2359 = vmatprep.mubr.f32.mxu0 0.0
  %2360 = vmatmul.mubr.f32.gmra.mrb[0].mxu0 %v2293
  %v2361 = vpop.f32.mrb[0].mxu0
  %v2362 = vadd.f32 0.0, %v2361
  %v2363 = vpop.f32.mrb[0].mxu0
  %2364 = vdwg.mxu0
  %v2366 = vsel %vm111, %v2281, 0
  %2368 = vmatprep.subr.mxu0 0.0
  %2369 = vmatpush1.msra.mxu0 %v2282
  %2370 = vmatprep.subr.mxu0 0.0
  %2371 = vmatpush1.msra.mxu0 %v2283
  %2372 = vmatprep.subr.mxu0 0.0
  %2373 = vmatpush1.msra.mxu0 %v2284
  %2374 = vmatprep.subr.mxu0 0.0
  %2375 = vmatpush1.msra.mxu0 %v2285
  %2376 = vmatprep.subr.mxu0 0.0
  %2377 = vmatpush1.msra.mxu0 0.0
  %2378 = vmatprep.subr.mxu0 0.0
  %2379 = vmatpush1.msra.mxu0 0.0
  %2380 = vmatprep.subr.mxu0 0.0
  %2381 = vmatpush1.msra.mxu0 0.0
  %2382 = vmatprep.subr.mxu0 0.0
  %2383 = vmatpush1.msra.mxu0 0.0
  %2384 = vmatprep.subr.mxu0 0.0
  %2385 = vmatpush1.msra.mxu0 0.0
  %2386 = vmatprep.subr.mxu0 0.0
  %2387 = vmatpush1.msra.mxu0 0.0
  %2388 = vmatprep.subr.mxu0 0.0
  %2389 = vmatpush1.msra.mxu0 0.0
  %2390 = vmatprep.subr.mxu0 0.0
  %2391 = vmatpush1.msra.mxu0 0.0
  %2392 = vmatprep.subr.mxu0 0.0
  %2393 = vmatpush1.msra.mxu0 0.0
  %2394 = vmatprep.subr.mxu0 0.0
  %2395 = vmatpush1.msra.mxu0 0.0
  %2396 = vmatprep.subr.mxu0 0.0
  %2397 = vmatpush1.msra.mxu0 0.0
  %2398 = vmatprep.subr.mxu0 0.0
  %2399 = vmatpush1.msra.mxu0 0.0
  %2400 = vmatprep.subr.mxu0 0.0
  %2401 = vmatpush1.msra.mxu0 0.0
  %2402 = vmatprep.subr.mxu0 0.0
  %2403 = vmatpush1.msra.mxu0 0.0
  %2404 = vmatprep.subr.mxu0 0.0
  %2405 = vmatpush1.msra.mxu0 0.0
  %2406 = vmatprep.subr.mxu0 0.0
  %2407 = vmatpush1.msra.mxu0 0.0
  %2408 = vmatprep.subr.mxu0 0.0
  %2409 = vmatpush1.msra.mxu0 0.0
  %2410 = vmatprep.subr.mxu0 0.0
  %2411 = vmatpush1.msra.mxu0 0.0
  %2412 = vmatprep.subr.mxu0 0.0
  %2413 = vmatpush1.msra.mxu0 0.0
  %2414 = vmatprep.subr.mxu0 0.0
  %2415 = vmatpush1.msra.mxu0 0.0
  %2416 = vmatprep.subr.mxu0 0.0
  %2417 = vmatpush1.msra.mxu0 0.0
  %2418 = vmatprep.subr.mxu0 0.0
  %2419 = vmatpush1.msra.mxu0 0.0
  %2420 = vmatprep.subr.mxu0 0.0
  %2421 = vmatpush1.msra.mxu0 0.0
  %2422 = vmatprep.subr.mxu0 0.0
  %2423 = vmatpush1.msra.mxu0 0.0
  %2424 = vmatprep.subr.mxu0 0.0
  %2425 = vmatpush1.msra.mxu0 0.0
  %2426 = vmatprep.subr.mxu0 0.0
  %2427 = vmatpush1.msra.mxu0 0.0
  %2428 = vmatprep.subr.mxu0 0.0
  %2429 = vmatpush1.msra.mxu0 0.0
  %2430 = vmatprep.subr.mxu0 0.0
  %2431 = vmatpush1.msra.mxu0 0.0
  %2432 = vmatprep.mubr.f32.mxu0 0.0
  %2433 = vmatmul.mubr.f32.gmra.mrb[0].mxu0 %v2366
  %v2434 = vpop.f32.mrb[0].mxu0
  %v2435 = vadd.f32 %v2362, %v2434
  %v2436 = vpop.f32.mrb[0].mxu0
  %2437 = vdwg.mxu0
  %v2438 = vld [vmem:[%s9] sm:$0x1]
  %v2440 = vlaneseq
  %v2441 = vshrl.u32 %v2440, 7
  %v2442 = vsub.s32 0, %v2441
  %v2443 = vrot.slane %v2438, %v2442
  %v2445 = vadd.f32 %v2435, %v2443
  %s2446 = scalar_lea.vmem [#allocation3], 12
  %2447 = vst [vmem:[%s2446] sm:$0x3] %v2445
  %s2448 = scalar_lea.vmem %s0, 14
  %v2449 = vld [vmem:[%s2448] sm:$0x3]
  %v2450 = vld [vmem:[%s4] sm:$0xff]
  %v2451 = vld [vmem:[%s4 + $0x8] sm:$0xff]
  %v2452 = vld [vmem:[%s4 + $0x10] sm:$0xff]
  %v2453 = vld [vmem:[%s4 + $0x18] sm:$0xff]
  %s2454 = scalar_lea.vmem %s1, 14
  %v2455 = vld [vmem:[%s2454] sm:$0x3]
  %v2456 = vld [vmem:[%s5] sm:$0xff]
  %v2457 = vld [vmem:[%s5 + $0x8] sm:$0xff]
  %v2458 = vld [vmem:[%s5 + $0x10] sm:$0xff]
  %v2459 = vld [vmem:[%s5 + $0x18] sm:$0xff]
  %v2461 = vsel %vm111, %v2455, 0
  %2463 = vmatprep.subr.mxu0 0.0
  %2464 = vmatpush1.msra.mxu0 %v2456
  %2465 = vmatprep.subr.mxu0 0.0
  %2466 = vmatpush1.msra.mxu0 %v2457
  %2467 = vmatprep.subr.mxu0 0.0
  %2468 = vmatpush1.msra.mxu0 %v2458
  %2469 = vmatprep.subr.mxu0 0.0
  %2470 = vmatpush1.msra.mxu0 %v2459
  %2471 = vmatprep.subr.mxu0 0.0
  %2472 = vmatpush1.msra.mxu0 0.0
  %2473 = vmatprep.subr.mxu0 0.0
  %2474 = vmatpush1.msra.mxu0 0.0
  %2475 = vmatprep.subr.mxu0 0.0
  %2476 = vmatpush1.msra.mxu0 0.0
  %2477 = vmatprep.subr.mxu0 0.0
  %2478 = vmatpush1.msra.mxu0 0.0
  %2479 = vmatprep.subr.mxu0 0.0
  %2480 = vmatpush1.msra.mxu0 0.0
  %2481 = vmatprep.subr.mxu0 0.0
  %2482 = vmatpush1.msra.mxu0 0.0
  %2483 = vmatprep.subr.mxu0 0.0
  %2484 = vmatpush1.msra.mxu0 0.0
  %2485 = vmatprep.subr.mxu0 0.0
  %2486 = vmatpush1.msra.mxu0 0.0
  %2487 = vmatprep.subr.mxu0 0.0
  %2488 = vmatpush1.msra.mxu0 0.0
  %2489 = vmatprep.subr.mxu0 0.0
  %2490 = vmatpush1.msra.mxu0 0.0
  %2491 = vmatprep.subr.mxu0 0.0
  %2492 = vmatpush1.msra.mxu0 0.0
  %2493 = vmatprep.subr.mxu0 0.0
  %2494 = vmatpush1.msra.mxu0 0.0
  %2495 = vmatprep.subr.mxu0 0.0
  %2496 = vmatpush1.msra.mxu0 0.0
  %2497 = vmatprep.subr.mxu0 0.0
  %2498 = vmatpush1.msra.mxu0 0.0
  %2499 = vmatprep.subr.mxu0 0.0
  %2500 = vmatpush1.msra.mxu0 0.0
  %2501 = vmatprep.subr.mxu0 0.0
  %2502 = vmatpush1.msra.mxu0 0.0
  %2503 = vmatprep.subr.mxu0 0.0
  %2504 = vmatpush1.msra.mxu0 0.0
  %2505 = vmatprep.subr.mxu0 0.0
  %2506 = vmatpush1.msra.mxu0 0.0
  %2507 = vmatprep.subr.mxu0 0.0
  %2508 = vmatpush1.msra.mxu0 0.0
  %2509 = vmatprep.subr.mxu0 0.0
  %2510 = vmatpush1.msra.mxu0 0.0
  %2511 = vmatprep.subr.mxu0 0.0
  %2512 = vmatpush1.msra.mxu0 0.0
  %2513 = vmatprep.subr.mxu0 0.0
  %2514 = vmatpush1.msra.mxu0 0.0
  %2515 = vmatprep.subr.mxu0 0.0
  %2516 = vmatpush1.msra.mxu0 0.0
  %2517 = vmatprep.subr.mxu0 0.0
  %2518 = vmatpush1.msra.mxu0 0.0
  %2519 = vmatprep.subr.mxu0 0.0
  %2520 = vmatpush1.msra.mxu0 0.0
  %2521 = vmatprep.subr.mxu0 0.0
  %2522 = vmatpush1.msra.mxu0 0.0
  %2523 = vmatprep.subr.mxu0 0.0
  %2524 = vmatpush1.msra.mxu0 0.0
  %2525 = vmatprep.subr.mxu0 0.0
  %2526 = vmatpush1.msra.mxu0 0.0
  %2527 = vmatprep.mubr.f32.mxu0 0.0
  %2528 = vmatmul.mubr.f32.gmra.mrb[0].mxu0 %v2461
  %v2529 = vpop.f32.mrb[0].mxu0
  %v2530 = vadd.f32 0.0, %v2529
  %v2531 = vpop.f32.mrb[0].mxu0
  %2532 = vdwg.mxu0
  %v2534 = vsel %vm111, %v2449, 0
  %2536 = vmatprep.subr.mxu0 0.0
  %2537 = vmatpush1.msra.mxu0 %v2450
  %2538 = vmatprep.subr.mxu0 0.0
  %2539 = vmatpush1.msra.mxu0 %v2451
  %2540 = vmatprep.subr.mxu0 0.0
  %2541 = vmatpush1.msra.mxu0 %v2452
  %2542 = vmatprep.subr.mxu0 0.0
  %2543 = vmatpush1.msra.mxu0 %v2453
  %2544 = vmatprep.subr.mxu0 0.0
  %2545 = vmatpush1.msra.mxu0 0.0
  %2546 = vmatprep.subr.mxu0 0.0
  %2547 = vmatpush1.msra.mxu0 0.0
  %2548 = vmatprep.subr.mxu0 0.0
  %2549 = vmatpush1.msra.mxu0 0.0
  %2550 = vmatprep.subr.mxu0 0.0
  %2551 = vmatpush1.msra.mxu0 0.0
  %2552 = vmatprep.subr.mxu0 0.0
  %2553 = vmatpush1.msra.mxu0 0.0
  %2554 = vmatprep.subr.mxu0 0.0
  %2555 = vmatpush1.msra.mxu0 0.0
  %2556 = vmatprep.subr.mxu0 0.0
  %2557 = vmatpush1.msra.mxu0 0.0
  %2558 = vmatprep.subr.mxu0 0.0
  %2559 = vmatpush1.msra.mxu0 0.0
  %2560 = vmatprep.subr.mxu0 0.0
  %2561 = vmatpush1.msra.mxu0 0.0
  %2562 = vmatprep.subr.mxu0 0.0
  %2563 = vmatpush1.msra.mxu0 0.0
  %2564 = vmatprep.subr.mxu0 0.0
  %2565 = vmatpush1.msra.mxu0 0.0
  %2566 = vmatprep.subr.mxu0 0.0
  %2567 = vmatpush1.msra.mxu0 0.0
  %2568 = vmatprep.subr.mxu0 0.0
  %2569 = vmatpush1.msra.mxu0 0.0
  %2570 = vmatprep.subr.mxu0 0.0
  %2571 = vmatpush1.msra.mxu0 0.0
  %2572 = vmatprep.subr.mxu0 0.0
  %2573 = vmatpush1.msra.mxu0 0.0
  %2574 = vmatprep.subr.mxu0 0.0
  %2575 = vmatpush1.msra.mxu0 0.0
  %2576 = vmatprep.subr.mxu0 0.0
  %2577 = vmatpush1.msra.mxu0 0.0
  %2578 = vmatprep.subr.mxu0 0.0
  %2579 = vmatpush1.msra.mxu0 0.0
  %2580 = vmatprep.subr.mxu0 0.0
  %2581 = vmatpush1.msra.mxu0 0.0
  %2582 = vmatprep.subr.mxu0 0.0
  %2583 = vmatpush1.msra.mxu0 0.0
  %2584 = vmatprep.subr.mxu0 0.0
  %2585 = vmatpush1.msra.mxu0 0.0
  %2586 = vmatprep.subr.mxu0 0.0
  %2587 = vmatpush1.msra.mxu0 0.0
  %2588 = vmatprep.subr.mxu0 0.0
  %2589 = vmatpush1.msra.mxu0 0.0
  %2590 = vmatprep.subr.mxu0 0.0
  %2591 = vmatpush1.msra.mxu0 0.0
  %2592 = vmatprep.subr.mxu0 0.0
  %2593 = vmatpush1.msra.mxu0 0.0
  %2594 = vmatprep.subr.mxu0 0.0
  %2595 = vmatpush1.msra.mxu0 0.0
  %2596 = vmatprep.subr.mxu0 0.0
  %2597 = vmatpush1.msra.mxu0 0.0
  %2598 = vmatprep.subr.mxu0 0.0
  %2599 = vmatpush1.msra.mxu0 0.0
  %2600 = vmatprep.mubr.f32.mxu0 0.0
  %2601 = vmatmul.mubr.f32.gmra.mrb[0].mxu0 %v2534
  %v2602 = vpop.f32.mrb[0].mxu0
  %v2603 = vadd.f32 %v2530, %v2602
  %v2604 = vpop.f32.mrb[0].mxu0
  %2605 = vdwg.mxu0
  %v2606 = vld [vmem:[%s8] sm:$0x1]
  %v2608 = vlaneseq
  %v2609 = vshrl.u32 %v2608, 7
  %v2610 = vsub.s32 0, %v2609
  %v2611 = vrot.slane %v2606, %v2610
  %v2613 = vadd.f32 %v2603, %v2611
  %s2614 = scalar_lea.vmem [#allocation2], 14
  %2615 = vst [vmem:[%s2614] sm:$0x3] %v2613
  %s2616 = scalar_lea.vmem %s82, 14
  %v2617 = vld [vmem:[%s2616] sm:$0x3]
  %v2618 = vld [vmem:[%s6] sm:$0xff]
  %v2619 = vld [vmem:[%s6 + $0x8] sm:$0xff]
  %v2620 = vld [vmem:[%s6 + $0x10] sm:$0xff]
  %v2621 = vld [vmem:[%s6 + $0x18] sm:$0xff]
  %s2622 = scalar_lea.vmem %s90, 14
  %v2623 = vld [vmem:[%s2622] sm:$0x3]
  %v2624 = vld [vmem:[%s7] sm:$0xff]
  %v2625 = vld [vmem:[%s7 + $0x8] sm:$0xff]
  %v2626 = vld [vmem:[%s7 + $0x10] sm:$0xff]
  %v2627 = vld [vmem:[%s7 + $0x18] sm:$0xff]
  %v2629 = vsel %vm111, %v2623, 0
  %2631 = vmatprep.subr.mxu0 0.0
  %2632 = vmatpush1.msra.mxu0 %v2624
  %2633 = vmatprep.subr.mxu0 0.0
  %2634 = vmatpush1.msra.mxu0 %v2625
  %2635 = vmatprep.subr.mxu0 0.0
  %2636 = vmatpush1.msra.mxu0 %v2626
  %2637 = vmatprep.subr.mxu0 0.0
  %2638 = vmatpush1.msra.mxu0 %v2627
  %2639 = vmatprep.subr.mxu0 0.0
  %2640 = vmatpush1.msra.mxu0 0.0
  %2641 = vmatprep.subr.mxu0 0.0
  %2642 = vmatpush1.msra.mxu0 0.0
  %2643 = vmatprep.subr.mxu0 0.0
  %2644 = vmatpush1.msra.mxu0 0.0
  %2645 = vmatprep.subr.mxu0 0.0
  %2646 = vmatpush1.msra.mxu0 0.0
  %2647 = vmatprep.subr.mxu0 0.0
  %2648 = vmatpush1.msra.mxu0 0.0
  %2649 = vmatprep.subr.mxu0 0.0
  %2650 = vmatpush1.msra.mxu0 0.0
  %2651 = vmatprep.subr.mxu0 0.0
  %2652 = vmatpush1.msra.mxu0 0.0
  %2653 = vmatprep.subr.mxu0 0.0
  %2654 = vmatpush1.msra.mxu0 0.0
  %2655 = vmatprep.subr.mxu0 0.0
  %2656 = vmatpush1.msra.mxu0 0.0
  %2657 = vmatprep.subr.mxu0 0.0
  %2658 = vmatpush1.msra.mxu0 0.0
  %2659 = vmatprep.subr.mxu0 0.0
  %2660 = vmatpush1.msra.mxu0 0.0
  %2661 = vmatprep.subr.mxu0 0.0
  %2662 = vmatpush1.msra.mxu0 0.0
  %2663 = vmatprep.subr.mxu0 0.0
  %2664 = vmatpush1.msra.mxu0 0.0
  %2665 = vmatprep.subr.mxu0 0.0
  %2666 = vmatpush1.msra.mxu0 0.0
  %2667 = vmatprep.subr.mxu0 0.0
  %2668 = vmatpush1.msra.mxu0 0.0
  %2669 = vmatprep.subr.mxu0 0.0
  %2670 = vmatpush1.msra.mxu0 0.0
  %2671 = vmatprep.subr.mxu0 0.0
  %2672 = vmatpush1.msra.mxu0 0.0
  %2673 = vmatprep.subr.mxu0 0.0
  %2674 = vmatpush1.msra.mxu0 0.0
  %2675 = vmatprep.subr.mxu0 0.0
  %2676 = vmatpush1.msra.mxu0 0.0
  %2677 = vmatprep.subr.mxu0 0.0
  %2678 = vmatpush1.msra.mxu0 0.0
  %2679 = vmatprep.subr.mxu0 0.0
  %2680 = vmatpush1.msra.mxu0 0.0
  %2681 = vmatprep.subr.mxu0 0.0
  %2682 = vmatpush1.msra.mxu0 0.0
  %2683 = vmatprep.subr.mxu0 0.0
  %2684 = vmatpush1.msra.mxu0 0.0
  %2685 = vmatprep.subr.mxu0 0.0
  %2686 = vmatpush1.msra.mxu0 0.0
  %2687 = vmatprep.subr.mxu0 0.0
  %2688 = vmatpush1.msra.mxu0 0.0
  %2689 = vmatprep.subr.mxu0 0.0
  %2690 = vmatpush1.msra.mxu0 0.0
  %2691 = vmatprep.subr.mxu0 0.0
  %2692 = vmatpush1.msra.mxu0 0.0
  %2693 = vmatprep.subr.mxu0 0.0
  %2694 = vmatpush1.msra.mxu0 0.0
  %2695 = vmatprep.mubr.f32.mxu0 0.0
  %2696 = vmatmul.mubr.f32.gmra.mrb[0].mxu0 %v2629
  %v2697 = vpop.f32.mrb[0].mxu0
  %v2698 = vadd.f32 0.0, %v2697
  %v2699 = vpop.f32.mrb[0].mxu0
  %2700 = vdwg.mxu0
  %v2702 = vsel %vm111, %v2617, 0
  %2704 = vmatprep.subr.mxu0 0.0
  %2705 = vmatpush1.msra.mxu0 %v2618
  %2706 = vmatprep.subr.mxu0 0.0
  %2707 = vmatpush1.msra.mxu0 %v2619
  %2708 = vmatprep.subr.mxu0 0.0
  %2709 = vmatpush1.msra.mxu0 %v2620
  %2710 = vmatprep.subr.mxu0 0.0
  %2711 = vmatpush1.msra.mxu0 %v2621
  %2712 = vmatprep.subr.mxu0 0.0
  %2713 = vmatpush1.msra.mxu0 0.0
  %2714 = vmatprep.subr.mxu0 0.0
  %2715 = vmatpush1.msra.mxu0 0.0
  %2716 = vmatprep.subr.mxu0 0.0
  %2717 = vmatpush1.msra.mxu0 0.0
  %2718 = vmatprep.subr.mxu0 0.0
  %2719 = vmatpush1.msra.mxu0 0.0
  %2720 = vmatprep.subr.mxu0 0.0
  %2721 = vmatpush1.msra.mxu0 0.0
  %2722 = vmatprep.subr.mxu0 0.0
  %2723 = vmatpush1.msra.mxu0 0.0
  %2724 = vmatprep.subr.mxu0 0.0
  %2725 = vmatpush1.msra.mxu0 0.0
  %2726 = vmatprep.subr.mxu0 0.0
  %2727 = vmatpush1.msra.mxu0 0.0
  %2728 = vmatprep.subr.mxu0 0.0
  %2729 = vmatpush1.msra.mxu0 0.0
  %2730 = vmatprep.subr.mxu0 0.0
  %2731 = vmatpush1.msra.mxu0 0.0
  %2732 = vmatprep.subr.mxu0 0.0
  %2733 = vmatpush1.msra.mxu0 0.0
  %2734 = vmatprep.subr.mxu0 0.0
  %2735 = vmatpush1.msra.mxu0 0.0
  %2736 = vmatprep.subr.mxu0 0.0
  %2737 = vmatpush1.msra.mxu0 0.0
  %2738 = vmatprep.subr.mxu0 0.0
  %2739 = vmatpush1.msra.mxu0 0.0
  %2740 = vmatprep.subr.mxu0 0.0
  %2741 = vmatpush1.msra.mxu0 0.0
  %2742 = vmatprep.subr.mxu0 0.0
  %2743 = vmatpush1.msra.mxu0 0.0
  %2744 = vmatprep.subr.mxu0 0.0
  %2745 = vmatpush1.msra.mxu0 0.0
  %2746 = vmatprep.subr.mxu0 0.0
  %2747 = vmatpush1.msra.mxu0 0.0
  %2748 = vmatprep.subr.mxu0 0.0
  %2749 = vmatpush1.msra.mxu0 0.0
  %2750 = vmatprep.subr.mxu0 0.0
  %2751 = vmatpush1.msra.mxu0 0.0
  %2752 = vmatprep.subr.mxu0 0.0
  %2753 = vmatpush1.msra.mxu0 0.0
  %2754 = vmatprep.subr.mxu0 0.0
  %2755 = vmatpush1.msra.mxu0 0.0
  %2756 = vmatprep.subr.mxu0 0.0
  %2757 = vmatpush1.msra.mxu0 0.0
  %2758 = vmatprep.subr.mxu0 0.0
  %2759 = vmatpush1.msra.mxu0 0.0
  %2760 = vmatprep.subr.mxu0 0.0
  %2761 = vmatpush1.msra.mxu0 0.0
  %2762 = vmatprep.subr.mxu0 0.0
  %2763 = vmatpush1.msra.mxu0 0.0
  %2764 = vmatprep.subr.mxu0 0.0
  %2765 = vmatpush1.msra.mxu0 0.0
  %2766 = vmatprep.subr.mxu0 0.0
  %2767 = vmatpush1.msra.mxu0 0.0
  %2768 = vmatprep.mubr.f32.mxu0 0.0
  %2769 = vmatmul.mubr.f32.gmra.mrb[0].mxu0 %v2702
  %v2770 = vpop.f32.mrb[0].mxu0
  %v2771 = vadd.f32 %v2698, %v2770
  %v2772 = vpop.f32.mrb[0].mxu0
  %2773 = vdwg.mxu0
  %v2774 = vld [vmem:[%s9] sm:$0x1]
  %v2776 = vlaneseq
  %v2777 = vshrl.u32 %v2776, 7
  %v2778 = vsub.s32 0, %v2777
  %v2779 = vrot.slane %v2774, %v2778
  %v2781 = vadd.f32 %v2771, %v2779
  %s2782 = scalar_lea.vmem [#allocation3], 14
  %2783 = vst [vmem:[%s2782] sm:$0x3] %v2781
  %p2784 = scmp.eq.s32.totalorder 0, 0
  // Predicated region
  $region50: #{blstm_forward.4} parent=0 // pred_check
    %p2785 = pneg %p2784
  $region51: #{blstm_forward.4} parent=0 // pred_check_branch
    %2787 = sbr.rel (%p2785) target = $region53
  $region52: #{blstm_forward.4} parent=0 // pred_region
    %vm2788 = vcmask 254976
    %2789 = vst.msk [vmem:[#allocation4] sm:$0x3] %vm2788, 0.0
    %2790 = vst.msk [vmem:[#allocation5] sm:$0x3] %vm2788, 0.0
    %2791 = vst.msk [vmem:[#allocation6] sm:$0x3] %vm2788, 0.0
    %2792 = vst.msk [vmem:[#allocation7] sm:$0x3] %vm2788, 0.0
  $region53: #{blstm_forward.4} parent=0 // pred_fallthru
    _
  %v2793 = vld [vmem:[#allocation4] sm:$0x3]
  %v2794 = vld [vmem:[#allocation5] sm:$0x3]
  %v2795 = vld [vmem:[#allocation6] sm:$0x3]
  %v2796 = vld [vmem:[#allocation7] sm:$0x3]
  %v2797 = vld [vmem:[#allocation2] sm:$0x3]
  %v2798 = vld [vmem:[%s10] sm:$0xff]
  %v2799 = vld [vmem:[%s10 + $0x8] sm:$0xff]
  %v2800 = vld [vmem:[%s10 + $0x10] sm:$0xff]
  %v2801 = vld [vmem:[%s10 + $0x18] sm:$0xff]
  %v2803 = vsel %vm111, %v2793, 0
  %2805 = vmatprep.subr.mxu0 0.0
  %2806 = vmatpush1.msra.mxu0 %v2798
  %2807 = vmatprep.subr.mxu0 0.0
  %2808 = vmatpush1.msra.mxu0 %v2799
  %2809 = vmatprep.subr.mxu0 0.0
  %2810 = vmatpush1.msra.mxu0 %v2800
  %2811 = vmatprep.subr.mxu0 0.0
  %2812 = vmatpush1.msra.mxu0 %v2801
  %2813 = vmatprep.subr.mxu0 0.0
  %2814 = vmatpush1.msra.mxu0 0.0
  %2815 = vmatprep.subr.mxu0 0.0
  %2816 = vmatpush1.msra.mxu0 0.0
  %2817 = vmatprep.subr.mxu0 0.0
  %2818 = vmatpush1.msra.mxu0 0.0
  %2819 = vmatprep.subr.mxu0 0.0
  %2820 = vmatpush1.msra.mxu0 0.0
  %2821 = vmatprep.subr.mxu0 0.0
  %2822 = vmatpush1.msra.mxu0 0.0
  %2823 = vmatprep.subr.mxu0 0.0
  %2824 = vmatpush1.msra.mxu0 0.0
  %2825 = vmatprep.subr.mxu0 0.0
  %2826 = vmatpush1.msra.mxu0 0.0
  %2827 = vmatprep.subr.mxu0 0.0
  %2828 = vmatpush1.msra.mxu0 0.0
  %2829 = vmatprep.subr.mxu0 0.0
  %2830 = vmatpush1.msra.mxu0 0.0
  %2831 = vmatprep.subr.mxu0 0.0
  %2832 = vmatpush1.msra.mxu0 0.0
  %2833 = vmatprep.subr.mxu0 0.0
  %2834 = vmatpush1.msra.mxu0 0.0
  %2835 = vmatprep.subr.mxu0 0.0
  %2836 = vmatpush1.msra.mxu0 0.0
  %2837 = vmatprep.subr.mxu0 0.0
  %2838 = vmatpush1.msra.mxu0 0.0
  %2839 = vmatprep.subr.mxu0 0.0
  %2840 = vmatpush1.msra.mxu0 0.0
  %2841 = vmatprep.subr.mxu0 0.0
  %2842 = vmatpush1.msra.mxu0 0.0
  %2843 = vmatprep.subr.mxu0 0.0
  %2844 = vmatpush1.msra.mxu0 0.0
  %2845 = vmatprep.subr.mxu0 0.0
  %2846 = vmatpush1.msra.mxu0 0.0
  %2847 = vmatprep.subr.mxu0 0.0
  %2848 = vmatpush1.msra.mxu0 0.0
  %2849 = vmatprep.subr.mxu0 0.0
  %2850 = vmatpush1.msra.mxu0 0.0
  %2851 = vmatprep.subr.mxu0 0.0
  %2852 = vmatpush1.msra.mxu0 0.0
  %2853 = vmatprep.subr.mxu0 0.0
  %2854 = vmatpush1.msra.mxu0 0.0
  %2855 = vmatprep.subr.mxu0 0.0
  %2856 = vmatpush1.msra.mxu0 0.0
  %2857 = vmatprep.subr.mxu0 0.0
  %2858 = vmatpush1.msra.mxu0 0.0
  %2859 = vmatprep.subr.mxu0 0.0
  %2860 = vmatpush1.msra.mxu0 0.0
  %2861 = vmatprep.subr.mxu0 0.0
  %2862 = vmatpush1.msra.mxu0 0.0
  %2863 = vmatprep.subr.mxu0 0.0
  %2864 = vmatpush1.msra.mxu0 0.0
  %2865 = vmatprep.subr.mxu0 0.0
  %2866 = vmatpush1.msra.mxu0 0.0
  %2867 = vmatprep.subr.mxu0 0.0
  %2868 = vmatpush1.msra.mxu0 0.0
  %2869 = vmatprep.mubr.f32.mxu0 0.0
  %2870 = vmatmul.mubr.f32.gmra.mrb[0].mxu0 %v2803
  %v2871 = vpop.f32.mrb[0].mxu0
  %v2872 = vadd.f32 0.0, %v2871
  %v2873 = vpop.f32.mrb[0].mxu0
  %2874 = vdwg.mxu0
  %v2875 = vadd.f32 %v2797, %v2872
  %v2876 = vxor.u32 %v2875, 2147483648
  %v2877 = vmul.f32 %v2876, 1.442695
  %v2878 = vpow.pop %v2877
  %v2879 = vadd.f32 %v2878, 1.0
  %v2880 = vrcp.pop %v2879
  %v2881 = vmul.f32 1.0, %v2880
  %v2882 = vtanh.pop %v2875
  %2884 = vrot.lane.b32.xlu0 %v2794, 32
  %v2885 = vpop.permute.xlu0 %2884
  %v2887 = vmul.f32 %v2881, %v2885
  %2889 = vrot.lane.b32.xlu0 %v2882, 64
  %v2890 = vpop.permute.xlu0 %2889
  %v2892 = vmul.f32 %v2881, %v2890
  %2894 = vrot.lane.b32.xlu0 %v2892, 32
  %v2895 = vpop.permute.xlu0 %2894
  %v2897 = vadd.f32 %v2887, %v2895
  %v2898 = vtanh.pop %v2897
  %2900 = vrot.lane.b32.xlu0 %v2898, 64
  %v2901 = vpop.permute.xlu0 %2900
  %v2903 = vmul.f32 %v2881, %v2901
  %2905 = vrot.lane.b32.xlu0 %v2903, 32
  %v2906 = vpop.permute.xlu0 %2905
  %vm2908 = vcmask 254976
  %2909 = vst.msk [vmem:[%s12] sm:$0x3] %vm2908, %v2906
  %v2910 = vld [vmem:[%s2782] sm:$0x3]
  %v2911 = vld [vmem:[%s11] sm:$0xff]
  %v2912 = vld [vmem:[%s11 + $0x8] sm:$0xff]
  %v2913 = vld [vmem:[%s11 + $0x10] sm:$0xff]
  %v2914 = vld [vmem:[%s11 + $0x18] sm:$0xff]
  %v2916 = vsel %vm111, %v2795, 0
  %2918 = vmatprep.subr.mxu0 0.0
  %2919 = vmatpush1.msra.mxu0 %v2911
  %2920 = vmatprep.subr.mxu0 0.0
  %2921 = vmatpush1.msra.mxu0 %v2912
  %2922 = vmatprep.subr.mxu0 0.0
  %2923 = vmatpush1.msra.mxu0 %v2913
  %2924 = vmatprep.subr.mxu0 0.0
  %2925 = vmatpush1.msra.mxu0 %v2914
  %2926 = vmatprep.subr.mxu0 0.0
  %2927 = vmatpush1.msra.mxu0 0.0
  %2928 = vmatprep.subr.mxu0 0.0
  %2929 = vmatpush1.msra.mxu0 0.0
  %2930 = vmatprep.subr.mxu0 0.0
  %2931 = vmatpush1.msra.mxu0 0.0
  %2932 = vmatprep.subr.mxu0 0.0
  %2933 = vmatpush1.msra.mxu0 0.0
  %2934 = vmatprep.subr.mxu0 0.0
  %2935 = vmatpush1.msra.mxu0 0.0
  %2936 = vmatprep.subr.mxu0 0.0
  %2937 = vmatpush1.msra.mxu0 0.0
  %2938 = vmatprep.subr.mxu0 0.0
  %2939 = vmatpush1.msra.mxu0 0.0
  %2940 = vmatprep.subr.mxu0 0.0
  %2941 = vmatpush1.msra.mxu0 0.0
  %2942 = vmatprep.subr.mxu0 0.0
  %2943 = vmatpush1.msra.mxu0 0.0
  %2944 = vmatprep.subr.mxu0 0.0
  %2945 = vmatpush1.msra.mxu0 0.0
  %2946 = vmatprep.subr.mxu0 0.0
  %2947 = vmatpush1.msra.mxu0 0.0
  %2948 = vmatprep.subr.mxu0 0.0
  %2949 = vmatpush1.msra.mxu0 0.0
  %2950 = vmatprep.subr.mxu0 0.0
  %2951 = vmatpush1.msra.mxu0 0.0
  %2952 = vmatprep.subr.mxu0 0.0
  %2953 = vmatpush1.msra.mxu0 0.0
  %2954 = vmatprep.subr.mxu0 0.0
  %2955 = vmatpush1.msra.mxu0 0.0
  %2956 = vmatprep.subr.mxu0 0.0
  %2957 = vmatpush1.msra.mxu0 0.0
  %2958 = vmatprep.subr.mxu0 0.0
  %2959 = vmatpush1.msra.mxu0 0.0
  %2960 = vmatprep.subr.mxu0 0.0
  %2961 = vmatpush1.msra.mxu0 0.0
  %2962 = vmatprep.subr.mxu0 0.0
  %2963 = vmatpush1.msra.mxu0 0.0
  %2964 = vmatprep.subr.mxu0 0.0
  %2965 = vmatpush1.msra.mxu0 0.0
  %2966 = vmatprep.subr.mxu0 0.0
  %2967 = vmatpush1.msra.mxu0 0.0
  %2968 = vmatprep.subr.mxu0 0.0
  %2969 = vmatpush1.msra.mxu0 0.0
  %2970 = vmatprep.subr.mxu0 0.0
  %2971 = vmatpush1.msra.mxu0 0.0
  %2972 = vmatprep.subr.mxu0 0.0
  %2973 = vmatpush1.msra.mxu0 0.0
  %2974 = vmatprep.subr.mxu0 0.0
  %2975 = vmatpush1.msra.mxu0 0.0
  %2976 = vmatprep.subr.mxu0 0.0
  %2977 = vmatpush1.msra.mxu0 0.0
  %2978 = vmatprep.subr.mxu0 0.0
  %2979 = vmatpush1.msra.mxu0 0.0
  %2980 = vmatprep.subr.mxu0 0.0
  %2981 = vmatpush1.msra.mxu0 0.0
  %2982 = vmatprep.mubr.f32.mxu0 0.0
  %2983 = vmatmul.mubr.f32.gmra.mrb[0].mxu0 %v2916
  %v2984 = vpop.f32.mrb[0].mxu0
  %v2985 = vadd.f32 0.0, %v2984
  %v2986 = vpop.f32.mrb[0].mxu0
  %2987 = vdwg.mxu0
  %v2988 = vadd.f32 %v2910, %v2985
  %v2989 = vxor.u32 %v2988, 2147483648
  %v2990 = vmul.f32 %v2989, 1.442695
  %v2991 = vpow.pop %v2990
  %v2992 = vadd.f32 %v2991, 1.0
  %v2993 = vrcp.pop %v2992
  %v2994 = vmul.f32 1.0, %v2993
  %v2995 = vtanh.pop %v2988
  %2997 = vrot.lane.b32.xlu0 %v2796, 32
  %v2998 = vpop.permute.xlu0 %2997
  %v3000 = vmul.f32 %v2994, %v2998
  %3002 = vrot.lane.b32.xlu0 %v2995, 64
  %v3003 = vpop.permute.xlu0 %3002
  %v3005 = vmul.f32 %v2994, %v3003
  %3007 = vrot.lane.b32.xlu0 %v3005, 32
  %v3008 = vpop.permute.xlu0 %3007
  %v3010 = vadd.f32 %v3000, %v3008
  %v3011 = vtanh.pop %v3010
  %3013 = vrot.lane.b32.xlu0 %v3011, 64
  %v3014 = vpop.permute.xlu0 %3013
  %v3016 = vmul.f32 %v2994, %v3014
  %3018 = vrot.lane.b32.xlu0 %v3016, 32
  %v3019 = vpop.permute.xlu0 %3018
  %s3021 = scalar_lea.vmem %s98, 14
  %3022 = vst.msk [vmem:[%s3021] sm:$0x3] %vm2908, %v3019
  %v3023 = vld [vmem:[%s598] sm:$0x3]
  %v3024 = vld [vmem:[%s10] sm:$0xff]
  %v3025 = vld [vmem:[%s10 + $0x8] sm:$0xff]
  %v3026 = vld [vmem:[%s10 + $0x10] sm:$0xff]
  %v3027 = vld [vmem:[%s10 + $0x18] sm:$0xff]
  %v3028 = vsel %vm111, %v2906, 0
  %3030 = vmatprep.subr.mxu0 0.0
  %3031 = vmatpush1.msra.mxu0 %v3024
  %3032 = vmatprep.subr.mxu0 0.0
  %3033 = vmatpush1.msra.mxu0 %v3025
  %3034 = vmatprep.subr.mxu0 0.0
  %3035 = vmatpush1.msra.mxu0 %v3026
  %3036 = vmatprep.subr.mxu0 0.0
  %3037 = vmatpush1.msra.mxu0 %v3027
  %3038 = vmatprep.subr.mxu0 0.0
  %3039 = vmatpush1.msra.mxu0 0.0
  %3040 = vmatprep.subr.mxu0 0.0
  %3041 = vmatpush1.msra.mxu0 0.0
  %3042 = vmatprep.subr.mxu0 0.0
  %3043 = vmatpush1.msra.mxu0 0.0
  %3044 = vmatprep.subr.mxu0 0.0
  %3045 = vmatpush1.msra.mxu0 0.0
  %3046 = vmatprep.subr.mxu0 0.0
  %3047 = vmatpush1.msra.mxu0 0.0
  %3048 = vmatprep.subr.mxu0 0.0
  %3049 = vmatpush1.msra.mxu0 0.0
  %3050 = vmatprep.subr.mxu0 0.0
  %3051 = vmatpush1.msra.mxu0 0.0
  %3052 = vmatprep.subr.mxu0 0.0
  %3053 = vmatpush1.msra.mxu0 0.0
  %3054 = vmatprep.subr.mxu0 0.0
  %3055 = vmatpush1.msra.mxu0 0.0
  %3056 = vmatprep.subr.mxu0 0.0
  %3057 = vmatpush1.msra.mxu0 0.0
  %3058 = vmatprep.subr.mxu0 0.0
  %3059 = vmatpush1.msra.mxu0 0.0
  %3060 = vmatprep.subr.mxu0 0.0
  %3061 = vmatpush1.msra.mxu0 0.0
  %3062 = vmatprep.subr.mxu0 0.0
  %3063 = vmatpush1.msra.mxu0 0.0
  %3064 = vmatprep.subr.mxu0 0.0
  %3065 = vmatpush1.msra.mxu0 0.0
  %3066 = vmatprep.subr.mxu0 0.0
  %3067 = vmatpush1.msra.mxu0 0.0
  %3068 = vmatprep.subr.mxu0 0.0
  %3069 = vmatpush1.msra.mxu0 0.0
  %3070 = vmatprep.subr.mxu0 0.0
  %3071 = vmatpush1.msra.mxu0 0.0
  %3072 = vmatprep.subr.mxu0 0.0
  %3073 = vmatpush1.msra.mxu0 0.0
  %3074 = vmatprep.subr.mxu0 0.0
  %3075 = vmatpush1.msra.mxu0 0.0
  %3076 = vmatprep.subr.mxu0 0.0
  %3077 = vmatpush1.msra.mxu0 0.0
  %3078 = vmatprep.subr.mxu0 0.0
  %3079 = vmatpush1.msra.mxu0 0.0
  %3080 = vmatprep.subr.mxu0 0.0
  %3081 = vmatpush1.msra.mxu0 0.0
  %3082 = vmatprep.subr.mxu0 0.0
  %3083 = vmatpush1.msra.mxu0 0.0
  %3084 = vmatprep.subr.mxu0 0.0
  %3085 = vmatpush1.msra.mxu0 0.0
  %3086 = vmatprep.subr.mxu0 0.0
  %3087 = vmatpush1.msra.mxu0 0.0
  %3088 = vmatprep.subr.mxu0 0.0
  %3089 = vmatpush1.msra.mxu0 0.0
  %3090 = vmatprep.subr.mxu0 0.0
  %3091 = vmatpush1.msra.mxu0 0.0
  %3092 = vmatprep.subr.mxu0 0.0
  %3093 = vmatpush1.msra.mxu0 0.0
  %3094 = vmatprep.mubr.f32.mxu0 0.0
  %3095 = vmatmul.mubr.f32.gmra.mrb[0].mxu0 %v3028
  %v3096 = vpop.f32.mrb[0].mxu0
  %v3097 = vadd.f32 0.0, %v3096
  %v3098 = vpop.f32.mrb[0].mxu0
  %3099 = vdwg.mxu0
  %v3100 = vadd.f32 %v3023, %v3097
  %v3101 = vxor.u32 %v3100, 2147483648
  %v3102 = vmul.f32 %v3101, 1.442695
  %v3103 = vpow.pop %v3102
  %v3104 = vadd.f32 %v3103, 1.0
  %v3105 = vrcp.pop %v3104
  %v3106 = vmul.f32 1.0, %v3105
  %v3107 = vtanh.pop %v3100
  %v3108 = vmul.f32 %v3106, %v2897
  %3110 = vrot.lane.b32.xlu0 %v3107, 64
  %v3111 = vpop.permute.xlu0 %3110
  %v3113 = vmul.f32 %v3106, %v3111
  %3115 = vrot.lane.b32.xlu0 %v3113, 32
  %v3116 = vpop.permute.xlu0 %3115
  %v3118 = vadd.f32 %v3108, %v3116
  %v3119 = vtanh.pop %v3118
  %3121 = vrot.lane.b32.xlu0 %v3119, 64
  %v3122 = vpop.permute.xlu0 %3121
  %v3124 = vmul.f32 %v3106, %v3122
  %3126 = vrot.lane.b32.xlu0 %v3124, 32
  %v3127 = vpop.permute.xlu0 %3126
  %s3129 = scalar_lea.vmem %s12, 2
  %3130 = vst.msk [vmem:[%s3129] sm:$0x3] %vm2908, %v3127
  %v3131 = vld [vmem:[%s2446] sm:$0x3]
  %v3132 = vld [vmem:[%s11] sm:$0xff]
  %v3133 = vld [vmem:[%s11 + $0x8] sm:$0xff]
  %v3134 = vld [vmem:[%s11 + $0x10] sm:$0xff]
  %v3135 = vld [vmem:[%s11 + $0x18] sm:$0xff]
  %v3136 = vsel %vm111, %v3019, 0
  %3138 = vmatprep.subr.mxu0 0.0
  %3139 = vmatpush1.msra.mxu0 %v3132
  %3140 = vmatprep.subr.mxu0 0.0
  %3141 = vmatpush1.msra.mxu0 %v3133
  %3142 = vmatprep.subr.mxu0 0.0
  %3143 = vmatpush1.msra.mxu0 %v3134
  %3144 = vmatprep.subr.mxu0 0.0
  %3145 = vmatpush1.msra.mxu0 %v3135
  %3146 = vmatprep.subr.mxu0 0.0
  %3147 = vmatpush1.msra.mxu0 0.0
  %3148 = vmatprep.subr.mxu0 0.0
  %3149 = vmatpush1.msra.mxu0 0.0
  %3150 = vmatprep.subr.mxu0 0.0
  %3151 = vmatpush1.msra.mxu0 0.0
  %3152 = vmatprep.subr.mxu0 0.0
  %3153 = vmatpush1.msra.mxu0 0.0
  %3154 = vmatprep.subr.mxu0 0.0
  %3155 = vmatpush1.msra.mxu0 0.0
  %3156 = vmatprep.subr.mxu0 0.0
  %3157 = vmatpush1.msra.mxu0 0.0
  %3158 = vmatprep.subr.mxu0 0.0
  %3159 = vmatpush1.msra.mxu0 0.0
  %3160 = vmatprep.subr.mxu0 0.0
  %3161 = vmatpush1.msra.mxu0 0.0
  %3162 = vmatprep.subr.mxu0 0.0
  %3163 = vmatpush1.msra.mxu0 0.0
  %3164 = vmatprep.subr.mxu0 0.0
  %3165 = vmatpush1.msra.mxu0 0.0
  %3166 = vmatprep.subr.mxu0 0.0
  %3167 = vmatpush1.msra.mxu0 0.0
  %3168 = vmatprep.subr.mxu0 0.0
  %3169 = vmatpush1.msra.mxu0 0.0
  %3170 = vmatprep.subr.mxu0 0.0
  %3171 = vmatpush1.msra.mxu0 0.0
  %3172 = vmatprep.subr.mxu0 0.0
  %3173 = vmatpush1.msra.mxu0 0.0
  %3174 = vmatprep.subr.mxu0 0.0
  %3175 = vmatpush1.msra.mxu0 0.0
  %3176 = vmatprep.subr.mxu0 0.0
  %3177 = vmatpush1.msra.mxu0 0.0
  %3178 = vmatprep.subr.mxu0 0.0
  %3179 = vmatpush1.msra.mxu0 0.0
  %3180 = vmatprep.subr.mxu0 0.0
  %3181 = vmatpush1.msra.mxu0 0.0
  %3182 = vmatprep.subr.mxu0 0.0
  %3183 = vmatpush1.msra.mxu0 0.0
  %3184 = vmatprep.subr.mxu0 0.0
  %3185 = vmatpush1.msra.mxu0 0.0
  %3186 = vmatprep.subr.mxu0 0.0
  %3187 = vmatpush1.msra.mxu0 0.0
  %3188 = vmatprep.subr.mxu0 0.0
  %3189 = vmatpush1.msra.mxu0 0.0
  %3190 = vmatprep.subr.mxu0 0.0
  %3191 = vmatpush1.msra.mxu0 0.0
  %3192 = vmatprep.subr.mxu0 0.0
  %3193 = vmatpush1.msra.mxu0 0.0
  %3194 = vmatprep.subr.mxu0 0.0
  %3195 = vmatpush1.msra.mxu0 0.0
  %3196 = vmatprep.subr.mxu0 0.0
  %3197 = vmatpush1.msra.mxu0 0.0
  %3198 = vmatprep.subr.mxu0 0.0
  %3199 = vmatpush1.msra.mxu0 0.0
  %3200 = vmatprep.subr.mxu0 0.0
  %3201 = vmatpush1.msra.mxu0 0.0
  %3202 = vmatprep.mubr.f32.mxu0 0.0
  %3203 = vmatmul.mubr.f32.gmra.mrb[0].mxu0 %v3136
  %v3204 = vpop.f32.mrb[0].mxu0
  %v3205 = vadd.f32 0.0, %v3204
  %v3206 = vpop.f32.mrb[0].mxu0
  %3207 = vdwg.mxu0
  %v3208 = vadd.f32 %v3131, %v3205
  %v3209 = vxor.u32 %v3208, 2147483648
  %v3210 = vmul.f32 %v3209, 1.442695
  %v3211 = vpow.pop %v3210
  %v3212 = vadd.f32 %v3211, 1.0
  %v3213 = vrcp.pop %v3212
  %v3214 = vmul.f32 1.0, %v3213
  %v3215 = vtanh.pop %v3208
  %v3216 = vmul.f32 %v3214, %v3010
  %3218 = vrot.lane.b32.xlu0 %v3215, 64
  %v3219 = vpop.permute.xlu0 %3218
  %v3221 = vmul.f32 %v3214, %v3219
  %3223 = vrot.lane.b32.xlu0 %v3221, 32
  %v3224 = vpop.permute.xlu0 %3223
  %v3226 = vadd.f32 %v3216, %v3224
  %v3227 = vtanh.pop %v3226
  %3229 = vrot.lane.b32.xlu0 %v3227, 64
  %v3230 = vpop.permute.xlu0 %3229
  %v3232 = vmul.f32 %v3214, %v3230
  %3234 = vrot.lane.b32.xlu0 %v3232, 32
  %v3235 = vpop.permute.xlu0 %3234
  %s3237 = scalar_lea.vmem %s98, 12
  %3238 = vst.msk [vmem:[%s3237] sm:$0x3] %vm2908, %v3235
  %v3239 = vld [vmem:[%s934] sm:$0x3]
  %v3240 = vld [vmem:[%s10] sm:$0xff]
  %v3241 = vld [vmem:[%s10 + $0x8] sm:$0xff]
  %v3242 = vld [vmem:[%s10 + $0x10] sm:$0xff]
  %v3243 = vld [vmem:[%s10 + $0x18] sm:$0xff]
  %v3244 = vsel %vm111, %v3127, 0
  %3246 = vmatprep.subr.mxu0 0.0
  %3247 = vmatpush1.msra.mxu0 %v3240
  %3248 = vmatprep.subr.mxu0 0.0
  %3249 = vmatpush1.msra.mxu0 %v3241
  %3250 = vmatprep.subr.mxu0 0.0
  %3251 = vmatpush1.msra.mxu0 %v3242
  %3252 = vmatprep.subr.mxu0 0.0
  %3253 = vmatpush1.msra.mxu0 %v3243
  %3254 = vmatprep.subr.mxu0 0.0
  %3255 = vmatpush1.msra.mxu0 0.0
  %3256 = vmatprep.subr.mxu0 0.0
  %3257 = vmatpush1.msra.mxu0 0.0
  %3258 = vmatprep.subr.mxu0 0.0
  %3259 = vmatpush1.msra.mxu0 0.0
  %3260 = vmatprep.subr.mxu0 0.0
  %3261 = vmatpush1.msra.mxu0 0.0
  %3262 = vmatprep.subr.mxu0 0.0
  %3263 = vmatpush1.msra.mxu0 0.0
  %3264 = vmatprep.subr.mxu0 0.0
  %3265 = vmatpush1.msra.mxu0 0.0
  %3266 = vmatprep.subr.mxu0 0.0
  %3267 = vmatpush1.msra.mxu0 0.0
  %3268 = vmatprep.subr.mxu0 0.0
  %3269 = vmatpush1.msra.mxu0 0.0
  %3270 = vmatprep.subr.mxu0 0.0
  %3271 = vmatpush1.msra.mxu0 0.0
  %3272 = vmatprep.subr.mxu0 0.0
  %3273 = vmatpush1.msra.mxu0 0.0
  %3274 = vmatprep.subr.mxu0 0.0
  %3275 = vmatpush1.msra.mxu0 0.0
  %3276 = vmatprep.subr.mxu0 0.0
  %3277 = vmatpush1.msra.mxu0 0.0
  %3278 = vmatprep.subr.mxu0 0.0
  %3279 = vmatpush1.msra.mxu0 0.0
  %3280 = vmatprep.subr.mxu0 0.0
  %3281 = vmatpush1.msra.mxu0 0.0
  %3282 = vmatprep.subr.mxu0 0.0
  %3283 = vmatpush1.msra.mxu0 0.0
  %3284 = vmatprep.subr.mxu0 0.0
  %3285 = vmatpush1.msra.mxu0 0.0
  %3286 = vmatprep.subr.mxu0 0.0
  %3287 = vmatpush1.msra.mxu0 0.0
  %3288 = vmatprep.subr.mxu0 0.0
  %3289 = vmatpush1.msra.mxu0 0.0
  %3290 = vmatprep.subr.mxu0 0.0
  %3291 = vmatpush1.msra.mxu0 0.0
  %3292 = vmatprep.subr.mxu0 0.0
  %3293 = vmatpush1.msra.mxu0 0.0
  %3294 = vmatprep.subr.mxu0 0.0
  %3295 = vmatpush1.msra.mxu0 0.0
  %3296 = vmatprep.subr.mxu0 0.0
  %3297 = vmatpush1.msra.mxu0 0.0
  %3298 = vmatprep.subr.mxu0 0.0
  %3299 = vmatpush1.msra.mxu0 0.0
  %3300 = vmatprep.subr.mxu0 0.0
  %3301 = vmatpush1.msra.mxu0 0.0
  %3302 = vmatprep.subr.mxu0 0.0
  %3303 = vmatpush1.msra.mxu0 0.0
  %3304 = vmatprep.subr.mxu0 0.0
  %3305 = vmatpush1.msra.mxu0 0.0
  %3306 = vmatprep.subr.mxu0 0.0
  %3307 = vmatpush1.msra.mxu0 0.0
  %3308 = vmatprep.subr.mxu0 0.0
  %3309 = vmatpush1.msra.mxu0 0.0
  %3310 = vmatprep.mubr.f32.mxu0 0.0
  %3311 = vmatmul.mubr.f32.gmra.mrb[0].mxu0 %v3244
  %v3312 = vpop.f32.mrb[0].mxu0
  %v3313 = vadd.f32 0.0, %v3312
  %v3314 = vpop.f32.mrb[0].mxu0
  %3315 = vdwg.mxu0
  %v3316 = vadd.f32 %v3239, %v3313
  %v3317 = vxor.u32 %v3316, 2147483648
  %v3318 = vmul.f32 %v3317, 1.442695
  %v3319 = vpow.pop %v3318
  %v3320 = vadd.f32 %v3319, 1.0
  %v3321 = vrcp.pop %v3320
  %v3322 = vmul.f32 1.0, %v3321
  %v3323 = vtanh.pop %v3316
  %v3324 = vmul.f32 %v3322, %v3118
  %3326 = vrot.lane.b32.xlu0 %v3323, 64
  %v3327 = vpop.permute.xlu0 %3326
  %v3329 = vmul.f32 %v3322, %v3327
  %3331 = vrot.lane.b32.xlu0 %v3329, 32
  %v3332 = vpop.permute.xlu0 %3331
  %v3334 = vadd.f32 %v3324, %v3332
  %v3335 = vtanh.pop %v3334
  %3337 = vrot.lane.b32.xlu0 %v3335, 64
  %v3338 = vpop.permute.xlu0 %3337
  %v3340 = vmul.f32 %v3322, %v3338
  %3342 = vrot.lane.b32.xlu0 %v3340, 32
  %v3343 = vpop.permute.xlu0 %3342
  %s3345 = scalar_lea.vmem %s12, 4
  %3346 = vst.msk [vmem:[%s3345] sm:$0x3] %vm2908, %v3343
  %v3347 = vld [vmem:[%s2110] sm:$0x3]
  %v3348 = vld [vmem:[%s11] sm:$0xff]
  %v3349 = vld [vmem:[%s11 + $0x8] sm:$0xff]
  %v3350 = vld [vmem:[%s11 + $0x10] sm:$0xff]
  %v3351 = vld [vmem:[%s11 + $0x18] sm:$0xff]
  %v3352 = vsel %vm111, %v3235, 0
  %3354 = vmatprep.subr.mxu0 0.0
  %3355 = vmatpush1.msra.mxu0 %v3348
  %3356 = vmatprep.subr.mxu0 0.0
  %3357 = vmatpush1.msra.mxu0 %v3349
  %3358 = vmatprep.subr.mxu0 0.0
  %3359 = vmatpush1.msra.mxu0 %v3350
  %3360 = vmatprep.subr.mxu0 0.0
  %3361 = vmatpush1.msra.mxu0 %v3351
  %3362 = vmatprep.subr.mxu0 0.0
  %3363 = vmatpush1.msra.mxu0 0.0
  %3364 = vmatprep.subr.mxu0 0.0
  %3365 = vmatpush1.msra.mxu0 0.0
  %3366 = vmatprep.subr.mxu0 0.0
  %3367 = vmatpush1.msra.mxu0 0.0
  %3368 = vmatprep.subr.mxu0 0.0
  %3369 = vmatpush1.msra.mxu0 0.0
  %3370 = vmatprep.subr.mxu0 0.0
  %3371 = vmatpush1.msra.mxu0 0.0
  %3372 = vmatprep.subr.mxu0 0.0
  %3373 = vmatpush1.msra.mxu0 0.0
  %3374 = vmatprep.subr.mxu0 0.0
  %3375 = vmatpush1.msra.mxu0 0.0
  %3376 = vmatprep.subr.mxu0 0.0
  %3377 = vmatpush1.msra.mxu0 0.0
  %3378 = vmatprep.subr.mxu0 0.0
  %3379 = vmatpush1.msra.mxu0 0.0
  %3380 = vmatprep.subr.mxu0 0.0
  %3381 = vmatpush1.msra.mxu0 0.0
  %3382 = vmatprep.subr.mxu0 0.0
  %3383 = vmatpush1.msra.mxu0 0.0
  %3384 = vmatprep.subr.mxu0 0.0
  %3385 = vmatpush1.msra.mxu0 0.0
  %3386 = vmatprep.subr.mxu0 0.0
  %3387 = vmatpush1.msra.mxu0 0.0
  %3388 = vmatprep.subr.mxu0 0.0
  %3389 = vmatpush1.msra.mxu0 0.0
  %3390 = vmatprep.subr.mxu0 0.0
  %3391 = vmatpush1.msra.mxu0 0.0
  %3392 = vmatprep.subr.mxu0 0.0
  %3393 = vmatpush1.msra.mxu0 0.0
  %3394 = vmatprep.subr.mxu0 0.0
  %3395 = vmatpush1.msra.mxu0 0.0
  %3396 = vmatprep.subr.mxu0 0.0
  %3397 = vmatpush1.msra.mxu0 0.0
  %3398 = vmatprep.subr.mxu0 0.0
  %3399 = vmatpush1.msra.mxu0 0.0
  %3400 = vmatprep.subr.mxu0 0.0
  %3401 = vmatpush1.msra.mxu0 0.0
  %3402 = vmatprep.subr.mxu0 0.0
  %3403 = vmatpush1.msra.mxu0 0.0
  %3404 = vmatprep.subr.mxu0 0.0
  %3405 = vmatpush1.msra.mxu0 0.0
  %3406 = vmatprep.subr.mxu0 0.0
  %3407 = vmatpush1.msra.mxu0 0.0
  %3408 = vmatprep.subr.mxu0 0.0
  %3409 = vmatpush1.msra.mxu0 0.0
  %3410 = vmatprep.subr.mxu0 0.0
  %3411 = vmatpush1.msra.mxu0 0.0
  %3412 = vmatprep.subr.mxu0 0.0
  %3413 = vmatpush1.msra.mxu0 0.0
  %3414 = vmatprep.subr.mxu0 0.0
  %3415 = vmatpush1.msra.mxu0 0.0
  %3416 = vmatprep.subr.mxu0 0.0
  %3417 = vmatpush1.msra.mxu0 0.0
  %3418 = vmatprep.mubr.f32.mxu0 0.0
  %3419 = vmatmul.mubr.f32.gmra.mrb[0].mxu0 %v3352
  %v3420 = vpop.f32.mrb[0].mxu0
  %v3421 = vadd.f32 0.0, %v3420
  %v3422 = vpop.f32.mrb[0].mxu0
  %3423 = vdwg.mxu0
  %v3424 = vadd.f32 %v3347, %v3421
  %v3425 = vxor.u32 %v3424, 2147483648
  %v3426 = vmul.f32 %v3425, 1.442695
  %v3427 = vpow.pop %v3426
  %v3428 = vadd.f32 %v3427, 1.0
  %v3429 = vrcp.pop %v3428
  %v3430 = vmul.f32 1.0, %v3429
  %v3431 = vtanh.pop %v3424
  %v3432 = vmul.f32 %v3430, %v3226
  %3434 = vrot.lane.b32.xlu0 %v3431, 64
  %v3435 = vpop.permute.xlu0 %3434
  %v3437 = vmul.f32 %v3430, %v3435
  %3439 = vrot.lane.b32.xlu0 %v3437, 32
  %v3440 = vpop.permute.xlu0 %3439
  %v3442 = vadd.f32 %v3432, %v3440
  %v3443 = vtanh.pop %v3442
  %3445 = vrot.lane.b32.xlu0 %v3443, 64
  %v3446 = vpop.permute.xlu0 %3445
  %v3448 = vmul.f32 %v3430, %v3446
  %3450 = vrot.lane.b32.xlu0 %v3448, 32
  %v3451 = vpop.permute.xlu0 %3450
  %s3453 = scalar_lea.vmem %s98, 10
  %3454 = vst.msk [vmem:[%s3453] sm:$0x3] %vm2908, %v3451
  %v3455 = vld [vmem:[%s1270] sm:$0x3]
  %v3456 = vld [vmem:[%s10] sm:$0xff]
  %v3457 = vld [vmem:[%s10 + $0x8] sm:$0xff]
  %v3458 = vld [vmem:[%s10 + $0x10] sm:$0xff]
  %v3459 = vld [vmem:[%s10 + $0x18] sm:$0xff]
  %v3460 = vsel %vm111, %v3343, 0
  %3462 = vmatprep.subr.mxu0 0.0
  %3463 = vmatpush1.msra.mxu0 %v3456
  %3464 = vmatprep.subr.mxu0 0.0
  %3465 = vmatpush1.msra.mxu0 %v3457
  %3466 = vmatprep.subr.mxu0 0.0
  %3467 = vmatpush1.msra.mxu0 %v3458
  %3468 = vmatprep.subr.mxu0 0.0
  %3469 = vmatpush1.msra.mxu0 %v3459
  %3470 = vmatprep.subr.mxu0 0.0
  %3471 = vmatpush1.msra.mxu0 0.0
  %3472 = vmatprep.subr.mxu0 0.0
  %3473 = vmatpush1.msra.mxu0 0.0
  %3474 = vmatprep.subr.mxu0 0.0
  %3475 = vmatpush1.msra.mxu0 0.0
  %3476 = vmatprep.subr.mxu0 0.0
  %3477 = vmatpush1.msra.mxu0 0.0
  %3478 = vmatprep.subr.mxu0 0.0
  %3479 = vmatpush1.msra.mxu0 0.0
  %3480 = vmatprep.subr.mxu0 0.0
  %3481 = vmatpush1.msra.mxu0 0.0
  %3482 = vmatprep.subr.mxu0 0.0
  %3483 = vmatpush1.msra.mxu0 0.0
  %3484 = vmatprep.subr.mxu0 0.0
  %3485 = vmatpush1.msra.mxu0 0.0
  %3486 = vmatprep.subr.mxu0 0.0
  %3487 = vmatpush1.msra.mxu0 0.0
  %3488 = vmatprep.subr.mxu0 0.0
  %3489 = vmatpush1.msra.mxu0 0.0
  %3490 = vmatprep.subr.mxu0 0.0
  %3491 = vmatpush1.msra.mxu0 0.0
  %3492 = vmatprep.subr.mxu0 0.0
  %3493 = vmatpush1.msra.mxu0 0.0
  %3494 = vmatprep.subr.mxu0 0.0
  %3495 = vmatpush1.msra.mxu0 0.0
  %3496 = vmatprep.subr.mxu0 0.0
  %3497 = vmatpush1.msra.mxu0 0.0
  %3498 = vmatprep.subr.mxu0 0.0
  %3499 = vmatpush1.msra.mxu0 0.0
  %3500 = vmatprep.subr.mxu0 0.0
  %3501 = vmatpush1.msra.mxu0 0.0
  %3502 = vmatprep.subr.mxu0 0.0
  %3503 = vmatpush1.msra.mxu0 0.0
  %3504 = vmatprep.subr.mxu0 0.0
  %3505 = vmatpush1.msra.mxu0 0.0
  %3506 = vmatprep.subr.mxu0 0.0
  %3507 = vmatpush1.msra.mxu0 0.0
  %3508 = vmatprep.subr.mxu0 0.0
  %3509 = vmatpush1.msra.mxu0 0.0
  %3510 = vmatprep.subr.mxu0 0.0
  %3511 = vmatpush1.msra.mxu0 0.0
  %3512 = vmatprep.subr.mxu0 0.0
  %3513 = vmatpush1.msra.mxu0 0.0
  %3514 = vmatprep.subr.mxu0 0.0
  %3515 = vmatpush1.msra.mxu0 0.0
  %3516 = vmatprep.subr.mxu0 0.0
  %3517 = vmatpush1.msra.mxu0 0.0
  %3518 = vmatprep.subr.mxu0 0.0
  %3519 = vmatpush1.msra.mxu0 0.0
  %3520 = vmatprep.subr.mxu0 0.0
  %3521 = vmatpush1.msra.mxu0 0.0
  %3522 = vmatprep.subr.mxu0 0.0
  %3523 = vmatpush1.msra.mxu0 0.0
  %3524 = vmatprep.subr.mxu0 0.0
  %3525 = vmatpush1.msra.mxu0 0.0
  %3526 = vmatprep.mubr.f32.mxu0 0.0
  %3527 = vmatmul.mubr.f32.gmra.mrb[0].mxu0 %v3460
  %v3528 = vpop.f32.mrb[0].mxu0
  %v3529 = vadd.f32 0.0, %v3528
  %v3530 = vpop.f32.mrb[0].mxu0
  %3531 = vdwg.mxu0
  %v3532 = vadd.f32 %v3455, %v3529
  %v3533 = vxor.u32 %v3532, 2147483648
  %v3534 = vmul.f32 %v3533, 1.442695
  %v3535 = vpow.pop %v3534
  %v3536 = vadd.f32 %v3535, 1.0
  %v3537 = vrcp.pop %v3536
  %v3538 = vmul.f32 1.0, %v3537
  %v3539 = vtanh.pop %v3532
  %v3540 = vmul.f32 %v3538, %v3334
  %3542 = vrot.lane.b32.xlu0 %v3539, 64
  %v3543 = vpop.permute.xlu0 %3542
  %v3545 = vmul.f32 %v3538, %v3543
  %3547 = vrot.lane.b32.xlu0 %v3545, 32
  %v3548 = vpop.permute.xlu0 %3547
  %v3550 = vadd.f32 %v3540, %v3548
  %v3551 = vtanh.pop %v3550
  %3553 = vrot.lane.b32.xlu0 %v3551, 64
  %v3554 = vpop.permute.xlu0 %3553
  %v3556 = vmul.f32 %v3538, %v3554
  %3558 = vrot.lane.b32.xlu0 %v3556, 32
  %v3559 = vpop.permute.xlu0 %3558
  %s3561 = scalar_lea.vmem %s12, 6
  %3562 = vst.msk [vmem:[%s3561] sm:$0x3] %vm2908, %v3559
  %v3563 = vld [vmem:[%s1774] sm:$0x3]
  %v3564 = vld [vmem:[%s11] sm:$0xff]
  %v3565 = vld [vmem:[%s11 + $0x8] sm:$0xff]
  %v3566 = vld [vmem:[%s11 + $0x10] sm:$0xff]
  %v3567 = vld [vmem:[%s11 + $0x18] sm:$0xff]
  %v3568 = vsel %vm111, %v3451, 0
  %3570 = vmatprep.subr.mxu0 0.0
  %3571 = vmatpush1.msra.mxu0 %v3564
  %3572 = vmatprep.subr.mxu0 0.0
  %3573 = vmatpush1.msra.mxu0 %v3565
  %3574 = vmatprep.subr.mxu0 0.0
  %3575 = vmatpush1.msra.mxu0 %v3566
  %3576 = vmatprep.subr.mxu0 0.0
  %3577 = vmatpush1.msra.mxu0 %v3567
  %3578 = vmatprep.subr.mxu0 0.0
  %3579 = vmatpush1.msra.mxu0 0.0
  %3580 = vmatprep.subr.mxu0 0.0
  %3581 = vmatpush1.msra.mxu0 0.0
  %3582 = vmatprep.subr.mxu0 0.0
  %3583 = vmatpush1.msra.mxu0 0.0
  %3584 = vmatprep.subr.mxu0 0.0
  %3585 = vmatpush1.msra.mxu0 0.0
  %3586 = vmatprep.subr.mxu0 0.0
  %3587 = vmatpush1.msra.mxu0 0.0
  %3588 = vmatprep.subr.mxu0 0.0
  %3589 = vmatpush1.msra.mxu0 0.0
  %3590 = vmatprep.subr.mxu0 0.0
  %3591 = vmatpush1.msra.mxu0 0.0
  %3592 = vmatprep.subr.mxu0 0.0
  %3593 = vmatpush1.msra.mxu0 0.0
  %3594 = vmatprep.subr.mxu0 0.0
  %3595 = vmatpush1.msra.mxu0 0.0
  %3596 = vmatprep.subr.mxu0 0.0
  %3597 = vmatpush1.msra.mxu0 0.0
  %3598 = vmatprep.subr.mxu0 0.0
  %3599 = vmatpush1.msra.mxu0 0.0
  %3600 = vmatprep.subr.mxu0 0.0
  %3601 = vmatpush1.msra.mxu0 0.0
  %3602 = vmatprep.subr.mxu0 0.0
  %3603 = vmatpush1.msra.mxu0 0.0
  %3604 = vmatprep.subr.mxu0 0.0
  %3605 = vmatpush1.msra.mxu0 0.0
  %3606 = vmatprep.subr.mxu0 0.0
  %3607 = vmatpush1.msra.mxu0 0.0
  %3608 = vmatprep.subr.mxu0 0.0
  %3609 = vmatpush1.msra.mxu0 0.0
  %3610 = vmatprep.subr.mxu0 0.0
  %3611 = vmatpush1.msra.mxu0 0.0
  %3612 = vmatprep.subr.mxu0 0.0
  %3613 = vmatpush1.msra.mxu0 0.0
  %3614 = vmatprep.subr.mxu0 0.0
  %3615 = vmatpush1.msra.mxu0 0.0
  %3616 = vmatprep.subr.mxu0 0.0
  %3617 = vmatpush1.msra.mxu0 0.0
  %3618 = vmatprep.subr.mxu0 0.0
  %3619 = vmatpush1.msra.mxu0 0.0
  %3620 = vmatprep.subr.mxu0 0.0
  %3621 = vmatpush1.msra.mxu0 0.0
  %3622 = vmatprep.subr.mxu0 0.0
  %3623 = vmatpush1.msra.mxu0 0.0
  %3624 = vmatprep.subr.mxu0 0.0
  %3625 = vmatpush1.msra.mxu0 0.0
  %3626 = vmatprep.subr.mxu0 0.0
  %3627 = vmatpush1.msra.mxu0 0.0
  %3628 = vmatprep.subr.mxu0 0.0
  %3629 = vmatpush1.msra.mxu0 0.0
  %3630 = vmatprep.subr.mxu0 0.0
  %3631 = vmatpush1.msra.mxu0 0.0
  %3632 = vmatprep.subr.mxu0 0.0
  %3633 = vmatpush1.msra.mxu0 0.0
  %3634 = vmatprep.mubr.f32.mxu0 0.0
  %3635 = vmatmul.mubr.f32.gmra.mrb[0].mxu0 %v3568
  %v3636 = vpop.f32.mrb[0].mxu0
  %v3637 = vadd.f32 0.0, %v3636
  %v3638 = vpop.f32.mrb[0].mxu0
  %3639 = vdwg.mxu0
  %v3640 = vadd.f32 %v3563, %v3637
  %v3641 = vxor.u32 %v3640, 2147483648
  %v3642 = vmul.f32 %v3641, 1.442695
  %v3643 = vpow.pop %v3642
  %v3644 = vadd.f32 %v3643, 1.0
  %v3645 = vrcp.pop %v3644
  %v3646 = vmul.f32 1.0, %v3645
  %v3647 = vtanh.pop %v3640
  %v3648 = vmul.f32 %v3646, %v3442
  %3650 = vrot.lane.b32.xlu0 %v3647, 64
  %v3651 = vpop.permute.xlu0 %3650
  %v3653 = vmul.f32 %v3646, %v3651
  %3655 = vrot.lane.b32.xlu0 %v3653, 32
  %v3656 = vpop.permute.xlu0 %3655
  %v3658 = vadd.f32 %v3648, %v3656
  %v3659 = vtanh.pop %v3658
  %3661 = vrot.lane.b32.xlu0 %v3659, 64
  %v3662 = vpop.permute.xlu0 %3661
  %v3664 = vmul.f32 %v3646, %v3662
  %3666 = vrot.lane.b32.xlu0 %v3664, 32
  %v3667 = vpop.permute.xlu0 %3666
  %s3669 = scalar_lea.vmem %s98, 8
  %3670 = vst.msk [vmem:[%s3669] sm:$0x3] %vm2908, %v3667
  %v3671 = vld [vmem:[%s1606] sm:$0x3]
  %v3672 = vld [vmem:[%s10] sm:$0xff]
  %v3673 = vld [vmem:[%s10 + $0x8] sm:$0xff]
  %v3674 = vld [vmem:[%s10 + $0x10] sm:$0xff]
  %v3675 = vld [vmem:[%s10 + $0x18] sm:$0xff]
  %v3676 = vsel %vm111, %v3559, 0
  %3678 = vmatprep.subr.mxu0 0.0
  %3679 = vmatpush1.msra.mxu0 %v3672
  %3680 = vmatprep.subr.mxu0 0.0
  %3681 = vmatpush1.msra.mxu0 %v3673
  %3682 = vmatprep.subr.mxu0 0.0
  %3683 = vmatpush1.msra.mxu0 %v3674
  %3684 = vmatprep.subr.mxu0 0.0
  %3685 = vmatpush1.msra.mxu0 %v3675
  %3686 = vmatprep.subr.mxu0 0.0
  %3687 = vmatpush1.msra.mxu0 0.0
  %3688 = vmatprep.subr.mxu0 0.0
  %3689 = vmatpush1.msra.mxu0 0.0
  %3690 = vmatprep.subr.mxu0 0.0
  %3691 = vmatpush1.msra.mxu0 0.0
  %3692 = vmatprep.subr.mxu0 0.0
  %3693 = vmatpush1.msra.mxu0 0.0
  %3694 = vmatprep.subr.mxu0 0.0
  %3695 = vmatpush1.msra.mxu0 0.0
  %3696 = vmatprep.subr.mxu0 0.0
  %3697 = vmatpush1.msra.mxu0 0.0
  %3698 = vmatprep.subr.mxu0 0.0
  %3699 = vmatpush1.msra.mxu0 0.0
  %3700 = vmatprep.subr.mxu0 0.0
  %3701 = vmatpush1.msra.mxu0 0.0
  %3702 = vmatprep.subr.mxu0 0.0
  %3703 = vmatpush1.msra.mxu0 0.0
  %3704 = vmatprep.subr.mxu0 0.0
  %3705 = vmatpush1.msra.mxu0 0.0
  %3706 = vmatprep.subr.mxu0 0.0
  %3707 = vmatpush1.msra.mxu0 0.0
  %3708 = vmatprep.subr.mxu0 0.0
  %3709 = vmatpush1.msra.mxu0 0.0
  %3710 = vmatprep.subr.mxu0 0.0
  %3711 = vmatpush1.msra.mxu0 0.0
  %3712 = vmatprep.subr.mxu0 0.0
  %3713 = vmatpush1.msra.mxu0 0.0
  %3714 = vmatprep.subr.mxu0 0.0
  %3715 = vmatpush1.msra.mxu0 0.0
  %3716 = vmatprep.subr.mxu0 0.0
  %3717 = vmatpush1.msra.mxu0 0.0
  %3718 = vmatprep.subr.mxu0 0.0
  %3719 = vmatpush1.msra.mxu0 0.0
  %3720 = vmatprep.subr.mxu0 0.0
  %3721 = vmatpush1.msra.mxu0 0.0
  %3722 = vmatprep.subr.mxu0 0.0
  %3723 = vmatpush1.msra.mxu0 0.0
  %3724 = vmatprep.subr.mxu0 0.0
  %3725 = vmatpush1.msra.mxu0 0.0
  %3726 = vmatprep.subr.mxu0 0.0
  %3727 = vmatpush1.msra.mxu0 0.0
  %3728 = vmatprep.subr.mxu0 0.0
  %3729 = vmatpush1.msra.mxu0 0.0
  %3730 = vmatprep.subr.mxu0 0.0
  %3731 = vmatpush1.msra.mxu0 0.0
  %3732 = vmatprep.subr.mxu0 0.0
  %3733 = vmatpush1.msra.mxu0 0.0
  %3734 = vmatprep.subr.mxu0 0.0
  %3735 = vmatpush1.msra.mxu0 0.0
  %3736 = vmatprep.subr.mxu0 0.0
  %3737 = vmatpush1.msra.mxu0 0.0
  %3738 = vmatprep.subr.mxu0 0.0
  %3739 = vmatpush1.msra.mxu0 0.0
  %3740 = vmatprep.subr.mxu0 0.0
  %3741 = vmatpush1.msra.mxu0 0.0
  %3742 = vmatprep.mubr.f32.mxu0 0.0
  %3743 = vmatmul.mubr.f32.gmra.mrb[0].mxu0 %v3676
  %v3744 = vpop.f32.mrb[0].mxu0
  %v3745 = vadd.f32 0.0, %v3744
  %v3746 = vpop.f32.mrb[0].mxu0
  %3747 = vdwg.mxu0
  %v3748 = vadd.f32 %v3671, %v3745
  %v3749 = vxor.u32 %v3748, 2147483648
  %v3750 = vmul.f32 %v3749, 1.442695
  %v3751 = vpow.pop %v3750
  %v3752 = vadd.f32 %v3751, 1.0
  %v3753 = vrcp.pop %v3752
  %v3754 = vmul.f32 1.0, %v3753
  %v3755 = vtanh.pop %v3748
  %v3756 = vmul.f32 %v3754, %v3550
  %3758 = vrot.lane.b32.xlu0 %v3755, 64
  %v3759 = vpop.permute.xlu0 %3758
  %v3761 = vmul.f32 %v3754, %v3759
  %3763 = vrot.lane.b32.xlu0 %v3761, 32
  %v3764 = vpop.permute.xlu0 %3763
  %v3766 = vadd.f32 %v3756, %v3764
  %v3767 = vtanh.pop %v3766
  %3769 = vrot.lane.b32.xlu0 %v3767, 64
  %v3770 = vpop.permute.xlu0 %3769
  %v3772 = vmul.f32 %v3754, %v3770
  %3774 = vrot.lane.b32.xlu0 %v3772, 32
  %v3775 = vpop.permute.xlu0 %3774
  %s3777 = scalar_lea.vmem %s12, 8
  %3778 = vst.msk [vmem:[%s3777] sm:$0x3] %vm2908, %v3775
  %v3779 = vld [vmem:[%s1438] sm:$0x3]
  %v3780 = vld [vmem:[%s11] sm:$0xff]
  %v3781 = vld [vmem:[%s11 + $0x8] sm:$0xff]
  %v3782 = vld [vmem:[%s11 + $0x10] sm:$0xff]
  %v3783 = vld [vmem:[%s11 + $0x18] sm:$0xff]
  %v3784 = vsel %vm111, %v3667, 0
  %3786 = vmatprep.subr.mxu0 0.0
  %3787 = vmatpush1.msra.mxu0 %v3780
  %3788 = vmatprep.subr.mxu0 0.0
  %3789 = vmatpush1.msra.mxu0 %v3781
  %3790 = vmatprep.subr.mxu0 0.0
  %3791 = vmatpush1.msra.mxu0 %v3782
  %3792 = vmatprep.subr.mxu0 0.0
  %3793 = vmatpush1.msra.mxu0 %v3783
  %3794 = vmatprep.subr.mxu0 0.0
  %3795 = vmatpush1.msra.mxu0 0.0
  %3796 = vmatprep.subr.mxu0 0.0
  %3797 = vmatpush1.msra.mxu0 0.0
  %3798 = vmatprep.subr.mxu0 0.0
  %3799 = vmatpush1.msra.mxu0 0.0
  %3800 = vmatprep.subr.mxu0 0.0
  %3801 = vmatpush1.msra.mxu0 0.0
  %3802 = vmatprep.subr.mxu0 0.0
  %3803 = vmatpush1.msra.mxu0 0.0
  %3804 = vmatprep.subr.mxu0 0.0
  %3805 = vmatpush1.msra.mxu0 0.0
  %3806 = vmatprep.subr.mxu0 0.0
  %3807 = vmatpush1.msra.mxu0 0.0
  %3808 = vmatprep.subr.mxu0 0.0
  %3809 = vmatpush1.msra.mxu0 0.0
  %3810 = vmatprep.subr.mxu0 0.0
  %3811 = vmatpush1.msra.mxu0 0.0
  %3812 = vmatprep.subr.mxu0 0.0
  %3813 = vmatpush1.msra.mxu0 0.0
  %3814 = vmatprep.subr.mxu0 0.0
  %3815 = vmatpush1.msra.mxu0 0.0
  %3816 = vmatprep.subr.mxu0 0.0
  %3817 = vmatpush1.msra.mxu0 0.0
  %3818 = vmatprep.subr.mxu0 0.0
  %3819 = vmatpush1.msra.mxu0 0.0
  %3820 = vmatprep.subr.mxu0 0.0
  %3821 = vmatpush1.msra.mxu0 0.0
  %3822 = vmatprep.subr.mxu0 0.0
  %3823 = vmatpush1.msra.mxu0 0.0
  %3824 = vmatprep.subr.mxu0 0.0
  %3825 = vmatpush1.msra.mxu0 0.0
  %3826 = vmatprep.subr.mxu0 0.0
  %3827 = vmatpush1.msra.mxu0 0.0
  %3828 = vmatprep.subr.mxu0 0.0
  %3829 = vmatpush1.msra.mxu0 0.0
  %3830 = vmatprep.subr.mxu0 0.0
  %3831 = vmatpush1.msra.mxu0 0.0
  %3832 = vmatprep.subr.mxu0 0.0
  %3833 = vmatpush1.msra.mxu0 0.0
  %3834 = vmatprep.subr.mxu0 0.0
  %3835 = vmatpush1.msra.mxu0 0.0
  %3836 = vmatprep.subr.mxu0 0.0
  %3837 = vmatpush1.msra.mxu0 0.0
  %3838 = vmatprep.subr.mxu0 0.0
  %3839 = vmatpush1.msra.mxu0 0.0
  %3840 = vmatprep.subr.mxu0 0.0
  %3841 = vmatpush1.msra.mxu0 0.0
  %3842 = vmatprep.subr.mxu0 0.0
  %3843 = vmatpush1.msra.mxu0 0.0
  %3844 = vmatprep.subr.mxu0 0.0
  %3845 = vmatpush1.msra.mxu0 0.0
  %3846 = vmatprep.subr.mxu0 0.0
  %3847 = vmatpush1.msra.mxu0 0.0
  %3848 = vmatprep.subr.mxu0 0.0
  %3849 = vmatpush1.msra.mxu0 0.0
  %3850 = vmatprep.mubr.f32.mxu0 0.0
  %3851 = vmatmul.mubr.f32.gmra.mrb[0].mxu0 %v3784
  %v3852 = vpop.f32.mrb[0].mxu0
  %v3853 = vadd.f32 0.0, %v3852
  %v3854 = vpop.f32.mrb[0].mxu0
  %3855 = vdwg.mxu0
  %v3856 = vadd.f32 %v3779, %v3853
  %v3857 = vxor.u32 %v3856, 2147483648
  %v3858 = vmul.f32 %v3857, 1.442695
  %v3859 = vpow.pop %v3858
  %v3860 = vadd.f32 %v3859, 1.0
  %v3861 = vrcp.pop %v3860
  %v3862 = vmul.f32 1.0, %v3861
  %v3863 = vtanh.pop %v3856
  %v3864 = vmul.f32 %v3862, %v3658
  %3866 = vrot.lane.b32.xlu0 %v3863, 64
  %v3867 = vpop.permute.xlu0 %3866
  %v3869 = vmul.f32 %v3862, %v3867
  %3871 = vrot.lane.b32.xlu0 %v3869, 32
  %v3872 = vpop.permute.xlu0 %3871
  %v3874 = vadd.f32 %v3864, %v3872
  %v3875 = vtanh.pop %v3874
  %3877 = vrot.lane.b32.xlu0 %v3875, 64
  %v3878 = vpop.permute.xlu0 %3877
  %v3880 = vmul.f32 %v3862, %v3878
  %3882 = vrot.lane.b32.xlu0 %v3880, 32
  %v3883 = vpop.permute.xlu0 %3882
  %s3885 = scalar_lea.vmem %s98, 6
  %3886 = vst.msk [vmem:[%s3885] sm:$0x3] %vm2908, %v3883
  %v3887 = vld [vmem:[%s1942] sm:$0x3]
  %v3888 = vld [vmem:[%s10] sm:$0xff]
  %v3889 = vld [vmem:[%s10 + $0x8] sm:$0xff]
  %v3890 = vld [vmem:[%s10 + $0x10] sm:$0xff]
  %v3891 = vld [vmem:[%s10 + $0x18] sm:$0xff]
  %v3892 = vsel %vm111, %v3775, 0
  %3894 = vmatprep.subr.mxu0 0.0
  %3895 = vmatpush1.msra.mxu0 %v3888
  %3896 = vmatprep.subr.mxu0 0.0
  %3897 = vmatpush1.msra.mxu0 %v3889
  %3898 = vmatprep.subr.mxu0 0.0
  %3899 = vmatpush1.msra.mxu0 %v3890
  %3900 = vmatprep.subr.mxu0 0.0
  %3901 = vmatpush1.msra.mxu0 %v3891
  %3902 = vmatprep.subr.mxu0 0.0
  %3903 = vmatpush1.msra.mxu0 0.0
  %3904 = vmatprep.subr.mxu0 0.0
  %3905 = vmatpush1.msra.mxu0 0.0
  %3906 = vmatprep.subr.mxu0 0.0
  %3907 = vmatpush1.msra.mxu0 0.0
  %3908 = vmatprep.subr.mxu0 0.0
  %3909 = vmatpush1.msra.mxu0 0.0
  %3910 = vmatprep.subr.mxu0 0.0
  %3911 = vmatpush1.msra.mxu0 0.0
  %3912 = vmatprep.subr.mxu0 0.0
  %3913 = vmatpush1.msra.mxu0 0.0
  %3914 = vmatprep.subr.mxu0 0.0
  %3915 = vmatpush1.msra.mxu0 0.0
  %3916 = vmatprep.subr.mxu0 0.0
  %3917 = vmatpush1.msra.mxu0 0.0
  %3918 = vmatprep.subr.mxu0 0.0
  %3919 = vmatpush1.msra.mxu0 0.0
  %3920 = vmatprep.subr.mxu0 0.0
  %3921 = vmatpush1.msra.mxu0 0.0
  %3922 = vmatprep.subr.mxu0 0.0
  %3923 = vmatpush1.msra.mxu0 0.0
  %3924 = vmatprep.subr.mxu0 0.0
  %3925 = vmatpush1.msra.mxu0 0.0
  %3926 = vmatprep.subr.mxu0 0.0
  %3927 = vmatpush1.msra.mxu0 0.0
  %3928 = vmatprep.subr.mxu0 0.0
  %3929 = vmatpush1.msra.mxu0 0.0
  %3930 = vmatprep.subr.mxu0 0.0
  %3931 = vmatpush1.msra.mxu0 0.0
  %3932 = vmatprep.subr.mxu0 0.0
  %3933 = vmatpush1.msra.mxu0 0.0
  %3934 = vmatprep.subr.mxu0 0.0
  %3935 = vmatpush1.msra.mxu0 0.0
  %3936 = vmatprep.subr.mxu0 0.0
  %3937 = vmatpush1.msra.mxu0 0.0
  %3938 = vmatprep.subr.mxu0 0.0
  %3939 = vmatpush1.msra.mxu0 0.0
  %3940 = vmatprep.subr.mxu0 0.0
  %3941 = vmatpush1.msra.mxu0 0.0
  %3942 = vmatprep.subr.mxu0 0.0
  %3943 = vmatpush1.msra.mxu0 0.0
  %3944 = vmatprep.subr.mxu0 0.0
  %3945 = vmatpush1.msra.mxu0 0.0
  %3946 = vmatprep.subr.mxu0 0.0
  %3947 = vmatpush1.msra.mxu0 0.0
  %3948 = vmatprep.subr.mxu0 0.0
  %3949 = vmatpush1.msra.mxu0 0.0
  %3950 = vmatprep.subr.mxu0 0.0
  %3951 = vmatpush1.msra.mxu0 0.0
  %3952 = vmatprep.subr.mxu0 0.0
  %3953 = vmatpush1.msra.mxu0 0.0
  %3954 = vmatprep.subr.mxu0 0.0
  %3955 = vmatpush1.msra.mxu0 0.0
  %3956 = vmatprep.subr.mxu0 0.0
  %3957 = vmatpush1.msra.mxu0 0.0
  %3958 = vmatprep.mubr.f32.mxu0 0.0
  %3959 = vmatmul.mubr.f32.gmra.mrb[0].mxu0 %v3892
  %v3960 = vpop.f32.mrb[0].mxu0
  %v3961 = vadd.f32 0.0, %v3960
  %v3962 = vpop.f32.mrb[0].mxu0
  %3963 = vdwg.mxu0
  %v3964 = vadd.f32 %v3887, %v3961
  %v3965 = vxor.u32 %v3964, 2147483648
  %v3966 = vmul.f32 %v3965, 1.442695
  %v3967 = vpow.pop %v3966
  %v3968 = vadd.f32 %v3967, 1.0
  %v3969 = vrcp.pop %v3968
  %v3970 = vmul.f32 1.0, %v3969
  %v3971 = vtanh.pop %v3964
  %v3972 = vmul.f32 %v3970, %v3766
  %3974 = vrot.lane.b32.xlu0 %v3971, 64
  %v3975 = vpop.permute.xlu0 %3974
  %v3977 = vmul.f32 %v3970, %v3975
  %3979 = vrot.lane.b32.xlu0 %v3977, 32
  %v3980 = vpop.permute.xlu0 %3979
  %v3982 = vadd.f32 %v3972, %v3980
  %v3983 = vtanh.pop %v3982
  %3985 = vrot.lane.b32.xlu0 %v3983, 64
  %v3986 = vpop.permute.xlu0 %3985
  %v3988 = vmul.f32 %v3970, %v3986
  %3990 = vrot.lane.b32.xlu0 %v3988, 32
  %v3991 = vpop.permute.xlu0 %3990
  %s3993 = scalar_lea.vmem %s12, 10
  %3994 = vst.msk [vmem:[%s3993] sm:$0x3] %vm2908, %v3991
  %v3995 = vld [vmem:[%s1102] sm:$0x3]
  %v3996 = vld [vmem:[%s11] sm:$0xff]
  %v3997 = vld [vmem:[%s11 + $0x8] sm:$0xff]
  %v3998 = vld [vmem:[%s11 + $0x10] sm:$0xff]
  %v3999 = vld [vmem:[%s11 + $0x18] sm:$0xff]
  %v4000 = vsel %vm111, %v3883, 0
  %4002 = vmatprep.subr.mxu0 0.0
  %4003 = vmatpush1.msra.mxu0 %v3996
  %4004 = vmatprep.subr.mxu0 0.0
  %4005 = vmatpush1.msra.mxu0 %v3997
  %4006 = vmatprep.subr.mxu0 0.0
  %4007 = vmatpush1.msra.mxu0 %v3998
  %4008 = vmatprep.subr.mxu0 0.0
  %4009 = vmatpush1.msra.mxu0 %v3999
  %4010 = vmatprep.subr.mxu0 0.0
  %4011 = vmatpush1.msra.mxu0 0.0
  %4012 = vmatprep.subr.mxu0 0.0
  %4013 = vmatpush1.msra.mxu0 0.0
  %4014 = vmatprep.subr.mxu0 0.0
  %4015 = vmatpush1.msra.mxu0 0.0
  %4016 = vmatprep.subr.mxu0 0.0
  %4017 = vmatpush1.msra.mxu0 0.0
  %4018 = vmatprep.subr.mxu0 0.0
  %4019 = vmatpush1.msra.mxu0 0.0
  %4020 = vmatprep.subr.mxu0 0.0
  %4021 = vmatpush1.msra.mxu0 0.0
  %4022 = vmatprep.subr.mxu0 0.0
  %4023 = vmatpush1.msra.mxu0 0.0
  %4024 = vmatprep.subr.mxu0 0.0
  %4025 = vmatpush1.msra.mxu0 0.0
  %4026 = vmatprep.subr.mxu0 0.0
  %4027 = vmatpush1.msra.mxu0 0.0
  %4028 = vmatprep.subr.mxu0 0.0
  %4029 = vmatpush1.msra.mxu0 0.0
  %4030 = vmatprep.subr.mxu0 0.0
  %4031 = vmatpush1.msra.mxu0 0.0
  %4032 = vmatprep.subr.mxu0 0.0
  %4033 = vmatpush1.msra.mxu0 0.0
  %4034 = vmatprep.subr.mxu0 0.0
  %4035 = vmatpush1.msra.mxu0 0.0
  %4036 = vmatprep.subr.mxu0 0.0
  %4037 = vmatpush1.msra.mxu0 0.0
  %4038 = vmatprep.subr.mxu0 0.0
  %4039 = vmatpush1.msra.mxu0 0.0
  %4040 = vmatprep.subr.mxu0 0.0
  %4041 = vmatpush1.msra.mxu0 0.0
  %4042 = vmatprep.subr.mxu0 0.0
  %4043 = vmatpush1.msra.mxu0 0.0
  %4044 = vmatprep.subr.mxu0 0.0
  %4045 = vmatpush1.msra.mxu0 0.0
  %4046 = vmatprep.subr.mxu0 0.0
  %4047 = vmatpush1.msra.mxu0 0.0
  %4048 = vmatprep.subr.mxu0 0.0
  %4049 = vmatpush1.msra.mxu0 0.0
  %4050 = vmatprep.subr.mxu0 0.0
  %4051 = vmatpush1.msra.mxu0 0.0
  %4052 = vmatprep.subr.mxu0 0.0
  %4053 = vmatpush1.msra.mxu0 0.0
  %4054 = vmatprep.subr.mxu0 0.0
  %4055 = vmatpush1.msra.mxu0 0.0
  %4056 = vmatprep.subr.mxu0 0.0
  %4057 = vmatpush1.msra.mxu0 0.0
  %4058 = vmatprep.subr.mxu0 0.0
  %4059 = vmatpush1.msra.mxu0 0.0
  %4060 = vmatprep.subr.mxu0 0.0
  %4061 = vmatpush1.msra.mxu0 0.0
  %4062 = vmatprep.subr.mxu0 0.0
  %4063 = vmatpush1.msra.mxu0 0.0
  %4064 = vmatprep.subr.mxu0 0.0
  %4065 = vmatpush1.msra.mxu0 0.0
  %4066 = vmatprep.mubr.f32.mxu0 0.0
  %4067 = vmatmul.mubr.f32.gmra.mrb[0].mxu0 %v4000
  %v4068 = vpop.f32.mrb[0].mxu0
  %v4069 = vadd.f32 0.0, %v4068
  %v4070 = vpop.f32.mrb[0].mxu0
  %4071 = vdwg.mxu0
  %v4072 = vadd.f32 %v3995, %v4069
  %v4073 = vxor.u32 %v4072, 2147483648
  %v4074 = vmul.f32 %v4073, 1.442695
  %v4075 = vpow.pop %v4074
  %v4076 = vadd.f32 %v4075, 1.0
  %v4077 = vrcp.pop %v4076
  %v4078 = vmul.f32 1.0, %v4077
  %v4079 = vtanh.pop %v4072
  %v4080 = vmul.f32 %v4078, %v3874
  %4082 = vrot.lane.b32.xlu0 %v4079, 64
  %v4083 = vpop.permute.xlu0 %4082
  %v4085 = vmul.f32 %v4078, %v4083
  %4087 = vrot.lane.b32.xlu0 %v4085, 32
  %v4088 = vpop.permute.xlu0 %4087
  %v4090 = vadd.f32 %v4080, %v4088
  %v4091 = vtanh.pop %v4090
  %4093 = vrot.lane.b32.xlu0 %v4091, 64
  %v4094 = vpop.permute.xlu0 %4093
  %v4096 = vmul.f32 %v4078, %v4094
  %4098 = vrot.lane.b32.xlu0 %v4096, 32
  %v4099 = vpop.permute.xlu0 %4098
  %s4101 = scalar_lea.vmem %s98, 4
  %4102 = vst.msk [vmem:[%s4101] sm:$0x3] %vm2908, %v4099
  %v4103 = vld [vmem:[%s2278] sm:$0x3]
  %v4104 = vld [vmem:[%s10] sm:$0xff]
  %v4105 = vld [vmem:[%s10 + $0x8] sm:$0xff]
  %v4106 = vld [vmem:[%s10 + $0x10] sm:$0xff]
  %v4107 = vld [vmem:[%s10 + $0x18] sm:$0xff]
  %v4108 = vsel %vm111, %v3991, 0
  %4110 = vmatprep.subr.mxu0 0.0
  %4111 = vmatpush1.msra.mxu0 %v4104
  %4112 = vmatprep.subr.mxu0 0.0
  %4113 = vmatpush1.msra.mxu0 %v4105
  %4114 = vmatprep.subr.mxu0 0.0
  %4115 = vmatpush1.msra.mxu0 %v4106
  %4116 = vmatprep.subr.mxu0 0.0
  %4117 = vmatpush1.msra.mxu0 %v4107
  %4118 = vmatprep.subr.mxu0 0.0
  %4119 = vmatpush1.msra.mxu0 0.0
  %4120 = vmatprep.subr.mxu0 0.0
  %4121 = vmatpush1.msra.mxu0 0.0
  %4122 = vmatprep.subr.mxu0 0.0
  %4123 = vmatpush1.msra.mxu0 0.0
  %4124 = vmatprep.subr.mxu0 0.0
  %4125 = vmatpush1.msra.mxu0 0.0
  %4126 = vmatprep.subr.mxu0 0.0
  %4127 = vmatpush1.msra.mxu0 0.0
  %4128 = vmatprep.subr.mxu0 0.0
  %4129 = vmatpush1.msra.mxu0 0.0
  %4130 = vmatprep.subr.mxu0 0.0
  %4131 = vmatpush1.msra.mxu0 0.0
  %4132 = vmatprep.subr.mxu0 0.0
  %4133 = vmatpush1.msra.mxu0 0.0
  %4134 = vmatprep.subr.mxu0 0.0
  %4135 = vmatpush1.msra.mxu0 0.0
  %4136 = vmatprep.subr.mxu0 0.0
  %4137 = vmatpush1.msra.mxu0 0.0
  %4138 = vmatprep.subr.mxu0 0.0
  %4139 = vmatpush1.msra.mxu0 0.0
  %4140 = vmatprep.subr.mxu0 0.0
  %4141 = vmatpush1.msra.mxu0 0.0
  %4142 = vmatprep.subr.mxu0 0.0
  %4143 = vmatpush1.msra.mxu0 0.0
  %4144 = vmatprep.subr.mxu0 0.0
  %4145 = vmatpush1.msra.mxu0 0.0
  %4146 = vmatprep.subr.mxu0 0.0
  %4147 = vmatpush1.msra.mxu0 0.0
  %4148 = vmatprep.subr.mxu0 0.0
  %4149 = vmatpush1.msra.mxu0 0.0
  %4150 = vmatprep.subr.mxu0 0.0
  %4151 = vmatpush1.msra.mxu0 0.0
  %4152 = vmatprep.subr.mxu0 0.0
  %4153 = vmatpush1.msra.mxu0 0.0
  %4154 = vmatprep.subr.mxu0 0.0
  %4155 = vmatpush1.msra.mxu0 0.0
  %4156 = vmatprep.subr.mxu0 0.0
  %4157 = vmatpush1.msra.mxu0 0.0
  %4158 = vmatprep.subr.mxu0 0.0
  %4159 = vmatpush1.msra.mxu0 0.0
  %4160 = vmatprep.subr.mxu0 0.0
  %4161 = vmatpush1.msra.mxu0 0.0
  %4162 = vmatprep.subr.mxu0 0.0
  %4163 = vmatpush1.msra.mxu0 0.0
  %4164 = vmatprep.subr.mxu0 0.0
  %4165 = vmatpush1.msra.mxu0 0.0
  %4166 = vmatprep.subr.mxu0 0.0
  %4167 = vmatpush1.msra.mxu0 0.0
  %4168 = vmatprep.subr.mxu0 0.0
  %4169 = vmatpush1.msra.mxu0 0.0
  %4170 = vmatprep.subr.mxu0 0.0
  %4171 = vmatpush1.msra.mxu0 0.0
  %4172 = vmatprep.subr.mxu0 0.0
  %4173 = vmatpush1.msra.mxu0 0.0
  %4174 = vmatprep.mubr.f32.mxu0 0.0
  %4175 = vmatmul.mubr.f32.gmra.mrb[0].mxu0 %v4108
  %v4176 = vpop.f32.mrb[0].mxu0
  %v4177 = vadd.f32 0.0, %v4176
  %v4178 = vpop.f32.mrb[0].mxu0
  %4179 = vdwg.mxu0
  %v4180 = vadd.f32 %v4103, %v4177
  %v4181 = vxor.u32 %v4180, 2147483648
  %v4182 = vmul.f32 %v4181, 1.442695
  %v4183 = vpow.pop %v4182
  %v4184 = vadd.f32 %v4183, 1.0
  %v4185 = vrcp.pop %v4184
  %v4186 = vmul.f32 1.0, %v4185
  %v4187 = vtanh.pop %v4180
  %v4188 = vmul.f32 %v4186, %v3982
  %4190 = vrot.lane.b32.xlu0 %v4187, 64
  %v4191 = vpop.permute.xlu0 %4190
  %v4193 = vmul.f32 %v4186, %v4191
  %4195 = vrot.lane.b32.xlu0 %v4193, 32
  %v4196 = vpop.permute.xlu0 %4195
  %v4198 = vadd.f32 %v4188, %v4196
  %v4199 = vtanh.pop %v4198
  %4201 = vrot.lane.b32.xlu0 %v4199, 64
  %v4202 = vpop.permute.xlu0 %4201
  %v4204 = vmul.f32 %v4186, %v4202
  %4206 = vrot.lane.b32.xlu0 %v4204, 32
  %v4207 = vpop.permute.xlu0 %4206
  %s4209 = scalar_lea.vmem %s12, 12
  %4210 = vst.msk [vmem:[%s4209] sm:$0x3] %vm2908, %v4207
  %v4211 = vld [vmem:[%s766] sm:$0x3]
  %v4212 = vld [vmem:[%s11] sm:$0xff]
  %v4213 = vld [vmem:[%s11 + $0x8] sm:$0xff]
  %v4214 = vld [vmem:[%s11 + $0x10] sm:$0xff]
  %v4215 = vld [vmem:[%s11 + $0x18] sm:$0xff]
  %v4216 = vsel %vm111, %v4099, 0
  %4218 = vmatprep.subr.mxu0 0.0
  %4219 = vmatpush1.msra.mxu0 %v4212
  %4220 = vmatprep.subr.mxu0 0.0
  %4221 = vmatpush1.msra.mxu0 %v4213
  %4222 = vmatprep.subr.mxu0 0.0
  %4223 = vmatpush1.msra.mxu0 %v4214
  %4224 = vmatprep.subr.mxu0 0.0
  %4225 = vmatpush1.msra.mxu0 %v4215
  %4226 = vmatprep.subr.mxu0 0.0
  %4227 = vmatpush1.msra.mxu0 0.0
  %4228 = vmatprep.subr.mxu0 0.0
  %4229 = vmatpush1.msra.mxu0 0.0
  %4230 = vmatprep.subr.mxu0 0.0
  %4231 = vmatpush1.msra.mxu0 0.0
  %4232 = vmatprep.subr.mxu0 0.0
  %4233 = vmatpush1.msra.mxu0 0.0
  %4234 = vmatprep.subr.mxu0 0.0
  %4235 = vmatpush1.msra.mxu0 0.0
  %4236 = vmatprep.subr.mxu0 0.0
  %4237 = vmatpush1.msra.mxu0 0.0
  %4238 = vmatprep.subr.mxu0 0.0
  %4239 = vmatpush1.msra.mxu0 0.0
  %4240 = vmatprep.subr.mxu0 0.0
  %4241 = vmatpush1.msra.mxu0 0.0
  %4242 = vmatprep.subr.mxu0 0.0
  %4243 = vmatpush1.msra.mxu0 0.0
  %4244 = vmatprep.subr.mxu0 0.0
  %4245 = vmatpush1.msra.mxu0 0.0
  %4246 = vmatprep.subr.mxu0 0.0
  %4247 = vmatpush1.msra.mxu0 0.0
  %4248 = vmatprep.subr.mxu0 0.0
  %4249 = vmatpush1.msra.mxu0 0.0
  %4250 = vmatprep.subr.mxu0 0.0
  %4251 = vmatpush1.msra.mxu0 0.0
  %4252 = vmatprep.subr.mxu0 0.0
  %4253 = vmatpush1.msra.mxu0 0.0
  %4254 = vmatprep.subr.mxu0 0.0
  %4255 = vmatpush1.msra.mxu0 0.0
  %4256 = vmatprep.subr.mxu0 0.0
  %4257 = vmatpush1.msra.mxu0 0.0
  %4258 = vmatprep.subr.mxu0 0.0
  %4259 = vmatpush1.msra.mxu0 0.0
  %4260 = vmatprep.subr.mxu0 0.0
  %4261 = vmatpush1.msra.mxu0 0.0
  %4262 = vmatprep.subr.mxu0 0.0
  %4263 = vmatpush1.msra.mxu0 0.0
  %4264 = vmatprep.subr.mxu0 0.0
  %4265 = vmatpush1.msra.mxu0 0.0
  %4266 = vmatprep.subr.mxu0 0.0
  %4267 = vmatpush1.msra.mxu0 0.0
  %4268 = vmatprep.subr.mxu0 0.0
  %4269 = vmatpush1.msra.mxu0 0.0
  %4270 = vmatprep.subr.mxu0 0.0
  %4271 = vmatpush1.msra.mxu0 0.0
  %4272 = vmatprep.subr.mxu0 0.0
  %4273 = vmatpush1.msra.mxu0 0.0
  %4274 = vmatprep.subr.mxu0 0.0
  %4275 = vmatpush1.msra.mxu0 0.0
  %4276 = vmatprep.subr.mxu0 0.0
  %4277 = vmatpush1.msra.mxu0 0.0
  %4278 = vmatprep.subr.mxu0 0.0
  %4279 = vmatpush1.msra.mxu0 0.0
  %4280 = vmatprep.subr.mxu0 0.0
  %4281 = vmatpush1.msra.mxu0 0.0
  %4282 = vmatprep.mubr.f32.mxu0 0.0
  %4283 = vmatmul.mubr.f32.gmra.mrb[0].mxu0 %v4216
  %v4284 = vpop.f32.mrb[0].mxu0
  %v4285 = vadd.f32 0.0, %v4284
  %v4286 = vpop.f32.mrb[0].mxu0
  %4287 = vdwg.mxu0
  %v4288 = vadd.f32 %v4211, %v4285
  %v4289 = vxor.u32 %v4288, 2147483648
  %v4290 = vmul.f32 %v4289, 1.442695
  %v4291 = vpow.pop %v4290
  %v4292 = vadd.f32 %v4291, 1.0
  %v4293 = vrcp.pop %v4292
  %v4294 = vmul.f32 1.0, %v4293
  %v4295 = vtanh.pop %v4288
  %v4296 = vmul.f32 %v4294, %v4090
  %4298 = vrot.lane.b32.xlu0 %v4295, 64
  %v4299 = vpop.permute.xlu0 %4298
  %v4301 = vmul.f32 %v4294, %v4299
  %4303 = vrot.lane.b32.xlu0 %v4301, 32
  %v4304 = vpop.permute.xlu0 %4303
  %v4306 = vadd.f32 %v4296, %v4304
  %v4307 = vtanh.pop %v4306
  %4309 = vrot.lane.b32.xlu0 %v4307, 64
  %v4310 = vpop.permute.xlu0 %4309
  %v4312 = vmul.f32 %v4294, %v4310
  %4314 = vrot.lane.b32.xlu0 %v4312, 32
  %v4315 = vpop.permute.xlu0 %4314
  %s4317 = scalar_lea.vmem %s98, 2
  %4318 = vst.msk [vmem:[%s4317] sm:$0x3] %vm2908, %v4315
  %v4319 = vld [vmem:[%s2614] sm:$0x3]
  %v4320 = vld [vmem:[%s10] sm:$0xff]
  %v4321 = vld [vmem:[%s10 + $0x8] sm:$0xff]
  %v4322 = vld [vmem:[%s10 + $0x10] sm:$0xff]
  %v4323 = vld [vmem:[%s10 + $0x18] sm:$0xff]
  %v4324 = vsel %vm111, %v4207, 0
  %4326 = vmatprep.subr.mxu0 0.0
  %4327 = vmatpush1.msra.mxu0 %v4320
  %4328 = vmatprep.subr.mxu0 0.0
  %4329 = vmatpush1.msra.mxu0 %v4321
  %4330 = vmatprep.subr.mxu0 0.0
  %4331 = vmatpush1.msra.mxu0 %v4322
  %4332 = vmatprep.subr.mxu0 0.0
  %4333 = vmatpush1.msra.mxu0 %v4323
  %4334 = vmatprep.subr.mxu0 0.0
  %4335 = vmatpush1.msra.mxu0 0.0
  %4336 = vmatprep.subr.mxu0 0.0
  %4337 = vmatpush1.msra.mxu0 0.0
  %4338 = vmatprep.subr.mxu0 0.0
  %4339 = vmatpush1.msra.mxu0 0.0
  %4340 = vmatprep.subr.mxu0 0.0
  %4341 = vmatpush1.msra.mxu0 0.0
  %4342 = vmatprep.subr.mxu0 0.0
  %4343 = vmatpush1.msra.mxu0 0.0
  %4344 = vmatprep.subr.mxu0 0.0
  %4345 = vmatpush1.msra.mxu0 0.0
  %4346 = vmatprep.subr.mxu0 0.0
  %4347 = vmatpush1.msra.mxu0 0.0
  %4348 = vmatprep.subr.mxu0 0.0
  %4349 = vmatpush1.msra.mxu0 0.0
  %4350 = vmatprep.subr.mxu0 0.0
  %4351 = vmatpush1.msra.mxu0 0.0
  %4352 = vmatprep.subr.mxu0 0.0
  %4353 = vmatpush1.msra.mxu0 0.0
  %4354 = vmatprep.subr.mxu0 0.0
  %4355 = vmatpush1.msra.mxu0 0.0
  %4356 = vmatprep.subr.mxu0 0.0
  %4357 = vmatpush1.msra.mxu0 0.0
  %4358 = vmatprep.subr.mxu0 0.0
  %4359 = vmatpush1.msra.mxu0 0.0
  %4360 = vmatprep.subr.mxu0 0.0
  %4361 = vmatpush1.msra.mxu0 0.0
  %4362 = vmatprep.subr.mxu0 0.0
  %4363 = vmatpush1.msra.mxu0 0.0
  %4364 = vmatprep.subr.mxu0 0.0
  %4365 = vmatpush1.msra.mxu0 0.0
  %4366 = vmatprep.subr.mxu0 0.0
  %4367 = vmatpush1.msra.mxu0 0.0
  %4368 = vmatprep.subr.mxu0 0.0
  %4369 = vmatpush1.msra.mxu0 0.0
  %4370 = vmatprep.subr.mxu0 0.0
  %4371 = vmatpush1.msra.mxu0 0.0
  %4372 = vmatprep.subr.mxu0 0.0
  %4373 = vmatpush1.msra.mxu0 0.0
  %4374 = vmatprep.subr.mxu0 0.0
  %4375 = vmatpush1.msra.mxu0 0.0
  %4376 = vmatprep.subr.mxu0 0.0
  %4377 = vmatpush1.msra.mxu0 0.0
  %4378 = vmatprep.subr.mxu0 0.0
  %4379 = vmatpush1.msra.mxu0 0.0
  %4380 = vmatprep.subr.mxu0 0.0
  %4381 = vmatpush1.msra.mxu0 0.0
  %4382 = vmatprep.subr.mxu0 0.0
  %4383 = vmatpush1.msra.mxu0 0.0
  %4384 = vmatprep.subr.mxu0 0.0
  %4385 = vmatpush1.msra.mxu0 0.0
  %4386 = vmatprep.subr.mxu0 0.0
  %4387 = vmatpush1.msra.mxu0 0.0
  %4388 = vmatprep.subr.mxu0 0.0
  %4389 = vmatpush1.msra.mxu0 0.0
  %4390 = vmatprep.mubr.f32.mxu0 0.0
  %4391 = vmatmul.mubr.f32.gmra.mrb[0].mxu0 %v4324
  %v4392 = vpop.f32.mrb[0].mxu0
  %v4393 = vadd.f32 0.0, %v4392
  %v4394 = vpop.f32.mrb[0].mxu0
  %4395 = vdwg.mxu0
  %v4396 = vadd.f32 %v4319, %v4393
  %v4397 = vxor.u32 %v4396, 2147483648
  %v4398 = vmul.f32 %v4397, 1.442695
  %v4399 = vpow.pop %v4398
  %v4400 = vadd.f32 %v4399, 1.0
  %v4401 = vrcp.pop %v4400
  %v4402 = vmul.f32 1.0, %v4401
  %v4403 = vtanh.pop %v4396
  %v4404 = vmul.f32 %v4402, %v4198
  %4406 = vrot.lane.b32.xlu0 %v4403, 64
  %v4407 = vpop.permute.xlu0 %4406
  %v4409 = vmul.f32 %v4402, %v4407
  %4411 = vrot.lane.b32.xlu0 %v4409, 32
  %v4412 = vpop.permute.xlu0 %4411
  %v4414 = vadd.f32 %v4404, %v4412
  %v4415 = vtanh.pop %v4414
  %4417 = vrot.lane.b32.xlu0 %v4415, 64
  %v4418 = vpop.permute.xlu0 %4417
  %v4420 = vmul.f32 %v4402, %v4418
  %4422 = vrot.lane.b32.xlu0 %v4420, 32
  %v4423 = vpop.permute.xlu0 %4422
  %s4425 = scalar_lea.vmem %s12, 14
  %4426 = vst.msk [vmem:[%s4425] sm:$0x3] %vm2908, %v4423
  %v4427 = vld [vmem:[#allocation3] sm:$0x3]
  %v4428 = vld [vmem:[%s11] sm:$0xff]
  %v4429 = vld [vmem:[%s11 + $0x8] sm:$0xff]
  %v4430 = vld [vmem:[%s11 + $0x10] sm:$0xff]
  %v4431 = vld [vmem:[%s11 + $0x18] sm:$0xff]
  %v4432 = vsel %vm111, %v4315, 0
  %4434 = vmatprep.subr.mxu0 0.0
  %4435 = vmatpush1.msra.mxu0 %v4428
  %4436 = vmatprep.subr.mxu0 0.0
  %4437 = vmatpush1.msra.mxu0 %v4429
  %4438 = vmatprep.subr.mxu0 0.0
  %4439 = vmatpush1.msra.mxu0 %v4430
  %4440 = vmatprep.subr.mxu0 0.0
  %4441 = vmatpush1.msra.mxu0 %v4431
  %4442 = vmatprep.subr.mxu0 0.0
  %4443 = vmatpush1.msra.mxu0 0.0
  %4444 = vmatprep.subr.mxu0 0.0
  %4445 = vmatpush1.msra.mxu0 0.0
  %4446 = vmatprep.subr.mxu0 0.0
  %4447 = vmatpush1.msra.mxu0 0.0
  %4448 = vmatprep.subr.mxu0 0.0
  %4449 = vmatpush1.msra.mxu0 0.0
  %4450 = vmatprep.subr.mxu0 0.0
  %4451 = vmatpush1.msra.mxu0 0.0
  %4452 = vmatprep.subr.mxu0 0.0
  %4453 = vmatpush1.msra.mxu0 0.0
  %4454 = vmatprep.subr.mxu0 0.0
  %4455 = vmatpush1.msra.mxu0 0.0
  %4456 = vmatprep.subr.mxu0 0.0
  %4457 = vmatpush1.msra.mxu0 0.0
  %4458 = vmatprep.subr.mxu0 0.0
  %4459 = vmatpush1.msra.mxu0 0.0
  %4460 = vmatprep.subr.mxu0 0.0
  %4461 = vmatpush1.msra.mxu0 0.0
  %4462 = vmatprep.subr.mxu0 0.0
  %4463 = vmatpush1.msra.mxu0 0.0
  %4464 = vmatprep.subr.mxu0 0.0
  %4465 = vmatpush1.msra.mxu0 0.0
  %4466 = vmatprep.subr.mxu0 0.0
  %4467 = vmatpush1.msra.mxu0 0.0
  %4468 = vmatprep.subr.mxu0 0.0
  %4469 = vmatpush1.msra.mxu0 0.0
  %4470 = vmatprep.subr.mxu0 0.0
  %4471 = vmatpush1.msra.mxu0 0.0
  %4472 = vmatprep.subr.mxu0 0.0
  %4473 = vmatpush1.msra.mxu0 0.0
  %4474 = vmatprep.subr.mxu0 0.0
  %4475 = vmatpush1.msra.mxu0 0.0
  %4476 = vmatprep.subr.mxu0 0.0
  %4477 = vmatpush1.msra.mxu0 0.0
  %4478 = vmatprep.subr.mxu0 0.0
  %4479 = vmatpush1.msra.mxu0 0.0
  %4480 = vmatprep.subr.mxu0 0.0
  %4481 = vmatpush1.msra.mxu0 0.0
  %4482 = vmatprep.subr.mxu0 0.0
  %4483 = vmatpush1.msra.mxu0 0.0
  %4484 = vmatprep.subr.mxu0 0.0
  %4485 = vmatpush1.msra.mxu0 0.0
  %4486 = vmatprep.subr.mxu0 0.0
  %4487 = vmatpush1.msra.mxu0 0.0
  %4488 = vmatprep.subr.mxu0 0.0
  %4489 = vmatpush1.msra.mxu0 0.0
  %4490 = vmatprep.subr.mxu0 0.0
  %4491 = vmatpush1.msra.mxu0 0.0
  %4492 = vmatprep.subr.mxu0 0.0
  %4493 = vmatpush1.msra.mxu0 0.0
  %4494 = vmatprep.subr.mxu0 0.0
  %4495 = vmatpush1.msra.mxu0 0.0
  %4496 = vmatprep.subr.mxu0 0.0
  %4497 = vmatpush1.msra.mxu0 0.0
  %4498 = vmatprep.mubr.f32.mxu0 0.0
  %4499 = vmatmul.mubr.f32.gmra.mrb[0].mxu0 %v4432
  %v4500 = vpop.f32.mrb[0].mxu0
  %v4501 = vadd.f32 0.0, %v4500
  %v4502 = vpop.f32.mrb[0].mxu0
  %4503 = vdwg.mxu0
  %v4504 = vadd.f32 %v4427, %v4501
  %v4505 = vxor.u32 %v4504, 2147483648
  %v4506 = vmul.f32 %v4505, 1.442695
  %v4507 = vpow.pop %v4506
  %v4508 = vadd.f32 %v4507, 1.0
  %v4509 = vrcp.pop %v4508
  %v4510 = vmul.f32 1.0, %v4509
  %v4511 = vtanh.pop %v4504
  %v4512 = vmul.f32 %v4510, %v4306
  %4514 = vrot.lane.b32.xlu0 %v4511, 64
  %v4515 = vpop.permute.xlu0 %4514
  %v4517 = vmul.f32 %v4510, %v4515
  %4519 = vrot.lane.b32.xlu0 %v4517, 32
  %v4520 = vpop.permute.xlu0 %4519
  %v4522 = vadd.f32 %v4512, %v4520
  %v4523 = vtanh.pop %v4522
  %4525 = vrot.lane.b32.xlu0 %v4523, 64
  %v4526 = vpop.permute.xlu0 %4525
  %v4528 = vmul.f32 %v4510, %v4526
  %4530 = vrot.lane.b32.xlu0 %v4528, 32
  %v4531 = vpop.permute.xlu0 %4530
  %4533 = vst.msk [vmem:[%s98] sm:$0x3] %vm2908, %v4531
  %4534 = vst.msk [vmem:[#allocation4] sm:$0x3] %vm2908, %v4423
  %4536 = vrot.lane.b32.xlu0 %v4414, 96
  %v4537 = vpop.permute.xlu0 %4536
  %4539 = vst.msk [vmem:[#allocation5] sm:$0x3] %vm2908, %v4537
  %4540 = vst.msk [vmem:[#allocation6] sm:$0x3] %vm2908, %v4531
  %4542 = vrot.lane.b32.xlu0 %v4522, 96
  %v4543 = vpop.permute.xlu0 %4542
  %4545 = vst.msk [vmem:[#allocation7] sm:$0x3] %vm2908, %v4543
  %s4546 = ssub.s32 0, 0
  %s4547 = smul.u32 8, %s4546
  %p4548 = scmp.lt.s32.totalorder %s4547, 7
  %s4549 = scalar_select %p4548, %s4547, 7
  %s4550 = smul.addr %s4549, 2
  %s4551 = scalar_lea.vmem %s13, %s4550
  // Predicated region
  $region54: #{blstm_forward.4} parent=0 // pred_check
    _
  $region55: #{blstm_forward.4} parent=0 // pred_check_branch
    %4553 = sbr.rel (0) target = $region57
  $region56: #{blstm_forward.4} parent=0 // pred_region
    _
  $region57: #{blstm_forward.4} parent=0 // pred_fallthru
    _
  // Predicated region
  $region58: #{blstm_forward.4} parent=0 // pred_check
    _
  $region59: #{blstm_forward.4} parent=0 // pred_check_branch
    %4555 = sbr.rel (0) target = $region61
  $region60: #{blstm_forward.4} parent=0 // pred_region
    %s4556 = ssub.s32 0, 0
    %s4557 = smul.u32 8, %s4556
  $region61: #{blstm_forward.4} parent=0 // pred_fallthru
    _
  // Predicated region
  $region62: #{blstm_forward.4} parent=0 // pred_check
    _
  $region63: #{blstm_forward.4} parent=0 // pred_check_branch
    %4559 = sbr.rel (0) target = $region65
  $region64: #{blstm_forward.4} parent=0 // pred_region
    _
  $region65: #{blstm_forward.4} parent=0 // pred_fallthru
    _
  // Predicated region
  $region66: #{blstm_forward.4} parent=0 // pred_check
    _
  $region67: #{blstm_forward.4} parent=0 // pred_check_branch
    %4561 = sbr.rel (0) target = $region69
  $region68: #{blstm_forward.4} parent=0 // pred_region
    %s4562 = ssub.s32 0, 0
    %s4563 = smul.u32 8, %s4562
    %p4564 = scmp.lt.s32.totalorder %s4563, 7
    %s4565 = scalar_select %p4564, %s4563, 7
    %s4566 = smul.addr %s4565, 2
    %s4567 = scalar_lea.vmem %s13, %s4566
  $region69: #{blstm_forward.4} parent=0 // pred_fallthru
    _

// kernel: blstm_forward.3
$region0: #{blstm_forward.3}
  #allocation0 [shape = 'u32[]', space=smem, size = 0x4, offset = 0x4, fixed_abs, tag = 'smem constant byte address 0x4 - core index']
  #allocation1 [shape = 'u32[144,128]{1,0:T(1,128)}', space=vmem, size = 0x12000, scoped, tag = 'internal scratch']
  #allocation2 [shape = 'f32[8,2,128]{2,1,0:T(2,128)}', space=vmem, size = 0x2000, scoped, tag = 'scratch operand']
  #allocation3 [shape = 'f32[8,2,128]{2,1,0:T(2,128)}', space=vmem, size = 0x2000, scoped, tag = 'scratch operand']
  #allocation4 [shape = 'f32[2,32]{1,0:T(2,128)}', space=vmem, size = 0x400, scoped, tag = 'scratch operand']
  #allocation5 [shape = 'f32[2,32]{1,0:T(2,128)}', space=vmem, size = 0x400, scoped, tag = 'scratch operand']
  #allocation6 [shape = 'f32[2,32]{1,0:T(2,128)}', space=vmem, size = 0x400, scoped, tag = 'scratch operand']
  #allocation7 [shape = 'f32[2,32]{1,0:T(2,128)}', space=vmem, size = 0x400, scoped, tag = 'scratch operand']
  %s0 = inlined_call_operand.vmem [shape: f32[8,2,16], index: 0, kind: input, shape index: {}, may-alias: {0,1}]
  %s1 = inlined_call_operand.vmem [shape: f32[8,2,16], index: 1, kind: input, shape index: {}, may-alias: {0,1}]
  %s2 = inlined_call_operand.vmem [shape: f32[16,128], index: 2, kind: input, shape index: {}]
  %s3 = inlined_call_operand.vmem [shape: f32[16,128], index: 3, kind: input, shape index: {}]
  %s4 = inlined_call_operand.vmem [shape: f32[1,128], index: 4, kind: input, shape index: {}]
  %s5 = inlined_call_operand.vmem [shape: f32[1,128], index: 5, kind: input, shape index: {}]
  %s6 = inlined_call_operand.vmem [shape: f32[32,128], index: 6, kind: input, shape index: {}]
  %s7 = inlined_call_operand.vmem [shape: f32[32,128], index: 7, kind: input, shape index: {}]
  %s8 = inlined_call_operand.vmem [shape: f32[8,2,32], index: 8, kind: output, shape index: {0}]
  %s9 = inlined_call_operand.vmem [shape: f32[8,2,32], index: 9, kind: output, shape index: {1}]
  %10 = xla_tuple %s8, %s9
  %s11 = sld [smem:[#allocation0]]
  $region54: #{blstm_forward.3} parent=0
    _
  %s13 = ssub.s32 1, %s11
  %s14 = scalar_select 0, %s13, %s11
  // Predicated region
  $region2: #{blstm_forward.3} parent=0 // pred_check
    _
  $region3: #{blstm_forward.3} parent=0 // pred_check_branch
    %16 = sbr.rel (0) target = $region5
  $region4: #{blstm_forward.3} parent=0 // pred_region
    _
  $region5: #{blstm_forward.3} parent=0 // pred_fallthru
    _
  // Predicated region
  $region6: #{blstm_forward.3} parent=0 // pred_check
    _
  $region7: #{blstm_forward.3} parent=0 // pred_check_branch
    %18 = sbr.rel (0) target = $region9
  $region8: #{blstm_forward.3} parent=0 // pred_region
    %s19 = ssub.s32 0, 0
    %s20 = smul.u32 8, %s19
    %p21 = scmp.lt.s32.totalorder %s20, 7
    %s22 = scalar_select %p21, %s20, 7
    %s23 = smul.addr %s22, 2
    %s24 = scalar_lea.vmem %s1, %s23
    %s25 = ssub.s32 0, 0
    %s26 = smul.u32 8, %s25
  $region9: #{blstm_forward.3} parent=0 // pred_fallthru
    _
  // Predicated region
  $region10: #{blstm_forward.3} parent=0 // pred_check
    _
  $region11: #{blstm_forward.3} parent=0 // pred_check_branch
    %28 = sbr.rel (0) target = $region13
  $region12: #{blstm_forward.3} parent=0 // pred_region
    _
  $region13: #{blstm_forward.3} parent=0 // pred_fallthru
    _
  // Predicated region
  $region14: #{blstm_forward.3} parent=0 // pred_check
    _
  $region15: #{blstm_forward.3} parent=0 // pred_check_branch
    %30 = sbr.rel (0) target = $region17
  $region16: #{blstm_forward.3} parent=0 // pred_region
    _
  $region17: #{blstm_forward.3} parent=0 // pred_fallthru
    _
  // Predicated region
  $region18: #{blstm_forward.3} parent=0 // pred_check
    _
  $region19: #{blstm_forward.3} parent=0 // pred_check_branch
    %32 = sbr.rel (0) target = $region21
  $region20: #{blstm_forward.3} parent=0 // pred_region
    _
  $region21: #{blstm_forward.3} parent=0 // pred_fallthru
    _
  // Predicated region
  $region22: #{blstm_forward.3} parent=0 // pred_check
    _
  $region23: #{blstm_forward.3} parent=0 // pred_check_branch
    %34 = sbr.rel (0) target = $region25
  $region24: #{blstm_forward.3} parent=0 // pred_region
    _
  $region25: #{blstm_forward.3} parent=0 // pred_fallthru
    _
  // Predicated region
  $region26: #{blstm_forward.3} parent=0 // pred_check
    _
  $region27: #{blstm_forward.3} parent=0 // pred_check_branch
    %36 = sbr.rel (0) target = $region29
  $region28: #{blstm_forward.3} parent=0 // pred_region
    _
  $region29: #{blstm_forward.3} parent=0 // pred_fallthru
    _
  // Predicated region
  $region30: #{blstm_forward.3} parent=0 // pred_check
    _
  $region31: #{blstm_forward.3} parent=0 // pred_check_branch
    %38 = sbr.rel (0) target = $region33
  $region32: #{blstm_forward.3} parent=0 // pred_region
    _
  $region33: #{blstm_forward.3} parent=0 // pred_fallthru
    _
  %s39 = ssub.s32 0, 0
  %s40 = smul.u32 8, %s39
  %p41 = scmp.lt.s32.totalorder %s40, 7
  %s42 = scalar_select %p41, %s40, 7
  %s43 = smul.addr %s42, 2
  %s44 = scalar_lea.vmem %s1, %s43
  %s45 = ssub.s32 0, 0
  %s46 = smul.u32 8, %s45
  %p47 = scmp.lt.s32.totalorder %s46, 7
  %s48 = scalar_select %p47, %s46, 7
  %s49 = smul.addr %s48, 2
  %s50 = scalar_lea.vmem %s9, %s49
  %s51 = ssub.s32 0, 0
  %s52 = smul.u32 8, %s51
  %p53 = scmp.lt.s32.totalorder %s52, 7
  %s54 = scalar_select %p53, %s52, 7
  %s55 = smul.addr %s54, 2
  %s56 = scalar_lea.vmem %s1, %s55
  %s57 = ssub.s32 0, 0
  %s58 = smul.u32 8, %s57
  %s59 = ssub.s32 0, 0
  %s60 = smul.u32 8, %s59
  %p61 = scmp.lt.s32.totalorder %s60, 7
  %s62 = scalar_select %p61, %s60, 7
  %s63 = smul.addr %s62, 2
  %s64 = scalar_lea.vmem %s9, %s63
  %s65 = ssub.s32 0, 0
  %s66 = smul.u32 8, %s65
  %v67 = vld [vmem:[%s0] sm:$0x3]
  %v68 = vld [vmem:[%s2] sm:$0xff]
  %v69 = vld [vmem:[%s2 + $0x8] sm:$0xff]
  %v70 = vld [vmem:[%s4] sm:$0x1]
  %v72 = vlaneseq
  %v73 = vshrl.u32 %v72, 7
  %v74 = vsub.s32 0, %v73
  %v75 = vrot.slane %v70, %v74
  %vm77 = vcmask 130048
  %v79 = vsel %vm77, %v67, 0
  %81 = vmatprep.subr.mxu0 0.0
  %82 = vmatpush1.msra.mxu0 %v68
  %83 = vmatprep.subr.mxu0 0.0
  %84 = vmatpush1.msra.mxu0 %v69
  %85 = vmatprep.subr.mxu0 0.0
  %86 = vmatpush1.msra.mxu0 0.0
  %87 = vmatprep.subr.mxu0 0.0
  %88 = vmatpush1.msra.mxu0 0.0
  %89 = vmatprep.subr.mxu0 0.0
  %90 = vmatpush1.msra.mxu0 0.0
  %91 = vmatprep.subr.mxu0 0.0
  %92 = vmatpush1.msra.mxu0 0.0
  %93 = vmatprep.subr.mxu0 0.0
  %94 = vmatpush1.msra.mxu0 0.0
  %95 = vmatprep.subr.mxu0 0.0
  %96 = vmatpush1.msra.mxu0 0.0
  %97 = vmatprep.subr.mxu0 0.0
  %98 = vmatpush1.msra.mxu0 0.0
  %99 = vmatprep.subr.mxu0 0.0
  %100 = vmatpush1.msra.mxu0 0.0
  %101 = vmatprep.subr.mxu0 0.0
  %102 = vmatpush1.msra.mxu0 0.0
  %103 = vmatprep.subr.mxu0 0.0
  %104 = vmatpush1.msra.mxu0 0.0
  %105 = vmatprep.subr.mxu0 0.0
  %106 = vmatpush1.msra.mxu0 0.0
  %107 = vmatprep.subr.mxu0 0.0
  %108 = vmatpush1.msra.mxu0 0.0
  %109 = vmatprep.subr.mxu0 0.0
  %110 = vmatpush1.msra.mxu0 0.0
  %111 = vmatprep.subr.mxu0 0.0
  %112 = vmatpush1.msra.mxu0 0.0
  %113 = vmatprep.subr.mxu0 0.0
  %114 = vmatpush1.msra.mxu0 0.0
  %115 = vmatprep.subr.mxu0 0.0
  %116 = vmatpush1.msra.mxu0 0.0
  %117 = vmatprep.subr.mxu0 0.0
  %118 = vmatpush1.msra.mxu0 0.0
  %119 = vmatprep.subr.mxu0 0.0
  %120 = vmatpush1.msra.mxu0 0.0
  %121 = vmatprep.subr.mxu0 0.0
  %122 = vmatpush1.msra.mxu0 0.0
  %123 = vmatprep.subr.mxu0 0.0
  %124 = vmatpush1.msra.mxu0 0.0
  %125 = vmatprep.subr.mxu0 0.0
  %126 = vmatpush1.msra.mxu0 0.0
  %127 = vmatprep.subr.mxu0 0.0
  %128 = vmatpush1.msra.mxu0 0.0
  %129 = vmatprep.subr.mxu0 0.0
  %130 = vmatpush1.msra.mxu0 0.0
  %131 = vmatprep.subr.mxu0 0.0
  %132 = vmatpush1.msra.mxu0 0.0
  %133 = vmatprep.subr.mxu0 0.0
  %134 = vmatpush1.msra.mxu0 0.0
  %135 = vmatprep.subr.mxu0 0.0
  %136 = vmatpush1.msra.mxu0 0.0
  %137 = vmatprep.subr.mxu0 0.0
  %138 = vmatpush1.msra.mxu0 0.0
  %139 = vmatprep.subr.mxu0 0.0
  %140 = vmatpush1.msra.mxu0 0.0
  %141 = vmatprep.subr.mxu0 0.0
  %142 = vmatpush1.msra.mxu0 0.0
  %143 = vmatprep.subr.mxu0 0.0
  %144 = vmatpush1.msra.mxu0 0.0
  %145 = vmatprep.mubr.f32.mxu0 0.0
  %146 = vmatmul.mubr.f32.gmra.mrb[0].mxu0 %v79
  %v147 = vpop.f32.mrb[0].mxu0
  %v148 = vadd.f32 %v75, %v147
  %v149 = vpop.f32.mrb[0].mxu0
  %150 = vdwg.mxu0
  %151 = vst [vmem:[#allocation2] sm:$0x3] %v148
  %v152 = vld [vmem:[%s56] sm:$0x3]
  %v153 = vld [vmem:[%s3] sm:$0xff]
  %v154 = vld [vmem:[%s3 + $0x8] sm:$0xff]
  %v155 = vld [vmem:[%s5] sm:$0x1]
  %v157 = vlaneseq
  %v158 = vshrl.u32 %v157, 7
  %v159 = vsub.s32 0, %v158
  %v160 = vrot.slane %v155, %v159
  %v163 = vsel %vm77, %v152, 0
  %165 = vmatprep.subr.mxu0 0.0
  %166 = vmatpush1.msra.mxu0 %v153
  %167 = vmatprep.subr.mxu0 0.0
  %168 = vmatpush1.msra.mxu0 %v154
  %169 = vmatprep.subr.mxu0 0.0
  %170 = vmatpush1.msra.mxu0 0.0
  %171 = vmatprep.subr.mxu0 0.0
  %172 = vmatpush1.msra.mxu0 0.0
  %173 = vmatprep.subr.mxu0 0.0
  %174 = vmatpush1.msra.mxu0 0.0
  %175 = vmatprep.subr.mxu0 0.0
  %176 = vmatpush1.msra.mxu0 0.0
  %177 = vmatprep.subr.mxu0 0.0
  %178 = vmatpush1.msra.mxu0 0.0
  %179 = vmatprep.subr.mxu0 0.0
  %180 = vmatpush1.msra.mxu0 0.0
  %181 = vmatprep.subr.mxu0 0.0
  %182 = vmatpush1.msra.mxu0 0.0
  %183 = vmatprep.subr.mxu0 0.0
  %184 = vmatpush1.msra.mxu0 0.0
  %185 = vmatprep.subr.mxu0 0.0
  %186 = vmatpush1.msra.mxu0 0.0
  %187 = vmatprep.subr.mxu0 0.0
  %188 = vmatpush1.msra.mxu0 0.0
  %189 = vmatprep.subr.mxu0 0.0
  %190 = vmatpush1.msra.mxu0 0.0
  %191 = vmatprep.subr.mxu0 0.0
  %192 = vmatpush1.msra.mxu0 0.0
  %193 = vmatprep.subr.mxu0 0.0
  %194 = vmatpush1.msra.mxu0 0.0
  %195 = vmatprep.subr.mxu0 0.0
  %196 = vmatpush1.msra.mxu0 0.0
  %197 = vmatprep.subr.mxu0 0.0
  %198 = vmatpush1.msra.mxu0 0.0
  %199 = vmatprep.subr.mxu0 0.0
  %200 = vmatpush1.msra.mxu0 0.0
  %201 = vmatprep.subr.mxu0 0.0
  %202 = vmatpush1.msra.mxu0 0.0
  %203 = vmatprep.subr.mxu0 0.0
  %204 = vmatpush1.msra.mxu0 0.0
  %205 = vmatprep.subr.mxu0 0.0
  %206 = vmatpush1.msra.mxu0 0.0
  %207 = vmatprep.subr.mxu0 0.0
  %208 = vmatpush1.msra.mxu0 0.0
  %209 = vmatprep.subr.mxu0 0.0
  %210 = vmatpush1.msra.mxu0 0.0
  %211 = vmatprep.subr.mxu0 0.0
  %212 = vmatpush1.msra.mxu0 0.0
  %213 = vmatprep.subr.mxu0 0.0
  %214 = vmatpush1.msra.mxu0 0.0
  %215 = vmatprep.subr.mxu0 0.0
  %216 = vmatpush1.msra.mxu0 0.0
  %217 = vmatprep.subr.mxu0 0.0
  %218 = vmatpush1.msra.mxu0 0.0
  %219 = vmatprep.subr.mxu0 0.0
  %220 = vmatpush1.msra.mxu0 0.0
  %221 = vmatprep.subr.mxu0 0.0
  %222 = vmatpush1.msra.mxu0 0.0
  %223 = vmatprep.subr.mxu0 0.0
  %224 = vmatpush1.msra.mxu0 0.0
  %225 = vmatprep.subr.mxu0 0.0
  %226 = vmatpush1.msra.mxu0 0.0
  %227 = vmatprep.subr.mxu0 0.0
  %228 = vmatpush1.msra.mxu0 0.0
  %229 = vmatprep.mubr.f32.mxu0 0.0
  %230 = vmatmul.mubr.f32.gmra.mrb[0].mxu0 %v163
  %v231 = vpop.f32.mrb[0].mxu0
  %v232 = vadd.f32 %v160, %v231
  %v233 = vpop.f32.mrb[0].mxu0
  %234 = vdwg.mxu0
  %235 = vst [vmem:[#allocation3] sm:$0x3] %v232
  %s236 = scalar_lea.vmem %s0, 2
  %v237 = vld [vmem:[%s236] sm:$0x3]
  %v238 = vld [vmem:[%s2] sm:$0xff]
  %v239 = vld [vmem:[%s2 + $0x8] sm:$0xff]
  %v240 = vld [vmem:[%s4] sm:$0x1]
  %v242 = vlaneseq
  %v243 = vshrl.u32 %v242, 7
  %v244 = vsub.s32 0, %v243
  %v245 = vrot.slane %v240, %v244
  %v248 = vsel %vm77, %v237, 0
  %250 = vmatprep.subr.mxu0 0.0
  %251 = vmatpush1.msra.mxu0 %v238
  %252 = vmatprep.subr.mxu0 0.0
  %253 = vmatpush1.msra.mxu0 %v239
  %254 = vmatprep.subr.mxu0 0.0
  %255 = vmatpush1.msra.mxu0 0.0
  %256 = vmatprep.subr.mxu0 0.0
  %257 = vmatpush1.msra.mxu0 0.0
  %258 = vmatprep.subr.mxu0 0.0
  %259 = vmatpush1.msra.mxu0 0.0
  %260 = vmatprep.subr.mxu0 0.0
  %261 = vmatpush1.msra.mxu0 0.0
  %262 = vmatprep.subr.mxu0 0.0
  %263 = vmatpush1.msra.mxu0 0.0
  %264 = vmatprep.subr.mxu0 0.0
  %265 = vmatpush1.msra.mxu0 0.0
  %266 = vmatprep.subr.mxu0 0.0
  %267 = vmatpush1.msra.mxu0 0.0
  %268 = vmatprep.subr.mxu0 0.0
  %269 = vmatpush1.msra.mxu0 0.0
  %270 = vmatprep.subr.mxu0 0.0
  %271 = vmatpush1.msra.mxu0 0.0
  %272 = vmatprep.subr.mxu0 0.0
  %273 = vmatpush1.msra.mxu0 0.0
  %274 = vmatprep.subr.mxu0 0.0
  %275 = vmatpush1.msra.mxu0 0.0
  %276 = vmatprep.subr.mxu0 0.0
  %277 = vmatpush1.msra.mxu0 0.0
  %278 = vmatprep.subr.mxu0 0.0
  %279 = vmatpush1.msra.mxu0 0.0
  %280 = vmatprep.subr.mxu0 0.0
  %281 = vmatpush1.msra.mxu0 0.0
  %282 = vmatprep.subr.mxu0 0.0
  %283 = vmatpush1.msra.mxu0 0.0
  %284 = vmatprep.subr.mxu0 0.0
  %285 = vmatpush1.msra.mxu0 0.0
  %286 = vmatprep.subr.mxu0 0.0
  %287 = vmatpush1.msra.mxu0 0.0
  %288 = vmatprep.subr.mxu0 0.0
  %289 = vmatpush1.msra.mxu0 0.0
  %290 = vmatprep.subr.mxu0 0.0
  %291 = vmatpush1.msra.mxu0 0.0
  %292 = vmatprep.subr.mxu0 0.0
  %293 = vmatpush1.msra.mxu0 0.0
  %294 = vmatprep.subr.mxu0 0.0
  %295 = vmatpush1.msra.mxu0 0.0
  %296 = vmatprep.subr.mxu0 0.0
  %297 = vmatpush1.msra.mxu0 0.0
  %298 = vmatprep.subr.mxu0 0.0
  %299 = vmatpush1.msra.mxu0 0.0
  %300 = vmatprep.subr.mxu0 0.0
  %301 = vmatpush1.msra.mxu0 0.0
  %302 = vmatprep.subr.mxu0 0.0
  %303 = vmatpush1.msra.mxu0 0.0
  %304 = vmatprep.subr.mxu0 0.0
  %305 = vmatpush1.msra.mxu0 0.0
  %306 = vmatprep.subr.mxu0 0.0
  %307 = vmatpush1.msra.mxu0 0.0
  %308 = vmatprep.subr.mxu0 0.0
  %309 = vmatpush1.msra.mxu0 0.0
  %310 = vmatprep.subr.mxu0 0.0
  %311 = vmatpush1.msra.mxu0 0.0
  %312 = vmatprep.subr.mxu0 0.0
  %313 = vmatpush1.msra.mxu0 0.0
  %314 = vmatprep.mubr.f32.mxu0 0.0
  %315 = vmatmul.mubr.f32.gmra.mrb[0].mxu0 %v248
  %v316 = vpop.f32.mrb[0].mxu0
  %v317 = vadd.f32 %v245, %v316
  %v318 = vpop.f32.mrb[0].mxu0
  %319 = vdwg.mxu0
  %s320 = scalar_lea.vmem [#allocation2], 2
  %321 = vst [vmem:[%s320] sm:$0x3] %v317
  %s322 = scalar_lea.vmem %s56, 2
  %v323 = vld [vmem:[%s322] sm:$0x3]
  %v324 = vld [vmem:[%s3] sm:$0xff]
  %v325 = vld [vmem:[%s3 + $0x8] sm:$0xff]
  %v326 = vld [vmem:[%s5] sm:$0x1]
  %v328 = vlaneseq
  %v329 = vshrl.u32 %v328, 7
  %v330 = vsub.s32 0, %v329
  %v331 = vrot.slane %v326, %v330
  %v334 = vsel %vm77, %v323, 0
  %336 = vmatprep.subr.mxu0 0.0
  %337 = vmatpush1.msra.mxu0 %v324
  %338 = vmatprep.subr.mxu0 0.0
  %339 = vmatpush1.msra.mxu0 %v325
  %340 = vmatprep.subr.mxu0 0.0
  %341 = vmatpush1.msra.mxu0 0.0
  %342 = vmatprep.subr.mxu0 0.0
  %343 = vmatpush1.msra.mxu0 0.0
  %344 = vmatprep.subr.mxu0 0.0
  %345 = vmatpush1.msra.mxu0 0.0
  %346 = vmatprep.subr.mxu0 0.0
  %347 = vmatpush1.msra.mxu0 0.0
  %348 = vmatprep.subr.mxu0 0.0
  %349 = vmatpush1.msra.mxu0 0.0
  %350 = vmatprep.subr.mxu0 0.0
  %351 = vmatpush1.msra.mxu0 0.0
  %352 = vmatprep.subr.mxu0 0.0
  %353 = vmatpush1.msra.mxu0 0.0
  %354 = vmatprep.subr.mxu0 0.0
  %355 = vmatpush1.msra.mxu0 0.0
  %356 = vmatprep.subr.mxu0 0.0
  %357 = vmatpush1.msra.mxu0 0.0
  %358 = vmatprep.subr.mxu0 0.0
  %359 = vmatpush1.msra.mxu0 0.0
  %360 = vmatprep.subr.mxu0 0.0
  %361 = vmatpush1.msra.mxu0 0.0
  %362 = vmatprep.subr.mxu0 0.0
  %363 = vmatpush1.msra.mxu0 0.0
  %364 = vmatprep.subr.mxu0 0.0
  %365 = vmatpush1.msra.mxu0 0.0
  %366 = vmatprep.subr.mxu0 0.0
  %367 = vmatpush1.msra.mxu0 0.0
  %368 = vmatprep.subr.mxu0 0.0
  %369 = vmatpush1.msra.mxu0 0.0
  %370 = vmatprep.subr.mxu0 0.0
  %371 = vmatpush1.msra.mxu0 0.0
  %372 = vmatprep.subr.mxu0 0.0
  %373 = vmatpush1.msra.mxu0 0.0
  %374 = vmatprep.subr.mxu0 0.0
  %375 = vmatpush1.msra.mxu0 0.0
  %376 = vmatprep.subr.mxu0 0.0
  %377 = vmatpush1.msra.mxu0 0.0
  %378 = vmatprep.subr.mxu0 0.0
  %379 = vmatpush1.msra.mxu0 0.0
  %380 = vmatprep.subr.mxu0 0.0
  %381 = vmatpush1.msra.mxu0 0.0
  %382 = vmatprep.subr.mxu0 0.0
  %383 = vmatpush1.msra.mxu0 0.0
  %384 = vmatprep.subr.mxu0 0.0
  %385 = vmatpush1.msra.mxu0 0.0
  %386 = vmatprep.subr.mxu0 0.0
  %387 = vmatpush1.msra.mxu0 0.0
  %388 = vmatprep.subr.mxu0 0.0
  %389 = vmatpush1.msra.mxu0 0.0
  %390 = vmatprep.subr.mxu0 0.0
  %391 = vmatpush1.msra.mxu0 0.0
  %392 = vmatprep.subr.mxu0 0.0
  %393 = vmatpush1.msra.mxu0 0.0
  %394 = vmatprep.subr.mxu0 0.0
  %395 = vmatpush1.msra.mxu0 0.0
  %396 = vmatprep.subr.mxu0 0.0
  %397 = vmatpush1.msra.mxu0 0.0
  %398 = vmatprep.subr.mxu0 0.0
  %399 = vmatpush1.msra.mxu0 0.0
  %400 = vmatprep.mubr.f32.mxu0 0.0
  %401 = vmatmul.mubr.f32.gmra.mrb[0].mxu0 %v334
  %v402 = vpop.f32.mrb[0].mxu0
  %v403 = vadd.f32 %v331, %v402
  %v404 = vpop.f32.mrb[0].mxu0
  %405 = vdwg.mxu0
  %s406 = scalar_lea.vmem [#allocation3], 2
  %407 = vst [vmem:[%s406] sm:$0x3] %v403
  %s408 = scalar_lea.vmem %s0, 4
  %v409 = vld [vmem:[%s408] sm:$0x3]
  %v410 = vld [vmem:[%s2] sm:$0xff]
  %v411 = vld [vmem:[%s2 + $0x8] sm:$0xff]
  %v412 = vld [vmem:[%s4] sm:$0x1]
  %v414 = vlaneseq
  %v415 = vshrl.u32 %v414, 7
  %v416 = vsub.s32 0, %v415
  %v417 = vrot.slane %v412, %v416
  %v420 = vsel %vm77, %v409, 0
  %422 = vmatprep.subr.mxu0 0.0
  %423 = vmatpush1.msra.mxu0 %v410
  %424 = vmatprep.subr.mxu0 0.0
  %425 = vmatpush1.msra.mxu0 %v411
  %426 = vmatprep.subr.mxu0 0.0
  %427 = vmatpush1.msra.mxu0 0.0
  %428 = vmatprep.subr.mxu0 0.0
  %429 = vmatpush1.msra.mxu0 0.0
  %430 = vmatprep.subr.mxu0 0.0
  %431 = vmatpush1.msra.mxu0 0.0
  %432 = vmatprep.subr.mxu0 0.0
  %433 = vmatpush1.msra.mxu0 0.0
  %434 = vmatprep.subr.mxu0 0.0
  %435 = vmatpush1.msra.mxu0 0.0
  %436 = vmatprep.subr.mxu0 0.0
  %437 = vmatpush1.msra.mxu0 0.0
  %438 = vmatprep.subr.mxu0 0.0
  %439 = vmatpush1.msra.mxu0 0.0
  %440 = vmatprep.subr.mxu0 0.0
  %441 = vmatpush1.msra.mxu0 0.0
  %442 = vmatprep.subr.mxu0 0.0
  %443 = vmatpush1.msra.mxu0 0.0
  %444 = vmatprep.subr.mxu0 0.0
  %445 = vmatpush1.msra.mxu0 0.0
  %446 = vmatprep.subr.mxu0 0.0
  %447 = vmatpush1.msra.mxu0 0.0
  %448 = vmatprep.subr.mxu0 0.0
  %449 = vmatpush1.msra.mxu0 0.0
  %450 = vmatprep.subr.mxu0 0.0
  %451 = vmatpush1.msra.mxu0 0.0
  %452 = vmatprep.subr.mxu0 0.0
  %453 = vmatpush1.msra.mxu0 0.0
  %454 = vmatprep.subr.mxu0 0.0
  %455 = vmatpush1.msra.mxu0 0.0
  %456 = vmatprep.subr.mxu0 0.0
  %457 = vmatpush1.msra.mxu0 0.0
  %458 = vmatprep.subr.mxu0 0.0
  %459 = vmatpush1.msra.mxu0 0.0
  %460 = vmatprep.subr.mxu0 0.0
  %461 = vmatpush1.msra.mxu0 0.0
  %462 = vmatprep.subr.mxu0 0.0
  %463 = vmatpush1.msra.mxu0 0.0
  %464 = vmatprep.subr.mxu0 0.0
  %465 = vmatpush1.msra.mxu0 0.0
  %466 = vmatprep.subr.mxu0 0.0
  %467 = vmatpush1.msra.mxu0 0.0
  %468 = vmatprep.subr.mxu0 0.0
  %469 = vmatpush1.msra.mxu0 0.0
  %470 = vmatprep.subr.mxu0 0.0
  %471 = vmatpush1.msra.mxu0 0.0
  %472 = vmatprep.subr.mxu0 0.0
  %473 = vmatpush1.msra.mxu0 0.0
  %474 = vmatprep.subr.mxu0 0.0
  %475 = vmatpush1.msra.mxu0 0.0
  %476 = vmatprep.subr.mxu0 0.0
  %477 = vmatpush1.msra.mxu0 0.0
  %478 = vmatprep.subr.mxu0 0.0
  %479 = vmatpush1.msra.mxu0 0.0
  %480 = vmatprep.subr.mxu0 0.0
  %481 = vmatpush1.msra.mxu0 0.0
  %482 = vmatprep.subr.mxu0 0.0
  %483 = vmatpush1.msra.mxu0 0.0
  %484 = vmatprep.subr.mxu0 0.0
  %485 = vmatpush1.msra.mxu0 0.0
  %486 = vmatprep.mubr.f32.mxu0 0.0
  %487 = vmatmul.mubr.f32.gmra.mrb[0].mxu0 %v420
  %v488 = vpop.f32.mrb[0].mxu0
  %v489 = vadd.f32 %v417, %v488
  %v490 = vpop.f32.mrb[0].mxu0
  %491 = vdwg.mxu0
  %s492 = scalar_lea.vmem [#allocation2], 4
  %493 = vst [vmem:[%s492] sm:$0x3] %v489
  %s494 = scalar_lea.vmem %s56, 4
  %v495 = vld [vmem:[%s494] sm:$0x3]
  %v496 = vld [vmem:[%s3] sm:$0xff]
  %v497 = vld [vmem:[%s3 + $0x8] sm:$0xff]
  %v498 = vld [vmem:[%s5] sm:$0x1]
  %v500 = vlaneseq
  %v501 = vshrl.u32 %v500, 7
  %v502 = vsub.s32 0, %v501
  %v503 = vrot.slane %v498, %v502
  %v506 = vsel %vm77, %v495, 0
  %508 = vmatprep.subr.mxu0 0.0
  %509 = vmatpush1.msra.mxu0 %v496
  %510 = vmatprep.subr.mxu0 0.0
  %511 = vmatpush1.msra.mxu0 %v497
  %512 = vmatprep.subr.mxu0 0.0
  %513 = vmatpush1.msra.mxu0 0.0
  %514 = vmatprep.subr.mxu0 0.0
  %515 = vmatpush1.msra.mxu0 0.0
  %516 = vmatprep.subr.mxu0 0.0
  %517 = vmatpush1.msra.mxu0 0.0
  %518 = vmatprep.subr.mxu0 0.0
  %519 = vmatpush1.msra.mxu0 0.0
  %520 = vmatprep.subr.mxu0 0.0
  %521 = vmatpush1.msra.mxu0 0.0
  %522 = vmatprep.subr.mxu0 0.0
  %523 = vmatpush1.msra.mxu0 0.0
  %524 = vmatprep.subr.mxu0 0.0
  %525 = vmatpush1.msra.mxu0 0.0
  %526 = vmatprep.subr.mxu0 0.0
  %527 = vmatpush1.msra.mxu0 0.0
  %528 = vmatprep.subr.mxu0 0.0
  %529 = vmatpush1.msra.mxu0 0.0
  %530 = vmatprep.subr.mxu0 0.0
  %531 = vmatpush1.msra.mxu0 0.0
  %532 = vmatprep.subr.mxu0 0.0
  %533 = vmatpush1.msra.mxu0 0.0
  %534 = vmatprep.subr.mxu0 0.0
  %535 = vmatpush1.msra.mxu0 0.0
  %536 = vmatprep.subr.mxu0 0.0
  %537 = vmatpush1.msra.mxu0 0.0
  %538 = vmatprep.subr.mxu0 0.0
  %539 = vmatpush1.msra.mxu0 0.0
  %540 = vmatprep.subr.mxu0 0.0
  %541 = vmatpush1.msra.mxu0 0.0
  %542 = vmatprep.subr.mxu0 0.0
  %543 = vmatpush1.msra.mxu0 0.0
  %544 = vmatprep.subr.mxu0 0.0
  %545 = vmatpush1.msra.mxu0 0.0
  %546 = vmatprep.subr.mxu0 0.0
  %547 = vmatpush1.msra.mxu0 0.0
  %548 = vmatprep.subr.mxu0 0.0
  %549 = vmatpush1.msra.mxu0 0.0
  %550 = vmatprep.subr.mxu0 0.0
  %551 = vmatpush1.msra.mxu0 0.0
  %552 = vmatprep.subr.mxu0 0.0
  %553 = vmatpush1.msra.mxu0 0.0
  %554 = vmatprep.subr.mxu0 0.0
  %555 = vmatpush1.msra.mxu0 0.0
  %556 = vmatprep.subr.mxu0 0.0
  %557 = vmatpush1.msra.mxu0 0.0
  %558 = vmatprep.subr.mxu0 0.0
  %559 = vmatpush1.msra.mxu0 0.0
  %560 = vmatprep.subr.mxu0 0.0
  %561 = vmatpush1.msra.mxu0 0.0
  %562 = vmatprep.subr.mxu0 0.0
  %563 = vmatpush1.msra.mxu0 0.0
  %564 = vmatprep.subr.mxu0 0.0
  %565 = vmatpush1.msra.mxu0 0.0
  %566 = vmatprep.subr.mxu0 0.0
  %567 = vmatpush1.msra.mxu0 0.0
  %568 = vmatprep.subr.mxu0 0.0
  %569 = vmatpush1.msra.mxu0 0.0
  %570 = vmatprep.subr.mxu0 0.0
  %571 = vmatpush1.msra.mxu0 0.0
  %572 = vmatprep.mubr.f32.mxu0 0.0
  %573 = vmatmul.mubr.f32.gmra.mrb[0].mxu0 %v506
  %v574 = vpop.f32.mrb[0].mxu0
  %v575 = vadd.f32 %v503, %v574
  %v576 = vpop.f32.mrb[0].mxu0
  %577 = vdwg.mxu0
  %s578 = scalar_lea.vmem [#allocation3], 4
  %579 = vst [vmem:[%s578] sm:$0x3] %v575
  %s580 = scalar_lea.vmem %s0, 6
  %v581 = vld [vmem:[%s580] sm:$0x3]
  %v582 = vld [vmem:[%s2] sm:$0xff]
  %v583 = vld [vmem:[%s2 + $0x8] sm:$0xff]
  %v584 = vld [vmem:[%s4] sm:$0x1]
  %v586 = vlaneseq
  %v587 = vshrl.u32 %v586, 7
  %v588 = vsub.s32 0, %v587
  %v589 = vrot.slane %v584, %v588
  %v592 = vsel %vm77, %v581, 0
  %594 = vmatprep.subr.mxu0 0.0
  %595 = vmatpush1.msra.mxu0 %v582
  %596 = vmatprep.subr.mxu0 0.0
  %597 = vmatpush1.msra.mxu0 %v583
  %598 = vmatprep.subr.mxu0 0.0
  %599 = vmatpush1.msra.mxu0 0.0
  %600 = vmatprep.subr.mxu0 0.0
  %601 = vmatpush1.msra.mxu0 0.0
  %602 = vmatprep.subr.mxu0 0.0
  %603 = vmatpush1.msra.mxu0 0.0
  %604 = vmatprep.subr.mxu0 0.0
  %605 = vmatpush1.msra.mxu0 0.0
  %606 = vmatprep.subr.mxu0 0.0
  %607 = vmatpush1.msra.mxu0 0.0
  %608 = vmatprep.subr.mxu0 0.0
  %609 = vmatpush1.msra.mxu0 0.0
  %610 = vmatprep.subr.mxu0 0.0
  %611 = vmatpush1.msra.mxu0 0.0
  %612 = vmatprep.subr.mxu0 0.0
  %613 = vmatpush1.msra.mxu0 0.0
  %614 = vmatprep.subr.mxu0 0.0
  %615 = vmatpush1.msra.mxu0 0.0
  %616 = vmatprep.subr.mxu0 0.0
  %617 = vmatpush1.msra.mxu0 0.0
  %618 = vmatprep.subr.mxu0 0.0
  %619 = vmatpush1.msra.mxu0 0.0
  %620 = vmatprep.subr.mxu0 0.0
  %621 = vmatpush1.msra.mxu0 0.0
  %622 = vmatprep.subr.mxu0 0.0
  %623 = vmatpush1.msra.mxu0 0.0
  %624 = vmatprep.subr.mxu0 0.0
  %625 = vmatpush1.msra.mxu0 0.0
  %626 = vmatprep.subr.mxu0 0.0
  %627 = vmatpush1.msra.mxu0 0.0
  %628 = vmatprep.subr.mxu0 0.0
  %629 = vmatpush1.msra.mxu0 0.0
  %630 = vmatprep.subr.mxu0 0.0
  %631 = vmatpush1.msra.mxu0 0.0
  %632 = vmatprep.subr.mxu0 0.0
  %633 = vmatpush1.msra.mxu0 0.0
  %634 = vmatprep.subr.mxu0 0.0
  %635 = vmatpush1.msra.mxu0 0.0
  %636 = vmatprep.subr.mxu0 0.0
  %637 = vmatpush1.msra.mxu0 0.0
  %638 = vmatprep.subr.mxu0 0.0
  %639 = vmatpush1.msra.mxu0 0.0
  %640 = vmatprep.subr.mxu0 0.0
  %641 = vmatpush1.msra.mxu0 0.0
  %642 = vmatprep.subr.mxu0 0.0
  %643 = vmatpush1.msra.mxu0 0.0
  %644 = vmatprep.subr.mxu0 0.0
  %645 = vmatpush1.msra.mxu0 0.0
  %646 = vmatprep.subr.mxu0 0.0
  %647 = vmatpush1.msra.mxu0 0.0
  %648 = vmatprep.subr.mxu0 0.0
  %649 = vmatpush1.msra.mxu0 0.0
  %650 = vmatprep.subr.mxu0 0.0
  %651 = vmatpush1.msra.mxu0 0.0
  %652 = vmatprep.subr.mxu0 0.0
  %653 = vmatpush1.msra.mxu0 0.0
  %654 = vmatprep.subr.mxu0 0.0
  %655 = vmatpush1.msra.mxu0 0.0
  %656 = vmatprep.subr.mxu0 0.0
  %657 = vmatpush1.msra.mxu0 0.0
  %658 = vmatprep.mubr.f32.mxu0 0.0
  %659 = vmatmul.mubr.f32.gmra.mrb[0].mxu0 %v592
  %v660 = vpop.f32.mrb[0].mxu0
  %v661 = vadd.f32 %v589, %v660
  %v662 = vpop.f32.mrb[0].mxu0
  %663 = vdwg.mxu0
  %s664 = scalar_lea.vmem [#allocation2], 6
  %665 = vst [vmem:[%s664] sm:$0x3] %v661
  %s666 = scalar_lea.vmem %s56, 6
  %v667 = vld [vmem:[%s666] sm:$0x3]
  %v668 = vld [vmem:[%s3] sm:$0xff]
  %v669 = vld [vmem:[%s3 + $0x8] sm:$0xff]
  %v670 = vld [vmem:[%s5] sm:$0x1]
  %v672 = vlaneseq
  %v673 = vshrl.u32 %v672, 7
  %v674 = vsub.s32 0, %v673
  %v675 = vrot.slane %v670, %v674
  %v678 = vsel %vm77, %v667, 0
  %680 = vmatprep.subr.mxu0 0.0
  %681 = vmatpush1.msra.mxu0 %v668
  %682 = vmatprep.subr.mxu0 0.0
  %683 = vmatpush1.msra.mxu0 %v669
  %684 = vmatprep.subr.mxu0 0.0
  %685 = vmatpush1.msra.mxu0 0.0
  %686 = vmatprep.subr.mxu0 0.0
  %687 = vmatpush1.msra.mxu0 0.0
  %688 = vmatprep.subr.mxu0 0.0
  %689 = vmatpush1.msra.mxu0 0.0
  %690 = vmatprep.subr.mxu0 0.0
  %691 = vmatpush1.msra.mxu0 0.0
  %692 = vmatprep.subr.mxu0 0.0
  %693 = vmatpush1.msra.mxu0 0.0
  %694 = vmatprep.subr.mxu0 0.0
  %695 = vmatpush1.msra.mxu0 0.0
  %696 = vmatprep.subr.mxu0 0.0
  %697 = vmatpush1.msra.mxu0 0.0
  %698 = vmatprep.subr.mxu0 0.0
  %699 = vmatpush1.msra.mxu0 0.0
  %700 = vmatprep.subr.mxu0 0.0
  %701 = vmatpush1.msra.mxu0 0.0
  %702 = vmatprep.subr.mxu0 0.0
  %703 = vmatpush1.msra.mxu0 0.0
  %704 = vmatprep.subr.mxu0 0.0
  %705 = vmatpush1.msra.mxu0 0.0
  %706 = vmatprep.subr.mxu0 0.0
  %707 = vmatpush1.msra.mxu0 0.0
  %708 = vmatprep.subr.mxu0 0.0
  %709 = vmatpush1.msra.mxu0 0.0
  %710 = vmatprep.subr.mxu0 0.0
  %711 = vmatpush1.msra.mxu0 0.0
  %712 = vmatprep.subr.mxu0 0.0
  %713 = vmatpush1.msra.mxu0 0.0
  %714 = vmatprep.subr.mxu0 0.0
  %715 = vmatpush1.msra.mxu0 0.0
  %716 = vmatprep.subr.mxu0 0.0
  %717 = vmatpush1.msra.mxu0 0.0
  %718 = vmatprep.subr.mxu0 0.0
  %719 = vmatpush1.msra.mxu0 0.0
  %720 = vmatprep.subr.mxu0 0.0
  %721 = vmatpush1.msra.mxu0 0.0
  %722 = vmatprep.subr.mxu0 0.0
  %723 = vmatpush1.msra.mxu0 0.0
  %724 = vmatprep.subr.mxu0 0.0
  %725 = vmatpush1.msra.mxu0 0.0
  %726 = vmatprep.subr.mxu0 0.0
  %727 = vmatpush1.msra.mxu0 0.0
  %728 = vmatprep.subr.mxu0 0.0
  %729 = vmatpush1.msra.mxu0 0.0
  %730 = vmatprep.subr.mxu0 0.0
  %731 = vmatpush1.msra.mxu0 0.0
  %732 = vmatprep.subr.mxu0 0.0
  %733 = vmatpush1.msra.mxu0 0.0
  %734 = vmatprep.subr.mxu0 0.0
  %735 = vmatpush1.msra.mxu0 0.0
  %736 = vmatprep.subr.mxu0 0.0
  %737 = vmatpush1.msra.mxu0 0.0
  %738 = vmatprep.subr.mxu0 0.0
  %739 = vmatpush1.msra.mxu0 0.0
  %740 = vmatprep.subr.mxu0 0.0
  %741 = vmatpush1.msra.mxu0 0.0
  %742 = vmatprep.subr.mxu0 0.0
  %743 = vmatpush1.msra.mxu0 0.0
  %744 = vmatprep.mubr.f32.mxu0 0.0
  %745 = vmatmul.mubr.f32.gmra.mrb[0].mxu0 %v678
  %v746 = vpop.f32.mrb[0].mxu0
  %v747 = vadd.f32 %v675, %v746
  %v748 = vpop.f32.mrb[0].mxu0
  %749 = vdwg.mxu0
  %s750 = scalar_lea.vmem [#allocation3], 6
  %751 = vst [vmem:[%s750] sm:$0x3] %v747
  %s752 = scalar_lea.vmem %s0, 8
  %v753 = vld [vmem:[%s752] sm:$0x3]
  %v754 = vld [vmem:[%s2] sm:$0xff]
  %v755 = vld [vmem:[%s2 + $0x8] sm:$0xff]
  %v756 = vld [vmem:[%s4] sm:$0x1]
  %v758 = vlaneseq
  %v759 = vshrl.u32 %v758, 7
  %v760 = vsub.s32 0, %v759
  %v761 = vrot.slane %v756, %v760
  %v764 = vsel %vm77, %v753, 0
  %766 = vmatprep.subr.mxu0 0.0
  %767 = vmatpush1.msra.mxu0 %v754
  %768 = vmatprep.subr.mxu0 0.0
  %769 = vmatpush1.msra.mxu0 %v755
  %770 = vmatprep.subr.mxu0 0.0
  %771 = vmatpush1.msra.mxu0 0.0
  %772 = vmatprep.subr.mxu0 0.0
  %773 = vmatpush1.msra.mxu0 0.0
  %774 = vmatprep.subr.mxu0 0.0
  %775 = vmatpush1.msra.mxu0 0.0
  %776 = vmatprep.subr.mxu0 0.0
  %777 = vmatpush1.msra.mxu0 0.0
  %778 = vmatprep.subr.mxu0 0.0
  %779 = vmatpush1.msra.mxu0 0.0
  %780 = vmatprep.subr.mxu0 0.0
  %781 = vmatpush1.msra.mxu0 0.0
  %782 = vmatprep.subr.mxu0 0.0
  %783 = vmatpush1.msra.mxu0 0.0
  %784 = vmatprep.subr.mxu0 0.0
  %785 = vmatpush1.msra.mxu0 0.0
  %786 = vmatprep.subr.mxu0 0.0
  %787 = vmatpush1.msra.mxu0 0.0
  %788 = vmatprep.subr.mxu0 0.0
  %789 = vmatpush1.msra.mxu0 0.0
  %790 = vmatprep.subr.mxu0 0.0
  %791 = vmatpush1.msra.mxu0 0.0
  %792 = vmatprep.subr.mxu0 0.0
  %793 = vmatpush1.msra.mxu0 0.0
  %794 = vmatprep.subr.mxu0 0.0
  %795 = vmatpush1.msra.mxu0 0.0
  %796 = vmatprep.subr.mxu0 0.0
  %797 = vmatpush1.msra.mxu0 0.0
  %798 = vmatprep.subr.mxu0 0.0
  %799 = vmatpush1.msra.mxu0 0.0
  %800 = vmatprep.subr.mxu0 0.0
  %801 = vmatpush1.msra.mxu0 0.0
  %802 = vmatprep.subr.mxu0 0.0
  %803 = vmatpush1.msra.mxu0 0.0
  %804 = vmatprep.subr.mxu0 0.0
  %805 = vmatpush1.msra.mxu0 0.0
  %806 = vmatprep.subr.mxu0 0.0
  %807 = vmatpush1.msra.mxu0 0.0
  %808 = vmatprep.subr.mxu0 0.0
  %809 = vmatpush1.msra.mxu0 0.0
  %810 = vmatprep.subr.mxu0 0.0
  %811 = vmatpush1.msra.mxu0 0.0
  %812 = vmatprep.subr.mxu0 0.0
  %813 = vmatpush1.msra.mxu0 0.0
  %814 = vmatprep.subr.mxu0 0.0
  %815 = vmatpush1.msra.mxu0 0.0
  %816 = vmatprep.subr.mxu0 0.0
  %817 = vmatpush1.msra.mxu0 0.0
  %818 = vmatprep.subr.mxu0 0.0
  %819 = vmatpush1.msra.mxu0 0.0
  %820 = vmatprep.subr.mxu0 0.0
  %821 = vmatpush1.msra.mxu0 0.0
  %822 = vmatprep.subr.mxu0 0.0
  %823 = vmatpush1.msra.mxu0 0.0
  %824 = vmatprep.subr.mxu0 0.0
  %825 = vmatpush1.msra.mxu0 0.0
  %826 = vmatprep.subr.mxu0 0.0
  %827 = vmatpush1.msra.mxu0 0.0
  %828 = vmatprep.subr.mxu0 0.0
  %829 = vmatpush1.msra.mxu0 0.0
  %830 = vmatprep.mubr.f32.mxu0 0.0
  %831 = vmatmul.mubr.f32.gmra.mrb[0].mxu0 %v764
  %v832 = vpop.f32.mrb[0].mxu0
  %v833 = vadd.f32 %v761, %v832
  %v834 = vpop.f32.mrb[0].mxu0
  %835 = vdwg.mxu0
  %s836 = scalar_lea.vmem [#allocation2], 8
  %837 = vst [vmem:[%s836] sm:$0x3] %v833
  %s838 = scalar_lea.vmem %s56, 8
  %v839 = vld [vmem:[%s838] sm:$0x3]
  %v840 = vld [vmem:[%s3] sm:$0xff]
  %v841 = vld [vmem:[%s3 + $0x8] sm:$0xff]
  %v842 = vld [vmem:[%s5] sm:$0x1]
  %v844 = vlaneseq
  %v845 = vshrl.u32 %v844, 7
  %v846 = vsub.s32 0, %v845
  %v847 = vrot.slane %v842, %v846
  %v850 = vsel %vm77, %v839, 0
  %852 = vmatprep.subr.mxu0 0.0
  %853 = vmatpush1.msra.mxu0 %v840
  %854 = vmatprep.subr.mxu0 0.0
  %855 = vmatpush1.msra.mxu0 %v841
  %856 = vmatprep.subr.mxu0 0.0
  %857 = vmatpush1.msra.mxu0 0.0
  %858 = vmatprep.subr.mxu0 0.0
  %859 = vmatpush1.msra.mxu0 0.0
  %860 = vmatprep.subr.mxu0 0.0
  %861 = vmatpush1.msra.mxu0 0.0
  %862 = vmatprep.subr.mxu0 0.0
  %863 = vmatpush1.msra.mxu0 0.0
  %864 = vmatprep.subr.mxu0 0.0
  %865 = vmatpush1.msra.mxu0 0.0
  %866 = vmatprep.subr.mxu0 0.0
  %867 = vmatpush1.msra.mxu0 0.0
  %868 = vmatprep.subr.mxu0 0.0
  %869 = vmatpush1.msra.mxu0 0.0
  %870 = vmatprep.subr.mxu0 0.0
  %871 = vmatpush1.msra.mxu0 0.0
  %872 = vmatprep.subr.mxu0 0.0
  %873 = vmatpush1.msra.mxu0 0.0
  %874 = vmatprep.subr.mxu0 0.0
  %875 = vmatpush1.msra.mxu0 0.0
  %876 = vmatprep.subr.mxu0 0.0
  %877 = vmatpush1.msra.mxu0 0.0
  %878 = vmatprep.subr.mxu0 0.0
  %879 = vmatpush1.msra.mxu0 0.0
  %880 = vmatprep.subr.mxu0 0.0
  %881 = vmatpush1.msra.mxu0 0.0
  %882 = vmatprep.subr.mxu0 0.0
  %883 = vmatpush1.msra.mxu0 0.0
  %884 = vmatprep.subr.mxu0 0.0
  %885 = vmatpush1.msra.mxu0 0.0
  %886 = vmatprep.subr.mxu0 0.0
  %887 = vmatpush1.msra.mxu0 0.0
  %888 = vmatprep.subr.mxu0 0.0
  %889 = vmatpush1.msra.mxu0 0.0
  %890 = vmatprep.subr.mxu0 0.0
  %891 = vmatpush1.msra.mxu0 0.0
  %892 = vmatprep.subr.mxu0 0.0
  %893 = vmatpush1.msra.mxu0 0.0
  %894 = vmatprep.subr.mxu0 0.0
  %895 = vmatpush1.msra.mxu0 0.0
  %896 = vmatprep.subr.mxu0 0.0
  %897 = vmatpush1.msra.mxu0 0.0
  %898 = vmatprep.subr.mxu0 0.0
  %899 = vmatpush1.msra.mxu0 0.0
  %900 = vmatprep.subr.mxu0 0.0
  %901 = vmatpush1.msra.mxu0 0.0
  %902 = vmatprep.subr.mxu0 0.0
  %903 = vmatpush1.msra.mxu0 0.0
  %904 = vmatprep.subr.mxu0 0.0
  %905 = vmatpush1.msra.mxu0 0.0
  %906 = vmatprep.subr.mxu0 0.0
  %907 = vmatpush1.msra.mxu0 0.0
  %908 = vmatprep.subr.mxu0 0.0
  %909 = vmatpush1.msra.mxu0 0.0
  %910 = vmatprep.subr.mxu0 0.0
  %911 = vmatpush1.msra.mxu0 0.0
  %912 = vmatprep.subr.mxu0 0.0
  %913 = vmatpush1.msra.mxu0 0.0
  %914 = vmatprep.subr.mxu0 0.0
  %915 = vmatpush1.msra.mxu0 0.0
  %916 = vmatprep.mubr.f32.mxu0 0.0
  %917 = vmatmul.mubr.f32.gmra.mrb[0].mxu0 %v850
  %v918 = vpop.f32.mrb[0].mxu0
  %v919 = vadd.f32 %v847, %v918
  %v920 = vpop.f32.mrb[0].mxu0
  %921 = vdwg.mxu0
  %s922 = scalar_lea.vmem [#allocation3], 8
  %923 = vst [vmem:[%s922] sm:$0x3] %v919
  %s924 = scalar_lea.vmem %s0, 10
  %v925 = vld [vmem:[%s924] sm:$0x3]
  %v926 = vld [vmem:[%s2] sm:$0xff]
  %v927 = vld [vmem:[%s2 + $0x8] sm:$0xff]
  %v928 = vld [vmem:[%s4] sm:$0x1]
  %v930 = vlaneseq
  %v931 = vshrl.u32 %v930, 7
  %v932 = vsub.s32 0, %v931
  %v933 = vrot.slane %v928, %v932
  %v936 = vsel %vm77, %v925, 0
  %938 = vmatprep.subr.mxu0 0.0
  %939 = vmatpush1.msra.mxu0 %v926
  %940 = vmatprep.subr.mxu0 0.0
  %941 = vmatpush1.msra.mxu0 %v927
  %942 = vmatprep.subr.mxu0 0.0
  %943 = vmatpush1.msra.mxu0 0.0
  %944 = vmatprep.subr.mxu0 0.0
  %945 = vmatpush1.msra.mxu0 0.0
  %946 = vmatprep.subr.mxu0 0.0
  %947 = vmatpush1.msra.mxu0 0.0
  %948 = vmatprep.subr.mxu0 0.0
  %949 = vmatpush1.msra.mxu0 0.0
  %950 = vmatprep.subr.mxu0 0.0
  %951 = vmatpush1.msra.mxu0 0.0
  %952 = vmatprep.subr.mxu0 0.0
  %953 = vmatpush1.msra.mxu0 0.0
  %954 = vmatprep.subr.mxu0 0.0
  %955 = vmatpush1.msra.mxu0 0.0
  %956 = vmatprep.subr.mxu0 0.0
  %957 = vmatpush1.msra.mxu0 0.0
  %958 = vmatprep.subr.mxu0 0.0
  %959 = vmatpush1.msra.mxu0 0.0
  %960 = vmatprep.subr.mxu0 0.0
  %961 = vmatpush1.msra.mxu0 0.0
  %962 = vmatprep.subr.mxu0 0.0
  %963 = vmatpush1.msra.mxu0 0.0
  %964 = vmatprep.subr.mxu0 0.0
  %965 = vmatpush1.msra.mxu0 0.0
  %966 = vmatprep.subr.mxu0 0.0
  %967 = vmatpush1.msra.mxu0 0.0
  %968 = vmatprep.subr.mxu0 0.0
  %969 = vmatpush1.msra.mxu0 0.0
  %970 = vmatprep.subr.mxu0 0.0
  %971 = vmatpush1.msra.mxu0 0.0
  %972 = vmatprep.subr.mxu0 0.0
  %973 = vmatpush1.msra.mxu0 0.0
  %974 = vmatprep.subr.mxu0 0.0
  %975 = vmatpush1.msra.mxu0 0.0
  %976 = vmatprep.subr.mxu0 0.0
  %977 = vmatpush1.msra.mxu0 0.0
  %978 = vmatprep.subr.mxu0 0.0
  %979 = vmatpush1.msra.mxu0 0.0
  %980 = vmatprep.subr.mxu0 0.0
  %981 = vmatpush1.msra.mxu0 0.0
  %982 = vmatprep.subr.mxu0 0.0
  %983 = vmatpush1.msra.mxu0 0.0
  %984 = vmatprep.subr.mxu0 0.0
  %985 = vmatpush1.msra.mxu0 0.0
  %986 = vmatprep.subr.mxu0 0.0
  %987 = vmatpush1.msra.mxu0 0.0
  %988 = vmatprep.subr.mxu0 0.0
  %989 = vmatpush1.msra.mxu0 0.0
  %990 = vmatprep.subr.mxu0 0.0
  %991 = vmatpush1.msra.mxu0 0.0
  %992 = vmatprep.subr.mxu0 0.0
  %993 = vmatpush1.msra.mxu0 0.0
  %994 = vmatprep.subr.mxu0 0.0
  %995 = vmatpush1.msra.mxu0 0.0
  %996 = vmatprep.subr.mxu0 0.0
  %997 = vmatpush1.msra.mxu0 0.0
  %998 = vmatprep.subr.mxu0 0.0
  %999 = vmatpush1.msra.mxu0 0.0
  %1000 = vmatprep.subr.mxu0 0.0
  %1001 = vmatpush1.msra.mxu0 0.0
  %1002 = vmatprep.mubr.f32.mxu0 0.0
  %1003 = vmatmul.mubr.f32.gmra.mrb[0].mxu0 %v936
  %v1004 = vpop.f32.mrb[0].mxu0
  %v1005 = vadd.f32 %v933, %v1004
  %v1006 = vpop.f32.mrb[0].mxu0
  %1007 = vdwg.mxu0
  %s1008 = scalar_lea.vmem [#allocation2], 10
  %1009 = vst [vmem:[%s1008] sm:$0x3] %v1005
  %s1010 = scalar_lea.vmem %s56, 10
  %v1011 = vld [vmem:[%s1010] sm:$0x3]
  %v1012 = vld [vmem:[%s3] sm:$0xff]
  %v1013 = vld [vmem:[%s3 + $0x8] sm:$0xff]
  %v1014 = vld [vmem:[%s5] sm:$0x1]
  %v1016 = vlaneseq
  %v1017 = vshrl.u32 %v1016, 7
  %v1018 = vsub.s32 0, %v1017
  %v1019 = vrot.slane %v1014, %v1018
  %v1022 = vsel %vm77, %v1011, 0
  %1024 = vmatprep.subr.mxu0 0.0
  %1025 = vmatpush1.msra.mxu0 %v1012
  %1026 = vmatprep.subr.mxu0 0.0
  %1027 = vmatpush1.msra.mxu0 %v1013
  %1028 = vmatprep.subr.mxu0 0.0
  %1029 = vmatpush1.msra.mxu0 0.0
  %1030 = vmatprep.subr.mxu0 0.0
  %1031 = vmatpush1.msra.mxu0 0.0
  %1032 = vmatprep.subr.mxu0 0.0
  %1033 = vmatpush1.msra.mxu0 0.0
  %1034 = vmatprep.subr.mxu0 0.0
  %1035 = vmatpush1.msra.mxu0 0.0
  %1036 = vmatprep.subr.mxu0 0.0
  %1037 = vmatpush1.msra.mxu0 0.0
  %1038 = vmatprep.subr.mxu0 0.0
  %1039 = vmatpush1.msra.mxu0 0.0
  %1040 = vmatprep.subr.mxu0 0.0
  %1041 = vmatpush1.msra.mxu0 0.0
  %1042 = vmatprep.subr.mxu0 0.0
  %1043 = vmatpush1.msra.mxu0 0.0
  %1044 = vmatprep.subr.mxu0 0.0
  %1045 = vmatpush1.msra.mxu0 0.0
  %1046 = vmatprep.subr.mxu0 0.0
  %1047 = vmatpush1.msra.mxu0 0.0
  %1048 = vmatprep.subr.mxu0 0.0
  %1049 = vmatpush1.msra.mxu0 0.0
  %1050 = vmatprep.subr.mxu0 0.0
  %1051 = vmatpush1.msra.mxu0 0.0
  %1052 = vmatprep.subr.mxu0 0.0
  %1053 = vmatpush1.msra.mxu0 0.0
  %1054 = vmatprep.subr.mxu0 0.0
  %1055 = vmatpush1.msra.mxu0 0.0
  %1056 = vmatprep.subr.mxu0 0.0
  %1057 = vmatpush1.msra.mxu0 0.0
  %1058 = vmatprep.subr.mxu0 0.0
  %1059 = vmatpush1.msra.mxu0 0.0
  %1060 = vmatprep.subr.mxu0 0.0
  %1061 = vmatpush1.msra.mxu0 0.0
  %1062 = vmatprep.subr.mxu0 0.0
  %1063 = vmatpush1.msra.mxu0 0.0
  %1064 = vmatprep.subr.mxu0 0.0
  %1065 = vmatpush1.msra.mxu0 0.0
  %1066 = vmatprep.subr.mxu0 0.0
  %1067 = vmatpush1.msra.mxu0 0.0
  %1068 = vmatprep.subr.mxu0 0.0
  %1069 = vmatpush1.msra.mxu0 0.0
  %1070 = vmatprep.subr.mxu0 0.0
  %1071 = vmatpush1.msra.mxu0 0.0
  %1072 = vmatprep.subr.mxu0 0.0
  %1073 = vmatpush1.msra.mxu0 0.0
  %1074 = vmatprep.subr.mxu0 0.0
  %1075 = vmatpush1.msra.mxu0 0.0
  %1076 = vmatprep.subr.mxu0 0.0
  %1077 = vmatpush1.msra.mxu0 0.0
  %1078 = vmatprep.subr.mxu0 0.0
  %1079 = vmatpush1.msra.mxu0 0.0
  %1080 = vmatprep.subr.mxu0 0.0
  %1081 = vmatpush1.msra.mxu0 0.0
  %1082 = vmatprep.subr.mxu0 0.0
  %1083 = vmatpush1.msra.mxu0 0.0
  %1084 = vmatprep.subr.mxu0 0.0
  %1085 = vmatpush1.msra.mxu0 0.0
  %1086 = vmatprep.subr.mxu0 0.0
  %1087 = vmatpush1.msra.mxu0 0.0
  %1088 = vmatprep.mubr.f32.mxu0 0.0
  %1089 = vmatmul.mubr.f32.gmra.mrb[0].mxu0 %v1022
  %v1090 = vpop.f32.mrb[0].mxu0
  %v1091 = vadd.f32 %v1019, %v1090
  %v1092 = vpop.f32.mrb[0].mxu0
  %1093 = vdwg.mxu0
  %s1094 = scalar_lea.vmem [#allocation3], 10
  %1095 = vst [vmem:[%s1094] sm:$0x3] %v1091
  %s1096 = scalar_lea.vmem %s0, 12
  %v1097 = vld [vmem:[%s1096] sm:$0x3]
  %v1098 = vld [vmem:[%s2] sm:$0xff]
  %v1099 = vld [vmem:[%s2 + $0x8] sm:$0xff]
  %v1100 = vld [vmem:[%s4] sm:$0x1]
  %v1102 = vlaneseq
  %v1103 = vshrl.u32 %v1102, 7
  %v1104 = vsub.s32 0, %v1103
  %v1105 = vrot.slane %v1100, %v1104
  %v1108 = vsel %vm77, %v1097, 0
  %1110 = vmatprep.subr.mxu0 0.0
  %1111 = vmatpush1.msra.mxu0 %v1098
  %1112 = vmatprep.subr.mxu0 0.0
  %1113 = vmatpush1.msra.mxu0 %v1099
  %1114 = vmatprep.subr.mxu0 0.0
  %1115 = vmatpush1.msra.mxu0 0.0
  %1116 = vmatprep.subr.mxu0 0.0
  %1117 = vmatpush1.msra.mxu0 0.0
  %1118 = vmatprep.subr.mxu0 0.0
  %1119 = vmatpush1.msra.mxu0 0.0
  %1120 = vmatprep.subr.mxu0 0.0
  %1121 = vmatpush1.msra.mxu0 0.0
  %1122 = vmatprep.subr.mxu0 0.0
  %1123 = vmatpush1.msra.mxu0 0.0
  %1124 = vmatprep.subr.mxu0 0.0
  %1125 = vmatpush1.msra.mxu0 0.0
  %1126 = vmatprep.subr.mxu0 0.0
  %1127 = vmatpush1.msra.mxu0 0.0
  %1128 = vmatprep.subr.mxu0 0.0
  %1129 = vmatpush1.msra.mxu0 0.0
  %1130 = vmatprep.subr.mxu0 0.0
  %1131 = vmatpush1.msra.mxu0 0.0
  %1132 = vmatprep.subr.mxu0 0.0
  %1133 = vmatpush1.msra.mxu0 0.0
  %1134 = vmatprep.subr.mxu0 0.0
  %1135 = vmatpush1.msra.mxu0 0.0
  %1136 = vmatprep.subr.mxu0 0.0
  %1137 = vmatpush1.msra.mxu0 0.0
  %1138 = vmatprep.subr.mxu0 0.0
  %1139 = vmatpush1.msra.mxu0 0.0
  %1140 = vmatprep.subr.mxu0 0.0
  %1141 = vmatpush1.msra.mxu0 0.0
  %1142 = vmatprep.subr.mxu0 0.0
  %1143 = vmatpush1.msra.mxu0 0.0
  %1144 = vmatprep.subr.mxu0 0.0
  %1145 = vmatpush1.msra.mxu0 0.0
  %1146 = vmatprep.subr.mxu0 0.0
  %1147 = vmatpush1.msra.mxu0 0.0
  %1148 = vmatprep.subr.mxu0 0.0
  %1149 = vmatpush1.msra.mxu0 0.0
  %1150 = vmatprep.subr.mxu0 0.0
  %1151 = vmatpush1.msra.mxu0 0.0
  %1152 = vmatprep.subr.mxu0 0.0
  %1153 = vmatpush1.msra.mxu0 0.0
  %1154 = vmatprep.subr.mxu0 0.0
  %1155 = vmatpush1.msra.mxu0 0.0
  %1156 = vmatprep.subr.mxu0 0.0
  %1157 = vmatpush1.msra.mxu0 0.0
  %1158 = vmatprep.subr.mxu0 0.0
  %1159 = vmatpush1.msra.mxu0 0.0
  %1160 = vmatprep.subr.mxu0 0.0
  %1161 = vmatpush1.msra.mxu0 0.0
  %1162 = vmatprep.subr.mxu0 0.0
  %1163 = vmatpush1.msra.mxu0 0.0
  %1164 = vmatprep.subr.mxu0 0.0
  %1165 = vmatpush1.msra.mxu0 0.0
  %1166 = vmatprep.subr.mxu0 0.0
  %1167 = vmatpush1.msra.mxu0 0.0
  %1168 = vmatprep.subr.mxu0 0.0
  %1169 = vmatpush1.msra.mxu0 0.0
  %1170 = vmatprep.subr.mxu0 0.0
  %1171 = vmatpush1.msra.mxu0 0.0
  %1172 = vmatprep.subr.mxu0 0.0
  %1173 = vmatpush1.msra.mxu0 0.0
  %1174 = vmatprep.mubr.f32.mxu0 0.0
  %1175 = vmatmul.mubr.f32.gmra.mrb[0].mxu0 %v1108
  %v1176 = vpop.f32.mrb[0].mxu0
  %v1177 = vadd.f32 %v1105, %v1176
  %v1178 = vpop.f32.mrb[0].mxu0
  %1179 = vdwg.mxu0
  %s1180 = scalar_lea.vmem [#allocation2], 12
  %1181 = vst [vmem:[%s1180] sm:$0x3] %v1177
  %s1182 = scalar_lea.vmem %s56, 12
  %v1183 = vld [vmem:[%s1182] sm:$0x3]
  %v1184 = vld [vmem:[%s3] sm:$0xff]
  %v1185 = vld [vmem:[%s3 + $0x8] sm:$0xff]
  %v1186 = vld [vmem:[%s5] sm:$0x1]
  %v1188 = vlaneseq
  %v1189 = vshrl.u32 %v1188, 7
  %v1190 = vsub.s32 0, %v1189
  %v1191 = vrot.slane %v1186, %v1190
  %v1194 = vsel %vm77, %v1183, 0
  %1196 = vmatprep.subr.mxu0 0.0
  %1197 = vmatpush1.msra.mxu0 %v1184
  %1198 = vmatprep.subr.mxu0 0.0
  %1199 = vmatpush1.msra.mxu0 %v1185
  %1200 = vmatprep.subr.mxu0 0.0
  %1201 = vmatpush1.msra.mxu0 0.0
  %1202 = vmatprep.subr.mxu0 0.0
  %1203 = vmatpush1.msra.mxu0 0.0
  %1204 = vmatprep.subr.mxu0 0.0
  %1205 = vmatpush1.msra.mxu0 0.0
  %1206 = vmatprep.subr.mxu0 0.0
  %1207 = vmatpush1.msra.mxu0 0.0
  %1208 = vmatprep.subr.mxu0 0.0
  %1209 = vmatpush1.msra.mxu0 0.0
  %1210 = vmatprep.subr.mxu0 0.0
  %1211 = vmatpush1.msra.mxu0 0.0
  %1212 = vmatprep.subr.mxu0 0.0
  %1213 = vmatpush1.msra.mxu0 0.0
  %1214 = vmatprep.subr.mxu0 0.0
  %1215 = vmatpush1.msra.mxu0 0.0
  %1216 = vmatprep.subr.mxu0 0.0
  %1217 = vmatpush1.msra.mxu0 0.0
  %1218 = vmatprep.subr.mxu0 0.0
  %1219 = vmatpush1.msra.mxu0 0.0
  %1220 = vmatprep.subr.mxu0 0.0
  %1221 = vmatpush1.msra.mxu0 0.0
  %1222 = vmatprep.subr.mxu0 0.0
  %1223 = vmatpush1.msra.mxu0 0.0
  %1224 = vmatprep.subr.mxu0 0.0
  %1225 = vmatpush1.msra.mxu0 0.0
  %1226 = vmatprep.subr.mxu0 0.0
  %1227 = vmatpush1.msra.mxu0 0.0
  %1228 = vmatprep.subr.mxu0 0.0
  %1229 = vmatpush1.msra.mxu0 0.0
  %1230 = vmatprep.subr.mxu0 0.0
  %1231 = vmatpush1.msra.mxu0 0.0
  %1232 = vmatprep.subr.mxu0 0.0
  %1233 = vmatpush1.msra.mxu0 0.0
  %1234 = vmatprep.subr.mxu0 0.0
  %1235 = vmatpush1.msra.mxu0 0.0
  %1236 = vmatprep.subr.mxu0 0.0
  %1237 = vmatpush1.msra.mxu0 0.0
  %1238 = vmatprep.subr.mxu0 0.0
  %1239 = vmatpush1.msra.mxu0 0.0
  %1240 = vmatprep.subr.mxu0 0.0
  %1241 = vmatpush1.msra.mxu0 0.0
  %1242 = vmatprep.subr.mxu0 0.0
  %1243 = vmatpush1.msra.mxu0 0.0
  %1244 = vmatprep.subr.mxu0 0.0
  %1245 = vmatpush1.msra.mxu0 0.0
  %1246 = vmatprep.subr.mxu0 0.0
  %1247 = vmatpush1.msra.mxu0 0.0
  %1248 = vmatprep.subr.mxu0 0.0
  %1249 = vmatpush1.msra.mxu0 0.0
  %1250 = vmatprep.subr.mxu0 0.0
  %1251 = vmatpush1.msra.mxu0 0.0
  %1252 = vmatprep.subr.mxu0 0.0
  %1253 = vmatpush1.msra.mxu0 0.0
  %1254 = vmatprep.subr.mxu0 0.0
  %1255 = vmatpush1.msra.mxu0 0.0
  %1256 = vmatprep.subr.mxu0 0.0
  %1257 = vmatpush1.msra.mxu0 0.0
  %1258 = vmatprep.subr.mxu0 0.0
  %1259 = vmatpush1.msra.mxu0 0.0
  %1260 = vmatprep.mubr.f32.mxu0 0.0
  %1261 = vmatmul.mubr.f32.gmra.mrb[0].mxu0 %v1194
  %v1262 = vpop.f32.mrb[0].mxu0
  %v1263 = vadd.f32 %v1191, %v1262
  %v1264 = vpop.f32.mrb[0].mxu0
  %1265 = vdwg.mxu0
  %s1266 = scalar_lea.vmem [#allocation3], 12
  %1267 = vst [vmem:[%s1266] sm:$0x3] %v1263
  %s1268 = scalar_lea.vmem %s0, 14
  %v1269 = vld [vmem:[%s1268] sm:$0x3]
  %v1270 = vld [vmem:[%s2] sm:$0xff]
  %v1271 = vld [vmem:[%s2 + $0x8] sm:$0xff]
  %v1272 = vld [vmem:[%s4] sm:$0x1]
  %v1274 = vlaneseq
  %v1275 = vshrl.u32 %v1274, 7
  %v1276 = vsub.s32 0, %v1275
  %v1277 = vrot.slane %v1272, %v1276
  %v1280 = vsel %vm77, %v1269, 0
  %1282 = vmatprep.subr.mxu0 0.0
  %1283 = vmatpush1.msra.mxu0 %v1270
  %1284 = vmatprep.subr.mxu0 0.0
  %1285 = vmatpush1.msra.mxu0 %v1271
  %1286 = vmatprep.subr.mxu0 0.0
  %1287 = vmatpush1.msra.mxu0 0.0
  %1288 = vmatprep.subr.mxu0 0.0
  %1289 = vmatpush1.msra.mxu0 0.0
  %1290 = vmatprep.subr.mxu0 0.0
  %1291 = vmatpush1.msra.mxu0 0.0
  %1292 = vmatprep.subr.mxu0 0.0
  %1293 = vmatpush1.msra.mxu0 0.0
  %1294 = vmatprep.subr.mxu0 0.0
  %1295 = vmatpush1.msra.mxu0 0.0
  %1296 = vmatprep.subr.mxu0 0.0
  %1297 = vmatpush1.msra.mxu0 0.0
  %1298 = vmatprep.subr.mxu0 0.0
  %1299 = vmatpush1.msra.mxu0 0.0
  %1300 = vmatprep.subr.mxu0 0.0
  %1301 = vmatpush1.msra.mxu0 0.0
  %1302 = vmatprep.subr.mxu0 0.0
  %1303 = vmatpush1.msra.mxu0 0.0
  %1304 = vmatprep.subr.mxu0 0.0
  %1305 = vmatpush1.msra.mxu0 0.0
  %1306 = vmatprep.subr.mxu0 0.0
  %1307 = vmatpush1.msra.mxu0 0.0
  %1308 = vmatprep.subr.mxu0 0.0
  %1309 = vmatpush1.msra.mxu0 0.0
  %1310 = vmatprep.subr.mxu0 0.0
  %1311 = vmatpush1.msra.mxu0 0.0
  %1312 = vmatprep.subr.mxu0 0.0
  %1313 = vmatpush1.msra.mxu0 0.0
  %1314 = vmatprep.subr.mxu0 0.0
  %1315 = vmatpush1.msra.mxu0 0.0
  %1316 = vmatprep.subr.mxu0 0.0
  %1317 = vmatpush1.msra.mxu0 0.0
  %1318 = vmatprep.subr.mxu0 0.0
  %1319 = vmatpush1.msra.mxu0 0.0
  %1320 = vmatprep.subr.mxu0 0.0
  %1321 = vmatpush1.msra.mxu0 0.0
  %1322 = vmatprep.subr.mxu0 0.0
  %1323 = vmatpush1.msra.mxu0 0.0
  %1324 = vmatprep.subr.mxu0 0.0
  %1325 = vmatpush1.msra.mxu0 0.0
  %1326 = vmatprep.subr.mxu0 0.0
  %1327 = vmatpush1.msra.mxu0 0.0
  %1328 = vmatprep.subr.mxu0 0.0
  %1329 = vmatpush1.msra.mxu0 0.0
  %1330 = vmatprep.subr.mxu0 0.0
  %1331 = vmatpush1.msra.mxu0 0.0
  %1332 = vmatprep.subr.mxu0 0.0
  %1333 = vmatpush1.msra.mxu0 0.0
  %1334 = vmatprep.subr.mxu0 0.0
  %1335 = vmatpush1.msra.mxu0 0.0
  %1336 = vmatprep.subr.mxu0 0.0
  %1337 = vmatpush1.msra.mxu0 0.0
  %1338 = vmatprep.subr.mxu0 0.0
  %1339 = vmatpush1.msra.mxu0 0.0
  %1340 = vmatprep.subr.mxu0 0.0
  %1341 = vmatpush1.msra.mxu0 0.0
  %1342 = vmatprep.subr.mxu0 0.0
  %1343 = vmatpush1.msra.mxu0 0.0
  %1344 = vmatprep.subr.mxu0 0.0
  %1345 = vmatpush1.msra.mxu0 0.0
  %1346 = vmatprep.mubr.f32.mxu0 0.0
  %1347 = vmatmul.mubr.f32.gmra.mrb[0].mxu0 %v1280
  %v1348 = vpop.f32.mrb[0].mxu0
  %v1349 = vadd.f32 %v1277, %v1348
  %v1350 = vpop.f32.mrb[0].mxu0
  %1351 = vdwg.mxu0
  %s1352 = scalar_lea.vmem [#allocation2], 14
  %1353 = vst [vmem:[%s1352] sm:$0x3] %v1349
  %s1354 = scalar_lea.vmem %s56, 14
  %v1355 = vld [vmem:[%s1354] sm:$0x3]
  %v1356 = vld [vmem:[%s3] sm:$0xff]
  %v1357 = vld [vmem:[%s3 + $0x8] sm:$0xff]
  %v1358 = vld [vmem:[%s5] sm:$0x1]
  %v1360 = vlaneseq
  %v1361 = vshrl.u32 %v1360, 7
  %v1362 = vsub.s32 0, %v1361
  %v1363 = vrot.slane %v1358, %v1362
  %v1366 = vsel %vm77, %v1355, 0
  %1368 = vmatprep.subr.mxu0 0.0
  %1369 = vmatpush1.msra.mxu0 %v1356
  %1370 = vmatprep.subr.mxu0 0.0
  %1371 = vmatpush1.msra.mxu0 %v1357
  %1372 = vmatprep.subr.mxu0 0.0
  %1373 = vmatpush1.msra.mxu0 0.0
  %1374 = vmatprep.subr.mxu0 0.0
  %1375 = vmatpush1.msra.mxu0 0.0
  %1376 = vmatprep.subr.mxu0 0.0
  %1377 = vmatpush1.msra.mxu0 0.0
  %1378 = vmatprep.subr.mxu0 0.0
  %1379 = vmatpush1.msra.mxu0 0.0
  %1380 = vmatprep.subr.mxu0 0.0
  %1381 = vmatpush1.msra.mxu0 0.0
  %1382 = vmatprep.subr.mxu0 0.0
  %1383 = vmatpush1.msra.mxu0 0.0
  %1384 = vmatprep.subr.mxu0 0.0
  %1385 = vmatpush1.msra.mxu0 0.0
  %1386 = vmatprep.subr.mxu0 0.0
  %1387 = vmatpush1.msra.mxu0 0.0
  %1388 = vmatprep.subr.mxu0 0.0
  %1389 = vmatpush1.msra.mxu0 0.0
  %1390 = vmatprep.subr.mxu0 0.0
  %1391 = vmatpush1.msra.mxu0 0.0
  %1392 = vmatprep.subr.mxu0 0.0
  %1393 = vmatpush1.msra.mxu0 0.0
  %1394 = vmatprep.subr.mxu0 0.0
  %1395 = vmatpush1.msra.mxu0 0.0
  %1396 = vmatprep.subr.mxu0 0.0
  %1397 = vmatpush1.msra.mxu0 0.0
  %1398 = vmatprep.subr.mxu0 0.0
  %1399 = vmatpush1.msra.mxu0 0.0
  %1400 = vmatprep.subr.mxu0 0.0
  %1401 = vmatpush1.msra.mxu0 0.0
  %1402 = vmatprep.subr.mxu0 0.0
  %1403 = vmatpush1.msra.mxu0 0.0
  %1404 = vmatprep.subr.mxu0 0.0
  %1405 = vmatpush1.msra.mxu0 0.0
  %1406 = vmatprep.subr.mxu0 0.0
  %1407 = vmatpush1.msra.mxu0 0.0
  %1408 = vmatprep.subr.mxu0 0.0
  %1409 = vmatpush1.msra.mxu0 0.0
  %1410 = vmatprep.subr.mxu0 0.0
  %1411 = vmatpush1.msra.mxu0 0.0
  %1412 = vmatprep.subr.mxu0 0.0
  %1413 = vmatpush1.msra.mxu0 0.0
  %1414 = vmatprep.subr.mxu0 0.0
  %1415 = vmatpush1.msra.mxu0 0.0
  %1416 = vmatprep.subr.mxu0 0.0
  %1417 = vmatpush1.msra.mxu0 0.0
  %1418 = vmatprep.subr.mxu0 0.0
  %1419 = vmatpush1.msra.mxu0 0.0
  %1420 = vmatprep.subr.mxu0 0.0
  %1421 = vmatpush1.msra.mxu0 0.0
  %1422 = vmatprep.subr.mxu0 0.0
  %1423 = vmatpush1.msra.mxu0 0.0
  %1424 = vmatprep.subr.mxu0 0.0
  %1425 = vmatpush1.msra.mxu0 0.0
  %1426 = vmatprep.subr.mxu0 0.0
  %1427 = vmatpush1.msra.mxu0 0.0
  %1428 = vmatprep.subr.mxu0 0.0
  %1429 = vmatpush1.msra.mxu0 0.0
  %1430 = vmatprep.subr.mxu0 0.0
  %1431 = vmatpush1.msra.mxu0 0.0
  %1432 = vmatprep.mubr.f32.mxu0 0.0
  %1433 = vmatmul.mubr.f32.gmra.mrb[0].mxu0 %v1366
  %v1434 = vpop.f32.mrb[0].mxu0
  %v1435 = vadd.f32 %v1363, %v1434
  %v1436 = vpop.f32.mrb[0].mxu0
  %1437 = vdwg.mxu0
  %s1438 = scalar_lea.vmem [#allocation3], 14
  %1439 = vst [vmem:[%s1438] sm:$0x3] %v1435
  %p1440 = scmp.eq.s32.totalorder 0, 0
  // Predicated region
  $region34: #{blstm_forward.3} parent=0 // pred_check
    %p1441 = pneg %p1440
  $region35: #{blstm_forward.3} parent=0 // pred_check_branch
    %1443 = sbr.rel (%p1441) target = $region37
  $region36: #{blstm_forward.3} parent=0 // pred_region
    %vm1444 = vcmask 254976
    %1445 = vst.msk [vmem:[#allocation4] sm:$0x3] %vm1444, 0.0
    %1446 = vst.msk [vmem:[#allocation5] sm:$0x3] %vm1444, 0.0
    %1447 = vst.msk [vmem:[#allocation6] sm:$0x3] %vm1444, 0.0
    %1448 = vst.msk [vmem:[#allocation7] sm:$0x3] %vm1444, 0.0
  $region37: #{blstm_forward.3} parent=0 // pred_fallthru
    _
  %v1449 = vld [vmem:[#allocation4] sm:$0x3]
  %v1450 = vld [vmem:[#allocation5] sm:$0x3]
  %v1451 = vld [vmem:[#allocation6] sm:$0x3]
  %v1452 = vld [vmem:[#allocation7] sm:$0x3]
  %v1453 = vld [vmem:[#allocation2] sm:$0x3]
  %v1454 = vld [vmem:[%s6] sm:$0xff]
  %v1455 = vld [vmem:[%s6 + $0x8] sm:$0xff]
  %v1456 = vld [vmem:[%s6 + $0x10] sm:$0xff]
  %v1457 = vld [vmem:[%s6 + $0x18] sm:$0xff]
  %vm1458 = vcmask 261120
  %v1460 = vsel %vm1458, %v1449, 0
  %1462 = vmatprep.subr.mxu0 0.0
  %1463 = vmatpush1.msra.mxu0 %v1454
  %1464 = vmatprep.subr.mxu0 0.0
  %1465 = vmatpush1.msra.mxu0 %v1455
  %1466 = vmatprep.subr.mxu0 0.0
  %1467 = vmatpush1.msra.mxu0 %v1456
  %1468 = vmatprep.subr.mxu0 0.0
  %1469 = vmatpush1.msra.mxu0 %v1457
  %1470 = vmatprep.subr.mxu0 0.0
  %1471 = vmatpush1.msra.mxu0 0.0
  %1472 = vmatprep.subr.mxu0 0.0
  %1473 = vmatpush1.msra.mxu0 0.0
  %1474 = vmatprep.subr.mxu0 0.0
  %1475 = vmatpush1.msra.mxu0 0.0
  %1476 = vmatprep.subr.mxu0 0.0
  %1477 = vmatpush1.msra.mxu0 0.0
  %1478 = vmatprep.subr.mxu0 0.0
  %1479 = vmatpush1.msra.mxu0 0.0
  %1480 = vmatprep.subr.mxu0 0.0
  %1481 = vmatpush1.msra.mxu0 0.0
  %1482 = vmatprep.subr.mxu0 0.0
  %1483 = vmatpush1.msra.mxu0 0.0
  %1484 = vmatprep.subr.mxu0 0.0
  %1485 = vmatpush1.msra.mxu0 0.0
  %1486 = vmatprep.subr.mxu0 0.0
  %1487 = vmatpush1.msra.mxu0 0.0
  %1488 = vmatprep.subr.mxu0 0.0
  %1489 = vmatpush1.msra.mxu0 0.0
  %1490 = vmatprep.subr.mxu0 0.0
  %1491 = vmatpush1.msra.mxu0 0.0
  %1492 = vmatprep.subr.mxu0 0.0
  %1493 = vmatpush1.msra.mxu0 0.0
  %1494 = vmatprep.subr.mxu0 0.0
  %1495 = vmatpush1.msra.mxu0 0.0
  %1496 = vmatprep.subr.mxu0 0.0
  %1497 = vmatpush1.msra.mxu0 0.0
  %1498 = vmatprep.subr.mxu0 0.0
  %1499 = vmatpush1.msra.mxu0 0.0
  %1500 = vmatprep.subr.mxu0 0.0
  %1501 = vmatpush1.msra.mxu0 0.0
  %1502 = vmatprep.subr.mxu0 0.0
  %1503 = vmatpush1.msra.mxu0 0.0
  %1504 = vmatprep.subr.mxu0 0.0
  %1505 = vmatpush1.msra.mxu0 0.0
  %1506 = vmatprep.subr.mxu0 0.0
  %1507 = vmatpush1.msra.mxu0 0.0
  %1508 = vmatprep.subr.mxu0 0.0
  %1509 = vmatpush1.msra.mxu0 0.0
  %1510 = vmatprep.subr.mxu0 0.0
  %1511 = vmatpush1.msra.mxu0 0.0
  %1512 = vmatprep.subr.mxu0 0.0
  %1513 = vmatpush1.msra.mxu0 0.0
  %1514 = vmatprep.subr.mxu0 0.0
  %1515 = vmatpush1.msra.mxu0 0.0
  %1516 = vmatprep.subr.mxu0 0.0
  %1517 = vmatpush1.msra.mxu0 0.0
  %1518 = vmatprep.subr.mxu0 0.0
  %1519 = vmatpush1.msra.mxu0 0.0
  %1520 = vmatprep.subr.mxu0 0.0
  %1521 = vmatpush1.msra.mxu0 0.0
  %1522 = vmatprep.subr.mxu0 0.0
  %1523 = vmatpush1.msra.mxu0 0.0
  %1524 = vmatprep.subr.mxu0 0.0
  %1525 = vmatpush1.msra.mxu0 0.0
  %1526 = vmatprep.mubr.f32.mxu0 0.0
  %1527 = vmatmul.mubr.f32.gmra.mrb[0].mxu0 %v1460
  %v1528 = vpop.f32.mrb[0].mxu0
  %v1529 = vadd.f32 0.0, %v1528
  %v1530 = vpop.f32.mrb[0].mxu0
  %1531 = vdwg.mxu0
  %v1532 = vadd.f32 %v1453, %v1529
  %v1533 = vxor.u32 %v1532, 2147483648
  %v1534 = vmul.f32 %v1533, 1.442695
  %v1535 = vpow.pop %v1534
  %v1536 = vadd.f32 %v1535, 1.0
  %v1537 = vrcp.pop %v1536
  %v1538 = vmul.f32 1.0, %v1537
  %v1539 = vtanh.pop %v1532
  %1541 = vrot.lane.b32.xlu0 %v1450, 32
  %v1542 = vpop.permute.xlu0 %1541
  %v1544 = vmul.f32 %v1538, %v1542
  %1546 = vrot.lane.b32.xlu0 %v1539, 64
  %v1547 = vpop.permute.xlu0 %1546
  %v1549 = vmul.f32 %v1538, %v1547
  %1551 = vrot.lane.b32.xlu0 %v1549, 32
  %v1552 = vpop.permute.xlu0 %1551
  %v1554 = vadd.f32 %v1544, %v1552
  %v1555 = vtanh.pop %v1554
  %1557 = vrot.lane.b32.xlu0 %v1555, 64
  %v1558 = vpop.permute.xlu0 %1557
  %v1560 = vmul.f32 %v1538, %v1558
  %1562 = vrot.lane.b32.xlu0 %v1560, 32
  %v1563 = vpop.permute.xlu0 %1562
  %vm1565 = vcmask 254976
  %1566 = vst.msk [vmem:[%s8] sm:$0x3] %vm1565, %v1563
  %v1567 = vld [vmem:[%s1438] sm:$0x3]
  %v1568 = vld [vmem:[%s7] sm:$0xff]
  %v1569 = vld [vmem:[%s7 + $0x8] sm:$0xff]
  %v1570 = vld [vmem:[%s7 + $0x10] sm:$0xff]
  %v1571 = vld [vmem:[%s7 + $0x18] sm:$0xff]
  %v1573 = vsel %vm1458, %v1451, 0
  %1575 = vmatprep.subr.mxu0 0.0
  %1576 = vmatpush1.msra.mxu0 %v1568
  %1577 = vmatprep.subr.mxu0 0.0
  %1578 = vmatpush1.msra.mxu0 %v1569
  %1579 = vmatprep.subr.mxu0 0.0
  %1580 = vmatpush1.msra.mxu0 %v1570
  %1581 = vmatprep.subr.mxu0 0.0
  %1582 = vmatpush1.msra.mxu0 %v1571
  %1583 = vmatprep.subr.mxu0 0.0
  %1584 = vmatpush1.msra.mxu0 0.0
  %1585 = vmatprep.subr.mxu0 0.0
  %1586 = vmatpush1.msra.mxu0 0.0
  %1587 = vmatprep.subr.mxu0 0.0
  %1588 = vmatpush1.msra.mxu0 0.0
  %1589 = vmatprep.subr.mxu0 0.0
  %1590 = vmatpush1.msra.mxu0 0.0
  %1591 = vmatprep.subr.mxu0 0.0
  %1592 = vmatpush1.msra.mxu0 0.0
  %1593 = vmatprep.subr.mxu0 0.0
  %1594 = vmatpush1.msra.mxu0 0.0
  %1595 = vmatprep.subr.mxu0 0.0
  %1596 = vmatpush1.msra.mxu0 0.0
  %1597 = vmatprep.subr.mxu0 0.0
  %1598 = vmatpush1.msra.mxu0 0.0
  %1599 = vmatprep.subr.mxu0 0.0
  %1600 = vmatpush1.msra.mxu0 0.0
  %1601 = vmatprep.subr.mxu0 0.0
  %1602 = vmatpush1.msra.mxu0 0.0
  %1603 = vmatprep.subr.mxu0 0.0
  %1604 = vmatpush1.msra.mxu0 0.0
  %1605 = vmatprep.subr.mxu0 0.0
  %1606 = vmatpush1.msra.mxu0 0.0
  %1607 = vmatprep.subr.mxu0 0.0
  %1608 = vmatpush1.msra.mxu0 0.0
  %1609 = vmatprep.subr.mxu0 0.0
  %1610 = vmatpush1.msra.mxu0 0.0
  %1611 = vmatprep.subr.mxu0 0.0
  %1612 = vmatpush1.msra.mxu0 0.0
  %1613 = vmatprep.subr.mxu0 0.0
  %1614 = vmatpush1.msra.mxu0 0.0
  %1615 = vmatprep.subr.mxu0 0.0
  %1616 = vmatpush1.msra.mxu0 0.0
  %1617 = vmatprep.subr.mxu0 0.0
  %1618 = vmatpush1.msra.mxu0 0.0
  %1619 = vmatprep.subr.mxu0 0.0
  %1620 = vmatpush1.msra.mxu0 0.0
  %1621 = vmatprep.subr.mxu0 0.0
  %1622 = vmatpush1.msra.mxu0 0.0
  %1623 = vmatprep.subr.mxu0 0.0
  %1624 = vmatpush1.msra.mxu0 0.0
  %1625 = vmatprep.subr.mxu0 0.0
  %1626 = vmatpush1.msra.mxu0 0.0
  %1627 = vmatprep.subr.mxu0 0.0
  %1628 = vmatpush1.msra.mxu0 0.0
  %1629 = vmatprep.subr.mxu0 0.0
  %1630 = vmatpush1.msra.mxu0 0.0
  %1631 = vmatprep.subr.mxu0 0.0
  %1632 = vmatpush1.msra.mxu0 0.0
  %1633 = vmatprep.subr.mxu0 0.0
  %1634 = vmatpush1.msra.mxu0 0.0
  %1635 = vmatprep.subr.mxu0 0.0
  %1636 = vmatpush1.msra.mxu0 0.0
  %1637 = vmatprep.subr.mxu0 0.0
  %1638 = vmatpush1.msra.mxu0 0.0
  %1639 = vmatprep.mubr.f32.mxu0 0.0
  %1640 = vmatmul.mubr.f32.gmra.mrb[0].mxu0 %v1573
  %v1641 = vpop.f32.mrb[0].mxu0
  %v1642 = vadd.f32 0.0, %v1641
  %v1643 = vpop.f32.mrb[0].mxu0
  %1644 = vdwg.mxu0
  %v1645 = vadd.f32 %v1567, %v1642
  %v1646 = vxor.u32 %v1645, 2147483648
  %v1647 = vmul.f32 %v1646, 1.442695
  %v1648 = vpow.pop %v1647
  %v1649 = vadd.f32 %v1648, 1.0
  %v1650 = vrcp.pop %v1649
  %v1651 = vmul.f32 1.0, %v1650
  %v1652 = vtanh.pop %v1645
  %1654 = vrot.lane.b32.xlu0 %v1452, 32
  %v1655 = vpop.permute.xlu0 %1654
  %v1657 = vmul.f32 %v1651, %v1655
  %1659 = vrot.lane.b32.xlu0 %v1652, 64
  %v1660 = vpop.permute.xlu0 %1659
  %v1662 = vmul.f32 %v1651, %v1660
  %1664 = vrot.lane.b32.xlu0 %v1662, 32
  %v1665 = vpop.permute.xlu0 %1664
  %v1667 = vadd.f32 %v1657, %v1665
  %v1668 = vtanh.pop %v1667
  %1670 = vrot.lane.b32.xlu0 %v1668, 64
  %v1671 = vpop.permute.xlu0 %1670
  %v1673 = vmul.f32 %v1651, %v1671
  %1675 = vrot.lane.b32.xlu0 %v1673, 32
  %v1676 = vpop.permute.xlu0 %1675
  %s1678 = scalar_lea.vmem %s64, 14
  %1679 = vst.msk [vmem:[%s1678] sm:$0x3] %vm1565, %v1676
  %v1680 = vld [vmem:[%s320] sm:$0x3]
  %v1681 = vld [vmem:[%s6] sm:$0xff]
  %v1682 = vld [vmem:[%s6 + $0x8] sm:$0xff]
  %v1683 = vld [vmem:[%s6 + $0x10] sm:$0xff]
  %v1684 = vld [vmem:[%s6 + $0x18] sm:$0xff]
  %v1685 = vsel %vm1458, %v1563, 0
  %1687 = vmatprep.subr.mxu0 0.0
  %1688 = vmatpush1.msra.mxu0 %v1681
  %1689 = vmatprep.subr.mxu0 0.0
  %1690 = vmatpush1.msra.mxu0 %v1682
  %1691 = vmatprep.subr.mxu0 0.0
  %1692 = vmatpush1.msra.mxu0 %v1683
  %1693 = vmatprep.subr.mxu0 0.0
  %1694 = vmatpush1.msra.mxu0 %v1684
  %1695 = vmatprep.subr.mxu0 0.0
  %1696 = vmatpush1.msra.mxu0 0.0
  %1697 = vmatprep.subr.mxu0 0.0
  %1698 = vmatpush1.msra.mxu0 0.0
  %1699 = vmatprep.subr.mxu0 0.0
  %1700 = vmatpush1.msra.mxu0 0.0
  %1701 = vmatprep.subr.mxu0 0.0
  %1702 = vmatpush1.msra.mxu0 0.0
  %1703 = vmatprep.subr.mxu0 0.0
  %1704 = vmatpush1.msra.mxu0 0.0
  %1705 = vmatprep.subr.mxu0 0.0
  %1706 = vmatpush1.msra.mxu0 0.0
  %1707 = vmatprep.subr.mxu0 0.0
  %1708 = vmatpush1.msra.mxu0 0.0
  %1709 = vmatprep.subr.mxu0 0.0
  %1710 = vmatpush1.msra.mxu0 0.0
  %1711 = vmatprep.subr.mxu0 0.0
  %1712 = vmatpush1.msra.mxu0 0.0
  %1713 = vmatprep.subr.mxu0 0.0
  %1714 = vmatpush1.msra.mxu0 0.0
  %1715 = vmatprep.subr.mxu0 0.0
  %1716 = vmatpush1.msra.mxu0 0.0
  %1717 = vmatprep.subr.mxu0 0.0
  %1718 = vmatpush1.msra.mxu0 0.0
  %1719 = vmatprep.subr.mxu0 0.0
  %1720 = vmatpush1.msra.mxu0 0.0
  %1721 = vmatprep.subr.mxu0 0.0
  %1722 = vmatpush1.msra.mxu0 0.0
  %1723 = vmatprep.subr.mxu0 0.0
  %1724 = vmatpush1.msra.mxu0 0.0
  %1725 = vmatprep.subr.mxu0 0.0
  %1726 = vmatpush1.msra.mxu0 0.0
  %1727 = vmatprep.subr.mxu0 0.0
  %1728 = vmatpush1.msra.mxu0 0.0
  %1729 = vmatprep.subr.mxu0 0.0
  %1730 = vmatpush1.msra.mxu0 0.0
  %1731 = vmatprep.subr.mxu0 0.0
  %1732 = vmatpush1.msra.mxu0 0.0
  %1733 = vmatprep.subr.mxu0 0.0
  %1734 = vmatpush1.msra.mxu0 0.0
  %1735 = vmatprep.subr.mxu0 0.0
  %1736 = vmatpush1.msra.mxu0 0.0
  %1737 = vmatprep.subr.mxu0 0.0
  %1738 = vmatpush1.msra.mxu0 0.0
  %1739 = vmatprep.subr.mxu0 0.0
  %1740 = vmatpush1.msra.mxu0 0.0
  %1741 = vmatprep.subr.mxu0 0.0
  %1742 = vmatpush1.msra.mxu0 0.0
  %1743 = vmatprep.subr.mxu0 0.0
  %1744 = vmatpush1.msra.mxu0 0.0
  %1745 = vmatprep.subr.mxu0 0.0
  %1746 = vmatpush1.msra.mxu0 0.0
  %1747 = vmatprep.subr.mxu0 0.0
  %1748 = vmatpush1.msra.mxu0 0.0
  %1749 = vmatprep.subr.mxu0 0.0
  %1750 = vmatpush1.msra.mxu0 0.0
  %1751 = vmatprep.mubr.f32.mxu0 0.0
  %1752 = vmatmul.mubr.f32.gmra.mrb[0].mxu0 %v1685
  %v1753 = vpop.f32.mrb[0].mxu0
  %v1754 = vadd.f32 0.0, %v1753
  %v1755 = vpop.f32.mrb[0].mxu0
  %1756 = vdwg.mxu0
  %v1757 = vadd.f32 %v1680, %v1754
  %v1758 = vxor.u32 %v1757, 2147483648
  %v1759 = vmul.f32 %v1758, 1.442695
  %v1760 = vpow.pop %v1759
  %v1761 = vadd.f32 %v1760, 1.0
  %v1762 = vrcp.pop %v1761
  %v1763 = vmul.f32 1.0, %v1762
  %v1764 = vtanh.pop %v1757
  %v1765 = vmul.f32 %v1763, %v1554
  %1767 = vrot.lane.b32.xlu0 %v1764, 64
  %v1768 = vpop.permute.xlu0 %1767
  %v1770 = vmul.f32 %v1763, %v1768
  %1772 = vrot.lane.b32.xlu0 %v1770, 32
  %v1773 = vpop.permute.xlu0 %1772
  %v1775 = vadd.f32 %v1765, %v1773
  %v1776 = vtanh.pop %v1775
  %1778 = vrot.lane.b32.xlu0 %v1776, 64
  %v1779 = vpop.permute.xlu0 %1778
  %v1781 = vmul.f32 %v1763, %v1779
  %1783 = vrot.lane.b32.xlu0 %v1781, 32
  %v1784 = vpop.permute.xlu0 %1783
  %s1786 = scalar_lea.vmem %s8, 2
  %1787 = vst.msk [vmem:[%s1786] sm:$0x3] %vm1565, %v1784
  %v1788 = vld [vmem:[%s1266] sm:$0x3]
  %v1789 = vld [vmem:[%s7] sm:$0xff]
  %v1790 = vld [vmem:[%s7 + $0x8] sm:$0xff]
  %v1791 = vld [vmem:[%s7 + $0x10] sm:$0xff]
  %v1792 = vld [vmem:[%s7 + $0x18] sm:$0xff]
  %v1793 = vsel %vm1458, %v1676, 0
  %1795 = vmatprep.subr.mxu0 0.0
  %1796 = vmatpush1.msra.mxu0 %v1789
  %1797 = vmatprep.subr.mxu0 0.0
  %1798 = vmatpush1.msra.mxu0 %v1790
  %1799 = vmatprep.subr.mxu0 0.0
  %1800 = vmatpush1.msra.mxu0 %v1791
  %1801 = vmatprep.subr.mxu0 0.0
  %1802 = vmatpush1.msra.mxu0 %v1792
  %1803 = vmatprep.subr.mxu0 0.0
  %1804 = vmatpush1.msra.mxu0 0.0
  %1805 = vmatprep.subr.mxu0 0.0
  %1806 = vmatpush1.msra.mxu0 0.0
  %1807 = vmatprep.subr.mxu0 0.0
  %1808 = vmatpush1.msra.mxu0 0.0
  %1809 = vmatprep.subr.mxu0 0.0
  %1810 = vmatpush1.msra.mxu0 0.0
  %1811 = vmatprep.subr.mxu0 0.0
  %1812 = vmatpush1.msra.mxu0 0.0
  %1813 = vmatprep.subr.mxu0 0.0
  %1814 = vmatpush1.msra.mxu0 0.0
  %1815 = vmatprep.subr.mxu0 0.0
  %1816 = vmatpush1.msra.mxu0 0.0
  %1817 = vmatprep.subr.mxu0 0.0
  %1818 = vmatpush1.msra.mxu0 0.0
  %1819 = vmatprep.subr.mxu0 0.0
  %1820 = vmatpush1.msra.mxu0 0.0
  %1821 = vmatprep.subr.mxu0 0.0
  %1822 = vmatpush1.msra.mxu0 0.0
  %1823 = vmatprep.subr.mxu0 0.0
  %1824 = vmatpush1.msra.mxu0 0.0
  %1825 = vmatprep.subr.mxu0 0.0
  %1826 = vmatpush1.msra.mxu0 0.0
  %1827 = vmatprep.subr.mxu0 0.0
  %1828 = vmatpush1.msra.mxu0 0.0
  %1829 = vmatprep.subr.mxu0 0.0
  %1830 = vmatpush1.msra.mxu0 0.0
  %1831 = vmatprep.subr.mxu0 0.0
  %1832 = vmatpush1.msra.mxu0 0.0
  %1833 = vmatprep.subr.mxu0 0.0
  %1834 = vmatpush1.msra.mxu0 0.0
  %1835 = vmatprep.subr.mxu0 0.0
  %1836 = vmatpush1.msra.mxu0 0.0
  %1837 = vmatprep.subr.mxu0 0.0
  %1838 = vmatpush1.msra.mxu0 0.0
  %1839 = vmatprep.subr.mxu0 0.0
  %1840 = vmatpush1.msra.mxu0 0.0
  %1841 = vmatprep.subr.mxu0 0.0
  %1842 = vmatpush1.msra.mxu0 0.0
  %1843 = vmatprep.subr.mxu0 0.0
  %1844 = vmatpush1.msra.mxu0 0.0
  %1845 = vmatprep.subr.mxu0 0.0
  %1846 = vmatpush1.msra.mxu0 0.0
  %1847 = vmatprep.subr.mxu0 0.0
  %1848 = vmatpush1.msra.mxu0 0.0
  %1849 = vmatprep.subr.mxu0 0.0
  %1850 = vmatpush1.msra.mxu0 0.0
  %1851 = vmatprep.subr.mxu0 0.0
  %1852 = vmatpush1.msra.mxu0 0.0
  %1853 = vmatprep.subr.mxu0 0.0
  %1854 = vmatpush1.msra.mxu0 0.0
  %1855 = vmatprep.subr.mxu0 0.0
  %1856 = vmatpush1.msra.mxu0 0.0
  %1857 = vmatprep.subr.mxu0 0.0
  %1858 = vmatpush1.msra.mxu0 0.0
  %1859 = vmatprep.mubr.f32.mxu0 0.0
  %1860 = vmatmul.mubr.f32.gmra.mrb[0].mxu0 %v1793
  %v1861 = vpop.f32.mrb[0].mxu0
  %v1862 = vadd.f32 0.0, %v1861
  %v1863 = vpop.f32.mrb[0].mxu0
  %1864 = vdwg.mxu0
  %v1865 = vadd.f32 %v1788, %v1862
  %v1866 = vxor.u32 %v1865, 2147483648
  %v1867 = vmul.f32 %v1866, 1.442695
  %v1868 = vpow.pop %v1867
  %v1869 = vadd.f32 %v1868, 1.0
  %v1870 = vrcp.pop %v1869
  %v1871 = vmul.f32 1.0, %v1870
  %v1872 = vtanh.pop %v1865
  %v1873 = vmul.f32 %v1871, %v1667
  %1875 = vrot.lane.b32.xlu0 %v1872, 64
  %v1876 = vpop.permute.xlu0 %1875
  %v1878 = vmul.f32 %v1871, %v1876
  %1880 = vrot.lane.b32.xlu0 %v1878, 32
  %v1881 = vpop.permute.xlu0 %1880
  %v1883 = vadd.f32 %v1873, %v1881
  %v1884 = vtanh.pop %v1883
  %1886 = vrot.lane.b32.xlu0 %v1884, 64
  %v1887 = vpop.permute.xlu0 %1886
  %v1889 = vmul.f32 %v1871, %v1887
  %1891 = vrot.lane.b32.xlu0 %v1889, 32
  %v1892 = vpop.permute.xlu0 %1891
  %s1894 = scalar_lea.vmem %s64, 12
  %1895 = vst.msk [vmem:[%s1894] sm:$0x3] %vm1565, %v1892
  %v1896 = vld [vmem:[%s492] sm:$0x3]
  %v1897 = vld [vmem:[%s6] sm:$0xff]
  %v1898 = vld [vmem:[%s6 + $0x8] sm:$0xff]
  %v1899 = vld [vmem:[%s6 + $0x10] sm:$0xff]
  %v1900 = vld [vmem:[%s6 + $0x18] sm:$0xff]
  %v1901 = vsel %vm1458, %v1784, 0
  %1903 = vmatprep.subr.mxu0 0.0
  %1904 = vmatpush1.msra.mxu0 %v1897
  %1905 = vmatprep.subr.mxu0 0.0
  %1906 = vmatpush1.msra.mxu0 %v1898
  %1907 = vmatprep.subr.mxu0 0.0
  %1908 = vmatpush1.msra.mxu0 %v1899
  %1909 = vmatprep.subr.mxu0 0.0
  %1910 = vmatpush1.msra.mxu0 %v1900
  %1911 = vmatprep.subr.mxu0 0.0
  %1912 = vmatpush1.msra.mxu0 0.0
  %1913 = vmatprep.subr.mxu0 0.0
  %1914 = vmatpush1.msra.mxu0 0.0
  %1915 = vmatprep.subr.mxu0 0.0
  %1916 = vmatpush1.msra.mxu0 0.0
  %1917 = vmatprep.subr.mxu0 0.0
  %1918 = vmatpush1.msra.mxu0 0.0
  %1919 = vmatprep.subr.mxu0 0.0
  %1920 = vmatpush1.msra.mxu0 0.0
  %1921 = vmatprep.subr.mxu0 0.0
  %1922 = vmatpush1.msra.mxu0 0.0
  %1923 = vmatprep.subr.mxu0 0.0
  %1924 = vmatpush1.msra.mxu0 0.0
  %1925 = vmatprep.subr.mxu0 0.0
  %1926 = vmatpush1.msra.mxu0 0.0
  %1927 = vmatprep.subr.mxu0 0.0
  %1928 = vmatpush1.msra.mxu0 0.0
  %1929 = vmatprep.subr.mxu0 0.0
  %1930 = vmatpush1.msra.mxu0 0.0
  %1931 = vmatprep.subr.mxu0 0.0
  %1932 = vmatpush1.msra.mxu0 0.0
  %1933 = vmatprep.subr.mxu0 0.0
  %1934 = vmatpush1.msra.mxu0 0.0
  %1935 = vmatprep.subr.mxu0 0.0
  %1936 = vmatpush1.msra.mxu0 0.0
  %1937 = vmatprep.subr.mxu0 0.0
  %1938 = vmatpush1.msra.mxu0 0.0
  %1939 = vmatprep.subr.mxu0 0.0
  %1940 = vmatpush1.msra.mxu0 0.0
  %1941 = vmatprep.subr.mxu0 0.0
  %1942 = vmatpush1.msra.mxu0 0.0
  %1943 = vmatprep.subr.mxu0 0.0
  %1944 = vmatpush1.msra.mxu0 0.0
  %1945 = vmatprep.subr.mxu0 0.0
  %1946 = vmatpush1.msra.mxu0 0.0
  %1947 = vmatprep.subr.mxu0 0.0
  %1948 = vmatpush1.msra.mxu0 0.0
  %1949 = vmatprep.subr.mxu0 0.0
  %1950 = vmatpush1.msra.mxu0 0.0
  %1951 = vmatprep.subr.mxu0 0.0
  %1952 = vmatpush1.msra.mxu0 0.0
  %1953 = vmatprep.subr.mxu0 0.0
  %1954 = vmatpush1.msra.mxu0 0.0
  %1955 = vmatprep.subr.mxu0 0.0
  %1956 = vmatpush1.msra.mxu0 0.0
  %1957 = vmatprep.subr.mxu0 0.0
  %1958 = vmatpush1.msra.mxu0 0.0
  %1959 = vmatprep.subr.mxu0 0.0
  %1960 = vmatpush1.msra.mxu0 0.0
  %1961 = vmatprep.subr.mxu0 0.0
  %1962 = vmatpush1.msra.mxu0 0.0
  %1963 = vmatprep.subr.mxu0 0.0
  %1964 = vmatpush1.msra.mxu0 0.0
  %1965 = vmatprep.subr.mxu0 0.0
  %1966 = vmatpush1.msra.mxu0 0.0
  %1967 = vmatprep.mubr.f32.mxu0 0.0
  %1968 = vmatmul.mubr.f32.gmra.mrb[0].mxu0 %v1901
  %v1969 = vpop.f32.mrb[0].mxu0
  %v1970 = vadd.f32 0.0, %v1969
  %v1971 = vpop.f32.mrb[0].mxu0
  %1972 = vdwg.mxu0
  %v1973 = vadd.f32 %v1896, %v1970
  %v1974 = vxor.u32 %v1973, 2147483648
  %v1975 = vmul.f32 %v1974, 1.442695
  %v1976 = vpow.pop %v1975
  %v1977 = vadd.f32 %v1976, 1.0
  %v1978 = vrcp.pop %v1977
  %v1979 = vmul.f32 1.0, %v1978
  %v1980 = vtanh.pop %v1973
  %v1981 = vmul.f32 %v1979, %v1775
  %1983 = vrot.lane.b32.xlu0 %v1980, 64
  %v1984 = vpop.permute.xlu0 %1983
  %v1986 = vmul.f32 %v1979, %v1984
  %1988 = vrot.lane.b32.xlu0 %v1986, 32
  %v1989 = vpop.permute.xlu0 %1988
  %v1991 = vadd.f32 %v1981, %v1989
  %v1992 = vtanh.pop %v1991
  %1994 = vrot.lane.b32.xlu0 %v1992, 64
  %v1995 = vpop.permute.xlu0 %1994
  %v1997 = vmul.f32 %v1979, %v1995
  %1999 = vrot.lane.b32.xlu0 %v1997, 32
  %v2000 = vpop.permute.xlu0 %1999
  %s2002 = scalar_lea.vmem %s8, 4
  %2003 = vst.msk [vmem:[%s2002] sm:$0x3] %vm1565, %v2000
  %v2004 = vld [vmem:[%s1094] sm:$0x3]
  %v2005 = vld [vmem:[%s7] sm:$0xff]
  %v2006 = vld [vmem:[%s7 + $0x8] sm:$0xff]
  %v2007 = vld [vmem:[%s7 + $0x10] sm:$0xff]
  %v2008 = vld [vmem:[%s7 + $0x18] sm:$0xff]
  %v2009 = vsel %vm1458, %v1892, 0
  %2011 = vmatprep.subr.mxu0 0.0
  %2012 = vmatpush1.msra.mxu0 %v2005
  %2013 = vmatprep.subr.mxu0 0.0
  %2014 = vmatpush1.msra.mxu0 %v2006
  %2015 = vmatprep.subr.mxu0 0.0
  %2016 = vmatpush1.msra.mxu0 %v2007
  %2017 = vmatprep.subr.mxu0 0.0
  %2018 = vmatpush1.msra.mxu0 %v2008
  %2019 = vmatprep.subr.mxu0 0.0
  %2020 = vmatpush1.msra.mxu0 0.0
  %2021 = vmatprep.subr.mxu0 0.0
  %2022 = vmatpush1.msra.mxu0 0.0
  %2023 = vmatprep.subr.mxu0 0.0
  %2024 = vmatpush1.msra.mxu0 0.0
  %2025 = vmatprep.subr.mxu0 0.0
  %2026 = vmatpush1.msra.mxu0 0.0
  %2027 = vmatprep.subr.mxu0 0.0
  %2028 = vmatpush1.msra.mxu0 0.0
  %2029 = vmatprep.subr.mxu0 0.0
  %2030 = vmatpush1.msra.mxu0 0.0
  %2031 = vmatprep.subr.mxu0 0.0
  %2032 = vmatpush1.msra.mxu0 0.0
  %2033 = vmatprep.subr.mxu0 0.0
  %2034 = vmatpush1.msra.mxu0 0.0
  %2035 = vmatprep.subr.mxu0 0.0
  %2036 = vmatpush1.msra.mxu0 0.0
  %2037 = vmatprep.subr.mxu0 0.0
  %2038 = vmatpush1.msra.mxu0 0.0
  %2039 = vmatprep.subr.mxu0 0.0
  %2040 = vmatpush1.msra.mxu0 0.0
  %2041 = vmatprep.subr.mxu0 0.0
  %2042 = vmatpush1.msra.mxu0 0.0
  %2043 = vmatprep.subr.mxu0 0.0
  %2044 = vmatpush1.msra.mxu0 0.0
  %2045 = vmatprep.subr.mxu0 0.0
  %2046 = vmatpush1.msra.mxu0 0.0
  %2047 = vmatprep.subr.mxu0 0.0
  %2048 = vmatpush1.msra.mxu0 0.0
  %2049 = vmatprep.subr.mxu0 0.0
  %2050 = vmatpush1.msra.mxu0 0.0
  %2051 = vmatprep.subr.mxu0 0.0
  %2052 = vmatpush1.msra.mxu0 0.0
  %2053 = vmatprep.subr.mxu0 0.0
  %2054 = vmatpush1.msra.mxu0 0.0
  %2055 = vmatprep.subr.mxu0 0.0
  %2056 = vmatpush1.msra.mxu0 0.0
  %2057 = vmatprep.subr.mxu0 0.0
  %2058 = vmatpush1.msra.mxu0 0.0
  %2059 = vmatprep.subr.mxu0 0.0
  %2060 = vmatpush1.msra.mxu0 0.0
  %2061 = vmatprep.subr.mxu0 0.0
  %2062 = vmatpush1.msra.mxu0 0.0
  %2063 = vmatprep.subr.mxu0 0.0
  %2064 = vmatpush1.msra.mxu0 0.0
  %2065 = vmatprep.subr.mxu0 0.0
  %2066 = vmatpush1.msra.mxu0 0.0
  %2067 = vmatprep.subr.mxu0 0.0
  %2068 = vmatpush1.msra.mxu0 0.0
  %2069 = vmatprep.subr.mxu0 0.0
  %2070 = vmatpush1.msra.mxu0 0.0
  %2071 = vmatprep.subr.mxu0 0.0
  %2072 = vmatpush1.msra.mxu0 0.0
  %2073 = vmatprep.subr.mxu0 0.0
  %2074 = vmatpush1.msra.mxu0 0.0
  %2075 = vmatprep.mubr.f32.mxu0 0.0
  %2076 = vmatmul.mubr.f32.gmra.mrb[0].mxu0 %v2009
  %v2077 = vpop.f32.mrb[0].mxu0
  %v2078 = vadd.f32 0.0, %v2077
  %v2079 = vpop.f32.mrb[0].mxu0
  %2080 = vdwg.mxu0
  %v2081 = vadd.f32 %v2004, %v2078
  %v2082 = vxor.u32 %v2081, 2147483648
  %v2083 = vmul.f32 %v2082, 1.442695
  %v2084 = vpow.pop %v2083
  %v2085 = vadd.f32 %v2084, 1.0
  %v2086 = vrcp.pop %v2085
  %v2087 = vmul.f32 1.0, %v2086
  %v2088 = vtanh.pop %v2081
  %v2089 = vmul.f32 %v2087, %v1883
  %2091 = vrot.lane.b32.xlu0 %v2088, 64
  %v2092 = vpop.permute.xlu0 %2091
  %v2094 = vmul.f32 %v2087, %v2092
  %2096 = vrot.lane.b32.xlu0 %v2094, 32
  %v2097 = vpop.permute.xlu0 %2096
  %v2099 = vadd.f32 %v2089, %v2097
  %v2100 = vtanh.pop %v2099
  %2102 = vrot.lane.b32.xlu0 %v2100, 64
  %v2103 = vpop.permute.xlu0 %2102
  %v2105 = vmul.f32 %v2087, %v2103
  %2107 = vrot.lane.b32.xlu0 %v2105, 32
  %v2108 = vpop.permute.xlu0 %2107
  %s2110 = scalar_lea.vmem %s64, 10
  %2111 = vst.msk [vmem:[%s2110] sm:$0x3] %vm1565, %v2108
  %v2112 = vld [vmem:[%s664] sm:$0x3]
  %v2113 = vld [vmem:[%s6] sm:$0xff]
  %v2114 = vld [vmem:[%s6 + $0x8] sm:$0xff]
  %v2115 = vld [vmem:[%s6 + $0x10] sm:$0xff]
  %v2116 = vld [vmem:[%s6 + $0x18] sm:$0xff]
  %v2117 = vsel %vm1458, %v2000, 0
  %2119 = vmatprep.subr.mxu0 0.0
  %2120 = vmatpush1.msra.mxu0 %v2113
  %2121 = vmatprep.subr.mxu0 0.0
  %2122 = vmatpush1.msra.mxu0 %v2114
  %2123 = vmatprep.subr.mxu0 0.0
  %2124 = vmatpush1.msra.mxu0 %v2115
  %2125 = vmatprep.subr.mxu0 0.0
  %2126 = vmatpush1.msra.mxu0 %v2116
  %2127 = vmatprep.subr.mxu0 0.0
  %2128 = vmatpush1.msra.mxu0 0.0
  %2129 = vmatprep.subr.mxu0 0.0
  %2130 = vmatpush1.msra.mxu0 0.0
  %2131 = vmatprep.subr.mxu0 0.0
  %2132 = vmatpush1.msra.mxu0 0.0
  %2133 = vmatprep.subr.mxu0 0.0
  %2134 = vmatpush1.msra.mxu0 0.0
  %2135 = vmatprep.subr.mxu0 0.0
  %2136 = vmatpush1.msra.mxu0 0.0
  %2137 = vmatprep.subr.mxu0 0.0
  %2138 = vmatpush1.msra.mxu0 0.0
  %2139 = vmatprep.subr.mxu0 0.0
  %2140 = vmatpush1.msra.mxu0 0.0
  %2141 = vmatprep.subr.mxu0 0.0
  %2142 = vmatpush1.msra.mxu0 0.0
  %2143 = vmatprep.subr.mxu0 0.0
  %2144 = vmatpush1.msra.mxu0 0.0
  %2145 = vmatprep.subr.mxu0 0.0
  %2146 = vmatpush1.msra.mxu0 0.0
  %2147 = vmatprep.subr.mxu0 0.0
  %2148 = vmatpush1.msra.mxu0 0.0
  %2149 = vmatprep.subr.mxu0 0.0
  %2150 = vmatpush1.msra.mxu0 0.0
  %2151 = vmatprep.subr.mxu0 0.0
  %2152 = vmatpush1.msra.mxu0 0.0
  %2153 = vmatprep.subr.mxu0 0.0
  %2154 = vmatpush1.msra.mxu0 0.0
  %2155 = vmatprep.subr.mxu0 0.0
  %2156 = vmatpush1.msra.mxu0 0.0
  %2157 = vmatprep.subr.mxu0 0.0
  %2158 = vmatpush1.msra.mxu0 0.0
  %2159 = vmatprep.subr.mxu0 0.0
  %2160 = vmatpush1.msra.mxu0 0.0
  %2161 = vmatprep.subr.mxu0 0.0
  %2162 = vmatpush1.msra.mxu0 0.0
  %2163 = vmatprep.subr.mxu0 0.0
  %2164 = vmatpush1.msra.mxu0 0.0
  %2165 = vmatprep.subr.mxu0 0.0
  %2166 = vmatpush1.msra.mxu0 0.0
  %2167 = vmatprep.subr.mxu0 0.0
  %2168 = vmatpush1.msra.mxu0 0.0
  %2169 = vmatprep.subr.mxu0 0.0
  %2170 = vmatpush1.msra.mxu0 0.0
  %2171 = vmatprep.subr.mxu0 0.0
  %2172 = vmatpush1.msra.mxu0 0.0
  %2173 = vmatprep.subr.mxu0 0.0
  %2174 = vmatpush1.msra.mxu0 0.0
  %2175 = vmatprep.subr.mxu0 0.0
  %2176 = vmatpush1.msra.mxu0 0.0
  %2177 = vmatprep.subr.mxu0 0.0
  %2178 = vmatpush1.msra.mxu0 0.0
  %2179 = vmatprep.subr.mxu0 0.0
  %2180 = vmatpush1.msra.mxu0 0.0
  %2181 = vmatprep.subr.mxu0 0.0
  %2182 = vmatpush1.msra.mxu0 0.0
  %2183 = vmatprep.mubr.f32.mxu0 0.0
  %2184 = vmatmul.mubr.f32.gmra.mrb[0].mxu0 %v2117
  %v2185 = vpop.f32.mrb[0].mxu0
  %v2186 = vadd.f32 0.0, %v2185
  %v2187 = vpop.f32.mrb[0].mxu0
  %2188 = vdwg.mxu0
  %v2189 = vadd.f32 %v2112, %v2186
  %v2190 = vxor.u32 %v2189, 2147483648
  %v2191 = vmul.f32 %v2190, 1.442695
  %v2192 = vpow.pop %v2191
  %v2193 = vadd.f32 %v2192, 1.0
  %v2194 = vrcp.pop %v2193
  %v2195 = vmul.f32 1.0, %v2194
  %v2196 = vtanh.pop %v2189
  %v2197 = vmul.f32 %v2195, %v1991
  %2199 = vrot.lane.b32.xlu0 %v2196, 64
  %v2200 = vpop.permute.xlu0 %2199
  %v2202 = vmul.f32 %v2195, %v2200
  %2204 = vrot.lane.b32.xlu0 %v2202, 32
  %v2205 = vpop.permute.xlu0 %2204
  %v2207 = vadd.f32 %v2197, %v2205
  %v2208 = vtanh.pop %v2207
  %2210 = vrot.lane.b32.xlu0 %v2208, 64
  %v2211 = vpop.permute.xlu0 %2210
  %v2213 = vmul.f32 %v2195, %v2211
  %2215 = vrot.lane.b32.xlu0 %v2213, 32
  %v2216 = vpop.permute.xlu0 %2215
  %s2218 = scalar_lea.vmem %s8, 6
  %2219 = vst.msk [vmem:[%s2218] sm:$0x3] %vm1565, %v2216
  %v2220 = vld [vmem:[%s922] sm:$0x3]
  %v2221 = vld [vmem:[%s7] sm:$0xff]
  %v2222 = vld [vmem:[%s7 + $0x8] sm:$0xff]
  %v2223 = vld [vmem:[%s7 + $0x10] sm:$0xff]
  %v2224 = vld [vmem:[%s7 + $0x18] sm:$0xff]
  %v2225 = vsel %vm1458, %v2108, 0
  %2227 = vmatprep.subr.mxu0 0.0
  %2228 = vmatpush1.msra.mxu0 %v2221
  %2229 = vmatprep.subr.mxu0 0.0
  %2230 = vmatpush1.msra.mxu0 %v2222
  %2231 = vmatprep.subr.mxu0 0.0
  %2232 = vmatpush1.msra.mxu0 %v2223
  %2233 = vmatprep.subr.mxu0 0.0
  %2234 = vmatpush1.msra.mxu0 %v2224
  %2235 = vmatprep.subr.mxu0 0.0
  %2236 = vmatpush1.msra.mxu0 0.0
  %2237 = vmatprep.subr.mxu0 0.0
  %2238 = vmatpush1.msra.mxu0 0.0
  %2239 = vmatprep.subr.mxu0 0.0
  %2240 = vmatpush1.msra.mxu0 0.0
  %2241 = vmatprep.subr.mxu0 0.0
  %2242 = vmatpush1.msra.mxu0 0.0
  %2243 = vmatprep.subr.mxu0 0.0
  %2244 = vmatpush1.msra.mxu0 0.0
  %2245 = vmatprep.subr.mxu0 0.0
  %2246 = vmatpush1.msra.mxu0 0.0
  %2247 = vmatprep.subr.mxu0 0.0
  %2248 = vmatpush1.msra.mxu0 0.0
  %2249 = vmatprep.subr.mxu0 0.0
  %2250 = vmatpush1.msra.mxu0 0.0
  %2251 = vmatprep.subr.mxu0 0.0
  %2252 = vmatpush1.msra.mxu0 0.0
  %2253 = vmatprep.subr.mxu0 0.0
  %2254 = vmatpush1.msra.mxu0 0.0
  %2255 = vmatprep.subr.mxu0 0.0
  %2256 = vmatpush1.msra.mxu0 0.0
  %2257 = vmatprep.subr.mxu0 0.0
  %2258 = vmatpush1.msra.mxu0 0.0
  %2259 = vmatprep.subr.mxu0 0.0
  %2260 = vmatpush1.msra.mxu0 0.0
  %2261 = vmatprep.subr.mxu0 0.0
  %2262 = vmatpush1.msra.mxu0 0.0
  %2263 = vmatprep.subr.mxu0 0.0
  %2264 = vmatpush1.msra.mxu0 0.0
  %2265 = vmatprep.subr.mxu0 0.0
  %2266 = vmatpush1.msra.mxu0 0.0
  %2267 = vmatprep.subr.mxu0 0.0
  %2268 = vmatpush1.msra.mxu0 0.0
  %2269 = vmatprep.subr.mxu0 0.0
  %2270 = vmatpush1.msra.mxu0 0.0
  %2271 = vmatprep.subr.mxu0 0.0
  %2272 = vmatpush1.msra.mxu0 0.0
  %2273 = vmatprep.subr.mxu0 0.0
  %2274 = vmatpush1.msra.mxu0 0.0
  %2275 = vmatprep.subr.mxu0 0.0
  %2276 = vmatpush1.msra.mxu0 0.0
  %2277 = vmatprep.subr.mxu0 0.0
  %2278 = vmatpush1.msra.mxu0 0.0
  %2279 = vmatprep.subr.mxu0 0.0
  %2280 = vmatpush1.msra.mxu0 0.0
  %2281 = vmatprep.subr.mxu0 0.0
  %2282 = vmatpush1.msra.mxu0 0.0
  %2283 = vmatprep.subr.mxu0 0.0
  %2284 = vmatpush1.msra.mxu0 0.0
  %2285 = vmatprep.subr.mxu0 0.0
  %2286 = vmatpush1.msra.mxu0 0.0
  %2287 = vmatprep.subr.mxu0 0.0
  %2288 = vmatpush1.msra.mxu0 0.0
  %2289 = vmatprep.subr.mxu0 0.0
  %2290 = vmatpush1.msra.mxu0 0.0
  %2291 = vmatprep.mubr.f32.mxu0 0.0
  %2292 = vmatmul.mubr.f32.gmra.mrb[0].mxu0 %v2225
  %v2293 = vpop.f32.mrb[0].mxu0
  %v2294 = vadd.f32 0.0, %v2293
  %v2295 = vpop.f32.mrb[0].mxu0
  %2296 = vdwg.mxu0
  %v2297 = vadd.f32 %v2220, %v2294
  %v2298 = vxor.u32 %v2297, 2147483648
  %v2299 = vmul.f32 %v2298, 1.442695
  %v2300 = vpow.pop %v2299
  %v2301 = vadd.f32 %v2300, 1.0
  %v2302 = vrcp.pop %v2301
  %v2303 = vmul.f32 1.0, %v2302
  %v2304 = vtanh.pop %v2297
  %v2305 = vmul.f32 %v2303, %v2099
  %2307 = vrot.lane.b32.xlu0 %v2304, 64
  %v2308 = vpop.permute.xlu0 %2307
  %v2310 = vmul.f32 %v2303, %v2308
  %2312 = vrot.lane.b32.xlu0 %v2310, 32
  %v2313 = vpop.permute.xlu0 %2312
  %v2315 = vadd.f32 %v2305, %v2313
  %v2316 = vtanh.pop %v2315
  %2318 = vrot.lane.b32.xlu0 %v2316, 64
  %v2319 = vpop.permute.xlu0 %2318
  %v2321 = vmul.f32 %v2303, %v2319
  %2323 = vrot.lane.b32.xlu0 %v2321, 32
  %v2324 = vpop.permute.xlu0 %2323
  %s2326 = scalar_lea.vmem %s64, 8
  %2327 = vst.msk [vmem:[%s2326] sm:$0x3] %vm1565, %v2324
  %v2328 = vld [vmem:[%s836] sm:$0x3]
  %v2329 = vld [vmem:[%s6] sm:$0xff]
  %v2330 = vld [vmem:[%s6 + $0x8] sm:$0xff]
  %v2331 = vld [vmem:[%s6 + $0x10] sm:$0xff]
  %v2332 = vld [vmem:[%s6 + $0x18] sm:$0xff]
  %v2333 = vsel %vm1458, %v2216, 0
  %2335 = vmatprep.subr.mxu0 0.0
  %2336 = vmatpush1.msra.mxu0 %v2329
  %2337 = vmatprep.subr.mxu0 0.0
  %2338 = vmatpush1.msra.mxu0 %v2330
  %2339 = vmatprep.subr.mxu0 0.0
  %2340 = vmatpush1.msra.mxu0 %v2331
  %2341 = vmatprep.subr.mxu0 0.0
  %2342 = vmatpush1.msra.mxu0 %v2332
  %2343 = vmatprep.subr.mxu0 0.0
  %2344 = vmatpush1.msra.mxu0 0.0
  %2345 = vmatprep.subr.mxu0 0.0
  %2346 = vmatpush1.msra.mxu0 0.0
  %2347 = vmatprep.subr.mxu0 0.0
  %2348 = vmatpush1.msra.mxu0 0.0
  %2349 = vmatprep.subr.mxu0 0.0
  %2350 = vmatpush1.msra.mxu0 0.0
  %2351 = vmatprep.subr.mxu0 0.0
  %2352 = vmatpush1.msra.mxu0 0.0
  %2353 = vmatprep.subr.mxu0 0.0
  %2354 = vmatpush1.msra.mxu0 0.0
  %2355 = vmatprep.subr.mxu0 0.0
  %2356 = vmatpush1.msra.mxu0 0.0
  %2357 = vmatprep.subr.mxu0 0.0
  %2358 = vmatpush1.msra.mxu0 0.0
  %2359 = vmatprep.subr.mxu0 0.0
  %2360 = vmatpush1.msra.mxu0 0.0
  %2361 = vmatprep.subr.mxu0 0.0
  %2362 = vmatpush1.msra.mxu0 0.0
  %2363 = vmatprep.subr.mxu0 0.0
  %2364 = vmatpush1.msra.mxu0 0.0
  %2365 = vmatprep.subr.mxu0 0.0
  %2366 = vmatpush1.msra.mxu0 0.0
  %2367 = vmatprep.subr.mxu0 0.0
  %2368 = vmatpush1.msra.mxu0 0.0
  %2369 = vmatprep.subr.mxu0 0.0
  %2370 = vmatpush1.msra.mxu0 0.0
  %2371 = vmatprep.subr.mxu0 0.0
  %2372 = vmatpush1.msra.mxu0 0.0
  %2373 = vmatprep.subr.mxu0 0.0
  %2374 = vmatpush1.msra.mxu0 0.0
  %2375 = vmatprep.subr.mxu0 0.0
  %2376 = vmatpush1.msra.mxu0 0.0
  %2377 = vmatprep.subr.mxu0 0.0
  %2378 = vmatpush1.msra.mxu0 0.0
  %2379 = vmatprep.subr.mxu0 0.0
  %2380 = vmatpush1.msra.mxu0 0.0
  %2381 = vmatprep.subr.mxu0 0.0
  %2382 = vmatpush1.msra.mxu0 0.0
  %2383 = vmatprep.subr.mxu0 0.0
  %2384 = vmatpush1.msra.mxu0 0.0
  %2385 = vmatprep.subr.mxu0 0.0
  %2386 = vmatpush1.msra.mxu0 0.0
  %2387 = vmatprep.subr.mxu0 0.0
  %2388 = vmatpush1.msra.mxu0 0.0
  %2389 = vmatprep.subr.mxu0 0.0
  %2390 = vmatpush1.msra.mxu0 0.0
  %2391 = vmatprep.subr.mxu0 0.0
  %2392 = vmatpush1.msra.mxu0 0.0
  %2393 = vmatprep.subr.mxu0 0.0
  %2394 = vmatpush1.msra.mxu0 0.0
  %2395 = vmatprep.subr.mxu0 0.0
  %2396 = vmatpush1.msra.mxu0 0.0
  %2397 = vmatprep.subr.mxu0 0.0
  %2398 = vmatpush1.msra.mxu0 0.0
  %2399 = vmatprep.mubr.f32.mxu0 0.0
  %2400 = vmatmul.mubr.f32.gmra.mrb[0].mxu0 %v2333
  %v2401 = vpop.f32.mrb[0].mxu0
  %v2402 = vadd.f32 0.0, %v2401
  %v2403 = vpop.f32.mrb[0].mxu0
  %2404 = vdwg.mxu0
  %v2405 = vadd.f32 %v2328, %v2402
  %v2406 = vxor.u32 %v2405, 2147483648
  %v2407 = vmul.f32 %v2406, 1.442695
  %v2408 = vpow.pop %v2407
  %v2409 = vadd.f32 %v2408, 1.0
  %v2410 = vrcp.pop %v2409
  %v2411 = vmul.f32 1.0, %v2410
  %v2412 = vtanh.pop %v2405
  %v2413 = vmul.f32 %v2411, %v2207
  %2415 = vrot.lane.b32.xlu0 %v2412, 64
  %v2416 = vpop.permute.xlu0 %2415
  %v2418 = vmul.f32 %v2411, %v2416
  %2420 = vrot.lane.b32.xlu0 %v2418, 32
  %v2421 = vpop.permute.xlu0 %2420
  %v2423 = vadd.f32 %v2413, %v2421
  %v2424 = vtanh.pop %v2423
  %2426 = vrot.lane.b32.xlu0 %v2424, 64
  %v2427 = vpop.permute.xlu0 %2426
  %v2429 = vmul.f32 %v2411, %v2427
  %2431 = vrot.lane.b32.xlu0 %v2429, 32
  %v2432 = vpop.permute.xlu0 %2431
  %s2434 = scalar_lea.vmem %s8, 8
  %2435 = vst.msk [vmem:[%s2434] sm:$0x3] %vm1565, %v2432
  %v2436 = vld [vmem:[%s750] sm:$0x3]
  %v2437 = vld [vmem:[%s7] sm:$0xff]
  %v2438 = vld [vmem:[%s7 + $0x8] sm:$0xff]
  %v2439 = vld [vmem:[%s7 + $0x10] sm:$0xff]
  %v2440 = vld [vmem:[%s7 + $0x18] sm:$0xff]
  %v2441 = vsel %vm1458, %v2324, 0
  %2443 = vmatprep.subr.mxu0 0.0
  %2444 = vmatpush1.msra.mxu0 %v2437
  %2445 = vmatprep.subr.mxu0 0.0
  %2446 = vmatpush1.msra.mxu0 %v2438
  %2447 = vmatprep.subr.mxu0 0.0
  %2448 = vmatpush1.msra.mxu0 %v2439
  %2449 = vmatprep.subr.mxu0 0.0
  %2450 = vmatpush1.msra.mxu0 %v2440
  %2451 = vmatprep.subr.mxu0 0.0
  %2452 = vmatpush1.msra.mxu0 0.0
  %2453 = vmatprep.subr.mxu0 0.0
  %2454 = vmatpush1.msra.mxu0 0.0
  %2455 = vmatprep.subr.mxu0 0.0
  %2456 = vmatpush1.msra.mxu0 0.0
  %2457 = vmatprep.subr.mxu0 0.0
  %2458 = vmatpush1.msra.mxu0 0.0
  %2459 = vmatprep.subr.mxu0 0.0
  %2460 = vmatpush1.msra.mxu0 0.0
  %2461 = vmatprep.subr.mxu0 0.0
  %2462 = vmatpush1.msra.mxu0 0.0
  %2463 = vmatprep.subr.mxu0 0.0
  %2464 = vmatpush1.msra.mxu0 0.0
  %2465 = vmatprep.subr.mxu0 0.0
  %2466 = vmatpush1.msra.mxu0 0.0
  %2467 = vmatprep.subr.mxu0 0.0
  %2468 = vmatpush1.msra.mxu0 0.0
  %2469 = vmatprep.subr.mxu0 0.0
  %2470 = vmatpush1.msra.mxu0 0.0
  %2471 = vmatprep.subr.mxu0 0.0
  %2472 = vmatpush1.msra.mxu0 0.0
  %2473 = vmatprep.subr.mxu0 0.0
  %2474 = vmatpush1.msra.mxu0 0.0
  %2475 = vmatprep.subr.mxu0 0.0
  %2476 = vmatpush1.msra.mxu0 0.0
  %2477 = vmatprep.subr.mxu0 0.0
  %2478 = vmatpush1.msra.mxu0 0.0
  %2479 = vmatprep.subr.mxu0 0.0
  %2480 = vmatpush1.msra.mxu0 0.0
  %2481 = vmatprep.subr.mxu0 0.0
  %2482 = vmatpush1.msra.mxu0 0.0
  %2483 = vmatprep.subr.mxu0 0.0
  %2484 = vmatpush1.msra.mxu0 0.0
  %2485 = vmatprep.subr.mxu0 0.0
  %2486 = vmatpush1.msra.mxu0 0.0
  %2487 = vmatprep.subr.mxu0 0.0
  %2488 = vmatpush1.msra.mxu0 0.0
  %2489 = vmatprep.subr.mxu0 0.0
  %2490 = vmatpush1.msra.mxu0 0.0
  %2491 = vmatprep.subr.mxu0 0.0
  %2492 = vmatpush1.msra.mxu0 0.0
  %2493 = vmatprep.subr.mxu0 0.0
  %2494 = vmatpush1.msra.mxu0 0.0
  %2495 = vmatprep.subr.mxu0 0.0
  %2496 = vmatpush1.msra.mxu0 0.0
  %2497 = vmatprep.subr.mxu0 0.0
  %2498 = vmatpush1.msra.mxu0 0.0
  %2499 = vmatprep.subr.mxu0 0.0
  %2500 = vmatpush1.msra.mxu0 0.0
  %2501 = vmatprep.subr.mxu0 0.0
  %2502 = vmatpush1.msra.mxu0 0.0
  %2503 = vmatprep.subr.mxu0 0.0
  %2504 = vmatpush1.msra.mxu0 0.0
  %2505 = vmatprep.subr.mxu0 0.0
  %2506 = vmatpush1.msra.mxu0 0.0
  %2507 = vmatprep.mubr.f32.mxu0 0.0
  %2508 = vmatmul.mubr.f32.gmra.mrb[0].mxu0 %v2441
  %v2509 = vpop.f32.mrb[0].mxu0
  %v2510 = vadd.f32 0.0, %v2509
  %v2511 = vpop.f32.mrb[0].mxu0
  %2512 = vdwg.mxu0
  %v2513 = vadd.f32 %v2436, %v2510
  %v2514 = vxor.u32 %v2513, 2147483648
  %v2515 = vmul.f32 %v2514, 1.442695
  %v2516 = vpow.pop %v2515
  %v2517 = vadd.f32 %v2516, 1.0
  %v2518 = vrcp.pop %v2517
  %v2519 = vmul.f32 1.0, %v2518
  %v2520 = vtanh.pop %v2513
  %v2521 = vmul.f32 %v2519, %v2315
  %2523 = vrot.lane.b32.xlu0 %v2520, 64
  %v2524 = vpop.permute.xlu0 %2523
  %v2526 = vmul.f32 %v2519, %v2524
  %2528 = vrot.lane.b32.xlu0 %v2526, 32
  %v2529 = vpop.permute.xlu0 %2528
  %v2531 = vadd.f32 %v2521, %v2529
  %v2532 = vtanh.pop %v2531
  %2534 = vrot.lane.b32.xlu0 %v2532, 64
  %v2535 = vpop.permute.xlu0 %2534
  %v2537 = vmul.f32 %v2519, %v2535
  %2539 = vrot.lane.b32.xlu0 %v2537, 32
  %v2540 = vpop.permute.xlu0 %2539
  %s2542 = scalar_lea.vmem %s64, 6
  %2543 = vst.msk [vmem:[%s2542] sm:$0x3] %vm1565, %v2540
  %v2544 = vld [vmem:[%s1008] sm:$0x3]
  %v2545 = vld [vmem:[%s6] sm:$0xff]
  %v2546 = vld [vmem:[%s6 + $0x8] sm:$0xff]
  %v2547 = vld [vmem:[%s6 + $0x10] sm:$0xff]
  %v2548 = vld [vmem:[%s6 + $0x18] sm:$0xff]
  %v2549 = vsel %vm1458, %v2432, 0
  %2551 = vmatprep.subr.mxu0 0.0
  %2552 = vmatpush1.msra.mxu0 %v2545
  %2553 = vmatprep.subr.mxu0 0.0
  %2554 = vmatpush1.msra.mxu0 %v2546
  %2555 = vmatprep.subr.mxu0 0.0
  %2556 = vmatpush1.msra.mxu0 %v2547
  %2557 = vmatprep.subr.mxu0 0.0
  %2558 = vmatpush1.msra.mxu0 %v2548
  %2559 = vmatprep.subr.mxu0 0.0
  %2560 = vmatpush1.msra.mxu0 0.0
  %2561 = vmatprep.subr.mxu0 0.0
  %2562 = vmatpush1.msra.mxu0 0.0
  %2563 = vmatprep.subr.mxu0 0.0
  %2564 = vmatpush1.msra.mxu0 0.0
  %2565 = vmatprep.subr.mxu0 0.0
  %2566 = vmatpush1.msra.mxu0 0.0
  %2567 = vmatprep.subr.mxu0 0.0
  %2568 = vmatpush1.msra.mxu0 0.0
  %2569 = vmatprep.subr.mxu0 0.0
  %2570 = vmatpush1.msra.mxu0 0.0
  %2571 = vmatprep.subr.mxu0 0.0
  %2572 = vmatpush1.msra.mxu0 0.0
  %2573 = vmatprep.subr.mxu0 0.0
  %2574 = vmatpush1.msra.mxu0 0.0
  %2575 = vmatprep.subr.mxu0 0.0
  %2576 = vmatpush1.msra.mxu0 0.0
  %2577 = vmatprep.subr.mxu0 0.0
  %2578 = vmatpush1.msra.mxu0 0.0
  %2579 = vmatprep.subr.mxu0 0.0
  %2580 = vmatpush1.msra.mxu0 0.0
  %2581 = vmatprep.subr.mxu0 0.0
  %2582 = vmatpush1.msra.mxu0 0.0
  %2583 = vmatprep.subr.mxu0 0.0
  %2584 = vmatpush1.msra.mxu0 0.0
  %2585 = vmatprep.subr.mxu0 0.0
  %2586 = vmatpush1.msra.mxu0 0.0
  %2587 = vmatprep.subr.mxu0 0.0
  %2588 = vmatpush1.msra.mxu0 0.0
  %2589 = vmatprep.subr.mxu0 0.0
  %2590 = vmatpush1.msra.mxu0 0.0
  %2591 = vmatprep.subr.mxu0 0.0
  %2592 = vmatpush1.msra.mxu0 0.0
  %2593 = vmatprep.subr.mxu0 0.0
  %2594 = vmatpush1.msra.mxu0 0.0
  %2595 = vmatprep.subr.mxu0 0.0
  %2596 = vmatpush1.msra.mxu0 0.0
  %2597 = vmatprep.subr.mxu0 0.0
  %2598 = vmatpush1.msra.mxu0 0.0
  %2599 = vmatprep.subr.mxu0 0.0
  %2600 = vmatpush1.msra.mxu0 0.0
  %2601 = vmatprep.subr.mxu0 0.0
  %2602 = vmatpush1.msra.mxu0 0.0
  %2603 = vmatprep.subr.mxu0 0.0
  %2604 = vmatpush1.msra.mxu0 0.0
  %2605 = vmatprep.subr.mxu0 0.0
  %2606 = vmatpush1.msra.mxu0 0.0
  %2607 = vmatprep.subr.mxu0 0.0
  %2608 = vmatpush1.msra.mxu0 0.0
  %2609 = vmatprep.subr.mxu0 0.0
  %2610 = vmatpush1.msra.mxu0 0.0
  %2611 = vmatprep.subr.mxu0 0.0
  %2612 = vmatpush1.msra.mxu0 0.0
  %2613 = vmatprep.subr.mxu0 0.0
  %2614 = vmatpush1.msra.mxu0 0.0
  %2615 = vmatprep.mubr.f32.mxu0 0.0
  %2616 = vmatmul.mubr.f32.gmra.mrb[0].mxu0 %v2549
  %v2617 = vpop.f32.mrb[0].mxu0
  %v2618 = vadd.f32 0.0, %v2617
  %v2619 = vpop.f32.mrb[0].mxu0
  %2620 = vdwg.mxu0
  %v2621 = vadd.f32 %v2544, %v2618
  %v2622 = vxor.u32 %v2621, 2147483648
  %v2623 = vmul.f32 %v2622, 1.442695
  %v2624 = vpow.pop %v2623
  %v2625 = vadd.f32 %v2624, 1.0
  %v2626 = vrcp.pop %v2625
  %v2627 = vmul.f32 1.0, %v2626
  %v2628 = vtanh.pop %v2621
  %v2629 = vmul.f32 %v2627, %v2423
  %2631 = vrot.lane.b32.xlu0 %v2628, 64
  %v2632 = vpop.permute.xlu0 %2631
  %v2634 = vmul.f32 %v2627, %v2632
  %2636 = vrot.lane.b32.xlu0 %v2634, 32
  %v2637 = vpop.permute.xlu0 %2636
  %v2639 = vadd.f32 %v2629, %v2637
  %v2640 = vtanh.pop %v2639
  %2642 = vrot.lane.b32.xlu0 %v2640, 64
  %v2643 = vpop.permute.xlu0 %2642
  %v2645 = vmul.f32 %v2627, %v2643
  %2647 = vrot.lane.b32.xlu0 %v2645, 32
  %v2648 = vpop.permute.xlu0 %2647
  %s2650 = scalar_lea.vmem %s8, 10
  %2651 = vst.msk [vmem:[%s2650] sm:$0x3] %vm1565, %v2648
  %v2652 = vld [vmem:[%s578] sm:$0x3]
  %v2653 = vld [vmem:[%s7] sm:$0xff]
  %v2654 = vld [vmem:[%s7 + $0x8] sm:$0xff]
  %v2655 = vld [vmem:[%s7 + $0x10] sm:$0xff]
  %v2656 = vld [vmem:[%s7 + $0x18] sm:$0xff]
  %v2657 = vsel %vm1458, %v2540, 0
  %2659 = vmatprep.subr.mxu0 0.0
  %2660 = vmatpush1.msra.mxu0 %v2653
  %2661 = vmatprep.subr.mxu0 0.0
  %2662 = vmatpush1.msra.mxu0 %v2654
  %2663 = vmatprep.subr.mxu0 0.0
  %2664 = vmatpush1.msra.mxu0 %v2655
  %2665 = vmatprep.subr.mxu0 0.0
  %2666 = vmatpush1.msra.mxu0 %v2656
  %2667 = vmatprep.subr.mxu0 0.0
  %2668 = vmatpush1.msra.mxu0 0.0
  %2669 = vmatprep.subr.mxu0 0.0
  %2670 = vmatpush1.msra.mxu0 0.0
  %2671 = vmatprep.subr.mxu0 0.0
  %2672 = vmatpush1.msra.mxu0 0.0
  %2673 = vmatprep.subr.mxu0 0.0
  %2674 = vmatpush1.msra.mxu0 0.0
  %2675 = vmatprep.subr.mxu0 0.0
  %2676 = vmatpush1.msra.mxu0 0.0
  %2677 = vmatprep.subr.mxu0 0.0
  %2678 = vmatpush1.msra.mxu0 0.0
  %2679 = vmatprep.subr.mxu0 0.0
  %2680 = vmatpush1.msra.mxu0 0.0
  %2681 = vmatprep.subr.mxu0 0.0
  %2682 = vmatpush1.msra.mxu0 0.0
  %2683 = vmatprep.subr.mxu0 0.0
  %2684 = vmatpush1.msra.mxu0 0.0
  %2685 = vmatprep.subr.mxu0 0.0
  %2686 = vmatpush1.msra.mxu0 0.0
  %2687 = vmatprep.subr.mxu0 0.0
  %2688 = vmatpush1.msra.mxu0 0.0
  %2689 = vmatprep.subr.mxu0 0.0
  %2690 = vmatpush1.msra.mxu0 0.0
  %2691 = vmatprep.subr.mxu0 0.0
  %2692 = vmatpush1.msra.mxu0 0.0
  %2693 = vmatprep.subr.mxu0 0.0
  %2694 = vmatpush1.msra.mxu0 0.0
  %2695 = vmatprep.subr.mxu0 0.0
  %2696 = vmatpush1.msra.mxu0 0.0
  %2697 = vmatprep.subr.mxu0 0.0
  %2698 = vmatpush1.msra.mxu0 0.0
  %2699 = vmatprep.subr.mxu0 0.0
  %2700 = vmatpush1.msra.mxu0 0.0
  %2701 = vmatprep.subr.mxu0 0.0
  %2702 = vmatpush1.msra.mxu0 0.0
  %2703 = vmatprep.subr.mxu0 0.0
  %2704 = vmatpush1.msra.mxu0 0.0
  %2705 = vmatprep.subr.mxu0 0.0
  %2706 = vmatpush1.msra.mxu0 0.0
  %2707 = vmatprep.subr.mxu0 0.0
  %2708 = vmatpush1.msra.mxu0 0.0
  %2709 = vmatprep.subr.mxu0 0.0
  %2710 = vmatpush1.msra.mxu0 0.0
  %2711 = vmatprep.subr.mxu0 0.0
  %2712 = vmatpush1.msra.mxu0 0.0
  %2713 = vmatprep.subr.mxu0 0.0
  %2714 = vmatpush1.msra.mxu0 0.0
  %2715 = vmatprep.subr.mxu0 0.0
  %2716 = vmatpush1.msra.mxu0 0.0
  %2717 = vmatprep.subr.mxu0 0.0
  %2718 = vmatpush1.msra.mxu0 0.0
  %2719 = vmatprep.subr.mxu0 0.0
  %2720 = vmatpush1.msra.mxu0 0.0
  %2721 = vmatprep.subr.mxu0 0.0
  %2722 = vmatpush1.msra.mxu0 0.0
  %2723 = vmatprep.mubr.f32.mxu0 0.0
  %2724 = vmatmul.mubr.f32.gmra.mrb[0].mxu0 %v2657
  %v2725 = vpop.f32.mrb[0].mxu0
  %v2726 = vadd.f32 0.0, %v2725
  %v2727 = vpop.f32.mrb[0].mxu0
  %2728 = vdwg.mxu0
  %v2729 = vadd.f32 %v2652, %v2726
  %v2730 = vxor.u32 %v2729, 2147483648
  %v2731 = vmul.f32 %v2730, 1.442695
  %v2732 = vpow.pop %v2731
  %v2733 = vadd.f32 %v2732, 1.0
  %v2734 = vrcp.pop %v2733
  %v2735 = vmul.f32 1.0, %v2734
  %v2736 = vtanh.pop %v2729
  %v2737 = vmul.f32 %v2735, %v2531
  %2739 = vrot.lane.b32.xlu0 %v2736, 64
  %v2740 = vpop.permute.xlu0 %2739
  %v2742 = vmul.f32 %v2735, %v2740
  %2744 = vrot.lane.b32.xlu0 %v2742, 32
  %v2745 = vpop.permute.xlu0 %2744
  %v2747 = vadd.f32 %v2737, %v2745
  %v2748 = vtanh.pop %v2747
  %2750 = vrot.lane.b32.xlu0 %v2748, 64
  %v2751 = vpop.permute.xlu0 %2750
  %v2753 = vmul.f32 %v2735, %v2751
  %2755 = vrot.lane.b32.xlu0 %v2753, 32
  %v2756 = vpop.permute.xlu0 %2755
  %s2758 = scalar_lea.vmem %s64, 4
  %2759 = vst.msk [vmem:[%s2758] sm:$0x3] %vm1565, %v2756
  %v2760 = vld [vmem:[%s1180] sm:$0x3]
  %v2761 = vld [vmem:[%s6] sm:$0xff]
  %v2762 = vld [vmem:[%s6 + $0x8] sm:$0xff]
  %v2763 = vld [vmem:[%s6 + $0x10] sm:$0xff]
  %v2764 = vld [vmem:[%s6 + $0x18] sm:$0xff]
  %v2765 = vsel %vm1458, %v2648, 0
  %2767 = vmatprep.subr.mxu0 0.0
  %2768 = vmatpush1.msra.mxu0 %v2761
  %2769 = vmatprep.subr.mxu0 0.0
  %2770 = vmatpush1.msra.mxu0 %v2762
  %2771 = vmatprep.subr.mxu0 0.0
  %2772 = vmatpush1.msra.mxu0 %v2763
  %2773 = vmatprep.subr.mxu0 0.0
  %2774 = vmatpush1.msra.mxu0 %v2764
  %2775 = vmatprep.subr.mxu0 0.0
  %2776 = vmatpush1.msra.mxu0 0.0
  %2777 = vmatprep.subr.mxu0 0.0
  %2778 = vmatpush1.msra.mxu0 0.0
  %2779 = vmatprep.subr.mxu0 0.0
  %2780 = vmatpush1.msra.mxu0 0.0
  %2781 = vmatprep.subr.mxu0 0.0
  %2782 = vmatpush1.msra.mxu0 0.0
  %2783 = vmatprep.subr.mxu0 0.0
  %2784 = vmatpush1.msra.mxu0 0.0
  %2785 = vmatprep.subr.mxu0 0.0
  %2786 = vmatpush1.msra.mxu0 0.0
  %2787 = vmatprep.subr.mxu0 0.0
  %2788 = vmatpush1.msra.mxu0 0.0
  %2789 = vmatprep.subr.mxu0 0.0
  %2790 = vmatpush1.msra.mxu0 0.0
  %2791 = vmatprep.subr.mxu0 0.0
  %2792 = vmatpush1.msra.mxu0 0.0
  %2793 = vmatprep.subr.mxu0 0.0
  %2794 = vmatpush1.msra.mxu0 0.0
  %2795 = vmatprep.subr.mxu0 0.0
  %2796 = vmatpush1.msra.mxu0 0.0
  %2797 = vmatprep.subr.mxu0 0.0
  %2798 = vmatpush1.msra.mxu0 0.0
  %2799 = vmatprep.subr.mxu0 0.0
  %2800 = vmatpush1.msra.mxu0 0.0
  %2801 = vmatprep.subr.mxu0 0.0
  %2802 = vmatpush1.msra.mxu0 0.0
  %2803 = vmatprep.subr.mxu0 0.0
  %2804 = vmatpush1.msra.mxu0 0.0
  %2805 = vmatprep.subr.mxu0 0.0
  %2806 = vmatpush1.msra.mxu0 0.0
  %2807 = vmatprep.subr.mxu0 0.0
  %2808 = vmatpush1.msra.mxu0 0.0
  %2809 = vmatprep.subr.mxu0 0.0
  %2810 = vmatpush1.msra.mxu0 0.0
  %2811 = vmatprep.subr.mxu0 0.0
  %2812 = vmatpush1.msra.mxu0 0.0
  %2813 = vmatprep.subr.mxu0 0.0
  %2814 = vmatpush1.msra.mxu0 0.0
  %2815 = vmatprep.subr.mxu0 0.0
  %2816 = vmatpush1.msra.mxu0 0.0
  %2817 = vmatprep.subr.mxu0 0.0
  %2818 = vmatpush1.msra.mxu0 0.0
  %2819 = vmatprep.subr.mxu0 0.0
  %2820 = vmatpush1.msra.mxu0 0.0
  %2821 = vmatprep.subr.mxu0 0.0
  %2822 = vmatpush1.msra.mxu0 0.0
  %2823 = vmatprep.subr.mxu0 0.0
  %2824 = vmatpush1.msra.mxu0 0.0
  %2825 = vmatprep.subr.mxu0 0.0
  %2826 = vmatpush1.msra.mxu0 0.0
  %2827 = vmatprep.subr.mxu0 0.0
  %2828 = vmatpush1.msra.mxu0 0.0
  %2829 = vmatprep.subr.mxu0 0.0
  %2830 = vmatpush1.msra.mxu0 0.0
  %2831 = vmatprep.mubr.f32.mxu0 0.0
  %2832 = vmatmul.mubr.f32.gmra.mrb[0].mxu0 %v2765
  %v2833 = vpop.f32.mrb[0].mxu0
  %v2834 = vadd.f32 0.0, %v2833
  %v2835 = vpop.f32.mrb[0].mxu0
  %2836 = vdwg.mxu0
  %v2837 = vadd.f32 %v2760, %v2834
  %v2838 = vxor.u32 %v2837, 2147483648
  %v2839 = vmul.f32 %v2838, 1.442695
  %v2840 = vpow.pop %v2839
  %v2841 = vadd.f32 %v2840, 1.0
  %v2842 = vrcp.pop %v2841
  %v2843 = vmul.f32 1.0, %v2842
  %v2844 = vtanh.pop %v2837
  %v2845 = vmul.f32 %v2843, %v2639
  %2847 = vrot.lane.b32.xlu0 %v2844, 64
  %v2848 = vpop.permute.xlu0 %2847
  %v2850 = vmul.f32 %v2843, %v2848
  %2852 = vrot.lane.b32.xlu0 %v2850, 32
  %v2853 = vpop.permute.xlu0 %2852
  %v2855 = vadd.f32 %v2845, %v2853
  %v2856 = vtanh.pop %v2855
  %2858 = vrot.lane.b32.xlu0 %v2856, 64
  %v2859 = vpop.permute.xlu0 %2858
  %v2861 = vmul.f32 %v2843, %v2859
  %2863 = vrot.lane.b32.xlu0 %v2861, 32
  %v2864 = vpop.permute.xlu0 %2863
  %s2866 = scalar_lea.vmem %s8, 12
  %2867 = vst.msk [vmem:[%s2866] sm:$0x3] %vm1565, %v2864
  %v2868 = vld [vmem:[%s406] sm:$0x3]
  %v2869 = vld [vmem:[%s7] sm:$0xff]
  %v2870 = vld [vmem:[%s7 + $0x8] sm:$0xff]
  %v2871 = vld [vmem:[%s7 + $0x10] sm:$0xff]
  %v2872 = vld [vmem:[%s7 + $0x18] sm:$0xff]
  %v2873 = vsel %vm1458, %v2756, 0
  %2875 = vmatprep.subr.mxu0 0.0
  %2876 = vmatpush1.msra.mxu0 %v2869
  %2877 = vmatprep.subr.mxu0 0.0
  %2878 = vmatpush1.msra.mxu0 %v2870
  %2879 = vmatprep.subr.mxu0 0.0
  %2880 = vmatpush1.msra.mxu0 %v2871
  %2881 = vmatprep.subr.mxu0 0.0
  %2882 = vmatpush1.msra.mxu0 %v2872
  %2883 = vmatprep.subr.mxu0 0.0
  %2884 = vmatpush1.msra.mxu0 0.0
  %2885 = vmatprep.subr.mxu0 0.0
  %2886 = vmatpush1.msra.mxu0 0.0
  %2887 = vmatprep.subr.mxu0 0.0
  %2888 = vmatpush1.msra.mxu0 0.0
  %2889 = vmatprep.subr.mxu0 0.0
  %2890 = vmatpush1.msra.mxu0 0.0
  %2891 = vmatprep.subr.mxu0 0.0
  %2892 = vmatpush1.msra.mxu0 0.0
  %2893 = vmatprep.subr.mxu0 0.0
  %2894 = vmatpush1.msra.mxu0 0.0
  %2895 = vmatprep.subr.mxu0 0.0
  %2896 = vmatpush1.msra.mxu0 0.0
  %2897 = vmatprep.subr.mxu0 0.0
  %2898 = vmatpush1.msra.mxu0 0.0
  %2899 = vmatprep.subr.mxu0 0.0
  %2900 = vmatpush1.msra.mxu0 0.0
  %2901 = vmatprep.subr.mxu0 0.0
  %2902 = vmatpush1.msra.mxu0 0.0
  %2903 = vmatprep.subr.mxu0 0.0
  %2904 = vmatpush1.msra.mxu0 0.0
  %2905 = vmatprep.subr.mxu0 0.0
  %2906 = vmatpush1.msra.mxu0 0.0
  %2907 = vmatprep.subr.mxu0 0.0
  %2908 = vmatpush1.msra.mxu0 0.0
  %2909 = vmatprep.subr.mxu0 0.0
  %2910 = vmatpush1.msra.mxu0 0.0
  %2911 = vmatprep.subr.mxu0 0.0
  %2912 = vmatpush1.msra.mxu0 0.0
  %2913 = vmatprep.subr.mxu0 0.0
  %2914 = vmatpush1.msra.mxu0 0.0
  %2915 = vmatprep.subr.mxu0 0.0
  %2916 = vmatpush1.msra.mxu0 0.0
  %2917 = vmatprep.subr.mxu0 0.0
  %2918 = vmatpush1.msra.mxu0 0.0
  %2919 = vmatprep.subr.mxu0 0.0
  %2920 = vmatpush1.msra.mxu0 0.0
  %2921 = vmatprep.subr.mxu0 0.0
  %2922 = vmatpush1.msra.mxu0 0.0
  %2923 = vmatprep.subr.mxu0 0.0
  %2924 = vmatpush1.msra.mxu0 0.0
  %2925 = vmatprep.subr.mxu0 0.0
  %2926 = vmatpush1.msra.mxu0 0.0
  %2927 = vmatprep.subr.mxu0 0.0
  %2928 = vmatpush1.msra.mxu0 0.0
  %2929 = vmatprep.subr.mxu0 0.0
  %2930 = vmatpush1.msra.mxu0 0.0
  %2931 = vmatprep.subr.mxu0 0.0
  %2932 = vmatpush1.msra.mxu0 0.0
  %2933 = vmatprep.subr.mxu0 0.0
  %2934 = vmatpush1.msra.mxu0 0.0
  %2935 = vmatprep.subr.mxu0 0.0
  %2936 = vmatpush1.msra.mxu0 0.0
  %2937 = vmatprep.subr.mxu0 0.0
  %2938 = vmatpush1.msra.mxu0 0.0
  %2939 = vmatprep.mubr.f32.mxu0 0.0
  %2940 = vmatmul.mubr.f32.gmra.mrb[0].mxu0 %v2873
  %v2941 = vpop.f32.mrb[0].mxu0
  %v2942 = vadd.f32 0.0, %v2941
  %v2943 = vpop.f32.mrb[0].mxu0
  %2944 = vdwg.mxu0
  %v2945 = vadd.f32 %v2868, %v2942
  %v2946 = vxor.u32 %v2945, 2147483648
  %v2947 = vmul.f32 %v2946, 1.442695
  %v2948 = vpow.pop %v2947
  %v2949 = vadd.f32 %v2948, 1.0
  %v2950 = vrcp.pop %v2949
  %v2951 = vmul.f32 1.0, %v2950
  %v2952 = vtanh.pop %v2945
  %v2953 = vmul.f32 %v2951, %v2747
  %2955 = vrot.lane.b32.xlu0 %v2952, 64
  %v2956 = vpop.permute.xlu0 %2955
  %v2958 = vmul.f32 %v2951, %v2956
  %2960 = vrot.lane.b32.xlu0 %v2958, 32
  %v2961 = vpop.permute.xlu0 %2960
  %v2963 = vadd.f32 %v2953, %v2961
  %v2964 = vtanh.pop %v2963
  %2966 = vrot.lane.b32.xlu0 %v2964, 64
  %v2967 = vpop.permute.xlu0 %2966
  %v2969 = vmul.f32 %v2951, %v2967
  %2971 = vrot.lane.b32.xlu0 %v2969, 32
  %v2972 = vpop.permute.xlu0 %2971
  %s2974 = scalar_lea.vmem %s64, 2
  %2975 = vst.msk [vmem:[%s2974] sm:$0x3] %vm1565, %v2972
  %v2976 = vld [vmem:[%s1352] sm:$0x3]
  %v2977 = vld [vmem:[%s6] sm:$0xff]
  %v2978 = vld [vmem:[%s6 + $0x8] sm:$0xff]
  %v2979 = vld [vmem:[%s6 + $0x10] sm:$0xff]
  %v2980 = vld [vmem:[%s6 + $0x18] sm:$0xff]
  %v2981 = vsel %vm1458, %v2864, 0
  %2983 = vmatprep.subr.mxu0 0.0
  %2984 = vmatpush1.msra.mxu0 %v2977
  %2985 = vmatprep.subr.mxu0 0.0
  %2986 = vmatpush1.msra.mxu0 %v2978
  %2987 = vmatprep.subr.mxu0 0.0
  %2988 = vmatpush1.msra.mxu0 %v2979
  %2989 = vmatprep.subr.mxu0 0.0
  %2990 = vmatpush1.msra.mxu0 %v2980
  %2991 = vmatprep.subr.mxu0 0.0
  %2992 = vmatpush1.msra.mxu0 0.0
  %2993 = vmatprep.subr.mxu0 0.0
  %2994 = vmatpush1.msra.mxu0 0.0
  %2995 = vmatprep.subr.mxu0 0.0
  %2996 = vmatpush1.msra.mxu0 0.0
  %2997 = vmatprep.subr.mxu0 0.0
  %2998 = vmatpush1.msra.mxu0 0.0
  %2999 = vmatprep.subr.mxu0 0.0
  %3000 = vmatpush1.msra.mxu0 0.0
  %3001 = vmatprep.subr.mxu0 0.0
  %3002 = vmatpush1.msra.mxu0 0.0
  %3003 = vmatprep.subr.mxu0 0.0
  %3004 = vmatpush1.msra.mxu0 0.0
  %3005 = vmatprep.subr.mxu0 0.0
  %3006 = vmatpush1.msra.mxu0 0.0
  %3007 = vmatprep.subr.mxu0 0.0
  %3008 = vmatpush1.msra.mxu0 0.0
  %3009 = vmatprep.subr.mxu0 0.0
  %3010 = vmatpush1.msra.mxu0 0.0
  %3011 = vmatprep.subr.mxu0 0.0
  %3012 = vmatpush1.msra.mxu0 0.0
  %3013 = vmatprep.subr.mxu0 0.0
  %3014 = vmatpush1.msra.mxu0 0.0
  %3015 = vmatprep.subr.mxu0 0.0
  %3016 = vmatpush1.msra.mxu0 0.0
  %3017 = vmatprep.subr.mxu0 0.0
  %3018 = vmatpush1.msra.mxu0 0.0
  %3019 = vmatprep.subr.mxu0 0.0
  %3020 = vmatpush1.msra.mxu0 0.0
  %3021 = vmatprep.subr.mxu0 0.0
  %3022 = vmatpush1.msra.mxu0 0.0
  %3023 = vmatprep.subr.mxu0 0.0
  %3024 = vmatpush1.msra.mxu0 0.0
  %3025 = vmatprep.subr.mxu0 0.0
  %3026 = vmatpush1.msra.mxu0 0.0
  %3027 = vmatprep.subr.mxu0 0.0
  %3028 = vmatpush1.msra.mxu0 0.0
  %3029 = vmatprep.subr.mxu0 0.0
  %3030 = vmatpush1.msra.mxu0 0.0
  %3031 = vmatprep.subr.mxu0 0.0
  %3032 = vmatpush1.msra.mxu0 0.0
  %3033 = vmatprep.subr.mxu0 0.0
  %3034 = vmatpush1.msra.mxu0 0.0
  %3035 = vmatprep.subr.mxu0 0.0
  %3036 = vmatpush1.msra.mxu0 0.0
  %3037 = vmatprep.subr.mxu0 0.0
  %3038 = vmatpush1.msra.mxu0 0.0
  %3039 = vmatprep.subr.mxu0 0.0
  %3040 = vmatpush1.msra.mxu0 0.0
  %3041 = vmatprep.subr.mxu0 0.0
  %3042 = vmatpush1.msra.mxu0 0.0
  %3043 = vmatprep.subr.mxu0 0.0
  %3044 = vmatpush1.msra.mxu0 0.0
  %3045 = vmatprep.subr.mxu0 0.0
  %3046 = vmatpush1.msra.mxu0 0.0
  %3047 = vmatprep.mubr.f32.mxu0 0.0
  %3048 = vmatmul.mubr.f32.gmra.mrb[0].mxu0 %v2981
  %v3049 = vpop.f32.mrb[0].mxu0
  %v3050 = vadd.f32 0.0, %v3049
  %v3051 = vpop.f32.mrb[0].mxu0
  %3052 = vdwg.mxu0
  %v3053 = vadd.f32 %v2976, %v3050
  %v3054 = vxor.u32 %v3053, 2147483648
  %v3055 = vmul.f32 %v3054, 1.442695
  %v3056 = vpow.pop %v3055
  %v3057 = vadd.f32 %v3056, 1.0
  %v3058 = vrcp.pop %v3057
  %v3059 = vmul.f32 1.0, %v3058
  %v3060 = vtanh.pop %v3053
  %v3061 = vmul.f32 %v3059, %v2855
  %3063 = vrot.lane.b32.xlu0 %v3060, 64
  %v3064 = vpop.permute.xlu0 %3063
  %v3066 = vmul.f32 %v3059, %v3064
  %3068 = vrot.lane.b32.xlu0 %v3066, 32
  %v3069 = vpop.permute.xlu0 %3068
  %v3071 = vadd.f32 %v3061, %v3069
  %v3072 = vtanh.pop %v3071
  %3074 = vrot.lane.b32.xlu0 %v3072, 64
  %v3075 = vpop.permute.xlu0 %3074
  %v3077 = vmul.f32 %v3059, %v3075
  %3079 = vrot.lane.b32.xlu0 %v3077, 32
  %v3080 = vpop.permute.xlu0 %3079
  %s3082 = scalar_lea.vmem %s8, 14
  %3083 = vst.msk [vmem:[%s3082] sm:$0x3] %vm1565, %v3080
  %v3084 = vld [vmem:[#allocation3] sm:$0x3]
  %v3085 = vld [vmem:[%s7] sm:$0xff]
  %v3086 = vld [vmem:[%s7 + $0x8] sm:$0xff]
  %v3087 = vld [vmem:[%s7 + $0x10] sm:$0xff]
  %v3088 = vld [vmem:[%s7 + $0x18] sm:$0xff]
  %v3089 = vsel %vm1458, %v2972, 0
  %3091 = vmatprep.subr.mxu0 0.0
  %3092 = vmatpush1.msra.mxu0 %v3085
  %3093 = vmatprep.subr.mxu0 0.0
  %3094 = vmatpush1.msra.mxu0 %v3086
  %3095 = vmatprep.subr.mxu0 0.0
  %3096 = vmatpush1.msra.mxu0 %v3087
  %3097 = vmatprep.subr.mxu0 0.0
  %3098 = vmatpush1.msra.mxu0 %v3088
  %3099 = vmatprep.subr.mxu0 0.0
  %3100 = vmatpush1.msra.mxu0 0.0
  %3101 = vmatprep.subr.mxu0 0.0
  %3102 = vmatpush1.msra.mxu0 0.0
  %3103 = vmatprep.subr.mxu0 0.0
  %3104 = vmatpush1.msra.mxu0 0.0
  %3105 = vmatprep.subr.mxu0 0.0
  %3106 = vmatpush1.msra.mxu0 0.0
  %3107 = vmatprep.subr.mxu0 0.0
  %3108 = vmatpush1.msra.mxu0 0.0
  %3109 = vmatprep.subr.mxu0 0.0
  %3110 = vmatpush1.msra.mxu0 0.0
  %3111 = vmatprep.subr.mxu0 0.0
  %3112 = vmatpush1.msra.mxu0 0.0
  %3113 = vmatprep.subr.mxu0 0.0
  %3114 = vmatpush1.msra.mxu0 0.0
  %3115 = vmatprep.subr.mxu0 0.0
  %3116 = vmatpush1.msra.mxu0 0.0
  %3117 = vmatprep.subr.mxu0 0.0
  %3118 = vmatpush1.msra.mxu0 0.0
  %3119 = vmatprep.subr.mxu0 0.0
  %3120 = vmatpush1.msra.mxu0 0.0
  %3121 = vmatprep.subr.mxu0 0.0
  %3122 = vmatpush1.msra.mxu0 0.0
  %3123 = vmatprep.subr.mxu0 0.0
  %3124 = vmatpush1.msra.mxu0 0.0
  %3125 = vmatprep.subr.mxu0 0.0
  %3126 = vmatpush1.msra.mxu0 0.0
  %3127 = vmatprep.subr.mxu0 0.0
  %3128 = vmatpush1.msra.mxu0 0.0
  %3129 = vmatprep.subr.mxu0 0.0
  %3130 = vmatpush1.msra.mxu0 0.0
  %3131 = vmatprep.subr.mxu0 0.0
  %3132 = vmatpush1.msra.mxu0 0.0
  %3133 = vmatprep.subr.mxu0 0.0
  %3134 = vmatpush1.msra.mxu0 0.0
  %3135 = vmatprep.subr.mxu0 0.0
  %3136 = vmatpush1.msra.mxu0 0.0
  %3137 = vmatprep.subr.mxu0 0.0
  %3138 = vmatpush1.msra.mxu0 0.0
  %3139 = vmatprep.subr.mxu0 0.0
  %3140 = vmatpush1.msra.mxu0 0.0
  %3141 = vmatprep.subr.mxu0 0.0
  %3142 = vmatpush1.msra.mxu0 0.0
  %3143 = vmatprep.subr.mxu0 0.0
  %3144 = vmatpush1.msra.mxu0 0.0
  %3145 = vmatprep.subr.mxu0 0.0
  %3146 = vmatpush1.msra.mxu0 0.0
  %3147 = vmatprep.subr.mxu0 0.0
  %3148 = vmatpush1.msra.mxu0 0.0
  %3149 = vmatprep.subr.mxu0 0.0
  %3150 = vmatpush1.msra.mxu0 0.0
  %3151 = vmatprep.subr.mxu0 0.0
  %3152 = vmatpush1.msra.mxu0 0.0
  %3153 = vmatprep.subr.mxu0 0.0
  %3154 = vmatpush1.msra.mxu0 0.0
  %3155 = vmatprep.mubr.f32.mxu0 0.0
  %3156 = vmatmul.mubr.f32.gmra.mrb[0].mxu0 %v3089
  %v3157 = vpop.f32.mrb[0].mxu0
  %v3158 = vadd.f32 0.0, %v3157
  %v3159 = vpop.f32.mrb[0].mxu0
  %3160 = vdwg.mxu0
  %v3161 = vadd.f32 %v3084, %v3158
  %v3162 = vxor.u32 %v3161, 2147483648
  %v3163 = vmul.f32 %v3162, 1.442695
  %v3164 = vpow.pop %v3163
  %v3165 = vadd.f32 %v3164, 1.0
  %v3166 = vrcp.pop %v3165
  %v3167 = vmul.f32 1.0, %v3166
  %v3168 = vtanh.pop %v3161
  %v3169 = vmul.f32 %v3167, %v2963
  %3171 = vrot.lane.b32.xlu0 %v3168, 64
  %v3172 = vpop.permute.xlu0 %3171
  %v3174 = vmul.f32 %v3167, %v3172
  %3176 = vrot.lane.b32.xlu0 %v3174, 32
  %v3177 = vpop.permute.xlu0 %3176
  %v3179 = vadd.f32 %v3169, %v3177
  %v3180 = vtanh.pop %v3179
  %3182 = vrot.lane.b32.xlu0 %v3180, 64
  %v3183 = vpop.permute.xlu0 %3182
  %v3185 = vmul.f32 %v3167, %v3183
  %3187 = vrot.lane.b32.xlu0 %v3185, 32
  %v3188 = vpop.permute.xlu0 %3187
  %3190 = vst.msk [vmem:[%s64] sm:$0x3] %vm1565, %v3188
  %3191 = vst.msk [vmem:[#allocation4] sm:$0x3] %vm1565, %v3080
  %3193 = vrot.lane.b32.xlu0 %v3071, 96
  %v3194 = vpop.permute.xlu0 %3193
  %3196 = vst.msk [vmem:[#allocation5] sm:$0x3] %vm1565, %v3194
  %3197 = vst.msk [vmem:[#allocation6] sm:$0x3] %vm1565, %v3188
  %3199 = vrot.lane.b32.xlu0 %v3179, 96
  %v3200 = vpop.permute.xlu0 %3199
  %3202 = vst.msk [vmem:[#allocation7] sm:$0x3] %vm1565, %v3200
  %s3203 = ssub.s32 0, 0
  %s3204 = smul.u32 8, %s3203
  %p3205 = scmp.lt.s32.totalorder %s3204, 7
  %s3206 = scalar_select %p3205, %s3204, 7
  %s3207 = smul.addr %s3206, 2
  %s3208 = scalar_lea.vmem %s9, %s3207
  // Predicated region
  $region38: #{blstm_forward.3} parent=0 // pred_check
    _
  $region39: #{blstm_forward.3} parent=0 // pred_check_branch
    %3210 = sbr.rel (0) target = $region41
  $region40: #{blstm_forward.3} parent=0 // pred_region
    _
  $region41: #{blstm_forward.3} parent=0 // pred_fallthru
    _
  // Predicated region
  $region42: #{blstm_forward.3} parent=0 // pred_check
    _
  $region43: #{blstm_forward.3} parent=0 // pred_check_branch
    %3212 = sbr.rel (0) target = $region45
  $region44: #{blstm_forward.3} parent=0 // pred_region
    %s3213 = ssub.s32 0, 0
    %s3214 = smul.u32 8, %s3213
  $region45: #{blstm_forward.3} parent=0 // pred_fallthru
    _
  // Predicated region
  $region46: #{blstm_forward.3} parent=0 // pred_check
    _
  $region47: #{blstm_forward.3} parent=0 // pred_check_branch
    %3216 = sbr.rel (0) target = $region49
  $region48: #{blstm_forward.3} parent=0 // pred_region
    _
  $region49: #{blstm_forward.3} parent=0 // pred_fallthru
    _
  // Predicated region
  $region50: #{blstm_forward.3} parent=0 // pred_check
    _
  $region51: #{blstm_forward.3} parent=0 // pred_check_branch
    %3218 = sbr.rel (0) target = $region53
  $region52: #{blstm_forward.3} parent=0 // pred_region
    %s3219 = ssub.s32 0, 0
    %s3220 = smul.u32 8, %s3219
    %p3221 = scmp.lt.s32.totalorder %s3220, 7
    %s3222 = scalar_select %p3221, %s3220, 7
    %s3223 = smul.addr %s3222, 2
    %s3224 = scalar_lea.vmem %s9, %s3223
  $region53: #{blstm_forward.3} parent=0 // pred_fallthru
    _

</llo_original>
